<compile_context>
chip_gen: v6e
topology: v6e:2x2x1
jax: 0.10.0
libtpu: 0.0.40
codegen_flags: <defaults>
</compile_context>

<pallas_src>
import jax
import jax.numpy as jnp
from jax import lax
from jax.experimental import pallas as pl
from jax.experimental.pallas import tpu as pltpu


KH = KW = 3  # 3x3 "same" conv, the GradCAM-targeted layer


# ---------------------------------------------------------------------------
# Fused kernel: conv(3x3, same) + bias + ReLU + global-avg-pool + FC
# ---------------------------------------------------------------------------
def fused_conv_gap_fc_kernel(x_ref, wc_ref, bc_ref, wf_ref, bf_ref, o_ref):
    """One batch tile of padded NCHW images -> one tile of logit rows.

    x_ref : [Btile, Cin, H+2, W+2] bf16 VMEM  (W on lanes, H on sublanes)
    wc_ref: [KH*KW*Cin*Cout]       f32  SMEM  (conv weights as scalars,
                                                (kh, kw, ci, co) flat order)
    bc_ref: [Cout]                 f32  SMEM  (conv bias scalars)
    wf_ref: [Cout, NC]             f32  VMEM
    bf_ref: [1, NC]                f32  VMEM
    o_ref : [Btile, NC]            f32  VMEM
    """
    Btile, Cin, Hp, Wp = x_ref.shape
    H, W = Hp - (KH - 1), Wp - (KW - 1)
    Cout, NC = wf_ref.shape

    # Single cheap upcast of the lane-dense block (bf16 stream stays the HBM
    # format; in CHW layout this copy is tiny, and it avoids re-casting each
    # of the 9 shifted views).
    x = x_ref[...].astype(jnp.float32)                       # [Btile,Cin,Hp,Wp]

    # Tap-wise conv on the VPU: for each of the 27 (kh,kw,ci) taps, slice one
    # shifted [Btile,H,W] view (hoisted out of the Cout loop) and FMA it with
    # a scalar weight from SMEM into the per-output-channel accumulator.
    # Total multiply work == exact MAC count (no im2col duplication).
    accs = [None] * Cout
    for kh in range(KH):
        for kw in range(KW):
            for ci in range(Cin):
                shifted = x[:, ci, kh:kh + H, kw:kw + W]     # [Btile, H, W]
                base = ((kh * KW + kw) * Cin + ci) * Cout
                for co in range(Cout):
                    w = wc_ref[base + co]                    # scalar f32
                    term = shifted * w
                    accs[co] = term if accs[co] is None else accs[co] + term

    # Bias + ReLU + global average pool per channel.  The pool is a lane
    # reduce (W) followed by a lane reduce of the [Btile,H] partial — XLU
    # slots are otherwise idle here, so this is effectively free.
    inv_hw = 1.0 / float(H * W)
    cols = []
    for co in range(Cout):
        act = jnp.maximum(accs[co] + bc_ref[co], 0.0)        # [Btile, H, W] f32
        s = jnp.sum(act, axis=2)                             # [Btile, H]
        s = jnp.sum(s, axis=1, keepdims=True)                # [Btile, 1]
        cols.append(s * inv_hw)
    pooled = jnp.concatenate(cols, axis=1)                   # [Btile, Cout]

    # Tiny classifier head fused as an epilogue (no HBM round-trip of the
    # pooled features, no second kernel launch).
    o_ref[...] = (
        jnp.dot(pooled, wf_ref[...], preferred_element_type=jnp.float32)
        + bf_ref[...]
    )


# ---------------------------------------------------------------------------
# Wrapper
# ---------------------------------------------------------------------------
def abstract_model_forward(x_nchw, params, *, batch_tile=8):
    """x_nchw: [B, 3, H, W] float32 -> logits [B, num_classes] float32."""
    w_conv = params["w_conv"]   # [KH, KW, Cin, Cout]  (HWIO)
    b_conv = params["b_conv"]   # [Cout]
    w_fc = params["w_fc"]       # [Cout, NC]
    b_fc = params["b_fc"]       # [NC]

    B, Cin, H, W = x_nchw.shape
    _kh, _kw, _, Cout = w_conv.shape
    NC = w_fc.shape[1]

    # Batch blocking: Btile images per grid step; pad B up to a multiple.
    Btile = min(batch_tile, B)
    n_steps = -(-B // Btile)
    Bpad = n_steps * Btile

    # Cast to bf16 BEFORE padding (half-width HBM pass), pad batch + 1-pixel
    # spatial halo in one op, and keep NCHW — no transpose anywhere.
    x_pad = jnp.pad(x_nchw.astype(jnp.bfloat16),
                    ((0, Bpad - B), (0, 0), (1, 1), (1, 1)))

    wc = w_conv.reshape(-1).astype(jnp.float32)              # (kh,kw,ci,co) flat
    bc = b_conv.astype(jnp.float32)
    wf = w_fc.astype(jnp.float32)
    bf = b_fc.reshape(1, NC).astype(jnp.float32)

    # TODO(synk): for very large H*W (e.g. 224x224 with Btile=8 on v7x's 64MiB
    # VMEM) additionally tile H with a 2-row halo and accumulate the pooled
    # sums per H-tile; at the shapes used here one block per step is plenty.
    logits = pl.pallas_call(
        fused_conv_gap_fc_kernel,
        out_shape=jax.ShapeDtypeStruct((Bpad, NC), jnp.float32),
        grid=(n_steps,),
        in_specs=[
            pl.BlockSpec((Btile, Cin, H + 2, W + 2), lambda i: (i, 0, 0, 0)),
            pl.BlockSpec(memory_space=pltpu.MemorySpace.SMEM),   # conv weights
            pl.BlockSpec(memory_space=pltpu.MemorySpace.SMEM),   # conv bias
            pl.BlockSpec((Cout, NC), lambda i: (0, 0)),
            pl.BlockSpec((1, NC), lambda i: (0, 0)),
        ],
        out_specs=pl.BlockSpec((Btile, NC), lambda i: (i, 0)),
        compiler_params=pltpu.CompilerParams(
            dimension_semantics=("parallel",),
            vmem_limit_bytes=48 * 1024 * 1024,
        ),
    )(x_pad, wc, bc, wf, bf)
    return logits[:B]


# ---------------------------------------------------------------------------
# Pure-JAX reference (inputs quantized to bf16 like the kernel's HBM stream;
# conv weights stay f32, matching the SMEM scalar path in the kernel)
# ---------------------------------------------------------------------------
def reference_forward(x_nchw, params):
    x = jnp.transpose(x_nchw, (0, 2, 3, 1))                  # NHWC
    xb = x.astype(jnp.bfloat16).astype(jnp.float32)
    conv = lax.conv_general_dilated(
        xb, params["w_conv"].astype(jnp.float32),
        window_strides=(1, 1), padding="SAME",
        dimension_numbers=("NHWC", "HWIO", "NHWC"))
    act = jnp.maximum(conv + params["b_conv"][None, None, None, :], 0.0)
    pooled = jnp.mean(act, axis=(1, 2))
    return pooled @ params["w_fc"] + params["b_fc"][None, :]


if __name__ == "__main__":
    key = jax.random.PRNGKey(0)
    k_x, k_wc, k_bc, k_wf, k_bf = jax.random.split(key, 5)

    B, Cin, H, W = 2, 3, 16, 16
    Cout, NC = 8, 8

    x = jax.random.normal(k_x, (B, Cin, H, W), dtype=jnp.float32)
    params = {
        "w_conv": 0.1 * jax.random.normal(k_wc, (3, 3, Cin, Cout), dtype=jnp.float32),
        "b_conv": 0.1 * jax.random.normal(k_bc, (Cout,), dtype=jnp.float32),
        "w_fc": 0.1 * jax.random.normal(k_wf, (Cout, NC), dtype=jnp.float32),
        "b_fc": 0.1 * jax.random.normal(k_bf, (NC,), dtype=jnp.float32),
    }

    out = jax.jit(abstract_model_forward)(x, params)
    out = jax.block_until_ready(out)

    ref = reference_forward(x, params)
    assert out.shape == (B, NC), out.shape
    assert jnp.allclose(out, ref, atol=1e-3, rtol=1e-3), (out, ref)

    # TODO(synk): the training loop, optimizer/loss, DataLoader, TensorBoard and
    # GradCAM activation-map rendering in AbstractModel are host-side
    # orchestration with no Pallas equivalent; only forward() is kernelized.
    print("KERNEL_OK")
</pallas_src>

<mosaic_0001>
module attributes {stable_mosaic.version = 11 : i64} {
  func.func @fused_conv_gap_fc_kernel(%arg0: i32, %arg1: memref<2x3x18x18xbf16, #tpu.memory_space<vmem>>, %arg2: memref<216xf32, #tpu.memory_space<smem>>, %arg3: memref<8xf32, #tpu.memory_space<smem>>, %arg4: memref<8x8xf32, #tpu.memory_space<vmem>>, %arg5: memref<1x8xf32, #tpu.memory_space<vmem>>, %arg6: memref<2x8xf32, #tpu.memory_space<vmem>>) attributes {dimension_semantics = [#tpu.dimension_semantics<parallel>], iteration_bounds = array<i64: 1>, scalar_prefetch = 0 : i64, scratch_operands = 0 : i64, tpu.core_type = #tpu.core_type<tc>, window_params = [{transform_indices = @transform_0, window_bounds = array<i64: 2, 3, 18, 18>}, {transform_indices = @transform_1, window_bounds = array<i64: 216>}, {transform_indices = @transform_2, window_bounds = array<i64: 8>}, {pipeline_mode = #tpu.pipeline_mode<synchronous>, transform_indices = @transform_3, window_bounds = array<i64: 8, 8>}, {pipeline_mode = #tpu.pipeline_mode<synchronous>, transform_indices = @transform_4, window_bounds = array<i64: 1, 8>}, {transform_indices = @transform_5, window_bounds = array<i64: 2, 8>}]} {
    %c0 = arith.constant 0 : index
    %c0_0 = arith.constant 0 : index
    %c0_1 = arith.constant 0 : index
    %c0_2 = arith.constant 0 : index
    %0 = vector.load %arg1[%c0, %c0_0, %c0_1, %c0_2] : memref<2x3x18x18xbf16, #tpu.memory_space<vmem>>, vector<2x3x18x18xbf16>
    %1 = arith.extf %0 : vector<2x3x18x18xbf16> to vector<2x3x18x18xf32>
    %2 = vector.extract_strided_slice %1 {offsets = [0, 0, 0, 0], sizes = [2, 1, 16, 16], strides = [1, 1, 1, 1]} : vector<2x3x18x18xf32> to vector<2x1x16x16xf32>
    %3 = vector.shape_cast %2 : vector<2x1x16x16xf32> to vector<2x16x16xf32>
    %c0_3 = arith.constant 0 : index
    %4 = memref.load %arg2[%c0_3] : memref<216xf32, #tpu.memory_space<smem>>
    %5 = vector.broadcast %4 : f32 to vector<2x16x16xf32>
    %6 = arith.mulf %3, %5 : vector<2x16x16xf32>
    %c1 = arith.constant 1 : index
    %7 = memref.load %arg2[%c1] : memref<216xf32, #tpu.memory_space<smem>>
    %8 = vector.broadcast %7 : f32 to vector<2x16x16xf32>
    %9 = arith.mulf %3, %8 : vector<2x16x16xf32>
    %c2 = arith.constant 2 : index
    %10 = memref.load %arg2[%c2] : memref<216xf32, #tpu.memory_space<smem>>
    %11 = vector.broadcast %10 : f32 to vector<2x16x16xf32>
    %12 = arith.mulf %3, %11 : vector<2x16x16xf32>
    %c3 = arith.constant 3 : index
    %13 = memref.load %arg2[%c3] : memref<216xf32, #tpu.memory_space<smem>>
    %14 = vector.broadcast %13 : f32 to vector<2x16x16xf32>
    %15 = arith.mulf %3, %14 : vector<2x16x16xf32>
    %c4 = arith.constant 4 : index
    %16 = memref.load %arg2[%c4] : memref<216xf32, #tpu.memory_space<smem>>
    %17 = vector.broadcast %16 : f32 to vector<2x16x16xf32>
    %18 = arith.mulf %3, %17 : vector<2x16x16xf32>
    %c5 = arith.constant 5 : index
    %19 = memref.load %arg2[%c5] : memref<216xf32, #tpu.memory_space<smem>>
    %20 = vector.broadcast %19 : f32 to vector<2x16x16xf32>
    %21 = arith.mulf %3, %20 : vector<2x16x16xf32>
    %c6 = arith.constant 6 : index
    %22 = memref.load %arg2[%c6] : memref<216xf32, #tpu.memory_space<smem>>
    %23 = vector.broadcast %22 : f32 to vector<2x16x16xf32>
    %24 = arith.mulf %3, %23 : vector<2x16x16xf32>
    %c7 = arith.constant 7 : index
    %25 = memref.load %arg2[%c7] : memref<216xf32, #tpu.memory_space<smem>>
    %26 = vector.broadcast %25 : f32 to vector<2x16x16xf32>
    %27 = arith.mulf %3, %26 : vector<2x16x16xf32>
    %28 = vector.extract_strided_slice %1 {offsets = [0, 1, 0, 0], sizes = [2, 1, 16, 16], strides = [1, 1, 1, 1]} : vector<2x3x18x18xf32> to vector<2x1x16x16xf32>
    %29 = vector.shape_cast %28 : vector<2x1x16x16xf32> to vector<2x16x16xf32>
    %c8 = arith.constant 8 : index
    %30 = memref.load %arg2[%c8] : memref<216xf32, #tpu.memory_space<smem>>
    %31 = vector.broadcast %30 : f32 to vector<2x16x16xf32>
    %32 = arith.mulf %29, %31 : vector<2x16x16xf32>
    %33 = arith.addf %6, %32 : vector<2x16x16xf32>
    %c9 = arith.constant 9 : index
    %34 = memref.load %arg2[%c9] : memref<216xf32, #tpu.memory_space<smem>>
    %35 = vector.broadcast %34 : f32 to vector<2x16x16xf32>
    %36 = arith.mulf %29, %35 : vector<2x16x16xf32>
    %37 = arith.addf %9, %36 : vector<2x16x16xf32>
    %c10 = arith.constant 10 : index
    %38 = memref.load %arg2[%c10] : memref<216xf32, #tpu.memory_space<smem>>
    %39 = vector.broadcast %38 : f32 to vector<2x16x16xf32>
    %40 = arith.mulf %29, %39 : vector<2x16x16xf32>
    %41 = arith.addf %12, %40 : vector<2x16x16xf32>
    %c11 = arith.constant 11 : index
    %42 = memref.load %arg2[%c11] : memref<216xf32, #tpu.memory_space<smem>>
    %43 = vector.broadcast %42 : f32 to vector<2x16x16xf32>
    %44 = arith.mulf %29, %43 : vector<2x16x16xf32>
    %45 = arith.addf %15, %44 : vector<2x16x16xf32>
    %c12 = arith.constant 12 : index
    %46 = memref.load %arg2[%c12] : memref<216xf32, #tpu.memory_space<smem>>
    %47 = vector.broadcast %46 : f32 to vector<2x16x16xf32>
    %48 = arith.mulf %29, %47 : vector<2x16x16xf32>
    %49 = arith.addf %18, %48 : vector<2x16x16xf32>
    %c13 = arith.constant 13 : index
    %50 = memref.load %arg2[%c13] : memref<216xf32, #tpu.memory_space<smem>>
    %51 = vector.broadcast %50 : f32 to vector<2x16x16xf32>
    %52 = arith.mulf %29, %51 : vector<2x16x16xf32>
    %53 = arith.addf %21, %52 : vector<2x16x16xf32>
    %c14 = arith.constant 14 : index
    %54 = memref.load %arg2[%c14] : memref<216xf32, #tpu.memory_space<smem>>
    %55 = vector.broadcast %54 : f32 to vector<2x16x16xf32>
    %56 = arith.mulf %29, %55 : vector<2x16x16xf32>
    %57 = arith.addf %24, %56 : vector<2x16x16xf32>
    %c15 = arith.constant 15 : index
    %58 = memref.load %arg2[%c15] : memref<216xf32, #tpu.memory_space<smem>>
    %59 = vector.broadcast %58 : f32 to vector<2x16x16xf32>
    %60 = arith.mulf %29, %59 : vector<2x16x16xf32>
    %61 = arith.addf %27, %60 : vector<2x16x16xf32>
    %62 = vector.extract_strided_slice %1 {offsets = [0, 2, 0, 0], sizes = [2, 1, 16, 16], strides = [1, 1, 1, 1]} : vector<2x3x18x18xf32> to vector<2x1x16x16xf32>
    %63 = vector.shape_cast %62 : vector<2x1x16x16xf32> to vector<2x16x16xf32>
    %c16 = arith.constant 16 : index
    %64 = memref.load %arg2[%c16] : memref<216xf32, #tpu.memory_space<smem>>
    %65 = vector.broadcast %64 : f32 to vector<2x16x16xf32>
    %66 = arith.mulf %63, %65 : vector<2x16x16xf32>
    %67 = arith.addf %33, %66 : vector<2x16x16xf32>
    %c17 = arith.constant 17 : index
    %68 = memref.load %arg2[%c17] : memref<216xf32, #tpu.memory_space<smem>>
    %69 = vector.broadcast %68 : f32 to vector<2x16x16xf32>
    %70 = arith.mulf %63, %69 : vector<2x16x16xf32>
    %71 = arith.addf %37, %70 : vector<2x16x16xf32>
    %c18 = arith.constant 18 : index
    %72 = memref.load %arg2[%c18] : memref<216xf32, #tpu.memory_space<smem>>
    %73 = vector.broadcast %72 : f32 to vector<2x16x16xf32>
    %74 = arith.mulf %63, %73 : vector<2x16x16xf32>
    %75 = arith.addf %41, %74 : vector<2x16x16xf32>
    %c19 = arith.constant 19 : index
    %76 = memref.load %arg2[%c19] : memref<216xf32, #tpu.memory_space<smem>>
    %77 = vector.broadcast %76 : f32 to vector<2x16x16xf32>
    %78 = arith.mulf %63, %77 : vector<2x16x16xf32>
    %79 = arith.addf %45, %78 : vector<2x16x16xf32>
    %c20 = arith.constant 20 : index
    %80 = memref.load %arg2[%c20] : memref<216xf32, #tpu.memory_space<smem>>
    %81 = vector.broadcast %80 : f32 to vector<2x16x16xf32>
    %82 = arith.mulf %63, %81 : vector<2x16x16xf32>
    %83 = arith.addf %49, %82 : vector<2x16x16xf32>
    %c21 = arith.constant 21 : index
    %84 = memref.load %arg2[%c21] : memref<216xf32, #tpu.memory_space<smem>>
    %85 = vector.broadcast %84 : f32 to vector<2x16x16xf32>
    %86 = arith.mulf %63, %85 : vector<2x16x16xf32>
    %87 = arith.addf %53, %86 : vector<2x16x16xf32>
    %c22 = arith.constant 22 : index
    %88 = memref.load %arg2[%c22] : memref<216xf32, #tpu.memory_space<smem>>
    %89 = vector.broadcast %88 : f32 to vector<2x16x16xf32>
    %90 = arith.mulf %63, %89 : vector<2x16x16xf32>
    %91 = arith.addf %57, %90 : vector<2x16x16xf32>
    %c23 = arith.constant 23 : index
    %92 = memref.load %arg2[%c23] : memref<216xf32, #tpu.memory_space<smem>>
    %93 = vector.broadcast %92 : f32 to vector<2x16x16xf32>
    %94 = arith.mulf %63, %93 : vector<2x16x16xf32>
    %95 = arith.addf %61, %94 : vector<2x16x16xf32>
    %96 = vector.extract_strided_slice %1 {offsets = [0, 0, 0, 1], sizes = [2, 1, 16, 16], strides = [1, 1, 1, 1]} : vector<2x3x18x18xf32> to vector<2x1x16x16xf32>
    %97 = vector.shape_cast %96 : vector<2x1x16x16xf32> to vector<2x16x16xf32>
    %c24 = arith.constant 24 : index
    %98 = memref.load %arg2[%c24] : memref<216xf32, #tpu.memory_space<smem>>
    %99 = vector.broadcast %98 : f32 to vector<2x16x16xf32>
    %100 = arith.mulf %97, %99 : vector<2x16x16xf32>
    %101 = arith.addf %67, %100 : vector<2x16x16xf32>
    %c25 = arith.constant 25 : index
    %102 = memref.load %arg2[%c25] : memref<216xf32, #tpu.memory_space<smem>>
    %103 = vector.broadcast %102 : f32 to vector<2x16x16xf32>
    %104 = arith.mulf %97, %103 : vector<2x16x16xf32>
    %105 = arith.addf %71, %104 : vector<2x16x16xf32>
    %c26 = arith.constant 26 : index
    %106 = memref.load %arg2[%c26] : memref<216xf32, #tpu.memory_space<smem>>
    %107 = vector.broadcast %106 : f32 to vector<2x16x16xf32>
    %108 = arith.mulf %97, %107 : vector<2x16x16xf32>
    %109 = arith.addf %75, %108 : vector<2x16x16xf32>
    %c27 = arith.constant 27 : index
    %110 = memref.load %arg2[%c27] : memref<216xf32, #tpu.memory_space<smem>>
    %111 = vector.broadcast %110 : f32 to vector<2x16x16xf32>
    %112 = arith.mulf %97, %111 : vector<2x16x16xf32>
    %113 = arith.addf %79, %112 : vector<2x16x16xf32>
    %c28 = arith.constant 28 : index
    %114 = memref.load %arg2[%c28] : memref<216xf32, #tpu.memory_space<smem>>
    %115 = vector.broadcast %114 : f32 to vector<2x16x16xf32>
    %116 = arith.mulf %97, %115 : vector<2x16x16xf32>
    %117 = arith.addf %83, %116 : vector<2x16x16xf32>
    %c29 = arith.constant 29 : index
    %118 = memref.load %arg2[%c29] : memref<216xf32, #tpu.memory_space<smem>>
    %119 = vector.broadcast %118 : f32 to vector<2x16x16xf32>
    %120 = arith.mulf %97, %119 : vector<2x16x16xf32>
    %121 = arith.addf %87, %120 : vector<2x16x16xf32>
    %c30 = arith.constant 30 : index
    %122 = memref.load %arg2[%c30] : memref<216xf32, #tpu.memory_space<smem>>
    %123 = vector.broadcast %122 : f32 to vector<2x16x16xf32>
    %124 = arith.mulf %97, %123 : vector<2x16x16xf32>
    %125 = arith.addf %91, %124 : vector<2x16x16xf32>
    %c31 = arith.constant 31 : index
    %126 = memref.load %arg2[%c31] : memref<216xf32, #tpu.memory_space<smem>>
    %127 = vector.broadcast %126 : f32 to vector<2x16x16xf32>
    %128 = arith.mulf %97, %127 : vector<2x16x16xf32>
    %129 = arith.addf %95, %128 : vector<2x16x16xf32>
    %130 = vector.extract_strided_slice %1 {offsets = [0, 1, 0, 1], sizes = [2, 1, 16, 16], strides = [1, 1, 1, 1]} : vector<2x3x18x18xf32> to vector<2x1x16x16xf32>
    %131 = vector.shape_cast %130 : vector<2x1x16x16xf32> to vector<2x16x16xf32>
    %c32 = arith.constant 32 : index
    %132 = memref.load %arg2[%c32] : memref<216xf32, #tpu.memory_space<smem>>
    %133 = vector.broadcast %132 : f32 to vector<2x16x16xf32>
    %134 = arith.mulf %131, %133 : vector<2x16x16xf32>
    %135 = arith.addf %101, %134 : vector<2x16x16xf32>
    %c33 = arith.constant 33 : index
    %136 = memref.load %arg2[%c33] : memref<216xf32, #tpu.memory_space<smem>>
    %137 = vector.broadcast %136 : f32 to vector<2x16x16xf32>
    %138 = arith.mulf %131, %137 : vector<2x16x16xf32>
    %139 = arith.addf %105, %138 : vector<2x16x16xf32>
    %c34 = arith.constant 34 : index
    %140 = memref.load %arg2[%c34] : memref<216xf32, #tpu.memory_space<smem>>
    %141 = vector.broadcast %140 : f32 to vector<2x16x16xf32>
    %142 = arith.mulf %131, %141 : vector<2x16x16xf32>
    %143 = arith.addf %109, %142 : vector<2x16x16xf32>
    %c35 = arith.constant 35 : index
    %144 = memref.load %arg2[%c35] : memref<216xf32, #tpu.memory_space<smem>>
    %145 = vector.broadcast %144 : f32 to vector<2x16x16xf32>
    %146 = arith.mulf %131, %145 : vector<2x16x16xf32>
    %147 = arith.addf %113, %146 : vector<2x16x16xf32>
    %c36 = arith.constant 36 : index
    %148 = memref.load %arg2[%c36] : memref<216xf32, #tpu.memory_space<smem>>
    %149 = vector.broadcast %148 : f32 to vector<2x16x16xf32>
    %150 = arith.mulf %131, %149 : vector<2x16x16xf32>
    %151 = arith.addf %117, %150 : vector<2x16x16xf32>
    %c37 = arith.constant 37 : index
    %152 = memref.load %arg2[%c37] : memref<216xf32, #tpu.memory_space<smem>>
    %153 = vector.broadcast %152 : f32 to vector<2x16x16xf32>
    %154 = arith.mulf %131, %153 : vector<2x16x16xf32>
    %155 = arith.addf %121, %154 : vector<2x16x16xf32>
    %c38 = arith.constant 38 : index
    %156 = memref.load %arg2[%c38] : memref<216xf32, #tpu.memory_space<smem>>
    %157 = vector.broadcast %156 : f32 to vector<2x16x16xf32>
    %158 = arith.mulf %131, %157 : vector<2x16x16xf32>
    %159 = arith.addf %125, %158 : vector<2x16x16xf32>
    %c39 = arith.constant 39 : index
    %160 = memref.load %arg2[%c39] : memref<216xf32, #tpu.memory_space<smem>>
    %161 = vector.broadcast %160 : f32 to vector<2x16x16xf32>
    %162 = arith.mulf %131, %161 : vector<2x16x16xf32>
    %163 = arith.addf %129, %162 : vector<2x16x16xf32>
    %164 = vector.extract_strided_slice %1 {offsets = [0, 2, 0, 1], sizes = [2, 1, 16, 16], strides = [1, 1, 1, 1]} : vector<2x3x18x18xf32> to vector<2x1x16x16xf32>
    %165 = vector.shape_cast %164 : vector<2x1x16x16xf32> to vector<2x16x16xf32>
    %c40 = arith.constant 40 : index
    %166 = memref.load %arg2[%c40] : memref<216xf32, #tpu.memory_space<smem>>
    %167 = vector.broadcast %166 : f32 to vector<2x16x16xf32>
    %168 = arith.mulf %165, %167 : vector<2x16x16xf32>
    %169 = arith.addf %135, %168 : vector<2x16x16xf32>
    %c41 = arith.constant 41 : index
    %170 = memref.load %arg2[%c41] : memref<216xf32, #tpu.memory_space<smem>>
    %171 = vector.broadcast %170 : f32 to vector<2x16x16xf32>
    %172 = arith.mulf %165, %171 : vector<2x16x16xf32>
    %173 = arith.addf %139, %172 : vector<2x16x16xf32>
    %c42 = arith.constant 42 : index
    %174 = memref.load %arg2[%c42] : memref<216xf32, #tpu.memory_space<smem>>
    %175 = vector.broadcast %174 : f32 to vector<2x16x16xf32>
    %176 = arith.mulf %165, %175 : vector<2x16x16xf32>
    %177 = arith.addf %143, %176 : vector<2x16x16xf32>
    %c43 = arith.constant 43 : index
    %178 = memref.load %arg2[%c43] : memref<216xf32, #tpu.memory_space<smem>>
    %179 = vector.broadcast %178 : f32 to vector<2x16x16xf32>
    %180 = arith.mulf %165, %179 : vector<2x16x16xf32>
    %181 = arith.addf %147, %180 : vector<2x16x16xf32>
    %c44 = arith.constant 44 : index
    %182 = memref.load %arg2[%c44] : memref<216xf32, #tpu.memory_space<smem>>
    %183 = vector.broadcast %182 : f32 to vector<2x16x16xf32>
    %184 = arith.mulf %165, %183 : vector<2x16x16xf32>
    %185 = arith.addf %151, %184 : vector<2x16x16xf32>
    %c45 = arith.constant 45 : index
    %186 = memref.load %arg2[%c45] : memref<216xf32, #tpu.memory_space<smem>>
    %187 = vector.broadcast %186 : f32 to vector<2x16x16xf32>
    %188 = arith.mulf %165, %187 : vector<2x16x16xf32>
    %189 = arith.addf %155, %188 : vector<2x16x16xf32>
    %c46 = arith.constant 46 : index
    %190 = memref.load %arg2[%c46] : memref<216xf32, #tpu.memory_space<smem>>
    %191 = vector.broadcast %190 : f32 to vector<2x16x16xf32>
    %192 = arith.mulf %165, %191 : vector<2x16x16xf32>
    %193 = arith.addf %159, %192 : vector<2x16x16xf32>
    %c47 = arith.constant 47 : index
    %194 = memref.load %arg2[%c47] : memref<216xf32, #tpu.memory_space<smem>>
    %195 = vector.broadcast %194 : f32 to vector<2x16x16xf32>
    %196 = arith.mulf %165, %195 : vector<2x16x16xf32>
    %197 = arith.addf %163, %196 : vector<2x16x16xf32>
    %198 = vector.extract_strided_slice %1 {offsets = [0, 0, 0, 2], sizes = [2, 1, 16, 16], strides = [1, 1, 1, 1]} : vector<2x3x18x18xf32> to vector<2x1x16x16xf32>
    %199 = vector.shape_cast %198 : vector<2x1x16x16xf32> to vector<2x16x16xf32>
    %c48 = arith.constant 48 : index
    %200 = memref.load %arg2[%c48] : memref<216xf32, #tpu.memory_space<smem>>
    %201 = vector.broadcast %200 : f32 to vector<2x16x16xf32>
    %202 = arith.mulf %199, %201 : vector<2x16x16xf32>
    %203 = arith.addf %169, %202 : vector<2x16x16xf32>
    %c49 = arith.constant 49 : index
    %204 = memref.load %arg2[%c49] : memref<216xf32, #tpu.memory_space<smem>>
    %205 = vector.broadcast %204 : f32 to vector<2x16x16xf32>
    %206 = arith.mulf %199, %205 : vector<2x16x16xf32>
    %207 = arith.addf %173, %206 : vector<2x16x16xf32>
    %c50 = arith.constant 50 : index
    %208 = memref.load %arg2[%c50] : memref<216xf32, #tpu.memory_space<smem>>
    %209 = vector.broadcast %208 : f32 to vector<2x16x16xf32>
    %210 = arith.mulf %199, %209 : vector<2x16x16xf32>
    %211 = arith.addf %177, %210 : vector<2x16x16xf32>
    %c51 = arith.constant 51 : index
    %212 = memref.load %arg2[%c51] : memref<216xf32, #tpu.memory_space<smem>>
    %213 = vector.broadcast %212 : f32 to vector<2x16x16xf32>
    %214 = arith.mulf %199, %213 : vector<2x16x16xf32>
    %215 = arith.addf %181, %214 : vector<2x16x16xf32>
    %c52 = arith.constant 52 : index
    %216 = memref.load %arg2[%c52] : memref<216xf32, #tpu.memory_space<smem>>
    %217 = vector.broadcast %216 : f32 to vector<2x16x16xf32>
    %218 = arith.mulf %199, %217 : vector<2x16x16xf32>
    %219 = arith.addf %185, %218 : vector<2x16x16xf32>
    %c53 = arith.constant 53 : index
    %220 = memref.load %arg2[%c53] : memref<216xf32, #tpu.memory_space<smem>>
    %221 = vector.broadcast %220 : f32 to vector<2x16x16xf32>
    %222 = arith.mulf %199, %221 : vector<2x16x16xf32>
    %223 = arith.addf %189, %222 : vector<2x16x16xf32>
    %c54 = arith.constant 54 : index
    %224 = memref.load %arg2[%c54] : memref<216xf32, #tpu.memory_space<smem>>
    %225 = vector.broadcast %224 : f32 to vector<2x16x16xf32>
    %226 = arith.mulf %199, %225 : vector<2x16x16xf32>
    %227 = arith.addf %193, %226 : vector<2x16x16xf32>
    %c55 = arith.constant 55 : index
    %228 = memref.load %arg2[%c55] : memref<216xf32, #tpu.memory_space<smem>>
    %229 = vector.broadcast %228 : f32 to vector<2x16x16xf32>
    %230 = arith.mulf %199, %229 : vector<2x16x16xf32>
    %231 = arith.addf %197, %230 : vector<2x16x16xf32>
    %232 = vector.extract_strided_slice %1 {offsets = [0, 1, 0, 2], sizes = [2, 1, 16, 16], strides = [1, 1, 1, 1]} : vector<2x3x18x18xf32> to vector<2x1x16x16xf32>
    %233 = vector.shape_cast %232 : vector<2x1x16x16xf32> to vector<2x16x16xf32>
    %c56 = arith.constant 56 : index
    %234 = memref.load %arg2[%c56] : memref<216xf32, #tpu.memory_space<smem>>
    %235 = vector.broadcast %234 : f32 to vector<2x16x16xf32>
    %236 = arith.mulf %233, %235 : vector<2x16x16xf32>
    %237 = arith.addf %203, %236 : vector<2x16x16xf32>
    %c57 = arith.constant 57 : index
    %238 = memref.load %arg2[%c57] : memref<216xf32, #tpu.memory_space<smem>>
    %239 = vector.broadcast %238 : f32 to vector<2x16x16xf32>
    %240 = arith.mulf %233, %239 : vector<2x16x16xf32>
    %241 = arith.addf %207, %240 : vector<2x16x16xf32>
    %c58 = arith.constant 58 : index
    %242 = memref.load %arg2[%c58] : memref<216xf32, #tpu.memory_space<smem>>
    %243 = vector.broadcast %242 : f32 to vector<2x16x16xf32>
    %244 = arith.mulf %233, %243 : vector<2x16x16xf32>
    %245 = arith.addf %211, %244 : vector<2x16x16xf32>
    %c59 = arith.constant 59 : index
    %246 = memref.load %arg2[%c59] : memref<216xf32, #tpu.memory_space<smem>>
    %247 = vector.broadcast %246 : f32 to vector<2x16x16xf32>
    %248 = arith.mulf %233, %247 : vector<2x16x16xf32>
    %249 = arith.addf %215, %248 : vector<2x16x16xf32>
    %c60 = arith.constant 60 : index
    %250 = memref.load %arg2[%c60] : memref<216xf32, #tpu.memory_space<smem>>
    %251 = vector.broadcast %250 : f32 to vector<2x16x16xf32>
    %252 = arith.mulf %233, %251 : vector<2x16x16xf32>
    %253 = arith.addf %219, %252 : vector<2x16x16xf32>
    %c61 = arith.constant 61 : index
    %254 = memref.load %arg2[%c61] : memref<216xf32, #tpu.memory_space<smem>>
    %255 = vector.broadcast %254 : f32 to vector<2x16x16xf32>
    %256 = arith.mulf %233, %255 : vector<2x16x16xf32>
    %257 = arith.addf %223, %256 : vector<2x16x16xf32>
    %c62 = arith.constant 62 : index
    %258 = memref.load %arg2[%c62] : memref<216xf32, #tpu.memory_space<smem>>
    %259 = vector.broadcast %258 : f32 to vector<2x16x16xf32>
    %260 = arith.mulf %233, %259 : vector<2x16x16xf32>
    %261 = arith.addf %227, %260 : vector<2x16x16xf32>
    %c63 = arith.constant 63 : index
    %262 = memref.load %arg2[%c63] : memref<216xf32, #tpu.memory_space<smem>>
    %263 = vector.broadcast %262 : f32 to vector<2x16x16xf32>
    %264 = arith.mulf %233, %263 : vector<2x16x16xf32>
    %265 = arith.addf %231, %264 : vector<2x16x16xf32>
    %266 = vector.extract_strided_slice %1 {offsets = [0, 2, 0, 2], sizes = [2, 1, 16, 16], strides = [1, 1, 1, 1]} : vector<2x3x18x18xf32> to vector<2x1x16x16xf32>
    %267 = vector.shape_cast %266 : vector<2x1x16x16xf32> to vector<2x16x16xf32>
    %c64 = arith.constant 64 : index
    %268 = memref.load %arg2[%c64] : memref<216xf32, #tpu.memory_space<smem>>
    %269 = vector.broadcast %268 : f32 to vector<2x16x16xf32>
    %270 = arith.mulf %267, %269 : vector<2x16x16xf32>
    %271 = arith.addf %237, %270 : vector<2x16x16xf32>
    %c65 = arith.constant 65 : index
    %272 = memref.load %arg2[%c65] : memref<216xf32, #tpu.memory_space<smem>>
    %273 = vector.broadcast %272 : f32 to vector<2x16x16xf32>
    %274 = arith.mulf %267, %273 : vector<2x16x16xf32>
    %275 = arith.addf %241, %274 : vector<2x16x16xf32>
    %c66 = arith.constant 66 : index
    %276 = memref.load %arg2[%c66] : memref<216xf32, #tpu.memory_space<smem>>
    %277 = vector.broadcast %276 : f32 to vector<2x16x16xf32>
    %278 = arith.mulf %267, %277 : vector<2x16x16xf32>
    %279 = arith.addf %245, %278 : vector<2x16x16xf32>
    %c67 = arith.constant 67 : index
    %280 = memref.load %arg2[%c67] : memref<216xf32, #tpu.memory_space<smem>>
    %281 = vector.broadcast %280 : f32 to vector<2x16x16xf32>
    %282 = arith.mulf %267, %281 : vector<2x16x16xf32>
    %283 = arith.addf %249, %282 : vector<2x16x16xf32>
    %c68 = arith.constant 68 : index
    %284 = memref.load %arg2[%c68] : memref<216xf32, #tpu.memory_space<smem>>
    %285 = vector.broadcast %284 : f32 to vector<2x16x16xf32>
    %286 = arith.mulf %267, %285 : vector<2x16x16xf32>
    %287 = arith.addf %253, %286 : vector<2x16x16xf32>
    %c69 = arith.constant 69 : index
    %288 = memref.load %arg2[%c69] : memref<216xf32, #tpu.memory_space<smem>>
    %289 = vector.broadcast %288 : f32 to vector<2x16x16xf32>
    %290 = arith.mulf %267, %289 : vector<2x16x16xf32>
    %291 = arith.addf %257, %290 : vector<2x16x16xf32>
    %c70 = arith.constant 70 : index
    %292 = memref.load %arg2[%c70] : memref<216xf32, #tpu.memory_space<smem>>
    %293 = vector.broadcast %292 : f32 to vector<2x16x16xf32>
    %294 = arith.mulf %267, %293 : vector<2x16x16xf32>
    %295 = arith.addf %261, %294 : vector<2x16x16xf32>
    %c71 = arith.constant 71 : index
    %296 = memref.load %arg2[%c71] : memref<216xf32, #tpu.memory_space<smem>>
    %297 = vector.broadcast %296 : f32 to vector<2x16x16xf32>
    %298 = arith.mulf %267, %297 : vector<2x16x16xf32>
    %299 = arith.addf %265, %298 : vector<2x16x16xf32>
    %300 = vector.extract_strided_slice %1 {offsets = [0, 0, 1, 0], sizes = [2, 1, 16, 16], strides = [1, 1, 1, 1]} : vector<2x3x18x18xf32> to vector<2x1x16x16xf32>
    %301 = vector.shape_cast %300 : vector<2x1x16x16xf32> to vector<2x16x16xf32>
    %c72 = arith.constant 72 : index
    %302 = memref.load %arg2[%c72] : memref<216xf32, #tpu.memory_space<smem>>
    %303 = vector.broadcast %302 : f32 to vector<2x16x16xf32>
    %304 = arith.mulf %301, %303 : vector<2x16x16xf32>
    %305 = arith.addf %271, %304 : vector<2x16x16xf32>
    %c73 = arith.constant 73 : index
    %306 = memref.load %arg2[%c73] : memref<216xf32, #tpu.memory_space<smem>>
    %307 = vector.broadcast %306 : f32 to vector<2x16x16xf32>
    %308 = arith.mulf %301, %307 : vector<2x16x16xf32>
    %309 = arith.addf %275, %308 : vector<2x16x16xf32>
    %c74 = arith.constant 74 : index
    %310 = memref.load %arg2[%c74] : memref<216xf32, #tpu.memory_space<smem>>
    %311 = vector.broadcast %310 : f32 to vector<2x16x16xf32>
    %312 = arith.mulf %301, %311 : vector<2x16x16xf32>
    %313 = arith.addf %279, %312 : vector<2x16x16xf32>
    %c75 = arith.constant 75 : index
    %314 = memref.load %arg2[%c75] : memref<216xf32, #tpu.memory_space<smem>>
    %315 = vector.broadcast %314 : f32 to vector<2x16x16xf32>
    %316 = arith.mulf %301, %315 : vector<2x16x16xf32>
    %317 = arith.addf %283, %316 : vector<2x16x16xf32>
    %c76 = arith.constant 76 : index
    %318 = memref.load %arg2[%c76] : memref<216xf32, #tpu.memory_space<smem>>
    %319 = vector.broadcast %318 : f32 to vector<2x16x16xf32>
    %320 = arith.mulf %301, %319 : vector<2x16x16xf32>
    %321 = arith.addf %287, %320 : vector<2x16x16xf32>
    %c77 = arith.constant 77 : index
    %322 = memref.load %arg2[%c77] : memref<216xf32, #tpu.memory_space<smem>>
    %323 = vector.broadcast %322 : f32 to vector<2x16x16xf32>
    %324 = arith.mulf %301, %323 : vector<2x16x16xf32>
    %325 = arith.addf %291, %324 : vector<2x16x16xf32>
    %c78 = arith.constant 78 : index
    %326 = memref.load %arg2[%c78] : memref<216xf32, #tpu.memory_space<smem>>
    %327 = vector.broadcast %326 : f32 to vector<2x16x16xf32>
    %328 = arith.mulf %301, %327 : vector<2x16x16xf32>
    %329 = arith.addf %295, %328 : vector<2x16x16xf32>
    %c79 = arith.constant 79 : index
    %330 = memref.load %arg2[%c79] : memref<216xf32, #tpu.memory_space<smem>>
    %331 = vector.broadcast %330 : f32 to vector<2x16x16xf32>
    %332 = arith.mulf %301, %331 : vector<2x16x16xf32>
    %333 = arith.addf %299, %332 : vector<2x16x16xf32>
    %334 = vector.extract_strided_slice %1 {offsets = [0, 1, 1, 0], sizes = [2, 1, 16, 16], strides = [1, 1, 1, 1]} : vector<2x3x18x18xf32> to vector<2x1x16x16xf32>
    %335 = vector.shape_cast %334 : vector<2x1x16x16xf32> to vector<2x16x16xf32>
    %c80 = arith.constant 80 : index
    %336 = memref.load %arg2[%c80] : memref<216xf32, #tpu.memory_space<smem>>
    %337 = vector.broadcast %336 : f32 to vector<2x16x16xf32>
    %338 = arith.mulf %335, %337 : vector<2x16x16xf32>
    %339 = arith.addf %305, %338 : vector<2x16x16xf32>
    %c81 = arith.constant 81 : index
    %340 = memref.load %arg2[%c81] : memref<216xf32, #tpu.memory_space<smem>>
    %341 = vector.broadcast %340 : f32 to vector<2x16x16xf32>
    %342 = arith.mulf %335, %341 : vector<2x16x16xf32>
    %343 = arith.addf %309, %342 : vector<2x16x16xf32>
    %c82 = arith.constant 82 : index
    %344 = memref.load %arg2[%c82] : memref<216xf32, #tpu.memory_space<smem>>
    %345 = vector.broadcast %344 : f32 to vector<2x16x16xf32>
    %346 = arith.mulf %335, %345 : vector<2x16x16xf32>
    %347 = arith.addf %313, %346 : vector<2x16x16xf32>
    %c83 = arith.constant 83 : index
    %348 = memref.load %arg2[%c83] : memref<216xf32, #tpu.memory_space<smem>>
    %349 = vector.broadcast %348 : f32 to vector<2x16x16xf32>
    %350 = arith.mulf %335, %349 : vector<2x16x16xf32>
    %351 = arith.addf %317, %350 : vector<2x16x16xf32>
    %c84 = arith.constant 84 : index
    %352 = memref.load %arg2[%c84] : memref<216xf32, #tpu.memory_space<smem>>
    %353 = vector.broadcast %352 : f32 to vector<2x16x16xf32>
    %354 = arith.mulf %335, %353 : vector<2x16x16xf32>
    %355 = arith.addf %321, %354 : vector<2x16x16xf32>
    %c85 = arith.constant 85 : index
    %356 = memref.load %arg2[%c85] : memref<216xf32, #tpu.memory_space<smem>>
    %357 = vector.broadcast %356 : f32 to vector<2x16x16xf32>
    %358 = arith.mulf %335, %357 : vector<2x16x16xf32>
    %359 = arith.addf %325, %358 : vector<2x16x16xf32>
    %c86 = arith.constant 86 : index
    %360 = memref.load %arg2[%c86] : memref<216xf32, #tpu.memory_space<smem>>
    %361 = vector.broadcast %360 : f32 to vector<2x16x16xf32>
    %362 = arith.mulf %335, %361 : vector<2x16x16xf32>
    %363 = arith.addf %329, %362 : vector<2x16x16xf32>
    %c87 = arith.constant 87 : index
    %364 = memref.load %arg2[%c87] : memref<216xf32, #tpu.memory_space<smem>>
    %365 = vector.broadcast %364 : f32 to vector<2x16x16xf32>
    %366 = arith.mulf %335, %365 : vector<2x16x16xf32>
    %367 = arith.addf %333, %366 : vector<2x16x16xf32>
    %368 = vector.extract_strided_slice %1 {offsets = [0, 2, 1, 0], sizes = [2, 1, 16, 16], strides = [1, 1, 1, 1]} : vector<2x3x18x18xf32> to vector<2x1x16x16xf32>
    %369 = vector.shape_cast %368 : vector<2x1x16x16xf32> to vector<2x16x16xf32>
    %c88 = arith.constant 88 : index
    %370 = memref.load %arg2[%c88] : memref<216xf32, #tpu.memory_space<smem>>
    %371 = vector.broadcast %370 : f32 to vector<2x16x16xf32>
    %372 = arith.mulf %369, %371 : vector<2x16x16xf32>
    %373 = arith.addf %339, %372 : vector<2x16x16xf32>
    %c89 = arith.constant 89 : index
    %374 = memref.load %arg2[%c89] : memref<216xf32, #tpu.memory_space<smem>>
    %375 = vector.broadcast %374 : f32 to vector<2x16x16xf32>
    %376 = arith.mulf %369, %375 : vector<2x16x16xf32>
    %377 = arith.addf %343, %376 : vector<2x16x16xf32>
    %c90 = arith.constant 90 : index
    %378 = memref.load %arg2[%c90] : memref<216xf32, #tpu.memory_space<smem>>
    %379 = vector.broadcast %378 : f32 to vector<2x16x16xf32>
    %380 = arith.mulf %369, %379 : vector<2x16x16xf32>
    %381 = arith.addf %347, %380 : vector<2x16x16xf32>
    %c91 = arith.constant 91 : index
    %382 = memref.load %arg2[%c91] : memref<216xf32, #tpu.memory_space<smem>>
    %383 = vector.broadcast %382 : f32 to vector<2x16x16xf32>
    %384 = arith.mulf %369, %383 : vector<2x16x16xf32>
    %385 = arith.addf %351, %384 : vector<2x16x16xf32>
    %c92 = arith.constant 92 : index
    %386 = memref.load %arg2[%c92] : memref<216xf32, #tpu.memory_space<smem>>
    %387 = vector.broadcast %386 : f32 to vector<2x16x16xf32>
    %388 = arith.mulf %369, %387 : vector<2x16x16xf32>
    %389 = arith.addf %355, %388 : vector<2x16x16xf32>
    %c93 = arith.constant 93 : index
    %390 = memref.load %arg2[%c93] : memref<216xf32, #tpu.memory_space<smem>>
    %391 = vector.broadcast %390 : f32 to vector<2x16x16xf32>
    %392 = arith.mulf %369, %391 : vector<2x16x16xf32>
    %393 = arith.addf %359, %392 : vector<2x16x16xf32>
    %c94 = arith.constant 94 : index
    %394 = memref.load %arg2[%c94] : memref<216xf32, #tpu.memory_space<smem>>
    %395 = vector.broadcast %394 : f32 to vector<2x16x16xf32>
    %396 = arith.mulf %369, %395 : vector<2x16x16xf32>
    %397 = arith.addf %363, %396 : vector<2x16x16xf32>
    %c95 = arith.constant 95 : index
    %398 = memref.load %arg2[%c95] : memref<216xf32, #tpu.memory_space<smem>>
    %399 = vector.broadcast %398 : f32 to vector<2x16x16xf32>
    %400 = arith.mulf %369, %399 : vector<2x16x16xf32>
    %401 = arith.addf %367, %400 : vector<2x16x16xf32>
    %402 = vector.extract_strided_slice %1 {offsets = [0, 0, 1, 1], sizes = [2, 1, 16, 16], strides = [1, 1, 1, 1]} : vector<2x3x18x18xf32> to vector<2x1x16x16xf32>
    %403 = vector.shape_cast %402 : vector<2x1x16x16xf32> to vector<2x16x16xf32>
    %c96 = arith.constant 96 : index
    %404 = memref.load %arg2[%c96] : memref<216xf32, #tpu.memory_space<smem>>
    %405 = vector.broadcast %404 : f32 to vector<2x16x16xf32>
    %406 = arith.mulf %403, %405 : vector<2x16x16xf32>
    %407 = arith.addf %373, %406 : vector<2x16x16xf32>
    %c97 = arith.constant 97 : index
    %408 = memref.load %arg2[%c97] : memref<216xf32, #tpu.memory_space<smem>>
    %409 = vector.broadcast %408 : f32 to vector<2x16x16xf32>
    %410 = arith.mulf %403, %409 : vector<2x16x16xf32>
    %411 = arith.addf %377, %410 : vector<2x16x16xf32>
    %c98 = arith.constant 98 : index
    %412 = memref.load %arg2[%c98] : memref<216xf32, #tpu.memory_space<smem>>
    %413 = vector.broadcast %412 : f32 to vector<2x16x16xf32>
    %414 = arith.mulf %403, %413 : vector<2x16x16xf32>
    %415 = arith.addf %381, %414 : vector<2x16x16xf32>
    %c99 = arith.constant 99 : index
    %416 = memref.load %arg2[%c99] : memref<216xf32, #tpu.memory_space<smem>>
    %417 = vector.broadcast %416 : f32 to vector<2x16x16xf32>
    %418 = arith.mulf %403, %417 : vector<2x16x16xf32>
    %419 = arith.addf %385, %418 : vector<2x16x16xf32>
    %c100 = arith.constant 100 : index
    %420 = memref.load %arg2[%c100] : memref<216xf32, #tpu.memory_space<smem>>
    %421 = vector.broadcast %420 : f32 to vector<2x16x16xf32>
    %422 = arith.mulf %403, %421 : vector<2x16x16xf32>
    %423 = arith.addf %389, %422 : vector<2x16x16xf32>
    %c101 = arith.constant 101 : index
    %424 = memref.load %arg2[%c101] : memref<216xf32, #tpu.memory_space<smem>>
    %425 = vector.broadcast %424 : f32 to vector<2x16x16xf32>
    %426 = arith.mulf %403, %425 : vector<2x16x16xf32>
    %427 = arith.addf %393, %426 : vector<2x16x16xf32>
    %c102 = arith.constant 102 : index
    %428 = memref.load %arg2[%c102] : memref<216xf32, #tpu.memory_space<smem>>
    %429 = vector.broadcast %428 : f32 to vector<2x16x16xf32>
    %430 = arith.mulf %403, %429 : vector<2x16x16xf32>
    %431 = arith.addf %397, %430 : vector<2x16x16xf32>
    %c103 = arith.constant 103 : index
    %432 = memref.load %arg2[%c103] : memref<216xf32, #tpu.memory_space<smem>>
    %433 = vector.broadcast %432 : f32 to vector<2x16x16xf32>
    %434 = arith.mulf %403, %433 : vector<2x16x16xf32>
    %435 = arith.addf %401, %434 : vector<2x16x16xf32>
    %436 = vector.extract_strided_slice %1 {offsets = [0, 1, 1, 1], sizes = [2, 1, 16, 16], strides = [1, 1, 1, 1]} : vector<2x3x18x18xf32> to vector<2x1x16x16xf32>
    %437 = vector.shape_cast %436 : vector<2x1x16x16xf32> to vector<2x16x16xf32>
    %c104 = arith.constant 104 : index
    %438 = memref.load %arg2[%c104] : memref<216xf32, #tpu.memory_space<smem>>
    %439 = vector.broadcast %438 : f32 to vector<2x16x16xf32>
    %440 = arith.mulf %437, %439 : vector<2x16x16xf32>
    %441 = arith.addf %407, %440 : vector<2x16x16xf32>
    %c105 = arith.constant 105 : index
    %442 = memref.load %arg2[%c105] : memref<216xf32, #tpu.memory_space<smem>>
    %443 = vector.broadcast %442 : f32 to vector<2x16x16xf32>
    %444 = arith.mulf %437, %443 : vector<2x16x16xf32>
    %445 = arith.addf %411, %444 : vector<2x16x16xf32>
    %c106 = arith.constant 106 : index
    %446 = memref.load %arg2[%c106] : memref<216xf32, #tpu.memory_space<smem>>
    %447 = vector.broadcast %446 : f32 to vector<2x16x16xf32>
    %448 = arith.mulf %437, %447 : vector<2x16x16xf32>
    %449 = arith.addf %415, %448 : vector<2x16x16xf32>
    %c107 = arith.constant 107 : index
    %450 = memref.load %arg2[%c107] : memref<216xf32, #tpu.memory_space<smem>>
    %451 = vector.broadcast %450 : f32 to vector<2x16x16xf32>
    %452 = arith.mulf %437, %451 : vector<2x16x16xf32>
    %453 = arith.addf %419, %452 : vector<2x16x16xf32>
    %c108 = arith.constant 108 : index
    %454 = memref.load %arg2[%c108] : memref<216xf32, #tpu.memory_space<smem>>
    %455 = vector.broadcast %454 : f32 to vector<2x16x16xf32>
    %456 = arith.mulf %437, %455 : vector<2x16x16xf32>
    %457 = arith.addf %423, %456 : vector<2x16x16xf32>
    %c109 = arith.constant 109 : index
    %458 = memref.load %arg2[%c109] : memref<216xf32, #tpu.memory_space<smem>>
    %459 = vector.broadcast %458 : f32 to vector<2x16x16xf32>
    %460 = arith.mulf %437, %459 : vector<2x16x16xf32>
    %461 = arith.addf %427, %460 : vector<2x16x16xf32>
    %c110 = arith.constant 110 : index
    %462 = memref.load %arg2[%c110] : memref<216xf32, #tpu.memory_space<smem>>
    %463 = vector.broadcast %462 : f32 to vector<2x16x16xf32>
    %464 = arith.mulf %437, %463 : vector<2x16x16xf32>
    %465 = arith.addf %431, %464 : vector<2x16x16xf32>
    %c111 = arith.constant 111 : index
    %466 = memref.load %arg2[%c111] : memref<216xf32, #tpu.memory_space<smem>>
    %467 = vector.broadcast %466 : f32 to vector<2x16x16xf32>
    %468 = arith.mulf %437, %467 : vector<2x16x16xf32>
    %469 = arith.addf %435, %468 : vector<2x16x16xf32>
    %470 = vector.extract_strided_slice %1 {offsets = [0, 2, 1, 1], sizes = [2, 1, 16, 16], strides = [1, 1, 1, 1]} : vector<2x3x18x18xf32> to vector<2x1x16x16xf32>
    %471 = vector.shape_cast %470 : vector<2x1x16x16xf32> to vector<2x16x16xf32>
    %c112 = arith.constant 112 : index
    %472 = memref.load %arg2[%c112] : memref<216xf32, #tpu.memory_space<smem>>
    %473 = vector.broadcast %472 : f32 to vector<2x16x16xf32>
    %474 = arith.mulf %471, %473 : vector<2x16x16xf32>
    %475 = arith.addf %441, %474 : vector<2x16x16xf32>
    %c113 = arith.constant 113 : index
    %476 = memref.load %arg2[%c113] : memref<216xf32, #tpu.memory_space<smem>>
    %477 = vector.broadcast %476 : f32 to vector<2x16x16xf32>
    %478 = arith.mulf %471, %477 : vector<2x16x16xf32>
    %479 = arith.addf %445, %478 : vector<2x16x16xf32>
    %c114 = arith.constant 114 : index
    %480 = memref.load %arg2[%c114] : memref<216xf32, #tpu.memory_space<smem>>
    %481 = vector.broadcast %480 : f32 to vector<2x16x16xf32>
    %482 = arith.mulf %471, %481 : vector<2x16x16xf32>
    %483 = arith.addf %449, %482 : vector<2x16x16xf32>
    %c115 = arith.constant 115 : index
    %484 = memref.load %arg2[%c115] : memref<216xf32, #tpu.memory_space<smem>>
    %485 = vector.broadcast %484 : f32 to vector<2x16x16xf32>
    %486 = arith.mulf %471, %485 : vector<2x16x16xf32>
    %487 = arith.addf %453, %486 : vector<2x16x16xf32>
    %c116 = arith.constant 116 : index
    %488 = memref.load %arg2[%c116] : memref<216xf32, #tpu.memory_space<smem>>
    %489 = vector.broadcast %488 : f32 to vector<2x16x16xf32>
    %490 = arith.mulf %471, %489 : vector<2x16x16xf32>
    %491 = arith.addf %457, %490 : vector<2x16x16xf32>
    %c117 = arith.constant 117 : index
    %492 = memref.load %arg2[%c117] : memref<216xf32, #tpu.memory_space<smem>>
    %493 = vector.broadcast %492 : f32 to vector<2x16x16xf32>
    %494 = arith.mulf %471, %493 : vector<2x16x16xf32>
    %495 = arith.addf %461, %494 : vector<2x16x16xf32>
    %c118 = arith.constant 118 : index
    %496 = memref.load %arg2[%c118] : memref<216xf32, #tpu.memory_space<smem>>
    %497 = vector.broadcast %496 : f32 to vector<2x16x16xf32>
    %498 = arith.mulf %471, %497 : vector<2x16x16xf32>
    %499 = arith.addf %465, %498 : vector<2x16x16xf32>
    %c119 = arith.constant 119 : index
    %500 = memref.load %arg2[%c119] : memref<216xf32, #tpu.memory_space<smem>>
    %501 = vector.broadcast %500 : f32 to vector<2x16x16xf32>
    %502 = arith.mulf %471, %501 : vector<2x16x16xf32>
    %503 = arith.addf %469, %502 : vector<2x16x16xf32>
    %504 = vector.extract_strided_slice %1 {offsets = [0, 0, 1, 2], sizes = [2, 1, 16, 16], strides = [1, 1, 1, 1]} : vector<2x3x18x18xf32> to vector<2x1x16x16xf32>
    %505 = vector.shape_cast %504 : vector<2x1x16x16xf32> to vector<2x16x16xf32>
    %c120 = arith.constant 120 : index
    %506 = memref.load %arg2[%c120] : memref<216xf32, #tpu.memory_space<smem>>
    %507 = vector.broadcast %506 : f32 to vector<2x16x16xf32>
    %508 = arith.mulf %505, %507 : vector<2x16x16xf32>
    %509 = arith.addf %475, %508 : vector<2x16x16xf32>
    %c121 = arith.constant 121 : index
    %510 = memref.load %arg2[%c121] : memref<216xf32, #tpu.memory_space<smem>>
    %511 = vector.broadcast %510 : f32 to vector<2x16x16xf32>
    %512 = arith.mulf %505, %511 : vector<2x16x16xf32>
    %513 = arith.addf %479, %512 : vector<2x16x16xf32>
    %c122 = arith.constant 122 : index
    %514 = memref.load %arg2[%c122] : memref<216xf32, #tpu.memory_space<smem>>
    %515 = vector.broadcast %514 : f32 to vector<2x16x16xf32>
    %516 = arith.mulf %505, %515 : vector<2x16x16xf32>
    %517 = arith.addf %483, %516 : vector<2x16x16xf32>
    %c123 = arith.constant 123 : index
    %518 = memref.load %arg2[%c123] : memref<216xf32, #tpu.memory_space<smem>>
    %519 = vector.broadcast %518 : f32 to vector<2x16x16xf32>
    %520 = arith.mulf %505, %519 : vector<2x16x16xf32>
    %521 = arith.addf %487, %520 : vector<2x16x16xf32>
    %c124 = arith.constant 124 : index
    %522 = memref.load %arg2[%c124] : memref<216xf32, #tpu.memory_space<smem>>
    %523 = vector.broadcast %522 : f32 to vector<2x16x16xf32>
    %524 = arith.mulf %505, %523 : vector<2x16x16xf32>
    %525 = arith.addf %491, %524 : vector<2x16x16xf32>
    %c125 = arith.constant 125 : index
    %526 = memref.load %arg2[%c125] : memref<216xf32, #tpu.memory_space<smem>>
    %527 = vector.broadcast %526 : f32 to vector<2x16x16xf32>
    %528 = arith.mulf %505, %527 : vector<2x16x16xf32>
    %529 = arith.addf %495, %528 : vector<2x16x16xf32>
    %c126 = arith.constant 126 : index
    %530 = memref.load %arg2[%c126] : memref<216xf32, #tpu.memory_space<smem>>
    %531 = vector.broadcast %530 : f32 to vector<2x16x16xf32>
    %532 = arith.mulf %505, %531 : vector<2x16x16xf32>
    %533 = arith.addf %499, %532 : vector<2x16x16xf32>
    %c127 = arith.constant 127 : index
    %534 = memref.load %arg2[%c127] : memref<216xf32, #tpu.memory_space<smem>>
    %535 = vector.broadcast %534 : f32 to vector<2x16x16xf32>
    %536 = arith.mulf %505, %535 : vector<2x16x16xf32>
    %537 = arith.addf %503, %536 : vector<2x16x16xf32>
    %538 = vector.extract_strided_slice %1 {offsets = [0, 1, 1, 2], sizes = [2, 1, 16, 16], strides = [1, 1, 1, 1]} : vector<2x3x18x18xf32> to vector<2x1x16x16xf32>
    %539 = vector.shape_cast %538 : vector<2x1x16x16xf32> to vector<2x16x16xf32>
    %c128 = arith.constant 128 : index
    %540 = memref.load %arg2[%c128] : memref<216xf32, #tpu.memory_space<smem>>
    %541 = vector.broadcast %540 : f32 to vector<2x16x16xf32>
    %542 = arith.mulf %539, %541 : vector<2x16x16xf32>
    %543 = arith.addf %509, %542 : vector<2x16x16xf32>
    %c129 = arith.constant 129 : index
    %544 = memref.load %arg2[%c129] : memref<216xf32, #tpu.memory_space<smem>>
    %545 = vector.broadcast %544 : f32 to vector<2x16x16xf32>
    %546 = arith.mulf %539, %545 : vector<2x16x16xf32>
    %547 = arith.addf %513, %546 : vector<2x16x16xf32>
    %c130 = arith.constant 130 : index
    %548 = memref.load %arg2[%c130] : memref<216xf32, #tpu.memory_space<smem>>
    %549 = vector.broadcast %548 : f32 to vector<2x16x16xf32>
    %550 = arith.mulf %539, %549 : vector<2x16x16xf32>
    %551 = arith.addf %517, %550 : vector<2x16x16xf32>
    %c131 = arith.constant 131 : index
    %552 = memref.load %arg2[%c131] : memref<216xf32, #tpu.memory_space<smem>>
    %553 = vector.broadcast %552 : f32 to vector<2x16x16xf32>
    %554 = arith.mulf %539, %553 : vector<2x16x16xf32>
    %555 = arith.addf %521, %554 : vector<2x16x16xf32>
    %c132 = arith.constant 132 : index
    %556 = memref.load %arg2[%c132] : memref<216xf32, #tpu.memory_space<smem>>
    %557 = vector.broadcast %556 : f32 to vector<2x16x16xf32>
    %558 = arith.mulf %539, %557 : vector<2x16x16xf32>
    %559 = arith.addf %525, %558 : vector<2x16x16xf32>
    %c133 = arith.constant 133 : index
    %560 = memref.load %arg2[%c133] : memref<216xf32, #tpu.memory_space<smem>>
    %561 = vector.broadcast %560 : f32 to vector<2x16x16xf32>
    %562 = arith.mulf %539, %561 : vector<2x16x16xf32>
    %563 = arith.addf %529, %562 : vector<2x16x16xf32>
    %c134 = arith.constant 134 : index
    %564 = memref.load %arg2[%c134] : memref<216xf32, #tpu.memory_space<smem>>
    %565 = vector.broadcast %564 : f32 to vector<2x16x16xf32>
    %566 = arith.mulf %539, %565 : vector<2x16x16xf32>
    %567 = arith.addf %533, %566 : vector<2x16x16xf32>
    %c135 = arith.constant 135 : index
    %568 = memref.load %arg2[%c135] : memref<216xf32, #tpu.memory_space<smem>>
    %569 = vector.broadcast %568 : f32 to vector<2x16x16xf32>
    %570 = arith.mulf %539, %569 : vector<2x16x16xf32>
    %571 = arith.addf %537, %570 : vector<2x16x16xf32>
    %572 = vector.extract_strided_slice %1 {offsets = [0, 2, 1, 2], sizes = [2, 1, 16, 16], strides = [1, 1, 1, 1]} : vector<2x3x18x18xf32> to vector<2x1x16x16xf32>
    %573 = vector.shape_cast %572 : vector<2x1x16x16xf32> to vector<2x16x16xf32>
    %c136 = arith.constant 136 : index
    %574 = memref.load %arg2[%c136] : memref<216xf32, #tpu.memory_space<smem>>
    %575 = vector.broadcast %574 : f32 to vector<2x16x16xf32>
    %576 = arith.mulf %573, %575 : vector<2x16x16xf32>
    %577 = arith.addf %543, %576 : vector<2x16x16xf32>
    %c137 = arith.constant 137 : index
    %578 = memref.load %arg2[%c137] : memref<216xf32, #tpu.memory_space<smem>>
    %579 = vector.broadcast %578 : f32 to vector<2x16x16xf32>
    %580 = arith.mulf %573, %579 : vector<2x16x16xf32>
    %581 = arith.addf %547, %580 : vector<2x16x16xf32>
    %c138 = arith.constant 138 : index
    %582 = memref.load %arg2[%c138] : memref<216xf32, #tpu.memory_space<smem>>
    %583 = vector.broadcast %582 : f32 to vector<2x16x16xf32>
    %584 = arith.mulf %573, %583 : vector<2x16x16xf32>
    %585 = arith.addf %551, %584 : vector<2x16x16xf32>
    %c139 = arith.constant 139 : index
    %586 = memref.load %arg2[%c139] : memref<216xf32, #tpu.memory_space<smem>>
    %587 = vector.broadcast %586 : f32 to vector<2x16x16xf32>
    %588 = arith.mulf %573, %587 : vector<2x16x16xf32>
    %589 = arith.addf %555, %588 : vector<2x16x16xf32>
    %c140 = arith.constant 140 : index
    %590 = memref.load %arg2[%c140] : memref<216xf32, #tpu.memory_space<smem>>
    %591 = vector.broadcast %590 : f32 to vector<2x16x16xf32>
    %592 = arith.mulf %573, %591 : vector<2x16x16xf32>
    %593 = arith.addf %559, %592 : vector<2x16x16xf32>
    %c141 = arith.constant 141 : index
    %594 = memref.load %arg2[%c141] : memref<216xf32, #tpu.memory_space<smem>>
    %595 = vector.broadcast %594 : f32 to vector<2x16x16xf32>
    %596 = arith.mulf %573, %595 : vector<2x16x16xf32>
    %597 = arith.addf %563, %596 : vector<2x16x16xf32>
    %c142 = arith.constant 142 : index
    %598 = memref.load %arg2[%c142] : memref<216xf32, #tpu.memory_space<smem>>
    %599 = vector.broadcast %598 : f32 to vector<2x16x16xf32>
    %600 = arith.mulf %573, %599 : vector<2x16x16xf32>
    %601 = arith.addf %567, %600 : vector<2x16x16xf32>
    %c143 = arith.constant 143 : index
    %602 = memref.load %arg2[%c143] : memref<216xf32, #tpu.memory_space<smem>>
    %603 = vector.broadcast %602 : f32 to vector<2x16x16xf32>
    %604 = arith.mulf %573, %603 : vector<2x16x16xf32>
    %605 = arith.addf %571, %604 : vector<2x16x16xf32>
    %606 = vector.extract_strided_slice %1 {offsets = [0, 0, 2, 0], sizes = [2, 1, 16, 16], strides = [1, 1, 1, 1]} : vector<2x3x18x18xf32> to vector<2x1x16x16xf32>
    %607 = vector.shape_cast %606 : vector<2x1x16x16xf32> to vector<2x16x16xf32>
    %c144 = arith.constant 144 : index
    %608 = memref.load %arg2[%c144] : memref<216xf32, #tpu.memory_space<smem>>
    %609 = vector.broadcast %608 : f32 to vector<2x16x16xf32>
    %610 = arith.mulf %607, %609 : vector<2x16x16xf32>
    %611 = arith.addf %577, %610 : vector<2x16x16xf32>
    %c145 = arith.constant 145 : index
    %612 = memref.load %arg2[%c145] : memref<216xf32, #tpu.memory_space<smem>>
    %613 = vector.broadcast %612 : f32 to vector<2x16x16xf32>
    %614 = arith.mulf %607, %613 : vector<2x16x16xf32>
    %615 = arith.addf %581, %614 : vector<2x16x16xf32>
    %c146 = arith.constant 146 : index
    %616 = memref.load %arg2[%c146] : memref<216xf32, #tpu.memory_space<smem>>
    %617 = vector.broadcast %616 : f32 to vector<2x16x16xf32>
    %618 = arith.mulf %607, %617 : vector<2x16x16xf32>
    %619 = arith.addf %585, %618 : vector<2x16x16xf32>
    %c147 = arith.constant 147 : index
    %620 = memref.load %arg2[%c147] : memref<216xf32, #tpu.memory_space<smem>>
    %621 = vector.broadcast %620 : f32 to vector<2x16x16xf32>
    %622 = arith.mulf %607, %621 : vector<2x16x16xf32>
    %623 = arith.addf %589, %622 : vector<2x16x16xf32>
    %c148 = arith.constant 148 : index
    %624 = memref.load %arg2[%c148] : memref<216xf32, #tpu.memory_space<smem>>
    %625 = vector.broadcast %624 : f32 to vector<2x16x16xf32>
    %626 = arith.mulf %607, %625 : vector<2x16x16xf32>
    %627 = arith.addf %593, %626 : vector<2x16x16xf32>
    %c149 = arith.constant 149 : index
    %628 = memref.load %arg2[%c149] : memref<216xf32, #tpu.memory_space<smem>>
    %629 = vector.broadcast %628 : f32 to vector<2x16x16xf32>
    %630 = arith.mulf %607, %629 : vector<2x16x16xf32>
    %631 = arith.addf %597, %630 : vector<2x16x16xf32>
    %c150 = arith.constant 150 : index
    %632 = memref.load %arg2[%c150] : memref<216xf32, #tpu.memory_space<smem>>
    %633 = vector.broadcast %632 : f32 to vector<2x16x16xf32>
    %634 = arith.mulf %607, %633 : vector<2x16x16xf32>
    %635 = arith.addf %601, %634 : vector<2x16x16xf32>
    %c151 = arith.constant 151 : index
    %636 = memref.load %arg2[%c151] : memref<216xf32, #tpu.memory_space<smem>>
    %637 = vector.broadcast %636 : f32 to vector<2x16x16xf32>
    %638 = arith.mulf %607, %637 : vector<2x16x16xf32>
    %639 = arith.addf %605, %638 : vector<2x16x16xf32>
    %640 = vector.extract_strided_slice %1 {offsets = [0, 1, 2, 0], sizes = [2, 1, 16, 16], strides = [1, 1, 1, 1]} : vector<2x3x18x18xf32> to vector<2x1x16x16xf32>
    %641 = vector.shape_cast %640 : vector<2x1x16x16xf32> to vector<2x16x16xf32>
    %c152 = arith.constant 152 : index
    %642 = memref.load %arg2[%c152] : memref<216xf32, #tpu.memory_space<smem>>
    %643 = vector.broadcast %642 : f32 to vector<2x16x16xf32>
    %644 = arith.mulf %641, %643 : vector<2x16x16xf32>
    %645 = arith.addf %611, %644 : vector<2x16x16xf32>
    %c153 = arith.constant 153 : index
    %646 = memref.load %arg2[%c153] : memref<216xf32, #tpu.memory_space<smem>>
    %647 = vector.broadcast %646 : f32 to vector<2x16x16xf32>
    %648 = arith.mulf %641, %647 : vector<2x16x16xf32>
    %649 = arith.addf %615, %648 : vector<2x16x16xf32>
    %c154 = arith.constant 154 : index
    %650 = memref.load %arg2[%c154] : memref<216xf32, #tpu.memory_space<smem>>
    %651 = vector.broadcast %650 : f32 to vector<2x16x16xf32>
    %652 = arith.mulf %641, %651 : vector<2x16x16xf32>
    %653 = arith.addf %619, %652 : vector<2x16x16xf32>
    %c155 = arith.constant 155 : index
    %654 = memref.load %arg2[%c155] : memref<216xf32, #tpu.memory_space<smem>>
    %655 = vector.broadcast %654 : f32 to vector<2x16x16xf32>
    %656 = arith.mulf %641, %655 : vector<2x16x16xf32>
    %657 = arith.addf %623, %656 : vector<2x16x16xf32>
    %c156 = arith.constant 156 : index
    %658 = memref.load %arg2[%c156] : memref<216xf32, #tpu.memory_space<smem>>
    %659 = vector.broadcast %658 : f32 to vector<2x16x16xf32>
    %660 = arith.mulf %641, %659 : vector<2x16x16xf32>
    %661 = arith.addf %627, %660 : vector<2x16x16xf32>
    %c157 = arith.constant 157 : index
    %662 = memref.load %arg2[%c157] : memref<216xf32, #tpu.memory_space<smem>>
    %663 = vector.broadcast %662 : f32 to vector<2x16x16xf32>
    %664 = arith.mulf %641, %663 : vector<2x16x16xf32>
    %665 = arith.addf %631, %664 : vector<2x16x16xf32>
    %c158 = arith.constant 158 : index
    %666 = memref.load %arg2[%c158] : memref<216xf32, #tpu.memory_space<smem>>
    %667 = vector.broadcast %666 : f32 to vector<2x16x16xf32>
    %668 = arith.mulf %641, %667 : vector<2x16x16xf32>
    %669 = arith.addf %635, %668 : vector<2x16x16xf32>
    %c159 = arith.constant 159 : index
    %670 = memref.load %arg2[%c159] : memref<216xf32, #tpu.memory_space<smem>>
    %671 = vector.broadcast %670 : f32 to vector<2x16x16xf32>
    %672 = arith.mulf %641, %671 : vector<2x16x16xf32>
    %673 = arith.addf %639, %672 : vector<2x16x16xf32>
    %674 = vector.extract_strided_slice %1 {offsets = [0, 2, 2, 0], sizes = [2, 1, 16, 16], strides = [1, 1, 1, 1]} : vector<2x3x18x18xf32> to vector<2x1x16x16xf32>
    %675 = vector.shape_cast %674 : vector<2x1x16x16xf32> to vector<2x16x16xf32>
    %c160 = arith.constant 160 : index
    %676 = memref.load %arg2[%c160] : memref<216xf32, #tpu.memory_space<smem>>
    %677 = vector.broadcast %676 : f32 to vector<2x16x16xf32>
    %678 = arith.mulf %675, %677 : vector<2x16x16xf32>
    %679 = arith.addf %645, %678 : vector<2x16x16xf32>
    %c161 = arith.constant 161 : index
    %680 = memref.load %arg2[%c161] : memref<216xf32, #tpu.memory_space<smem>>
    %681 = vector.broadcast %680 : f32 to vector<2x16x16xf32>
    %682 = arith.mulf %675, %681 : vector<2x16x16xf32>
    %683 = arith.addf %649, %682 : vector<2x16x16xf32>
    %c162 = arith.constant 162 : index
    %684 = memref.load %arg2[%c162] : memref<216xf32, #tpu.memory_space<smem>>
    %685 = vector.broadcast %684 : f32 to vector<2x16x16xf32>
    %686 = arith.mulf %675, %685 : vector<2x16x16xf32>
    %687 = arith.addf %653, %686 : vector<2x16x16xf32>
    %c163 = arith.constant 163 : index
    %688 = memref.load %arg2[%c163] : memref<216xf32, #tpu.memory_space<smem>>
    %689 = vector.broadcast %688 : f32 to vector<2x16x16xf32>
    %690 = arith.mulf %675, %689 : vector<2x16x16xf32>
    %691 = arith.addf %657, %690 : vector<2x16x16xf32>
    %c164 = arith.constant 164 : index
    %692 = memref.load %arg2[%c164] : memref<216xf32, #tpu.memory_space<smem>>
    %693 = vector.broadcast %692 : f32 to vector<2x16x16xf32>
    %694 = arith.mulf %675, %693 : vector<2x16x16xf32>
    %695 = arith.addf %661, %694 : vector<2x16x16xf32>
    %c165 = arith.constant 165 : index
    %696 = memref.load %arg2[%c165] : memref<216xf32, #tpu.memory_space<smem>>
    %697 = vector.broadcast %696 : f32 to vector<2x16x16xf32>
    %698 = arith.mulf %675, %697 : vector<2x16x16xf32>
    %699 = arith.addf %665, %698 : vector<2x16x16xf32>
    %c166 = arith.constant 166 : index
    %700 = memref.load %arg2[%c166] : memref<216xf32, #tpu.memory_space<smem>>
    %701 = vector.broadcast %700 : f32 to vector<2x16x16xf32>
    %702 = arith.mulf %675, %701 : vector<2x16x16xf32>
    %703 = arith.addf %669, %702 : vector<2x16x16xf32>
    %c167 = arith.constant 167 : index
    %704 = memref.load %arg2[%c167] : memref<216xf32, #tpu.memory_space<smem>>
    %705 = vector.broadcast %704 : f32 to vector<2x16x16xf32>
    %706 = arith.mulf %675, %705 : vector<2x16x16xf32>
    %707 = arith.addf %673, %706 : vector<2x16x16xf32>
    %708 = vector.extract_strided_slice %1 {offsets = [0, 0, 2, 1], sizes = [2, 1, 16, 16], strides = [1, 1, 1, 1]} : vector<2x3x18x18xf32> to vector<2x1x16x16xf32>
    %709 = vector.shape_cast %708 : vector<2x1x16x16xf32> to vector<2x16x16xf32>
    %c168 = arith.constant 168 : index
    %710 = memref.load %arg2[%c168] : memref<216xf32, #tpu.memory_space<smem>>
    %711 = vector.broadcast %710 : f32 to vector<2x16x16xf32>
    %712 = arith.mulf %709, %711 : vector<2x16x16xf32>
    %713 = arith.addf %679, %712 : vector<2x16x16xf32>
    %c169 = arith.constant 169 : index
    %714 = memref.load %arg2[%c169] : memref<216xf32, #tpu.memory_space<smem>>
    %715 = vector.broadcast %714 : f32 to vector<2x16x16xf32>
    %716 = arith.mulf %709, %715 : vector<2x16x16xf32>
    %717 = arith.addf %683, %716 : vector<2x16x16xf32>
    %c170 = arith.constant 170 : index
    %718 = memref.load %arg2[%c170] : memref<216xf32, #tpu.memory_space<smem>>
    %719 = vector.broadcast %718 : f32 to vector<2x16x16xf32>
    %720 = arith.mulf %709, %719 : vector<2x16x16xf32>
    %721 = arith.addf %687, %720 : vector<2x16x16xf32>
    %c171 = arith.constant 171 : index
    %722 = memref.load %arg2[%c171] : memref<216xf32, #tpu.memory_space<smem>>
    %723 = vector.broadcast %722 : f32 to vector<2x16x16xf32>
    %724 = arith.mulf %709, %723 : vector<2x16x16xf32>
    %725 = arith.addf %691, %724 : vector<2x16x16xf32>
    %c172 = arith.constant 172 : index
    %726 = memref.load %arg2[%c172] : memref<216xf32, #tpu.memory_space<smem>>
    %727 = vector.broadcast %726 : f32 to vector<2x16x16xf32>
    %728 = arith.mulf %709, %727 : vector<2x16x16xf32>
    %729 = arith.addf %695, %728 : vector<2x16x16xf32>
    %c173 = arith.constant 173 : index
    %730 = memref.load %arg2[%c173] : memref<216xf32, #tpu.memory_space<smem>>
    %731 = vector.broadcast %730 : f32 to vector<2x16x16xf32>
    %732 = arith.mulf %709, %731 : vector<2x16x16xf32>
    %733 = arith.addf %699, %732 : vector<2x16x16xf32>
    %c174 = arith.constant 174 : index
    %734 = memref.load %arg2[%c174] : memref<216xf32, #tpu.memory_space<smem>>
    %735 = vector.broadcast %734 : f32 to vector<2x16x16xf32>
    %736 = arith.mulf %709, %735 : vector<2x16x16xf32>
    %737 = arith.addf %703, %736 : vector<2x16x16xf32>
    %c175 = arith.constant 175 : index
    %738 = memref.load %arg2[%c175] : memref<216xf32, #tpu.memory_space<smem>>
    %739 = vector.broadcast %738 : f32 to vector<2x16x16xf32>
    %740 = arith.mulf %709, %739 : vector<2x16x16xf32>
    %741 = arith.addf %707, %740 : vector<2x16x16xf32>
    %742 = vector.extract_strided_slice %1 {offsets = [0, 1, 2, 1], sizes = [2, 1, 16, 16], strides = [1, 1, 1, 1]} : vector<2x3x18x18xf32> to vector<2x1x16x16xf32>
    %743 = vector.shape_cast %742 : vector<2x1x16x16xf32> to vector<2x16x16xf32>
    %c176 = arith.constant 176 : index
    %744 = memref.load %arg2[%c176] : memref<216xf32, #tpu.memory_space<smem>>
    %745 = vector.broadcast %744 : f32 to vector<2x16x16xf32>
    %746 = arith.mulf %743, %745 : vector<2x16x16xf32>
    %747 = arith.addf %713, %746 : vector<2x16x16xf32>
    %c177 = arith.constant 177 : index
    %748 = memref.load %arg2[%c177] : memref<216xf32, #tpu.memory_space<smem>>
    %749 = vector.broadcast %748 : f32 to vector<2x16x16xf32>
    %750 = arith.mulf %743, %749 : vector<2x16x16xf32>
    %751 = arith.addf %717, %750 : vector<2x16x16xf32>
    %c178 = arith.constant 178 : index
    %752 = memref.load %arg2[%c178] : memref<216xf32, #tpu.memory_space<smem>>
    %753 = vector.broadcast %752 : f32 to vector<2x16x16xf32>
    %754 = arith.mulf %743, %753 : vector<2x16x16xf32>
    %755 = arith.addf %721, %754 : vector<2x16x16xf32>
    %c179 = arith.constant 179 : index
    %756 = memref.load %arg2[%c179] : memref<216xf32, #tpu.memory_space<smem>>
    %757 = vector.broadcast %756 : f32 to vector<2x16x16xf32>
    %758 = arith.mulf %743, %757 : vector<2x16x16xf32>
    %759 = arith.addf %725, %758 : vector<2x16x16xf32>
    %c180 = arith.constant 180 : index
    %760 = memref.load %arg2[%c180] : memref<216xf32, #tpu.memory_space<smem>>
    %761 = vector.broadcast %760 : f32 to vector<2x16x16xf32>
    %762 = arith.mulf %743, %761 : vector<2x16x16xf32>
    %763 = arith.addf %729, %762 : vector<2x16x16xf32>
    %c181 = arith.constant 181 : index
    %764 = memref.load %arg2[%c181] : memref<216xf32, #tpu.memory_space<smem>>
    %765 = vector.broadcast %764 : f32 to vector<2x16x16xf32>
    %766 = arith.mulf %743, %765 : vector<2x16x16xf32>
    %767 = arith.addf %733, %766 : vector<2x16x16xf32>
    %c182 = arith.constant 182 : index
    %768 = memref.load %arg2[%c182] : memref<216xf32, #tpu.memory_space<smem>>
    %769 = vector.broadcast %768 : f32 to vector<2x16x16xf32>
    %770 = arith.mulf %743, %769 : vector<2x16x16xf32>
    %771 = arith.addf %737, %770 : vector<2x16x16xf32>
    %c183 = arith.constant 183 : index
    %772 = memref.load %arg2[%c183] : memref<216xf32, #tpu.memory_space<smem>>
    %773 = vector.broadcast %772 : f32 to vector<2x16x16xf32>
    %774 = arith.mulf %743, %773 : vector<2x16x16xf32>
    %775 = arith.addf %741, %774 : vector<2x16x16xf32>
    %776 = vector.extract_strided_slice %1 {offsets = [0, 2, 2, 1], sizes = [2, 1, 16, 16], strides = [1, 1, 1, 1]} : vector<2x3x18x18xf32> to vector<2x1x16x16xf32>
    %777 = vector.shape_cast %776 : vector<2x1x16x16xf32> to vector<2x16x16xf32>
    %c184 = arith.constant 184 : index
    %778 = memref.load %arg2[%c184] : memref<216xf32, #tpu.memory_space<smem>>
    %779 = vector.broadcast %778 : f32 to vector<2x16x16xf32>
    %780 = arith.mulf %777, %779 : vector<2x16x16xf32>
    %781 = arith.addf %747, %780 : vector<2x16x16xf32>
    %c185 = arith.constant 185 : index
    %782 = memref.load %arg2[%c185] : memref<216xf32, #tpu.memory_space<smem>>
    %783 = vector.broadcast %782 : f32 to vector<2x16x16xf32>
    %784 = arith.mulf %777, %783 : vector<2x16x16xf32>
    %785 = arith.addf %751, %784 : vector<2x16x16xf32>
    %c186 = arith.constant 186 : index
    %786 = memref.load %arg2[%c186] : memref<216xf32, #tpu.memory_space<smem>>
    %787 = vector.broadcast %786 : f32 to vector<2x16x16xf32>
    %788 = arith.mulf %777, %787 : vector<2x16x16xf32>
    %789 = arith.addf %755, %788 : vector<2x16x16xf32>
    %c187 = arith.constant 187 : index
    %790 = memref.load %arg2[%c187] : memref<216xf32, #tpu.memory_space<smem>>
    %791 = vector.broadcast %790 : f32 to vector<2x16x16xf32>
    %792 = arith.mulf %777, %791 : vector<2x16x16xf32>
    %793 = arith.addf %759, %792 : vector<2x16x16xf32>
    %c188 = arith.constant 188 : index
    %794 = memref.load %arg2[%c188] : memref<216xf32, #tpu.memory_space<smem>>
    %795 = vector.broadcast %794 : f32 to vector<2x16x16xf32>
    %796 = arith.mulf %777, %795 : vector<2x16x16xf32>
    %797 = arith.addf %763, %796 : vector<2x16x16xf32>
    %c189 = arith.constant 189 : index
    %798 = memref.load %arg2[%c189] : memref<216xf32, #tpu.memory_space<smem>>
    %799 = vector.broadcast %798 : f32 to vector<2x16x16xf32>
    %800 = arith.mulf %777, %799 : vector<2x16x16xf32>
    %801 = arith.addf %767, %800 : vector<2x16x16xf32>
    %c190 = arith.constant 190 : index
    %802 = memref.load %arg2[%c190] : memref<216xf32, #tpu.memory_space<smem>>
    %803 = vector.broadcast %802 : f32 to vector<2x16x16xf32>
    %804 = arith.mulf %777, %803 : vector<2x16x16xf32>
    %805 = arith.addf %771, %804 : vector<2x16x16xf32>
    %c191 = arith.constant 191 : index
    %806 = memref.load %arg2[%c191] : memref<216xf32, #tpu.memory_space<smem>>
    %807 = vector.broadcast %806 : f32 to vector<2x16x16xf32>
    %808 = arith.mulf %777, %807 : vector<2x16x16xf32>
    %809 = arith.addf %775, %808 : vector<2x16x16xf32>
    %810 = vector.extract_strided_slice %1 {offsets = [0, 0, 2, 2], sizes = [2, 1, 16, 16], strides = [1, 1, 1, 1]} : vector<2x3x18x18xf32> to vector<2x1x16x16xf32>
    %811 = vector.shape_cast %810 : vector<2x1x16x16xf32> to vector<2x16x16xf32>
    %c192 = arith.constant 192 : index
    %812 = memref.load %arg2[%c192] : memref<216xf32, #tpu.memory_space<smem>>
    %813 = vector.broadcast %812 : f32 to vector<2x16x16xf32>
    %814 = arith.mulf %811, %813 : vector<2x16x16xf32>
    %815 = arith.addf %781, %814 : vector<2x16x16xf32>
    %c193 = arith.constant 193 : index
    %816 = memref.load %arg2[%c193] : memref<216xf32, #tpu.memory_space<smem>>
    %817 = vector.broadcast %816 : f32 to vector<2x16x16xf32>
    %818 = arith.mulf %811, %817 : vector<2x16x16xf32>
    %819 = arith.addf %785, %818 : vector<2x16x16xf32>
    %c194 = arith.constant 194 : index
    %820 = memref.load %arg2[%c194] : memref<216xf32, #tpu.memory_space<smem>>
    %821 = vector.broadcast %820 : f32 to vector<2x16x16xf32>
    %822 = arith.mulf %811, %821 : vector<2x16x16xf32>
    %823 = arith.addf %789, %822 : vector<2x16x16xf32>
    %c195 = arith.constant 195 : index
    %824 = memref.load %arg2[%c195] : memref<216xf32, #tpu.memory_space<smem>>
    %825 = vector.broadcast %824 : f32 to vector<2x16x16xf32>
    %826 = arith.mulf %811, %825 : vector<2x16x16xf32>
    %827 = arith.addf %793, %826 : vector<2x16x16xf32>
    %c196 = arith.constant 196 : index
    %828 = memref.load %arg2[%c196] : memref<216xf32, #tpu.memory_space<smem>>
    %829 = vector.broadcast %828 : f32 to vector<2x16x16xf32>
    %830 = arith.mulf %811, %829 : vector<2x16x16xf32>
    %831 = arith.addf %797, %830 : vector<2x16x16xf32>
    %c197 = arith.constant 197 : index
    %832 = memref.load %arg2[%c197] : memref<216xf32, #tpu.memory_space<smem>>
    %833 = vector.broadcast %832 : f32 to vector<2x16x16xf32>
    %834 = arith.mulf %811, %833 : vector<2x16x16xf32>
    %835 = arith.addf %801, %834 : vector<2x16x16xf32>
    %c198 = arith.constant 198 : index
    %836 = memref.load %arg2[%c198] : memref<216xf32, #tpu.memory_space<smem>>
    %837 = vector.broadcast %836 : f32 to vector<2x16x16xf32>
    %838 = arith.mulf %811, %837 : vector<2x16x16xf32>
    %839 = arith.addf %805, %838 : vector<2x16x16xf32>
    %c199 = arith.constant 199 : index
    %840 = memref.load %arg2[%c199] : memref<216xf32, #tpu.memory_space<smem>>
    %841 = vector.broadcast %840 : f32 to vector<2x16x16xf32>
    %842 = arith.mulf %811, %841 : vector<2x16x16xf32>
    %843 = arith.addf %809, %842 : vector<2x16x16xf32>
    %844 = vector.extract_strided_slice %1 {offsets = [0, 1, 2, 2], sizes = [2, 1, 16, 16], strides = [1, 1, 1, 1]} : vector<2x3x18x18xf32> to vector<2x1x16x16xf32>
    %845 = vector.shape_cast %844 : vector<2x1x16x16xf32> to vector<2x16x16xf32>
    %c200 = arith.constant 200 : index
    %846 = memref.load %arg2[%c200] : memref<216xf32, #tpu.memory_space<smem>>
    %847 = vector.broadcast %846 : f32 to vector<2x16x16xf32>
    %848 = arith.mulf %845, %847 : vector<2x16x16xf32>
    %849 = arith.addf %815, %848 : vector<2x16x16xf32>
    %c201 = arith.constant 201 : index
    %850 = memref.load %arg2[%c201] : memref<216xf32, #tpu.memory_space<smem>>
    %851 = vector.broadcast %850 : f32 to vector<2x16x16xf32>
    %852 = arith.mulf %845, %851 : vector<2x16x16xf32>
    %853 = arith.addf %819, %852 : vector<2x16x16xf32>
    %c202 = arith.constant 202 : index
    %854 = memref.load %arg2[%c202] : memref<216xf32, #tpu.memory_space<smem>>
    %855 = vector.broadcast %854 : f32 to vector<2x16x16xf32>
    %856 = arith.mulf %845, %855 : vector<2x16x16xf32>
    %857 = arith.addf %823, %856 : vector<2x16x16xf32>
    %c203 = arith.constant 203 : index
    %858 = memref.load %arg2[%c203] : memref<216xf32, #tpu.memory_space<smem>>
    %859 = vector.broadcast %858 : f32 to vector<2x16x16xf32>
    %860 = arith.mulf %845, %859 : vector<2x16x16xf32>
    %861 = arith.addf %827, %860 : vector<2x16x16xf32>
    %c204 = arith.constant 204 : index
    %862 = memref.load %arg2[%c204] : memref<216xf32, #tpu.memory_space<smem>>
    %863 = vector.broadcast %862 : f32 to vector<2x16x16xf32>
    %864 = arith.mulf %845, %863 : vector<2x16x16xf32>
    %865 = arith.addf %831, %864 : vector<2x16x16xf32>
    %c205 = arith.constant 205 : index
    %866 = memref.load %arg2[%c205] : memref<216xf32, #tpu.memory_space<smem>>
    %867 = vector.broadcast %866 : f32 to vector<2x16x16xf32>
    %868 = arith.mulf %845, %867 : vector<2x16x16xf32>
    %869 = arith.addf %835, %868 : vector<2x16x16xf32>
    %c206 = arith.constant 206 : index
    %870 = memref.load %arg2[%c206] : memref<216xf32, #tpu.memory_space<smem>>
    %871 = vector.broadcast %870 : f32 to vector<2x16x16xf32>
    %872 = arith.mulf %845, %871 : vector<2x16x16xf32>
    %873 = arith.addf %839, %872 : vector<2x16x16xf32>
    %c207 = arith.constant 207 : index
    %874 = memref.load %arg2[%c207] : memref<216xf32, #tpu.memory_space<smem>>
    %875 = vector.broadcast %874 : f32 to vector<2x16x16xf32>
    %876 = arith.mulf %845, %875 : vector<2x16x16xf32>
    %877 = arith.addf %843, %876 : vector<2x16x16xf32>
    %878 = vector.extract_strided_slice %1 {offsets = [0, 2, 2, 2], sizes = [2, 1, 16, 16], strides = [1, 1, 1, 1]} : vector<2x3x18x18xf32> to vector<2x1x16x16xf32>
    %879 = vector.shape_cast %878 : vector<2x1x16x16xf32> to vector<2x16x16xf32>
    %c208 = arith.constant 208 : index
    %880 = memref.load %arg2[%c208] : memref<216xf32, #tpu.memory_space<smem>>
    %881 = vector.broadcast %880 : f32 to vector<2x16x16xf32>
    %882 = arith.mulf %879, %881 : vector<2x16x16xf32>
    %883 = arith.addf %849, %882 : vector<2x16x16xf32>
    %c209 = arith.constant 209 : index
    %884 = memref.load %arg2[%c209] : memref<216xf32, #tpu.memory_space<smem>>
    %885 = vector.broadcast %884 : f32 to vector<2x16x16xf32>
    %886 = arith.mulf %879, %885 : vector<2x16x16xf32>
    %887 = arith.addf %853, %886 : vector<2x16x16xf32>
    %c210 = arith.constant 210 : index
    %888 = memref.load %arg2[%c210] : memref<216xf32, #tpu.memory_space<smem>>
    %889 = vector.broadcast %888 : f32 to vector<2x16x16xf32>
    %890 = arith.mulf %879, %889 : vector<2x16x16xf32>
    %891 = arith.addf %857, %890 : vector<2x16x16xf32>
    %c211 = arith.constant 211 : index
    %892 = memref.load %arg2[%c211] : memref<216xf32, #tpu.memory_space<smem>>
    %893 = vector.broadcast %892 : f32 to vector<2x16x16xf32>
    %894 = arith.mulf %879, %893 : vector<2x16x16xf32>
    %895 = arith.addf %861, %894 : vector<2x16x16xf32>
    %c212 = arith.constant 212 : index
    %896 = memref.load %arg2[%c212] : memref<216xf32, #tpu.memory_space<smem>>
    %897 = vector.broadcast %896 : f32 to vector<2x16x16xf32>
    %898 = arith.mulf %879, %897 : vector<2x16x16xf32>
    %899 = arith.addf %865, %898 : vector<2x16x16xf32>
    %c213 = arith.constant 213 : index
    %900 = memref.load %arg2[%c213] : memref<216xf32, #tpu.memory_space<smem>>
    %901 = vector.broadcast %900 : f32 to vector<2x16x16xf32>
    %902 = arith.mulf %879, %901 : vector<2x16x16xf32>
    %903 = arith.addf %869, %902 : vector<2x16x16xf32>
    %c214 = arith.constant 214 : index
    %904 = memref.load %arg2[%c214] : memref<216xf32, #tpu.memory_space<smem>>
    %905 = vector.broadcast %904 : f32 to vector<2x16x16xf32>
    %906 = arith.mulf %879, %905 : vector<2x16x16xf32>
    %907 = arith.addf %873, %906 : vector<2x16x16xf32>
    %c215 = arith.constant 215 : index
    %908 = memref.load %arg2[%c215] : memref<216xf32, #tpu.memory_space<smem>>
    %909 = vector.broadcast %908 : f32 to vector<2x16x16xf32>
    %910 = arith.mulf %879, %909 : vector<2x16x16xf32>
    %911 = arith.addf %877, %910 : vector<2x16x16xf32>
    %c0_4 = arith.constant 0 : index
    %912 = memref.load %arg3[%c0_4] : memref<8xf32, #tpu.memory_space<smem>>
    %913 = vector.broadcast %912 : f32 to vector<2x16x16xf32>
    %914 = arith.addf %883, %913 : vector<2x16x16xf32>
    %cst = arith.constant 0.000000e+00 : f32
    %915 = vector.broadcast %cst : f32 to vector<2x16x16xf32>
    %916 = arith.maximumf %914, %915 : vector<2x16x16xf32>
    %cst_5 = arith.constant dense<0.000000e+00> : vector<2x16xf32>
    %917 = vector.multi_reduction <add>, %916, %cst_5 [2] : vector<2x16x16xf32> to vector<2x16xf32>
    %cst_6 = arith.constant dense<0.000000e+00> : vector<2xf32>
    %918 = vector.multi_reduction <add>, %917, %cst_6 [1] : vector<2x16xf32> to vector<2xf32>
    %919 = vector.shape_cast %918 : vector<2xf32> to vector<2x1xf32>
    %cst_7 = arith.constant 3.906250e-03 : f32
    %920 = vector.broadcast %cst_7 : f32 to vector<2x1xf32>
    %921 = arith.mulf %919, %920 : vector<2x1xf32>
    %c1_8 = arith.constant 1 : index
    %922 = memref.load %arg3[%c1_8] : memref<8xf32, #tpu.memory_space<smem>>
    %923 = vector.broadcast %922 : f32 to vector<2x16x16xf32>
    %924 = arith.addf %887, %923 : vector<2x16x16xf32>
    %cst_9 = arith.constant 0.000000e+00 : f32
    %925 = vector.broadcast %cst_9 : f32 to vector<2x16x16xf32>
    %926 = arith.maximumf %924, %925 : vector<2x16x16xf32>
    %cst_10 = arith.constant dense<0.000000e+00> : vector<2x16xf32>
    %927 = vector.multi_reduction <add>, %926, %cst_10 [2] : vector<2x16x16xf32> to vector<2x16xf32>
    %cst_11 = arith.constant dense<0.000000e+00> : vector<2xf32>
    %928 = vector.multi_reduction <add>, %927, %cst_11 [1] : vector<2x16xf32> to vector<2xf32>
    %929 = vector.shape_cast %928 : vector<2xf32> to vector<2x1xf32>
    %cst_12 = arith.constant 3.906250e-03 : f32
    %930 = vector.broadcast %cst_12 : f32 to vector<2x1xf32>
    %931 = arith.mulf %929, %930 : vector<2x1xf32>
    %c2_13 = arith.constant 2 : index
    %932 = memref.load %arg3[%c2_13] : memref<8xf32, #tpu.memory_space<smem>>
    %933 = vector.broadcast %932 : f32 to vector<2x16x16xf32>
    %934 = arith.addf %891, %933 : vector<2x16x16xf32>
    %cst_14 = arith.constant 0.000000e+00 : f32
    %935 = vector.broadcast %cst_14 : f32 to vector<2x16x16xf32>
    %936 = arith.maximumf %934, %935 : vector<2x16x16xf32>
    %cst_15 = arith.constant dense<0.000000e+00> : vector<2x16xf32>
    %937 = vector.multi_reduction <add>, %936, %cst_15 [2] : vector<2x16x16xf32> to vector<2x16xf32>
    %cst_16 = arith.constant dense<0.000000e+00> : vector<2xf32>
    %938 = vector.multi_reduction <add>, %937, %cst_16 [1] : vector<2x16xf32> to vector<2xf32>
    %939 = vector.shape_cast %938 : vector<2xf32> to vector<2x1xf32>
    %cst_17 = arith.constant 3.906250e-03 : f32
    %940 = vector.broadcast %cst_17 : f32 to vector<2x1xf32>
    %941 = arith.mulf %939, %940 : vector<2x1xf32>
    %c3_18 = arith.constant 3 : index
    %942 = memref.load %arg3[%c3_18] : memref<8xf32, #tpu.memory_space<smem>>
    %943 = vector.broadcast %942 : f32 to vector<2x16x16xf32>
    %944 = arith.addf %895, %943 : vector<2x16x16xf32>
    %cst_19 = arith.constant 0.000000e+00 : f32
    %945 = vector.broadcast %cst_19 : f32 to vector<2x16x16xf32>
    %946 = arith.maximumf %944, %945 : vector<2x16x16xf32>
    %cst_20 = arith.constant dense<0.000000e+00> : vector<2x16xf32>
    %947 = vector.multi_reduction <add>, %946, %cst_20 [2] : vector<2x16x16xf32> to vector<2x16xf32>
    %cst_21 = arith.constant dense<0.000000e+00> : vector<2xf32>
    %948 = vector.multi_reduction <add>, %947, %cst_21 [1] : vector<2x16xf32> to vector<2xf32>
    %949 = vector.shape_cast %948 : vector<2xf32> to vector<2x1xf32>
    %cst_22 = arith.constant 3.906250e-03 : f32
    %950 = vector.broadcast %cst_22 : f32 to vector<2x1xf32>
    %951 = arith.mulf %949, %950 : vector<2x1xf32>
    %c4_23 = arith.constant 4 : index
    %952 = memref.load %arg3[%c4_23] : memref<8xf32, #tpu.memory_space<smem>>
    %953 = vector.broadcast %952 : f32 to vector<2x16x16xf32>
    %954 = arith.addf %899, %953 : vector<2x16x16xf32>
    %cst_24 = arith.constant 0.000000e+00 : f32
    %955 = vector.broadcast %cst_24 : f32 to vector<2x16x16xf32>
    %956 = arith.maximumf %954, %955 : vector<2x16x16xf32>
    %cst_25 = arith.constant dense<0.000000e+00> : vector<2x16xf32>
    %957 = vector.multi_reduction <add>, %956, %cst_25 [2] : vector<2x16x16xf32> to vector<2x16xf32>
    %cst_26 = arith.constant dense<0.000000e+00> : vector<2xf32>
    %958 = vector.multi_reduction <add>, %957, %cst_26 [1] : vector<2x16xf32> to vector<2xf32>
    %959 = vector.shape_cast %958 : vector<2xf32> to vector<2x1xf32>
    %cst_27 = arith.constant 3.906250e-03 : f32
    %960 = vector.broadcast %cst_27 : f32 to vector<2x1xf32>
    %961 = arith.mulf %959, %960 : vector<2x1xf32>
    %c5_28 = arith.constant 5 : index
    %962 = memref.load %arg3[%c5_28] : memref<8xf32, #tpu.memory_space<smem>>
    %963 = vector.broadcast %962 : f32 to vector<2x16x16xf32>
    %964 = arith.addf %903, %963 : vector<2x16x16xf32>
    %cst_29 = arith.constant 0.000000e+00 : f32
    %965 = vector.broadcast %cst_29 : f32 to vector<2x16x16xf32>
    %966 = arith.maximumf %964, %965 : vector<2x16x16xf32>
    %cst_30 = arith.constant dense<0.000000e+00> : vector<2x16xf32>
    %967 = vector.multi_reduction <add>, %966, %cst_30 [2] : vector<2x16x16xf32> to vector<2x16xf32>
    %cst_31 = arith.constant dense<0.000000e+00> : vector<2xf32>
    %968 = vector.multi_reduction <add>, %967, %cst_31 [1] : vector<2x16xf32> to vector<2xf32>
    %969 = vector.shape_cast %968 : vector<2xf32> to vector<2x1xf32>
    %cst_32 = arith.constant 3.906250e-03 : f32
    %970 = vector.broadcast %cst_32 : f32 to vector<2x1xf32>
    %971 = arith.mulf %969, %970 : vector<2x1xf32>
    %c6_33 = arith.constant 6 : index
    %972 = memref.load %arg3[%c6_33] : memref<8xf32, #tpu.memory_space<smem>>
    %973 = vector.broadcast %972 : f32 to vector<2x16x16xf32>
    %974 = arith.addf %907, %973 : vector<2x16x16xf32>
    %cst_34 = arith.constant 0.000000e+00 : f32
    %975 = vector.broadcast %cst_34 : f32 to vector<2x16x16xf32>
    %976 = arith.maximumf %974, %975 : vector<2x16x16xf32>
    %cst_35 = arith.constant dense<0.000000e+00> : vector<2x16xf32>
    %977 = vector.multi_reduction <add>, %976, %cst_35 [2] : vector<2x16x16xf32> to vector<2x16xf32>
    %cst_36 = arith.constant dense<0.000000e+00> : vector<2xf32>
    %978 = vector.multi_reduction <add>, %977, %cst_36 [1] : vector<2x16xf32> to vector<2xf32>
    %979 = vector.shape_cast %978 : vector<2xf32> to vector<2x1xf32>
    %cst_37 = arith.constant 3.906250e-03 : f32
    %980 = vector.broadcast %cst_37 : f32 to vector<2x1xf32>
    %981 = arith.mulf %979, %980 : vector<2x1xf32>
    %c7_38 = arith.constant 7 : index
    %982 = memref.load %arg3[%c7_38] : memref<8xf32, #tpu.memory_space<smem>>
    %983 = vector.broadcast %982 : f32 to vector<2x16x16xf32>
    %984 = arith.addf %911, %983 : vector<2x16x16xf32>
    %cst_39 = arith.constant 0.000000e+00 : f32
    %985 = vector.broadcast %cst_39 : f32 to vector<2x16x16xf32>
    %986 = arith.maximumf %984, %985 : vector<2x16x16xf32>
    %cst_40 = arith.constant dense<0.000000e+00> : vector<2x16xf32>
    %987 = vector.multi_reduction <add>, %986, %cst_40 [2] : vector<2x16x16xf32> to vector<2x16xf32>
    %cst_41 = arith.constant dense<0.000000e+00> : vector<2xf32>
    %988 = vector.multi_reduction <add>, %987, %cst_41 [1] : vector<2x16xf32> to vector<2xf32>
    %989 = vector.shape_cast %988 : vector<2xf32> to vector<2x1xf32>
    %cst_42 = arith.constant 3.906250e-03 : f32
    %990 = vector.broadcast %cst_42 : f32 to vector<2x1xf32>
    %991 = arith.mulf %989, %990 : vector<2x1xf32>
    %992 = tpu.concatenate %921, %931, %941, %951, %961, %971, %981, %991 in 1 : vector<2x1xf32>, vector<2x1xf32>, vector<2x1xf32>, vector<2x1xf32>, vector<2x1xf32>, vector<2x1xf32>, vector<2x1xf32>, vector<2x1xf32> -> vector<2x8xf32>
    %c0_43 = arith.constant 0 : index
    %c0_44 = arith.constant 0 : index
    %993 = vector.load %arg4[%c0_43, %c0_44] : memref<8x8xf32, #tpu.memory_space<vmem>>, vector<8x8xf32>
    %cst_45 = arith.constant dense<0.000000e+00> : vector<2x8xf32>
    %994 = tpu.matmul %992, %993, %cst_45 {dimension_numbers = #tpu.dot_dimension_numbers<[1], [0], [0], [1], [0, 0, 1, 1], [], []>} : vector<2x8xf32>, vector<8x8xf32>, vector<2x8xf32> -> vector<2x8xf32>
    %c0_46 = arith.constant 0 : index
    %c0_47 = arith.constant 0 : index
    %995 = vector.load %arg5[%c0_46, %c0_47] : memref<1x8xf32, #tpu.memory_space<vmem>>, vector<1x8xf32>
    %996 = vector.broadcast %995 : vector<1x8xf32> to vector<2x8xf32>
    %997 = arith.addf %994, %996 : vector<2x8xf32>
    %c0_48 = arith.constant 0 : index
    %c0_49 = arith.constant 0 : index
    %998 = vector.load %arg6[%c0_48, %c0_49] : memref<2x8xf32, #tpu.memory_space<vmem>>, vector<2x8xf32>
    tpu.vector_store %arg6[%c0_48, %c0_49], %997 {strides = array<i32>} : memref<2x8xf32, #tpu.memory_space<vmem>>, vector<2x8xf32>,
    return
  }
  func.func @transform_0(%arg0: i32) -> (i32, i32, i32, i32) {
    %c0_i32 = arith.constant 0 : i32
    %c0_i32_0 = arith.constant 0 : i32
    %c0_i32_1 = arith.constant 0 : i32
    %c0_i32_2 = arith.constant 0 : i32
    return %arg0, %c0_i32, %c0_i32_0, %c0_i32_1 : i32, i32, i32, i32
  }
  func.func @transform_1(%arg0: i32) -> i32 {
    %c0_i32 = arith.constant 0 : i32
    %c0_i32_0 = arith.constant 0 : i32
    return %c0_i32 : i32
  }
  func.func @transform_2(%arg0: i32) -> i32 {
    %c0_i32 = arith.constant 0 : i32
    %c0_i32_0 = arith.constant 0 : i32
    return %c0_i32 : i32
  }
  func.func @transform_3(%arg0: i32) -> (i32, i32) {
    %c0_i32 = arith.constant 0 : i32
    %c0_i32_0 = arith.constant 0 : i32
    %c0_i32_1 = arith.constant 0 : i32
    return %c0_i32, %c0_i32_0 : i32, i32
  }
  func.func @transform_4(%arg0: i32) -> (i32, i32) {
    %c0_i32 = arith.constant 0 : i32
    %c0_i32_0 = arith.constant 0 : i32
    %c0_i32_1 = arith.constant 0 : i32
    return %c0_i32, %c0_i32_0 : i32, i32
  }
  func.func @transform_5(%arg0: i32) -> (i32, i32) {
    %c0_i32 = arith.constant 0 : i32
    %c0_i32_0 = arith.constant 0 : i32
    return %arg0, %c0_i32 : i32, i32
  }
}

</mosaic_0001>

<llo_original>
// kernel: abstract_model_forward.1
$region0: #{abstract_model_forward.1}
  #allocation0 [shape = 'u32[]', space=smem, size = 0x4, offset = 0x4, fixed_abs, tag = 'smem constant byte address 0x4 - core index']
  #allocation1 [shape = 'u32[144,128]{1,0:T(1,128)}', space=vmem, size = 0x12000, scoped, tag = 'internal scratch']
  %s0 = inlined_call_operand.vmem [shape: bf16[2,3,18,18], index: 0, kind: input, shape index: {}]
  %s1 = inlined_call_operand.vmem [shape: f32[216], index: 1, kind: input, shape index: {}]
  %s2 = inlined_call_operand.vmem [shape: f32[8], index: 2, kind: input, shape index: {}]
  %s3 = inlined_call_operand.vmem [shape: f32[8,8], index: 3, kind: input, shape index: {}]
  %s4 = inlined_call_operand.vmem [shape: f32[1,8], index: 4, kind: input, shape index: {}]
  %s5 = inlined_call_operand.hbm [shape: f32[2,8], index: 5, kind: output, shape index: {}]
  %s6 = sld [smem:[#allocation0]]
  $region38: #{abstract_model_forward.1} parent=0
    _
  %s8 = ssub.s32 1, %s6
  %s9 = scalar_select 0, %s8, %s6
  $region1: #{abstract_model_forward.1} parent=0
    #allocation2 [shape = 'u8[1024]{0}', space=smem, size = 0x400, scoped, tag = 'input window, operand 1, single buffered']
    #allocation3 [shape = 's32[1]{0}', space=sflag, size = 0x4, scoped, tag = 'scoped memory for abstract_model_forward.1']
    #allocation4 [shape = 's32[1]{0}', space=sflag, size = 0x4, scoped, tag = 'scoped memory for abstract_model_forward.1']
    #allocation5 [shape = 'u8[512]{0}', space=smem, size = 0x200, scoped, tag = 'input window, operand 2, single buffered']
    #allocation6 [shape = 's32[1]{0}', space=sflag, size = 0x4, scoped, tag = 'scoped memory for abstract_model_forward.1']
    #allocation7 [shape = 'u8[1024]{0}', space=vmem, size = 0x400, scoped, tag = 'output window, operand 0, single buffered']
    %10 = vsyncpa [#allocation4], 0
    %11 = vsyncpa [#allocation6], 0
    %12 = vsyncpa [#allocation3], 0
    // Predicated region
    $region2: #{abstract_model_forward.1} parent=1 // pred_check
      _
    $region3: #{abstract_model_forward.1} parent=1 // pred_check_branch
      %14 = sbr.rel (0) target = $region5
    $region4: #{abstract_model_forward.1} parent=1 // pred_region
      _
    $region5: #{abstract_model_forward.1} parent=1 // pred_fallthru
      _
    // Predicated region
    $region6: #{abstract_model_forward.1} parent=1 // pred_check
      _
    $region7: #{abstract_model_forward.1} parent=1 // pred_check_branch
      %16 = sbr.rel (0) target = $region9
    $region8: #{abstract_model_forward.1} parent=1 // pred_region
      %s18 = ssub.s32 32, 32
      %19 = vsyncadd [#allocation4], %s18
      %s21 = sshll.u32 %s1, 4
      %s22 = int_to_ptr.vmem [resolvable:$true] %s21
      %24 = dma.vmem_to_smem %s22, 32, [#allocation2], [#allocation4]
    $region9: #{abstract_model_forward.1} parent=1 // pred_fallthru
      _
    // Predicated region
    $region10: #{abstract_model_forward.1} parent=1 // pred_check
      _
    $region11: #{abstract_model_forward.1} parent=1 // pred_check_branch
      %26 = sbr.rel (0) target = $region13
    $region12: #{abstract_model_forward.1} parent=1 // pred_region
      %s28 = ssub.s32 16, 16
      %29 = vsyncadd [#allocation6], %s28
      %s31 = sshll.u32 %s2, 4
      %s32 = int_to_ptr.vmem [resolvable:$true] %s31
      %34 = dma.vmem_to_smem %s32, 16, [#allocation5], [#allocation6]
    $region13: #{abstract_model_forward.1} parent=1 // pred_fallthru
      _
    // Predicated region
    $region14: #{abstract_model_forward.1} parent=1 // pred_check
      _
    $region15: #{abstract_model_forward.1} parent=1 // pred_check_branch
      %36 = sbr.rel (0) target = $region17
    $region16: #{abstract_model_forward.1} parent=1 // pred_region
      _
    $region17: #{abstract_model_forward.1} parent=1 // pred_fallthru
      _
    // Predicated region
    $region18: #{abstract_model_forward.1} parent=1 // pred_check
      _
    $region19: #{abstract_model_forward.1} parent=1 // pred_check_branch
      %38 = sbr.rel (0) target = $region21
    $region20: #{abstract_model_forward.1} parent=1 // pred_region
      _
    $region21: #{abstract_model_forward.1} parent=1 // pred_fallthru
      _
    // Predicated region
    $region22: #{abstract_model_forward.1} parent=1 // pred_check
      _
    $region23: #{abstract_model_forward.1} parent=1 // pred_check_branch
      %40 = sbr.rel (0) target = $region25
    $region24: #{abstract_model_forward.1} parent=1 // pred_region
      %41 = dma.done [#allocation4], 32
    $region25: #{abstract_model_forward.1} parent=1 // pred_fallthru
      _
    // Predicated region
    $region26: #{abstract_model_forward.1} parent=1 // pred_check
      _
    $region27: #{abstract_model_forward.1} parent=1 // pred_check_branch
      %43 = sbr.rel (0) target = $region29
    $region28: #{abstract_model_forward.1} parent=1 // pred_region
      %44 = dma.done [#allocation6], 16
    $region29: #{abstract_model_forward.1} parent=1 // pred_fallthru
      _
    %45 = sfence
    %v46 = vld [vmem:[%s0] sm:$0xf]
    %v47 = vld [vmem:[%s0 + $0x4] sm:$0xf]
    %v48 = vld [vmem:[%s0 + $0x8] sm:$0x1]
    %v49 = vld [vmem:[%s0 + $0xc] sm:$0xf]
    %v50 = vld [vmem:[%s0 + $0x10] sm:$0xf]
    %v51 = vld [vmem:[%s0 + $0x14] sm:$0x1]
    %v52 = vld [vmem:[%s0 + $0x18] sm:$0xf]
    %v53 = vld [vmem:[%s0 + $0x1c] sm:$0xf]
    %v54 = vld [vmem:[%s0 + $0x20] sm:$0x1]
    %v55 = vld [vmem:[%s0 + $0x24] sm:$0xf]
    %v56 = vld [vmem:[%s0 + $0x28] sm:$0xf]
    %v57 = vld [vmem:[%s0 + $0x2c] sm:$0x1]
    %v58 = vld [vmem:[%s0 + $0x30] sm:$0xf]
    %v59 = vld [vmem:[%s0 + $0x34] sm:$0xf]
    %v60 = vld [vmem:[%s0 + $0x38] sm:$0x1]
    %v61 = vld [vmem:[%s0 + $0x3c] sm:$0xf]
    %v62 = vld [vmem:[%s0 + $0x40] sm:$0xf]
    %v63 = vld [vmem:[%s0 + $0x44] sm:$0x1]
    %v64 = vunpack.c.l.bf16 %v46
    %v65 = vunpack.c.l.bf16 %v47
    %v66 = vunpack.c.l.bf16 %v48
    %v67 = vunpack.c.l.bf16 %v49
    %v68 = vunpack.c.l.bf16 %v50
    %v69 = vunpack.c.l.bf16 %v51
    %v70 = vunpack.c.l.bf16 %v52
    %v71 = vunpack.c.l.bf16 %v53
    %v72 = vunpack.c.l.bf16 %v54
    %v73 = vunpack.c.l.bf16 %v55
    %v74 = vunpack.c.l.bf16 %v56
    %v75 = vunpack.c.l.bf16 %v57
    %v76 = vunpack.c.l.bf16 %v58
    %v77 = vunpack.c.l.bf16 %v59
    %v78 = vunpack.c.l.bf16 %v60
    %v79 = vunpack.c.l.bf16 %v61
    %v80 = vunpack.c.l.bf16 %v62
    %v81 = vunpack.c.l.bf16 %v63
    %s82 = sld [smem:[#allocation2]]
    %v83 = vstv %s82
    %v84 = vmul.f32 %v64, %v83
    %v85 = vmul.f32 %v65, %v83
    %v86 = vmul.f32 %v73, %v83
    %v87 = vmul.f32 %v74, %v83
    %s88 = sld [smem:[#allocation2 + $0x1]]
    %v89 = vstv %s88
    %v90 = vmul.f32 %v64, %v89
    %v91 = vmul.f32 %v65, %v89
    %v92 = vmul.f32 %v73, %v89
    %v93 = vmul.f32 %v74, %v89
    %s94 = sld [smem:[#allocation2 + $0x2]]
    %v95 = vstv %s94
    %v96 = vmul.f32 %v64, %v95
    %v97 = vmul.f32 %v65, %v95
    %v98 = vmul.f32 %v73, %v95
    %v99 = vmul.f32 %v74, %v95
    %s100 = sld [smem:[#allocation2 + $0x3]]
    %v101 = vstv %s100
    %v102 = vmul.f32 %v64, %v101
    %v103 = vmul.f32 %v65, %v101
    %v104 = vmul.f32 %v73, %v101
    %v105 = vmul.f32 %v74, %v101
    %s106 = sld [smem:[#allocation2 + $0x4]]
    %v107 = vstv %s106
    %v108 = vmul.f32 %v64, %v107
    %v109 = vmul.f32 %v65, %v107
    %v110 = vmul.f32 %v73, %v107
    %v111 = vmul.f32 %v74, %v107
    %s112 = sld [smem:[#allocation2 + $0x5]]
    %v113 = vstv %s112
    %v114 = vmul.f32 %v64, %v113
    %v115 = vmul.f32 %v65, %v113
    %v116 = vmul.f32 %v73, %v113
    %v117 = vmul.f32 %v74, %v113
    %s118 = sld [smem:[#allocation2 + $0x6]]
    %v119 = vstv %s118
    %v120 = vmul.f32 %v64, %v119
    %v121 = vmul.f32 %v65, %v119
    %v122 = vmul.f32 %v73, %v119
    %v123 = vmul.f32 %v74, %v119
    %s124 = sld [smem:[#allocation2 + $0x7]]
    %v125 = vstv %s124
    %v126 = vmul.f32 %v64, %v125
    %v127 = vmul.f32 %v65, %v125
    %v128 = vmul.f32 %v73, %v125
    %v129 = vmul.f32 %v74, %v125
    %s130 = sld [smem:[#allocation2 + $0x8]]
    %v131 = vstv %s130
    %v132 = vmul.f32 %v67, %v131
    %v133 = vmul.f32 %v68, %v131
    %v134 = vmul.f32 %v76, %v131
    %v135 = vmul.f32 %v77, %v131
    %v136 = vadd.f32 %v84, %v132
    %v137 = vadd.f32 %v85, %v133
    %v138 = vadd.f32 %v86, %v134
    %v139 = vadd.f32 %v87, %v135
    %s140 = sld [smem:[#allocation2 + $0x9]]
    %v141 = vstv %s140
    %v142 = vmul.f32 %v67, %v141
    %v143 = vmul.f32 %v68, %v141
    %v144 = vmul.f32 %v76, %v141
    %v145 = vmul.f32 %v77, %v141
    %v146 = vadd.f32 %v90, %v142
    %v147 = vadd.f32 %v91, %v143
    %v148 = vadd.f32 %v92, %v144
    %v149 = vadd.f32 %v93, %v145
    %s150 = sld [smem:[#allocation2 + $0xa]]
    %v151 = vstv %s150
    %v152 = vmul.f32 %v67, %v151
    %v153 = vmul.f32 %v68, %v151
    %v154 = vmul.f32 %v76, %v151
    %v155 = vmul.f32 %v77, %v151
    %v156 = vadd.f32 %v96, %v152
    %v157 = vadd.f32 %v97, %v153
    %v158 = vadd.f32 %v98, %v154
    %v159 = vadd.f32 %v99, %v155
    %s160 = sld [smem:[#allocation2 + $0xb]]
    %v161 = vstv %s160
    %v162 = vmul.f32 %v67, %v161
    %v163 = vmul.f32 %v68, %v161
    %v164 = vmul.f32 %v76, %v161
    %v165 = vmul.f32 %v77, %v161
    %v166 = vadd.f32 %v102, %v162
    %v167 = vadd.f32 %v103, %v163
    %v168 = vadd.f32 %v104, %v164
    %v169 = vadd.f32 %v105, %v165
    %s170 = sld [smem:[#allocation2 + $0xc]]
    %v171 = vstv %s170
    %v172 = vmul.f32 %v67, %v171
    %v173 = vmul.f32 %v68, %v171
    %v174 = vmul.f32 %v76, %v171
    %v175 = vmul.f32 %v77, %v171
    %v176 = vadd.f32 %v108, %v172
    %v177 = vadd.f32 %v109, %v173
    %v178 = vadd.f32 %v110, %v174
    %v179 = vadd.f32 %v111, %v175
    %s180 = sld [smem:[#allocation2 + $0xd]]
    %v181 = vstv %s180
    %v182 = vmul.f32 %v67, %v181
    %v183 = vmul.f32 %v68, %v181
    %v184 = vmul.f32 %v76, %v181
    %v185 = vmul.f32 %v77, %v181
    %v186 = vadd.f32 %v114, %v182
    %v187 = vadd.f32 %v115, %v183
    %v188 = vadd.f32 %v116, %v184
    %v189 = vadd.f32 %v117, %v185
    %s190 = sld [smem:[#allocation2 + $0xe]]
    %v191 = vstv %s190
    %v192 = vmul.f32 %v67, %v191
    %v193 = vmul.f32 %v68, %v191
    %v194 = vmul.f32 %v76, %v191
    %v195 = vmul.f32 %v77, %v191
    %v196 = vadd.f32 %v120, %v192
    %v197 = vadd.f32 %v121, %v193
    %v198 = vadd.f32 %v122, %v194
    %v199 = vadd.f32 %v123, %v195
    %s200 = sld [smem:[#allocation2 + $0xf]]
    %v201 = vstv %s200
    %v202 = vmul.f32 %v67, %v201
    %v203 = vmul.f32 %v68, %v201
    %v204 = vmul.f32 %v76, %v201
    %v205 = vmul.f32 %v77, %v201
    %v206 = vadd.f32 %v126, %v202
    %v207 = vadd.f32 %v127, %v203
    %v208 = vadd.f32 %v128, %v204
    %v209 = vadd.f32 %v129, %v205
    %s210 = sld [smem:[#allocation2 + $0x10]]
    %v211 = vstv %s210
    %v212 = vmul.f32 %v70, %v211
    %v213 = vmul.f32 %v71, %v211
    %v214 = vmul.f32 %v79, %v211
    %v215 = vmul.f32 %v80, %v211
    %v216 = vadd.f32 %v136, %v212
    %v217 = vadd.f32 %v137, %v213
    %v218 = vadd.f32 %v138, %v214
    %v219 = vadd.f32 %v139, %v215
    %s220 = sld [smem:[#allocation2 + $0x11]]
    %v221 = vstv %s220
    %v222 = vmul.f32 %v70, %v221
    %v223 = vmul.f32 %v71, %v221
    %v224 = vmul.f32 %v79, %v221
    %v225 = vmul.f32 %v80, %v221
    %v226 = vadd.f32 %v146, %v222
    %v227 = vadd.f32 %v147, %v223
    %v228 = vadd.f32 %v148, %v224
    %v229 = vadd.f32 %v149, %v225
    %s230 = sld [smem:[#allocation2 + $0x12]]
    %v231 = vstv %s230
    %v232 = vmul.f32 %v70, %v231
    %v233 = vmul.f32 %v71, %v231
    %v234 = vmul.f32 %v79, %v231
    %v235 = vmul.f32 %v80, %v231
    %v236 = vadd.f32 %v156, %v232
    %v237 = vadd.f32 %v157, %v233
    %v238 = vadd.f32 %v158, %v234
    %v239 = vadd.f32 %v159, %v235
    %s240 = sld [smem:[#allocation2 + $0x13]]
    %v241 = vstv %s240
    %v242 = vmul.f32 %v70, %v241
    %v243 = vmul.f32 %v71, %v241
    %v244 = vmul.f32 %v79, %v241
    %v245 = vmul.f32 %v80, %v241
    %v246 = vadd.f32 %v166, %v242
    %v247 = vadd.f32 %v167, %v243
    %v248 = vadd.f32 %v168, %v244
    %v249 = vadd.f32 %v169, %v245
    %s250 = sld [smem:[#allocation2 + $0x14]]
    %v251 = vstv %s250
    %v252 = vmul.f32 %v70, %v251
    %v253 = vmul.f32 %v71, %v251
    %v254 = vmul.f32 %v79, %v251
    %v255 = vmul.f32 %v80, %v251
    %v256 = vadd.f32 %v176, %v252
    %v257 = vadd.f32 %v177, %v253
    %v258 = vadd.f32 %v178, %v254
    %v259 = vadd.f32 %v179, %v255
    %s260 = sld [smem:[#allocation2 + $0x15]]
    %v261 = vstv %s260
    %v262 = vmul.f32 %v70, %v261
    %v263 = vmul.f32 %v71, %v261
    %v264 = vmul.f32 %v79, %v261
    %v265 = vmul.f32 %v80, %v261
    %v266 = vadd.f32 %v186, %v262
    %v267 = vadd.f32 %v187, %v263
    %v268 = vadd.f32 %v188, %v264
    %v269 = vadd.f32 %v189, %v265
    %s270 = sld [smem:[#allocation2 + $0x16]]
    %v271 = vstv %s270
    %v272 = vmul.f32 %v70, %v271
    %v273 = vmul.f32 %v71, %v271
    %v274 = vmul.f32 %v79, %v271
    %v275 = vmul.f32 %v80, %v271
    %v276 = vadd.f32 %v196, %v272
    %v277 = vadd.f32 %v197, %v273
    %v278 = vadd.f32 %v198, %v274
    %v279 = vadd.f32 %v199, %v275
    %s280 = sld [smem:[#allocation2 + $0x17]]
    %v281 = vstv %s280
    %v282 = vmul.f32 %v70, %v281
    %v283 = vmul.f32 %v71, %v281
    %v284 = vmul.f32 %v79, %v281
    %v285 = vmul.f32 %v80, %v281
    %v286 = vadd.f32 %v206, %v282
    %v287 = vadd.f32 %v207, %v283
    %v288 = vadd.f32 %v208, %v284
    %v289 = vadd.f32 %v209, %v285
    %s290 = sld [smem:[#allocation2 + $0x18]]
    %v291 = vstv %s290
    %v292 = vmul.f32 %v64, %v291
    %v293 = vmul.f32 %v65, %v291
    %v294 = vmul.f32 %v73, %v291
    %v295 = vmul.f32 %v74, %v291
    %300 = vrot.lane.b32.xlu0 %v292, 127
    %v301 = vpop.permute.xlu0 %300
    %302 = vrot.lane.b32.xlu0 %v293, 127
    %v303 = vpop.permute.xlu0 %302
    %304 = vrot.lane.b32.xlu0 %v294, 127
    %v305 = vpop.permute.xlu0 %304
    %306 = vrot.lane.b32.xlu0 %v295, 127
    %v307 = vpop.permute.xlu0 %306
    %v312 = vadd.f32 %v216, %v301
    %v313 = vadd.f32 %v217, %v303
    %v314 = vadd.f32 %v218, %v305
    %v315 = vadd.f32 %v219, %v307
    %s316 = sld [smem:[#allocation2 + $0x19]]
    %v317 = vstv %s316
    %v318 = vmul.f32 %v64, %v317
    %v319 = vmul.f32 %v65, %v317
    %v320 = vmul.f32 %v73, %v317
    %v321 = vmul.f32 %v74, %v317
    %326 = vrot.lane.b32.xlu0 %v318, 127
    %v327 = vpop.permute.xlu0 %326
    %328 = vrot.lane.b32.xlu0 %v319, 127
    %v329 = vpop.permute.xlu0 %328
    %330 = vrot.lane.b32.xlu0 %v320, 127
    %v331 = vpop.permute.xlu0 %330
    %332 = vrot.lane.b32.xlu0 %v321, 127
    %v333 = vpop.permute.xlu0 %332
    %v338 = vadd.f32 %v226, %v327
    %v339 = vadd.f32 %v227, %v329
    %v340 = vadd.f32 %v228, %v331
    %v341 = vadd.f32 %v229, %v333
    %s342 = sld [smem:[#allocation2 + $0x1a]]
    %v343 = vstv %s342
    %v344 = vmul.f32 %v64, %v343
    %v345 = vmul.f32 %v65, %v343
    %v346 = vmul.f32 %v73, %v343
    %v347 = vmul.f32 %v74, %v343
    %352 = vrot.lane.b32.xlu0 %v344, 127
    %v353 = vpop.permute.xlu0 %352
    %354 = vrot.lane.b32.xlu0 %v345, 127
    %v355 = vpop.permute.xlu0 %354
    %356 = vrot.lane.b32.xlu0 %v346, 127
    %v357 = vpop.permute.xlu0 %356
    %358 = vrot.lane.b32.xlu0 %v347, 127
    %v359 = vpop.permute.xlu0 %358
    %v364 = vadd.f32 %v236, %v353
    %v365 = vadd.f32 %v237, %v355
    %v366 = vadd.f32 %v238, %v357
    %v367 = vadd.f32 %v239, %v359
    %s368 = sld [smem:[#allocation2 + $0x1b]]
    %v369 = vstv %s368
    %v370 = vmul.f32 %v64, %v369
    %v371 = vmul.f32 %v65, %v369
    %v372 = vmul.f32 %v73, %v369
    %v373 = vmul.f32 %v74, %v369
    %378 = vrot.lane.b32.xlu0 %v370, 127
    %v379 = vpop.permute.xlu0 %378
    %380 = vrot.lane.b32.xlu0 %v371, 127
    %v381 = vpop.permute.xlu0 %380
    %382 = vrot.lane.b32.xlu0 %v372, 127
    %v383 = vpop.permute.xlu0 %382
    %384 = vrot.lane.b32.xlu0 %v373, 127
    %v385 = vpop.permute.xlu0 %384
    %v390 = vadd.f32 %v246, %v379
    %v391 = vadd.f32 %v247, %v381
    %v392 = vadd.f32 %v248, %v383
    %v393 = vadd.f32 %v249, %v385
    %s394 = sld [smem:[#allocation2 + $0x1c]]
    %v395 = vstv %s394
    %v396 = vmul.f32 %v64, %v395
    %v397 = vmul.f32 %v65, %v395
    %v398 = vmul.f32 %v73, %v395
    %v399 = vmul.f32 %v74, %v395
    %404 = vrot.lane.b32.xlu0 %v396, 127
    %v405 = vpop.permute.xlu0 %404
    %406 = vrot.lane.b32.xlu0 %v397, 127
    %v407 = vpop.permute.xlu0 %406
    %408 = vrot.lane.b32.xlu0 %v398, 127
    %v409 = vpop.permute.xlu0 %408
    %410 = vrot.lane.b32.xlu0 %v399, 127
    %v411 = vpop.permute.xlu0 %410
    %v416 = vadd.f32 %v256, %v405
    %v417 = vadd.f32 %v257, %v407
    %v418 = vadd.f32 %v258, %v409
    %v419 = vadd.f32 %v259, %v411
    %s420 = sld [smem:[#allocation2 + $0x1d]]
    %v421 = vstv %s420
    %v422 = vmul.f32 %v64, %v421
    %v423 = vmul.f32 %v65, %v421
    %v424 = vmul.f32 %v73, %v421
    %v425 = vmul.f32 %v74, %v421
    %430 = vrot.lane.b32.xlu0 %v422, 127
    %v431 = vpop.permute.xlu0 %430
    %432 = vrot.lane.b32.xlu0 %v423, 127
    %v433 = vpop.permute.xlu0 %432
    %434 = vrot.lane.b32.xlu0 %v424, 127
    %v435 = vpop.permute.xlu0 %434
    %436 = vrot.lane.b32.xlu0 %v425, 127
    %v437 = vpop.permute.xlu0 %436
    %v442 = vadd.f32 %v266, %v431
    %v443 = vadd.f32 %v267, %v433
    %v444 = vadd.f32 %v268, %v435
    %v445 = vadd.f32 %v269, %v437
    %s446 = sld [smem:[#allocation2 + $0x1e]]
    %v447 = vstv %s446
    %v448 = vmul.f32 %v64, %v447
    %v449 = vmul.f32 %v65, %v447
    %v450 = vmul.f32 %v73, %v447
    %v451 = vmul.f32 %v74, %v447
    %456 = vrot.lane.b32.xlu0 %v448, 127
    %v457 = vpop.permute.xlu0 %456
    %458 = vrot.lane.b32.xlu0 %v449, 127
    %v459 = vpop.permute.xlu0 %458
    %460 = vrot.lane.b32.xlu0 %v450, 127
    %v461 = vpop.permute.xlu0 %460
    %462 = vrot.lane.b32.xlu0 %v451, 127
    %v463 = vpop.permute.xlu0 %462
    %v468 = vadd.f32 %v276, %v457
    %v469 = vadd.f32 %v277, %v459
    %v470 = vadd.f32 %v278, %v461
    %v471 = vadd.f32 %v279, %v463
    %s472 = sld [smem:[#allocation2 + $0x1f]]
    %v473 = vstv %s472
    %v474 = vmul.f32 %v64, %v473
    %v475 = vmul.f32 %v65, %v473
    %v476 = vmul.f32 %v73, %v473
    %v477 = vmul.f32 %v74, %v473
    %482 = vrot.lane.b32.xlu0 %v474, 127
    %v483 = vpop.permute.xlu0 %482
    %484 = vrot.lane.b32.xlu0 %v475, 127
    %v485 = vpop.permute.xlu0 %484
    %486 = vrot.lane.b32.xlu0 %v476, 127
    %v487 = vpop.permute.xlu0 %486
    %488 = vrot.lane.b32.xlu0 %v477, 127
    %v489 = vpop.permute.xlu0 %488
    %v494 = vadd.f32 %v286, %v483
    %v495 = vadd.f32 %v287, %v485
    %v496 = vadd.f32 %v288, %v487
    %v497 = vadd.f32 %v289, %v489
    %s498 = sld [smem:[#allocation2 + $0x20]]
    %v499 = vstv %s498
    %v500 = vmul.f32 %v67, %v499
    %v501 = vmul.f32 %v68, %v499
    %v502 = vmul.f32 %v76, %v499
    %v503 = vmul.f32 %v77, %v499
    %508 = vrot.lane.b32.xlu0 %v500, 127
    %v509 = vpop.permute.xlu0 %508
    %510 = vrot.lane.b32.xlu0 %v501, 127
    %v511 = vpop.permute.xlu0 %510
    %512 = vrot.lane.b32.xlu0 %v502, 127
    %v513 = vpop.permute.xlu0 %512
    %514 = vrot.lane.b32.xlu0 %v503, 127
    %v515 = vpop.permute.xlu0 %514
    %v520 = vadd.f32 %v312, %v509
    %v521 = vadd.f32 %v313, %v511
    %v522 = vadd.f32 %v314, %v513
    %v523 = vadd.f32 %v315, %v515
    %s524 = sld [smem:[#allocation2 + $0x21]]
    %v525 = vstv %s524
    %v526 = vmul.f32 %v67, %v525
    %v527 = vmul.f32 %v68, %v525
    %v528 = vmul.f32 %v76, %v525
    %v529 = vmul.f32 %v77, %v525
    %534 = vrot.lane.b32.xlu0 %v526, 127
    %v535 = vpop.permute.xlu0 %534
    %536 = vrot.lane.b32.xlu0 %v527, 127
    %v537 = vpop.permute.xlu0 %536
    %538 = vrot.lane.b32.xlu0 %v528, 127
    %v539 = vpop.permute.xlu0 %538
    %540 = vrot.lane.b32.xlu0 %v529, 127
    %v541 = vpop.permute.xlu0 %540
    %v546 = vadd.f32 %v338, %v535
    %v547 = vadd.f32 %v339, %v537
    %v548 = vadd.f32 %v340, %v539
    %v549 = vadd.f32 %v341, %v541
    %s550 = sld [smem:[#allocation2 + $0x22]]
    %v551 = vstv %s550
    %v552 = vmul.f32 %v67, %v551
    %v553 = vmul.f32 %v68, %v551
    %v554 = vmul.f32 %v76, %v551
    %v555 = vmul.f32 %v77, %v551
    %560 = vrot.lane.b32.xlu0 %v552, 127
    %v561 = vpop.permute.xlu0 %560
    %562 = vrot.lane.b32.xlu0 %v553, 127
    %v563 = vpop.permute.xlu0 %562
    %564 = vrot.lane.b32.xlu0 %v554, 127
    %v565 = vpop.permute.xlu0 %564
    %566 = vrot.lane.b32.xlu0 %v555, 127
    %v567 = vpop.permute.xlu0 %566
    %v572 = vadd.f32 %v364, %v561
    %v573 = vadd.f32 %v365, %v563
    %v574 = vadd.f32 %v366, %v565
    %v575 = vadd.f32 %v367, %v567
    %s576 = sld [smem:[#allocation2 + $0x23]]
    %v577 = vstv %s576
    %v578 = vmul.f32 %v67, %v577
    %v579 = vmul.f32 %v68, %v577
    %v580 = vmul.f32 %v76, %v577
    %v581 = vmul.f32 %v77, %v577
    %586 = vrot.lane.b32.xlu0 %v578, 127
    %v587 = vpop.permute.xlu0 %586
    %588 = vrot.lane.b32.xlu0 %v579, 127
    %v589 = vpop.permute.xlu0 %588
    %590 = vrot.lane.b32.xlu0 %v580, 127
    %v591 = vpop.permute.xlu0 %590
    %592 = vrot.lane.b32.xlu0 %v581, 127
    %v593 = vpop.permute.xlu0 %592
    %v598 = vadd.f32 %v390, %v587
    %v599 = vadd.f32 %v391, %v589
    %v600 = vadd.f32 %v392, %v591
    %v601 = vadd.f32 %v393, %v593
    %s602 = sld [smem:[#allocation2 + $0x24]]
    %v603 = vstv %s602
    %v604 = vmul.f32 %v67, %v603
    %v605 = vmul.f32 %v68, %v603
    %v606 = vmul.f32 %v76, %v603
    %v607 = vmul.f32 %v77, %v603
    %612 = vrot.lane.b32.xlu0 %v604, 127
    %v613 = vpop.permute.xlu0 %612
    %614 = vrot.lane.b32.xlu0 %v605, 127
    %v615 = vpop.permute.xlu0 %614
    %616 = vrot.lane.b32.xlu0 %v606, 127
    %v617 = vpop.permute.xlu0 %616
    %618 = vrot.lane.b32.xlu0 %v607, 127
    %v619 = vpop.permute.xlu0 %618
    %v624 = vadd.f32 %v416, %v613
    %v625 = vadd.f32 %v417, %v615
    %v626 = vadd.f32 %v418, %v617
    %v627 = vadd.f32 %v419, %v619
    %s628 = sld [smem:[#allocation2 + $0x25]]
    %v629 = vstv %s628
    %v630 = vmul.f32 %v67, %v629
    %v631 = vmul.f32 %v68, %v629
    %v632 = vmul.f32 %v76, %v629
    %v633 = vmul.f32 %v77, %v629
    %638 = vrot.lane.b32.xlu0 %v630, 127
    %v639 = vpop.permute.xlu0 %638
    %640 = vrot.lane.b32.xlu0 %v631, 127
    %v641 = vpop.permute.xlu0 %640
    %642 = vrot.lane.b32.xlu0 %v632, 127
    %v643 = vpop.permute.xlu0 %642
    %644 = vrot.lane.b32.xlu0 %v633, 127
    %v645 = vpop.permute.xlu0 %644
    %v650 = vadd.f32 %v442, %v639
    %v651 = vadd.f32 %v443, %v641
    %v652 = vadd.f32 %v444, %v643
    %v653 = vadd.f32 %v445, %v645
    %s654 = sld [smem:[#allocation2 + $0x26]]
    %v655 = vstv %s654
    %v656 = vmul.f32 %v67, %v655
    %v657 = vmul.f32 %v68, %v655
    %v658 = vmul.f32 %v76, %v655
    %v659 = vmul.f32 %v77, %v655
    %664 = vrot.lane.b32.xlu0 %v656, 127
    %v665 = vpop.permute.xlu0 %664
    %666 = vrot.lane.b32.xlu0 %v657, 127
    %v667 = vpop.permute.xlu0 %666
    %668 = vrot.lane.b32.xlu0 %v658, 127
    %v669 = vpop.permute.xlu0 %668
    %670 = vrot.lane.b32.xlu0 %v659, 127
    %v671 = vpop.permute.xlu0 %670
    %v676 = vadd.f32 %v468, %v665
    %v677 = vadd.f32 %v469, %v667
    %v678 = vadd.f32 %v470, %v669
    %v679 = vadd.f32 %v471, %v671
    %s680 = sld [smem:[#allocation2 + $0x27]]
    %v681 = vstv %s680
    %v682 = vmul.f32 %v67, %v681
    %v683 = vmul.f32 %v68, %v681
    %v684 = vmul.f32 %v76, %v681
    %v685 = vmul.f32 %v77, %v681
    %690 = vrot.lane.b32.xlu0 %v682, 127
    %v691 = vpop.permute.xlu0 %690
    %692 = vrot.lane.b32.xlu0 %v683, 127
    %v693 = vpop.permute.xlu0 %692
    %694 = vrot.lane.b32.xlu0 %v684, 127
    %v695 = vpop.permute.xlu0 %694
    %696 = vrot.lane.b32.xlu0 %v685, 127
    %v697 = vpop.permute.xlu0 %696
    %v702 = vadd.f32 %v494, %v691
    %v703 = vadd.f32 %v495, %v693
    %v704 = vadd.f32 %v496, %v695
    %v705 = vadd.f32 %v497, %v697
    %s706 = sld [smem:[#allocation2 + $0x28]]
    %v707 = vstv %s706
    %v708 = vmul.f32 %v70, %v707
    %v709 = vmul.f32 %v71, %v707
    %v710 = vmul.f32 %v79, %v707
    %v711 = vmul.f32 %v80, %v707
    %716 = vrot.lane.b32.xlu0 %v708, 127
    %v717 = vpop.permute.xlu0 %716
    %718 = vrot.lane.b32.xlu0 %v709, 127
    %v719 = vpop.permute.xlu0 %718
    %720 = vrot.lane.b32.xlu0 %v710, 127
    %v721 = vpop.permute.xlu0 %720
    %722 = vrot.lane.b32.xlu0 %v711, 127
    %v723 = vpop.permute.xlu0 %722
    %v728 = vadd.f32 %v520, %v717
    %v729 = vadd.f32 %v521, %v719
    %v730 = vadd.f32 %v522, %v721
    %v731 = vadd.f32 %v523, %v723
    %s732 = sld [smem:[#allocation2 + $0x29]]
    %v733 = vstv %s732
    %v734 = vmul.f32 %v70, %v733
    %v735 = vmul.f32 %v71, %v733
    %v736 = vmul.f32 %v79, %v733
    %v737 = vmul.f32 %v80, %v733
    %742 = vrot.lane.b32.xlu0 %v734, 127
    %v743 = vpop.permute.xlu0 %742
    %744 = vrot.lane.b32.xlu0 %v735, 127
    %v745 = vpop.permute.xlu0 %744
    %746 = vrot.lane.b32.xlu0 %v736, 127
    %v747 = vpop.permute.xlu0 %746
    %748 = vrot.lane.b32.xlu0 %v737, 127
    %v749 = vpop.permute.xlu0 %748
    %v754 = vadd.f32 %v546, %v743
    %v755 = vadd.f32 %v547, %v745
    %v756 = vadd.f32 %v548, %v747
    %v757 = vadd.f32 %v549, %v749
    %s758 = sld [smem:[#allocation2 + $0x2a]]
    %v759 = vstv %s758
    %v760 = vmul.f32 %v70, %v759
    %v761 = vmul.f32 %v71, %v759
    %v762 = vmul.f32 %v79, %v759
    %v763 = vmul.f32 %v80, %v759
    %768 = vrot.lane.b32.xlu0 %v760, 127
    %v769 = vpop.permute.xlu0 %768
    %770 = vrot.lane.b32.xlu0 %v761, 127
    %v771 = vpop.permute.xlu0 %770
    %772 = vrot.lane.b32.xlu0 %v762, 127
    %v773 = vpop.permute.xlu0 %772
    %774 = vrot.lane.b32.xlu0 %v763, 127
    %v775 = vpop.permute.xlu0 %774
    %v780 = vadd.f32 %v572, %v769
    %v781 = vadd.f32 %v573, %v771
    %v782 = vadd.f32 %v574, %v773
    %v783 = vadd.f32 %v575, %v775
    %s784 = sld [smem:[#allocation2 + $0x2b]]
    %v785 = vstv %s784
    %v786 = vmul.f32 %v70, %v785
    %v787 = vmul.f32 %v71, %v785
    %v788 = vmul.f32 %v79, %v785
    %v789 = vmul.f32 %v80, %v785
    %794 = vrot.lane.b32.xlu0 %v786, 127
    %v795 = vpop.permute.xlu0 %794
    %796 = vrot.lane.b32.xlu0 %v787, 127
    %v797 = vpop.permute.xlu0 %796
    %798 = vrot.lane.b32.xlu0 %v788, 127
    %v799 = vpop.permute.xlu0 %798
    %800 = vrot.lane.b32.xlu0 %v789, 127
    %v801 = vpop.permute.xlu0 %800
    %v806 = vadd.f32 %v598, %v795
    %v807 = vadd.f32 %v599, %v797
    %v808 = vadd.f32 %v600, %v799
    %v809 = vadd.f32 %v601, %v801
    %s810 = sld [smem:[#allocation2 + $0x2c]]
    %v811 = vstv %s810
    %v812 = vmul.f32 %v70, %v811
    %v813 = vmul.f32 %v71, %v811
    %v814 = vmul.f32 %v79, %v811
    %v815 = vmul.f32 %v80, %v811
    %820 = vrot.lane.b32.xlu0 %v812, 127
    %v821 = vpop.permute.xlu0 %820
    %822 = vrot.lane.b32.xlu0 %v813, 127
    %v823 = vpop.permute.xlu0 %822
    %824 = vrot.lane.b32.xlu0 %v814, 127
    %v825 = vpop.permute.xlu0 %824
    %826 = vrot.lane.b32.xlu0 %v815, 127
    %v827 = vpop.permute.xlu0 %826
    %v832 = vadd.f32 %v624, %v821
    %v833 = vadd.f32 %v625, %v823
    %v834 = vadd.f32 %v626, %v825
    %v835 = vadd.f32 %v627, %v827
    %s836 = sld [smem:[#allocation2 + $0x2d]]
    %v837 = vstv %s836
    %v838 = vmul.f32 %v70, %v837
    %v839 = vmul.f32 %v71, %v837
    %v840 = vmul.f32 %v79, %v837
    %v841 = vmul.f32 %v80, %v837
    %846 = vrot.lane.b32.xlu0 %v838, 127
    %v847 = vpop.permute.xlu0 %846
    %848 = vrot.lane.b32.xlu0 %v839, 127
    %v849 = vpop.permute.xlu0 %848
    %850 = vrot.lane.b32.xlu0 %v840, 127
    %v851 = vpop.permute.xlu0 %850
    %852 = vrot.lane.b32.xlu0 %v841, 127
    %v853 = vpop.permute.xlu0 %852
    %v858 = vadd.f32 %v650, %v847
    %v859 = vadd.f32 %v651, %v849
    %v860 = vadd.f32 %v652, %v851
    %v861 = vadd.f32 %v653, %v853
    %s862 = sld [smem:[#allocation2 + $0x2e]]
    %v863 = vstv %s862
    %v864 = vmul.f32 %v70, %v863
    %v865 = vmul.f32 %v71, %v863
    %v866 = vmul.f32 %v79, %v863
    %v867 = vmul.f32 %v80, %v863
    %872 = vrot.lane.b32.xlu0 %v864, 127
    %v873 = vpop.permute.xlu0 %872
    %874 = vrot.lane.b32.xlu0 %v865, 127
    %v875 = vpop.permute.xlu0 %874
    %876 = vrot.lane.b32.xlu0 %v866, 127
    %v877 = vpop.permute.xlu0 %876
    %878 = vrot.lane.b32.xlu0 %v867, 127
    %v879 = vpop.permute.xlu0 %878
    %v884 = vadd.f32 %v676, %v873
    %v885 = vadd.f32 %v677, %v875
    %v886 = vadd.f32 %v678, %v877
    %v887 = vadd.f32 %v679, %v879
    %s888 = sld [smem:[#allocation2 + $0x2f]]
    %v889 = vstv %s888
    %v890 = vmul.f32 %v70, %v889
    %v891 = vmul.f32 %v71, %v889
    %v892 = vmul.f32 %v79, %v889
    %v893 = vmul.f32 %v80, %v889
    %898 = vrot.lane.b32.xlu0 %v890, 127
    %v899 = vpop.permute.xlu0 %898
    %900 = vrot.lane.b32.xlu0 %v891, 127
    %v901 = vpop.permute.xlu0 %900
    %902 = vrot.lane.b32.xlu0 %v892, 127
    %v903 = vpop.permute.xlu0 %902
    %904 = vrot.lane.b32.xlu0 %v893, 127
    %v905 = vpop.permute.xlu0 %904
    %v910 = vadd.f32 %v702, %v899
    %v911 = vadd.f32 %v703, %v901
    %v912 = vadd.f32 %v704, %v903
    %v913 = vadd.f32 %v705, %v905
    %s914 = sld [smem:[#allocation2 + $0x30]]
    %v915 = vstv %s914
    %v916 = vmul.f32 %v64, %v915
    %v917 = vmul.f32 %v65, %v915
    %v918 = vmul.f32 %v73, %v915
    %v919 = vmul.f32 %v74, %v915
    %924 = vrot.lane.b32.xlu0 %v916, 126
    %v925 = vpop.permute.xlu0 %924
    %926 = vrot.lane.b32.xlu0 %v917, 126
    %v927 = vpop.permute.xlu0 %926
    %928 = vrot.lane.b32.xlu0 %v918, 126
    %v929 = vpop.permute.xlu0 %928
    %930 = vrot.lane.b32.xlu0 %v919, 126
    %v931 = vpop.permute.xlu0 %930
    %v936 = vadd.f32 %v728, %v925
    %v937 = vadd.f32 %v729, %v927
    %v938 = vadd.f32 %v730, %v929
    %v939 = vadd.f32 %v731, %v931
    %s940 = sld [smem:[#allocation2 + $0x31]]
    %v941 = vstv %s940
    %v942 = vmul.f32 %v64, %v941
    %v943 = vmul.f32 %v65, %v941
    %v944 = vmul.f32 %v73, %v941
    %v945 = vmul.f32 %v74, %v941
    %950 = vrot.lane.b32.xlu0 %v942, 126
    %v951 = vpop.permute.xlu0 %950
    %952 = vrot.lane.b32.xlu0 %v943, 126
    %v953 = vpop.permute.xlu0 %952
    %954 = vrot.lane.b32.xlu0 %v944, 126
    %v955 = vpop.permute.xlu0 %954
    %956 = vrot.lane.b32.xlu0 %v945, 126
    %v957 = vpop.permute.xlu0 %956
    %v962 = vadd.f32 %v754, %v951
    %v963 = vadd.f32 %v755, %v953
    %v964 = vadd.f32 %v756, %v955
    %v965 = vadd.f32 %v757, %v957
    %s966 = sld [smem:[#allocation2 + $0x32]]
    %v967 = vstv %s966
    %v968 = vmul.f32 %v64, %v967
    %v969 = vmul.f32 %v65, %v967
    %v970 = vmul.f32 %v73, %v967
    %v971 = vmul.f32 %v74, %v967
    %976 = vrot.lane.b32.xlu0 %v968, 126
    %v977 = vpop.permute.xlu0 %976
    %978 = vrot.lane.b32.xlu0 %v969, 126
    %v979 = vpop.permute.xlu0 %978
    %980 = vrot.lane.b32.xlu0 %v970, 126
    %v981 = vpop.permute.xlu0 %980
    %982 = vrot.lane.b32.xlu0 %v971, 126
    %v983 = vpop.permute.xlu0 %982
    %v988 = vadd.f32 %v780, %v977
    %v989 = vadd.f32 %v781, %v979
    %v990 = vadd.f32 %v782, %v981
    %v991 = vadd.f32 %v783, %v983
    %s992 = sld [smem:[#allocation2 + $0x33]]
    %v993 = vstv %s992
    %v994 = vmul.f32 %v64, %v993
    %v995 = vmul.f32 %v65, %v993
    %v996 = vmul.f32 %v73, %v993
    %v997 = vmul.f32 %v74, %v993
    %1002 = vrot.lane.b32.xlu0 %v994, 126
    %v1003 = vpop.permute.xlu0 %1002
    %1004 = vrot.lane.b32.xlu0 %v995, 126
    %v1005 = vpop.permute.xlu0 %1004
    %1006 = vrot.lane.b32.xlu0 %v996, 126
    %v1007 = vpop.permute.xlu0 %1006
    %1008 = vrot.lane.b32.xlu0 %v997, 126
    %v1009 = vpop.permute.xlu0 %1008
    %v1014 = vadd.f32 %v806, %v1003
    %v1015 = vadd.f32 %v807, %v1005
    %v1016 = vadd.f32 %v808, %v1007
    %v1017 = vadd.f32 %v809, %v1009
    %s1018 = sld [smem:[#allocation2 + $0x34]]
    %v1019 = vstv %s1018
    %v1020 = vmul.f32 %v64, %v1019
    %v1021 = vmul.f32 %v65, %v1019
    %v1022 = vmul.f32 %v73, %v1019
    %v1023 = vmul.f32 %v74, %v1019
    %1028 = vrot.lane.b32.xlu0 %v1020, 126
    %v1029 = vpop.permute.xlu0 %1028
    %1030 = vrot.lane.b32.xlu0 %v1021, 126
    %v1031 = vpop.permute.xlu0 %1030
    %1032 = vrot.lane.b32.xlu0 %v1022, 126
    %v1033 = vpop.permute.xlu0 %1032
    %1034 = vrot.lane.b32.xlu0 %v1023, 126
    %v1035 = vpop.permute.xlu0 %1034
    %v1040 = vadd.f32 %v832, %v1029
    %v1041 = vadd.f32 %v833, %v1031
    %v1042 = vadd.f32 %v834, %v1033
    %v1043 = vadd.f32 %v835, %v1035
    %s1044 = sld [smem:[#allocation2 + $0x35]]
    %v1045 = vstv %s1044
    %v1046 = vmul.f32 %v64, %v1045
    %v1047 = vmul.f32 %v65, %v1045
    %v1048 = vmul.f32 %v73, %v1045
    %v1049 = vmul.f32 %v74, %v1045
    %1054 = vrot.lane.b32.xlu0 %v1046, 126
    %v1055 = vpop.permute.xlu0 %1054
    %1056 = vrot.lane.b32.xlu0 %v1047, 126
    %v1057 = vpop.permute.xlu0 %1056
    %1058 = vrot.lane.b32.xlu0 %v1048, 126
    %v1059 = vpop.permute.xlu0 %1058
    %1060 = vrot.lane.b32.xlu0 %v1049, 126
    %v1061 = vpop.permute.xlu0 %1060
    %v1066 = vadd.f32 %v858, %v1055
    %v1067 = vadd.f32 %v859, %v1057
    %v1068 = vadd.f32 %v860, %v1059
    %v1069 = vadd.f32 %v861, %v1061
    %s1070 = sld [smem:[#allocation2 + $0x36]]
    %v1071 = vstv %s1070
    %v1072 = vmul.f32 %v64, %v1071
    %v1073 = vmul.f32 %v65, %v1071
    %v1074 = vmul.f32 %v73, %v1071
    %v1075 = vmul.f32 %v74, %v1071
    %1080 = vrot.lane.b32.xlu0 %v1072, 126
    %v1081 = vpop.permute.xlu0 %1080
    %1082 = vrot.lane.b32.xlu0 %v1073, 126
    %v1083 = vpop.permute.xlu0 %1082
    %1084 = vrot.lane.b32.xlu0 %v1074, 126
    %v1085 = vpop.permute.xlu0 %1084
    %1086 = vrot.lane.b32.xlu0 %v1075, 126
    %v1087 = vpop.permute.xlu0 %1086
    %v1092 = vadd.f32 %v884, %v1081
    %v1093 = vadd.f32 %v885, %v1083
    %v1094 = vadd.f32 %v886, %v1085
    %v1095 = vadd.f32 %v887, %v1087
    %s1096 = sld [smem:[#allocation2 + $0x37]]
    %v1097 = vstv %s1096
    %v1098 = vmul.f32 %v64, %v1097
    %v1099 = vmul.f32 %v65, %v1097
    %v1100 = vmul.f32 %v73, %v1097
    %v1101 = vmul.f32 %v74, %v1097
    %1106 = vrot.lane.b32.xlu0 %v1098, 126
    %v1107 = vpop.permute.xlu0 %1106
    %1108 = vrot.lane.b32.xlu0 %v1099, 126
    %v1109 = vpop.permute.xlu0 %1108
    %1110 = vrot.lane.b32.xlu0 %v1100, 126
    %v1111 = vpop.permute.xlu0 %1110
    %1112 = vrot.lane.b32.xlu0 %v1101, 126
    %v1113 = vpop.permute.xlu0 %1112
    %v1118 = vadd.f32 %v910, %v1107
    %v1119 = vadd.f32 %v911, %v1109
    %v1120 = vadd.f32 %v912, %v1111
    %v1121 = vadd.f32 %v913, %v1113
    %s1122 = sld [smem:[#allocation2 + $0x38]]
    %v1123 = vstv %s1122
    %v1124 = vmul.f32 %v67, %v1123
    %v1125 = vmul.f32 %v68, %v1123
    %v1126 = vmul.f32 %v76, %v1123
    %v1127 = vmul.f32 %v77, %v1123
    %1132 = vrot.lane.b32.xlu0 %v1124, 126
    %v1133 = vpop.permute.xlu0 %1132
    %1134 = vrot.lane.b32.xlu0 %v1125, 126
    %v1135 = vpop.permute.xlu0 %1134
    %1136 = vrot.lane.b32.xlu0 %v1126, 126
    %v1137 = vpop.permute.xlu0 %1136
    %1138 = vrot.lane.b32.xlu0 %v1127, 126
    %v1139 = vpop.permute.xlu0 %1138
    %v1144 = vadd.f32 %v936, %v1133
    %v1145 = vadd.f32 %v937, %v1135
    %v1146 = vadd.f32 %v938, %v1137
    %v1147 = vadd.f32 %v939, %v1139
    %s1148 = sld [smem:[#allocation2 + $0x39]]
    %v1149 = vstv %s1148
    %v1150 = vmul.f32 %v67, %v1149
    %v1151 = vmul.f32 %v68, %v1149
    %v1152 = vmul.f32 %v76, %v1149
    %v1153 = vmul.f32 %v77, %v1149
    %1158 = vrot.lane.b32.xlu0 %v1150, 126
    %v1159 = vpop.permute.xlu0 %1158
    %1160 = vrot.lane.b32.xlu0 %v1151, 126
    %v1161 = vpop.permute.xlu0 %1160
    %1162 = vrot.lane.b32.xlu0 %v1152, 126
    %v1163 = vpop.permute.xlu0 %1162
    %1164 = vrot.lane.b32.xlu0 %v1153, 126
    %v1165 = vpop.permute.xlu0 %1164
    %v1170 = vadd.f32 %v962, %v1159
    %v1171 = vadd.f32 %v963, %v1161
    %v1172 = vadd.f32 %v964, %v1163
    %v1173 = vadd.f32 %v965, %v1165
    %s1174 = sld [smem:[#allocation2 + $0x3a]]
    %v1175 = vstv %s1174
    %v1176 = vmul.f32 %v67, %v1175
    %v1177 = vmul.f32 %v68, %v1175
    %v1178 = vmul.f32 %v76, %v1175
    %v1179 = vmul.f32 %v77, %v1175
    %1184 = vrot.lane.b32.xlu0 %v1176, 126
    %v1185 = vpop.permute.xlu0 %1184
    %1186 = vrot.lane.b32.xlu0 %v1177, 126
    %v1187 = vpop.permute.xlu0 %1186
    %1188 = vrot.lane.b32.xlu0 %v1178, 126
    %v1189 = vpop.permute.xlu0 %1188
    %1190 = vrot.lane.b32.xlu0 %v1179, 126
    %v1191 = vpop.permute.xlu0 %1190
    %v1196 = vadd.f32 %v988, %v1185
    %v1197 = vadd.f32 %v989, %v1187
    %v1198 = vadd.f32 %v990, %v1189
    %v1199 = vadd.f32 %v991, %v1191
    %s1200 = sld [smem:[#allocation2 + $0x3b]]
    %v1201 = vstv %s1200
    %v1202 = vmul.f32 %v67, %v1201
    %v1203 = vmul.f32 %v68, %v1201
    %v1204 = vmul.f32 %v76, %v1201
    %v1205 = vmul.f32 %v77, %v1201
    %1210 = vrot.lane.b32.xlu0 %v1202, 126
    %v1211 = vpop.permute.xlu0 %1210
    %1212 = vrot.lane.b32.xlu0 %v1203, 126
    %v1213 = vpop.permute.xlu0 %1212
    %1214 = vrot.lane.b32.xlu0 %v1204, 126
    %v1215 = vpop.permute.xlu0 %1214
    %1216 = vrot.lane.b32.xlu0 %v1205, 126
    %v1217 = vpop.permute.xlu0 %1216
    %v1222 = vadd.f32 %v1014, %v1211
    %v1223 = vadd.f32 %v1015, %v1213
    %v1224 = vadd.f32 %v1016, %v1215
    %v1225 = vadd.f32 %v1017, %v1217
    %s1226 = sld [smem:[#allocation2 + $0x3c]]
    %v1227 = vstv %s1226
    %v1228 = vmul.f32 %v67, %v1227
    %v1229 = vmul.f32 %v68, %v1227
    %v1230 = vmul.f32 %v76, %v1227
    %v1231 = vmul.f32 %v77, %v1227
    %1236 = vrot.lane.b32.xlu0 %v1228, 126
    %v1237 = vpop.permute.xlu0 %1236
    %1238 = vrot.lane.b32.xlu0 %v1229, 126
    %v1239 = vpop.permute.xlu0 %1238
    %1240 = vrot.lane.b32.xlu0 %v1230, 126
    %v1241 = vpop.permute.xlu0 %1240
    %1242 = vrot.lane.b32.xlu0 %v1231, 126
    %v1243 = vpop.permute.xlu0 %1242
    %v1248 = vadd.f32 %v1040, %v1237
    %v1249 = vadd.f32 %v1041, %v1239
    %v1250 = vadd.f32 %v1042, %v1241
    %v1251 = vadd.f32 %v1043, %v1243
    %s1252 = sld [smem:[#allocation2 + $0x3d]]
    %v1253 = vstv %s1252
    %v1254 = vmul.f32 %v67, %v1253
    %v1255 = vmul.f32 %v68, %v1253
    %v1256 = vmul.f32 %v76, %v1253
    %v1257 = vmul.f32 %v77, %v1253
    %1262 = vrot.lane.b32.xlu0 %v1254, 126
    %v1263 = vpop.permute.xlu0 %1262
    %1264 = vrot.lane.b32.xlu0 %v1255, 126
    %v1265 = vpop.permute.xlu0 %1264
    %1266 = vrot.lane.b32.xlu0 %v1256, 126
    %v1267 = vpop.permute.xlu0 %1266
    %1268 = vrot.lane.b32.xlu0 %v1257, 126
    %v1269 = vpop.permute.xlu0 %1268
    %v1274 = vadd.f32 %v1066, %v1263
    %v1275 = vadd.f32 %v1067, %v1265
    %v1276 = vadd.f32 %v1068, %v1267
    %v1277 = vadd.f32 %v1069, %v1269
    %s1278 = sld [smem:[#allocation2 + $0x3e]]
    %v1279 = vstv %s1278
    %v1280 = vmul.f32 %v67, %v1279
    %v1281 = vmul.f32 %v68, %v1279
    %v1282 = vmul.f32 %v76, %v1279
    %v1283 = vmul.f32 %v77, %v1279
    %1288 = vrot.lane.b32.xlu0 %v1280, 126
    %v1289 = vpop.permute.xlu0 %1288
    %1290 = vrot.lane.b32.xlu0 %v1281, 126
    %v1291 = vpop.permute.xlu0 %1290
    %1292 = vrot.lane.b32.xlu0 %v1282, 126
    %v1293 = vpop.permute.xlu0 %1292
    %1294 = vrot.lane.b32.xlu0 %v1283, 126
    %v1295 = vpop.permute.xlu0 %1294
    %v1300 = vadd.f32 %v1092, %v1289
    %v1301 = vadd.f32 %v1093, %v1291
    %v1302 = vadd.f32 %v1094, %v1293
    %v1303 = vadd.f32 %v1095, %v1295
    %s1304 = sld [smem:[#allocation2 + $0x3f]]
    %v1305 = vstv %s1304
    %v1306 = vmul.f32 %v67, %v1305
    %v1307 = vmul.f32 %v68, %v1305
    %v1308 = vmul.f32 %v76, %v1305
    %v1309 = vmul.f32 %v77, %v1305
    %1314 = vrot.lane.b32.xlu0 %v1306, 126
    %v1315 = vpop.permute.xlu0 %1314
    %1316 = vrot.lane.b32.xlu0 %v1307, 126
    %v1317 = vpop.permute.xlu0 %1316
    %1318 = vrot.lane.b32.xlu0 %v1308, 126
    %v1319 = vpop.permute.xlu0 %1318
    %1320 = vrot.lane.b32.xlu0 %v1309, 126
    %v1321 = vpop.permute.xlu0 %1320
    %v1326 = vadd.f32 %v1118, %v1315
    %v1327 = vadd.f32 %v1119, %v1317
    %v1328 = vadd.f32 %v1120, %v1319
    %v1329 = vadd.f32 %v1121, %v1321
    %s1330 = sld [smem:[#allocation2 + $0x40]]
    %v1331 = vstv %s1330
    %v1332 = vmul.f32 %v70, %v1331
    %v1333 = vmul.f32 %v71, %v1331
    %v1334 = vmul.f32 %v79, %v1331
    %v1335 = vmul.f32 %v80, %v1331
    %1340 = vrot.lane.b32.xlu0 %v1332, 126
    %v1341 = vpop.permute.xlu0 %1340
    %1342 = vrot.lane.b32.xlu0 %v1333, 126
    %v1343 = vpop.permute.xlu0 %1342
    %1344 = vrot.lane.b32.xlu0 %v1334, 126
    %v1345 = vpop.permute.xlu0 %1344
    %1346 = vrot.lane.b32.xlu0 %v1335, 126
    %v1347 = vpop.permute.xlu0 %1346
    %v1352 = vadd.f32 %v1144, %v1341
    %v1353 = vadd.f32 %v1145, %v1343
    %v1354 = vadd.f32 %v1146, %v1345
    %v1355 = vadd.f32 %v1147, %v1347
    %s1356 = sld [smem:[#allocation2 + $0x41]]
    %v1357 = vstv %s1356
    %v1358 = vmul.f32 %v70, %v1357
    %v1359 = vmul.f32 %v71, %v1357
    %v1360 = vmul.f32 %v79, %v1357
    %v1361 = vmul.f32 %v80, %v1357
    %1366 = vrot.lane.b32.xlu0 %v1358, 126
    %v1367 = vpop.permute.xlu0 %1366
    %1368 = vrot.lane.b32.xlu0 %v1359, 126
    %v1369 = vpop.permute.xlu0 %1368
    %1370 = vrot.lane.b32.xlu0 %v1360, 126
    %v1371 = vpop.permute.xlu0 %1370
    %1372 = vrot.lane.b32.xlu0 %v1361, 126
    %v1373 = vpop.permute.xlu0 %1372
    %v1378 = vadd.f32 %v1170, %v1367
    %v1379 = vadd.f32 %v1171, %v1369
    %v1380 = vadd.f32 %v1172, %v1371
    %v1381 = vadd.f32 %v1173, %v1373
    %s1382 = sld [smem:[#allocation2 + $0x42]]
    %v1383 = vstv %s1382
    %v1384 = vmul.f32 %v70, %v1383
    %v1385 = vmul.f32 %v71, %v1383
    %v1386 = vmul.f32 %v79, %v1383
    %v1387 = vmul.f32 %v80, %v1383
    %1392 = vrot.lane.b32.xlu0 %v1384, 126
    %v1393 = vpop.permute.xlu0 %1392
    %1394 = vrot.lane.b32.xlu0 %v1385, 126
    %v1395 = vpop.permute.xlu0 %1394
    %1396 = vrot.lane.b32.xlu0 %v1386, 126
    %v1397 = vpop.permute.xlu0 %1396
    %1398 = vrot.lane.b32.xlu0 %v1387, 126
    %v1399 = vpop.permute.xlu0 %1398
    %v1404 = vadd.f32 %v1196, %v1393
    %v1405 = vadd.f32 %v1197, %v1395
    %v1406 = vadd.f32 %v1198, %v1397
    %v1407 = vadd.f32 %v1199, %v1399
    %s1408 = sld [smem:[#allocation2 + $0x43]]
    %v1409 = vstv %s1408
    %v1410 = vmul.f32 %v70, %v1409
    %v1411 = vmul.f32 %v71, %v1409
    %v1412 = vmul.f32 %v79, %v1409
    %v1413 = vmul.f32 %v80, %v1409
    %1418 = vrot.lane.b32.xlu0 %v1410, 126
    %v1419 = vpop.permute.xlu0 %1418
    %1420 = vrot.lane.b32.xlu0 %v1411, 126
    %v1421 = vpop.permute.xlu0 %1420
    %1422 = vrot.lane.b32.xlu0 %v1412, 126
    %v1423 = vpop.permute.xlu0 %1422
    %1424 = vrot.lane.b32.xlu0 %v1413, 126
    %v1425 = vpop.permute.xlu0 %1424
    %v1430 = vadd.f32 %v1222, %v1419
    %v1431 = vadd.f32 %v1223, %v1421
    %v1432 = vadd.f32 %v1224, %v1423
    %v1433 = vadd.f32 %v1225, %v1425
    %s1434 = sld [smem:[#allocation2 + $0x44]]
    %v1435 = vstv %s1434
    %v1436 = vmul.f32 %v70, %v1435
    %v1437 = vmul.f32 %v71, %v1435
    %v1438 = vmul.f32 %v79, %v1435
    %v1439 = vmul.f32 %v80, %v1435
    %1444 = vrot.lane.b32.xlu0 %v1436, 126
    %v1445 = vpop.permute.xlu0 %1444
    %1446 = vrot.lane.b32.xlu0 %v1437, 126
    %v1447 = vpop.permute.xlu0 %1446
    %1448 = vrot.lane.b32.xlu0 %v1438, 126
    %v1449 = vpop.permute.xlu0 %1448
    %1450 = vrot.lane.b32.xlu0 %v1439, 126
    %v1451 = vpop.permute.xlu0 %1450
    %v1456 = vadd.f32 %v1248, %v1445
    %v1457 = vadd.f32 %v1249, %v1447
    %v1458 = vadd.f32 %v1250, %v1449
    %v1459 = vadd.f32 %v1251, %v1451
    %s1460 = sld [smem:[#allocation2 + $0x45]]
    %v1461 = vstv %s1460
    %v1462 = vmul.f32 %v70, %v1461
    %v1463 = vmul.f32 %v71, %v1461
    %v1464 = vmul.f32 %v79, %v1461
    %v1465 = vmul.f32 %v80, %v1461
    %1470 = vrot.lane.b32.xlu0 %v1462, 126
    %v1471 = vpop.permute.xlu0 %1470
    %1472 = vrot.lane.b32.xlu0 %v1463, 126
    %v1473 = vpop.permute.xlu0 %1472
    %1474 = vrot.lane.b32.xlu0 %v1464, 126
    %v1475 = vpop.permute.xlu0 %1474
    %1476 = vrot.lane.b32.xlu0 %v1465, 126
    %v1477 = vpop.permute.xlu0 %1476
    %v1482 = vadd.f32 %v1274, %v1471
    %v1483 = vadd.f32 %v1275, %v1473
    %v1484 = vadd.f32 %v1276, %v1475
    %v1485 = vadd.f32 %v1277, %v1477
    %s1486 = sld [smem:[#allocation2 + $0x46]]
    %v1487 = vstv %s1486
    %v1488 = vmul.f32 %v70, %v1487
    %v1489 = vmul.f32 %v71, %v1487
    %v1490 = vmul.f32 %v79, %v1487
    %v1491 = vmul.f32 %v80, %v1487
    %1496 = vrot.lane.b32.xlu0 %v1488, 126
    %v1497 = vpop.permute.xlu0 %1496
    %1498 = vrot.lane.b32.xlu0 %v1489, 126
    %v1499 = vpop.permute.xlu0 %1498
    %1500 = vrot.lane.b32.xlu0 %v1490, 126
    %v1501 = vpop.permute.xlu0 %1500
    %1502 = vrot.lane.b32.xlu0 %v1491, 126
    %v1503 = vpop.permute.xlu0 %1502
    %v1508 = vadd.f32 %v1300, %v1497
    %v1509 = vadd.f32 %v1301, %v1499
    %v1510 = vadd.f32 %v1302, %v1501
    %v1511 = vadd.f32 %v1303, %v1503
    %s1512 = sld [smem:[#allocation2 + $0x47]]
    %v1513 = vstv %s1512
    %v1514 = vmul.f32 %v70, %v1513
    %v1515 = vmul.f32 %v71, %v1513
    %v1516 = vmul.f32 %v79, %v1513
    %v1517 = vmul.f32 %v80, %v1513
    %1522 = vrot.lane.b32.xlu0 %v1514, 126
    %v1523 = vpop.permute.xlu0 %1522
    %1524 = vrot.lane.b32.xlu0 %v1515, 126
    %v1525 = vpop.permute.xlu0 %1524
    %1526 = vrot.lane.b32.xlu0 %v1516, 126
    %v1527 = vpop.permute.xlu0 %1526
    %1528 = vrot.lane.b32.xlu0 %v1517, 126
    %v1529 = vpop.permute.xlu0 %1528
    %v1534 = vadd.f32 %v1326, %v1523
    %v1535 = vadd.f32 %v1327, %v1525
    %v1536 = vadd.f32 %v1328, %v1527
    %v1537 = vadd.f32 %v1329, %v1529
    %s1538 = sld [smem:[#allocation2 + $0x48]]
    %v1539 = vstv %s1538
    %v1540 = vmul.f32 %v64, %v1539
    %v1541 = vmul.f32 %v65, %v1539
    %v1542 = vmul.f32 %v66, %v1539
    %v1543 = vmul.f32 %v73, %v1539
    %v1544 = vmul.f32 %v74, %v1539
    %v1545 = vmul.f32 %v75, %v1539
    %vm1552 = vcmask 1046528
    %v1553 = vrot.slane %v1540, 1
    %v1554 = vrot.slane %v1541, 1
    %v1555 = vsel %vm1552, %v1553, %v1554
    %v1556 = vrot.slane %v1542, 1
    %v1557 = vsel %vm1552, %v1554, %v1556
    %v1558 = vrot.slane %v1543, 1
    %v1559 = vrot.slane %v1544, 1
    %v1560 = vsel %vm1552, %v1558, %v1559
    %v1561 = vrot.slane %v1545, 1
    %v1562 = vsel %vm1552, %v1559, %v1561
    %v1567 = vadd.f32 %v1352, %v1555
    %v1568 = vadd.f32 %v1353, %v1557
    %v1569 = vadd.f32 %v1354, %v1560
    %v1570 = vadd.f32 %v1355, %v1562
    %s1571 = sld [smem:[#allocation2 + $0x49]]
    %v1572 = vstv %s1571
    %v1573 = vmul.f32 %v64, %v1572
    %v1574 = vmul.f32 %v65, %v1572
    %v1575 = vmul.f32 %v66, %v1572
    %v1576 = vmul.f32 %v73, %v1572
    %v1577 = vmul.f32 %v74, %v1572
    %v1578 = vmul.f32 %v75, %v1572
    %v1585 = vrot.slane %v1573, 1
    %v1586 = vrot.slane %v1574, 1
    %v1587 = vsel %vm1552, %v1585, %v1586
    %v1588 = vrot.slane %v1575, 1
    %v1589 = vsel %vm1552, %v1586, %v1588
    %v1590 = vrot.slane %v1576, 1
    %v1591 = vrot.slane %v1577, 1
    %v1592 = vsel %vm1552, %v1590, %v1591
    %v1593 = vrot.slane %v1578, 1
    %v1594 = vsel %vm1552, %v1591, %v1593
    %v1599 = vadd.f32 %v1378, %v1587
    %v1600 = vadd.f32 %v1379, %v1589
    %v1601 = vadd.f32 %v1380, %v1592
    %v1602 = vadd.f32 %v1381, %v1594
    %s1603 = sld [smem:[#allocation2 + $0x4a]]
    %v1604 = vstv %s1603
    %v1605 = vmul.f32 %v64, %v1604
    %v1606 = vmul.f32 %v65, %v1604
    %v1607 = vmul.f32 %v66, %v1604
    %v1608 = vmul.f32 %v73, %v1604
    %v1609 = vmul.f32 %v74, %v1604
    %v1610 = vmul.f32 %v75, %v1604
    %v1617 = vrot.slane %v1605, 1
    %v1618 = vrot.slane %v1606, 1
    %v1619 = vsel %vm1552, %v1617, %v1618
    %v1620 = vrot.slane %v1607, 1
    %v1621 = vsel %vm1552, %v1618, %v1620
    %v1622 = vrot.slane %v1608, 1
    %v1623 = vrot.slane %v1609, 1
    %v1624 = vsel %vm1552, %v1622, %v1623
    %v1625 = vrot.slane %v1610, 1
    %v1626 = vsel %vm1552, %v1623, %v1625
    %v1631 = vadd.f32 %v1404, %v1619
    %v1632 = vadd.f32 %v1405, %v1621
    %v1633 = vadd.f32 %v1406, %v1624
    %v1634 = vadd.f32 %v1407, %v1626
    %s1635 = sld [smem:[#allocation2 + $0x4b]]
    %v1636 = vstv %s1635
    %v1637 = vmul.f32 %v64, %v1636
    %v1638 = vmul.f32 %v65, %v1636
    %v1639 = vmul.f32 %v66, %v1636
    %v1640 = vmul.f32 %v73, %v1636
    %v1641 = vmul.f32 %v74, %v1636
    %v1642 = vmul.f32 %v75, %v1636
    %v1649 = vrot.slane %v1637, 1
    %v1650 = vrot.slane %v1638, 1
    %v1651 = vsel %vm1552, %v1649, %v1650
    %v1652 = vrot.slane %v1639, 1
    %v1653 = vsel %vm1552, %v1650, %v1652
    %v1654 = vrot.slane %v1640, 1
    %v1655 = vrot.slane %v1641, 1
    %v1656 = vsel %vm1552, %v1654, %v1655
    %v1657 = vrot.slane %v1642, 1
    %v1658 = vsel %vm1552, %v1655, %v1657
    %v1663 = vadd.f32 %v1430, %v1651
    %v1664 = vadd.f32 %v1431, %v1653
    %v1665 = vadd.f32 %v1432, %v1656
    %v1666 = vadd.f32 %v1433, %v1658
    %s1667 = sld [smem:[#allocation2 + $0x4c]]
    %v1668 = vstv %s1667
    %v1669 = vmul.f32 %v64, %v1668
    %v1670 = vmul.f32 %v65, %v1668
    %v1671 = vmul.f32 %v66, %v1668
    %v1672 = vmul.f32 %v73, %v1668
    %v1673 = vmul.f32 %v74, %v1668
    %v1674 = vmul.f32 %v75, %v1668
    %v1681 = vrot.slane %v1669, 1
    %v1682 = vrot.slane %v1670, 1
    %v1683 = vsel %vm1552, %v1681, %v1682
    %v1684 = vrot.slane %v1671, 1
    %v1685 = vsel %vm1552, %v1682, %v1684
    %v1686 = vrot.slane %v1672, 1
    %v1687 = vrot.slane %v1673, 1
    %v1688 = vsel %vm1552, %v1686, %v1687
    %v1689 = vrot.slane %v1674, 1
    %v1690 = vsel %vm1552, %v1687, %v1689
    %v1695 = vadd.f32 %v1456, %v1683
    %v1696 = vadd.f32 %v1457, %v1685
    %v1697 = vadd.f32 %v1458, %v1688
    %v1698 = vadd.f32 %v1459, %v1690
    %s1699 = sld [smem:[#allocation2 + $0x4d]]
    %v1700 = vstv %s1699
    %v1701 = vmul.f32 %v64, %v1700
    %v1702 = vmul.f32 %v65, %v1700
    %v1703 = vmul.f32 %v66, %v1700
    %v1704 = vmul.f32 %v73, %v1700
    %v1705 = vmul.f32 %v74, %v1700
    %v1706 = vmul.f32 %v75, %v1700
    %v1713 = vrot.slane %v1701, 1
    %v1714 = vrot.slane %v1702, 1
    %v1715 = vsel %vm1552, %v1713, %v1714
    %v1716 = vrot.slane %v1703, 1
    %v1717 = vsel %vm1552, %v1714, %v1716
    %v1718 = vrot.slane %v1704, 1
    %v1719 = vrot.slane %v1705, 1
    %v1720 = vsel %vm1552, %v1718, %v1719
    %v1721 = vrot.slane %v1706, 1
    %v1722 = vsel %vm1552, %v1719, %v1721
    %v1727 = vadd.f32 %v1482, %v1715
    %v1728 = vadd.f32 %v1483, %v1717
    %v1729 = vadd.f32 %v1484, %v1720
    %v1730 = vadd.f32 %v1485, %v1722
    %s1731 = sld [smem:[#allocation2 + $0x4e]]
    %v1732 = vstv %s1731
    %v1733 = vmul.f32 %v64, %v1732
    %v1734 = vmul.f32 %v65, %v1732
    %v1735 = vmul.f32 %v66, %v1732
    %v1736 = vmul.f32 %v73, %v1732
    %v1737 = vmul.f32 %v74, %v1732
    %v1738 = vmul.f32 %v75, %v1732
    %v1745 = vrot.slane %v1733, 1
    %v1746 = vrot.slane %v1734, 1
    %v1747 = vsel %vm1552, %v1745, %v1746
    %v1748 = vrot.slane %v1735, 1
    %v1749 = vsel %vm1552, %v1746, %v1748
    %v1750 = vrot.slane %v1736, 1
    %v1751 = vrot.slane %v1737, 1
    %v1752 = vsel %vm1552, %v1750, %v1751
    %v1753 = vrot.slane %v1738, 1
    %v1754 = vsel %vm1552, %v1751, %v1753
    %v1759 = vadd.f32 %v1508, %v1747
    %v1760 = vadd.f32 %v1509, %v1749
    %v1761 = vadd.f32 %v1510, %v1752
    %v1762 = vadd.f32 %v1511, %v1754
    %s1763 = sld [smem:[#allocation2 + $0x4f]]
    %v1764 = vstv %s1763
    %v1765 = vmul.f32 %v64, %v1764
    %v1766 = vmul.f32 %v65, %v1764
    %v1767 = vmul.f32 %v66, %v1764
    %v1768 = vmul.f32 %v73, %v1764
    %v1769 = vmul.f32 %v74, %v1764
    %v1770 = vmul.f32 %v75, %v1764
    %v1777 = vrot.slane %v1765, 1
    %v1778 = vrot.slane %v1766, 1
    %v1779 = vsel %vm1552, %v1777, %v1778
    %v1780 = vrot.slane %v1767, 1
    %v1781 = vsel %vm1552, %v1778, %v1780
    %v1782 = vrot.slane %v1768, 1
    %v1783 = vrot.slane %v1769, 1
    %v1784 = vsel %vm1552, %v1782, %v1783
    %v1785 = vrot.slane %v1770, 1
    %v1786 = vsel %vm1552, %v1783, %v1785
    %v1791 = vadd.f32 %v1534, %v1779
    %v1792 = vadd.f32 %v1535, %v1781
    %v1793 = vadd.f32 %v1536, %v1784
    %v1794 = vadd.f32 %v1537, %v1786
    %s1795 = sld [smem:[#allocation2 + $0x50]]
    %v1796 = vstv %s1795
    %v1797 = vmul.f32 %v67, %v1796
    %v1798 = vmul.f32 %v68, %v1796
    %v1799 = vmul.f32 %v69, %v1796
    %v1800 = vmul.f32 %v76, %v1796
    %v1801 = vmul.f32 %v77, %v1796
    %v1802 = vmul.f32 %v78, %v1796
    %v1809 = vrot.slane %v1797, 1
    %v1810 = vrot.slane %v1798, 1
    %v1811 = vsel %vm1552, %v1809, %v1810
    %v1812 = vrot.slane %v1799, 1
    %v1813 = vsel %vm1552, %v1810, %v1812
    %v1814 = vrot.slane %v1800, 1
    %v1815 = vrot.slane %v1801, 1
    %v1816 = vsel %vm1552, %v1814, %v1815
    %v1817 = vrot.slane %v1802, 1
    %v1818 = vsel %vm1552, %v1815, %v1817
    %v1823 = vadd.f32 %v1567, %v1811
    %v1824 = vadd.f32 %v1568, %v1813
    %v1825 = vadd.f32 %v1569, %v1816
    %v1826 = vadd.f32 %v1570, %v1818
    %s1827 = sld [smem:[#allocation2 + $0x51]]
    %v1828 = vstv %s1827
    %v1829 = vmul.f32 %v67, %v1828
    %v1830 = vmul.f32 %v68, %v1828
    %v1831 = vmul.f32 %v69, %v1828
    %v1832 = vmul.f32 %v76, %v1828
    %v1833 = vmul.f32 %v77, %v1828
    %v1834 = vmul.f32 %v78, %v1828
    %v1841 = vrot.slane %v1829, 1
    %v1842 = vrot.slane %v1830, 1
    %v1843 = vsel %vm1552, %v1841, %v1842
    %v1844 = vrot.slane %v1831, 1
    %v1845 = vsel %vm1552, %v1842, %v1844
    %v1846 = vrot.slane %v1832, 1
    %v1847 = vrot.slane %v1833, 1
    %v1848 = vsel %vm1552, %v1846, %v1847
    %v1849 = vrot.slane %v1834, 1
    %v1850 = vsel %vm1552, %v1847, %v1849
    %v1855 = vadd.f32 %v1599, %v1843
    %v1856 = vadd.f32 %v1600, %v1845
    %v1857 = vadd.f32 %v1601, %v1848
    %v1858 = vadd.f32 %v1602, %v1850
    %s1859 = sld [smem:[#allocation2 + $0x52]]
    %v1860 = vstv %s1859
    %v1861 = vmul.f32 %v67, %v1860
    %v1862 = vmul.f32 %v68, %v1860
    %v1863 = vmul.f32 %v69, %v1860
    %v1864 = vmul.f32 %v76, %v1860
    %v1865 = vmul.f32 %v77, %v1860
    %v1866 = vmul.f32 %v78, %v1860
    %v1873 = vrot.slane %v1861, 1
    %v1874 = vrot.slane %v1862, 1
    %v1875 = vsel %vm1552, %v1873, %v1874
    %v1876 = vrot.slane %v1863, 1
    %v1877 = vsel %vm1552, %v1874, %v1876
    %v1878 = vrot.slane %v1864, 1
    %v1879 = vrot.slane %v1865, 1
    %v1880 = vsel %vm1552, %v1878, %v1879
    %v1881 = vrot.slane %v1866, 1
    %v1882 = vsel %vm1552, %v1879, %v1881
    %v1887 = vadd.f32 %v1631, %v1875
    %v1888 = vadd.f32 %v1632, %v1877
    %v1889 = vadd.f32 %v1633, %v1880
    %v1890 = vadd.f32 %v1634, %v1882
    %s1891 = sld [smem:[#allocation2 + $0x53]]
    %v1892 = vstv %s1891
    %v1893 = vmul.f32 %v67, %v1892
    %v1894 = vmul.f32 %v68, %v1892
    %v1895 = vmul.f32 %v69, %v1892
    %v1896 = vmul.f32 %v76, %v1892
    %v1897 = vmul.f32 %v77, %v1892
    %v1898 = vmul.f32 %v78, %v1892
    %v1905 = vrot.slane %v1893, 1
    %v1906 = vrot.slane %v1894, 1
    %v1907 = vsel %vm1552, %v1905, %v1906
    %v1908 = vrot.slane %v1895, 1
    %v1909 = vsel %vm1552, %v1906, %v1908
    %v1910 = vrot.slane %v1896, 1
    %v1911 = vrot.slane %v1897, 1
    %v1912 = vsel %vm1552, %v1910, %v1911
    %v1913 = vrot.slane %v1898, 1
    %v1914 = vsel %vm1552, %v1911, %v1913
    %v1919 = vadd.f32 %v1663, %v1907
    %v1920 = vadd.f32 %v1664, %v1909
    %v1921 = vadd.f32 %v1665, %v1912
    %v1922 = vadd.f32 %v1666, %v1914
    %s1923 = sld [smem:[#allocation2 + $0x54]]
    %v1924 = vstv %s1923
    %v1925 = vmul.f32 %v67, %v1924
    %v1926 = vmul.f32 %v68, %v1924
    %v1927 = vmul.f32 %v69, %v1924
    %v1928 = vmul.f32 %v76, %v1924
    %v1929 = vmul.f32 %v77, %v1924
    %v1930 = vmul.f32 %v78, %v1924
    %v1937 = vrot.slane %v1925, 1
    %v1938 = vrot.slane %v1926, 1
    %v1939 = vsel %vm1552, %v1937, %v1938
    %v1940 = vrot.slane %v1927, 1
    %v1941 = vsel %vm1552, %v1938, %v1940
    %v1942 = vrot.slane %v1928, 1
    %v1943 = vrot.slane %v1929, 1
    %v1944 = vsel %vm1552, %v1942, %v1943
    %v1945 = vrot.slane %v1930, 1
    %v1946 = vsel %vm1552, %v1943, %v1945
    %v1951 = vadd.f32 %v1695, %v1939
    %v1952 = vadd.f32 %v1696, %v1941
    %v1953 = vadd.f32 %v1697, %v1944
    %v1954 = vadd.f32 %v1698, %v1946
    %s1955 = sld [smem:[#allocation2 + $0x55]]
    %v1956 = vstv %s1955
    %v1957 = vmul.f32 %v67, %v1956
    %v1958 = vmul.f32 %v68, %v1956
    %v1959 = vmul.f32 %v69, %v1956
    %v1960 = vmul.f32 %v76, %v1956
    %v1961 = vmul.f32 %v77, %v1956
    %v1962 = vmul.f32 %v78, %v1956
    %v1969 = vrot.slane %v1957, 1
    %v1970 = vrot.slane %v1958, 1
    %v1971 = vsel %vm1552, %v1969, %v1970
    %v1972 = vrot.slane %v1959, 1
    %v1973 = vsel %vm1552, %v1970, %v1972
    %v1974 = vrot.slane %v1960, 1
    %v1975 = vrot.slane %v1961, 1
    %v1976 = vsel %vm1552, %v1974, %v1975
    %v1977 = vrot.slane %v1962, 1
    %v1978 = vsel %vm1552, %v1975, %v1977
    %v1983 = vadd.f32 %v1727, %v1971
    %v1984 = vadd.f32 %v1728, %v1973
    %v1985 = vadd.f32 %v1729, %v1976
    %v1986 = vadd.f32 %v1730, %v1978
    %s1987 = sld [smem:[#allocation2 + $0x56]]
    %v1988 = vstv %s1987
    %v1989 = vmul.f32 %v67, %v1988
    %v1990 = vmul.f32 %v68, %v1988
    %v1991 = vmul.f32 %v69, %v1988
    %v1992 = vmul.f32 %v76, %v1988
    %v1993 = vmul.f32 %v77, %v1988
    %v1994 = vmul.f32 %v78, %v1988
    %v2001 = vrot.slane %v1989, 1
    %v2002 = vrot.slane %v1990, 1
    %v2003 = vsel %vm1552, %v2001, %v2002
    %v2004 = vrot.slane %v1991, 1
    %v2005 = vsel %vm1552, %v2002, %v2004
    %v2006 = vrot.slane %v1992, 1
    %v2007 = vrot.slane %v1993, 1
    %v2008 = vsel %vm1552, %v2006, %v2007
    %v2009 = vrot.slane %v1994, 1
    %v2010 = vsel %vm1552, %v2007, %v2009
    %v2015 = vadd.f32 %v1759, %v2003
    %v2016 = vadd.f32 %v1760, %v2005
    %v2017 = vadd.f32 %v1761, %v2008
    %v2018 = vadd.f32 %v1762, %v2010
    %s2019 = sld [smem:[#allocation2 + $0x57]]
    %v2020 = vstv %s2019
    %v2021 = vmul.f32 %v67, %v2020
    %v2022 = vmul.f32 %v68, %v2020
    %v2023 = vmul.f32 %v69, %v2020
    %v2024 = vmul.f32 %v76, %v2020
    %v2025 = vmul.f32 %v77, %v2020
    %v2026 = vmul.f32 %v78, %v2020
    %v2033 = vrot.slane %v2021, 1
    %v2034 = vrot.slane %v2022, 1
    %v2035 = vsel %vm1552, %v2033, %v2034
    %v2036 = vrot.slane %v2023, 1
    %v2037 = vsel %vm1552, %v2034, %v2036
    %v2038 = vrot.slane %v2024, 1
    %v2039 = vrot.slane %v2025, 1
    %v2040 = vsel %vm1552, %v2038, %v2039
    %v2041 = vrot.slane %v2026, 1
    %v2042 = vsel %vm1552, %v2039, %v2041
    %v2047 = vadd.f32 %v1791, %v2035
    %v2048 = vadd.f32 %v1792, %v2037
    %v2049 = vadd.f32 %v1793, %v2040
    %v2050 = vadd.f32 %v1794, %v2042
    %s2051 = sld [smem:[#allocation2 + $0x58]]
    %v2052 = vstv %s2051
    %v2053 = vmul.f32 %v70, %v2052
    %v2054 = vmul.f32 %v71, %v2052
    %v2055 = vmul.f32 %v72, %v2052
    %v2056 = vmul.f32 %v79, %v2052
    %v2057 = vmul.f32 %v80, %v2052
    %v2058 = vmul.f32 %v81, %v2052
    %v2065 = vrot.slane %v2053, 1
    %v2066 = vrot.slane %v2054, 1
    %v2067 = vsel %vm1552, %v2065, %v2066
    %v2068 = vrot.slane %v2055, 1
    %v2069 = vsel %vm1552, %v2066, %v2068
    %v2070 = vrot.slane %v2056, 1
    %v2071 = vrot.slane %v2057, 1
    %v2072 = vsel %vm1552, %v2070, %v2071
    %v2073 = vrot.slane %v2058, 1
    %v2074 = vsel %vm1552, %v2071, %v2073
    %v2079 = vadd.f32 %v1823, %v2067
    %v2080 = vadd.f32 %v1824, %v2069
    %v2081 = vadd.f32 %v1825, %v2072
    %v2082 = vadd.f32 %v1826, %v2074
    %s2083 = sld [smem:[#allocation2 + $0x59]]
    %v2084 = vstv %s2083
    %v2085 = vmul.f32 %v70, %v2084
    %v2086 = vmul.f32 %v71, %v2084
    %v2087 = vmul.f32 %v72, %v2084
    %v2088 = vmul.f32 %v79, %v2084
    %v2089 = vmul.f32 %v80, %v2084
    %v2090 = vmul.f32 %v81, %v2084
    %v2097 = vrot.slane %v2085, 1
    %v2098 = vrot.slane %v2086, 1
    %v2099 = vsel %vm1552, %v2097, %v2098
    %v2100 = vrot.slane %v2087, 1
    %v2101 = vsel %vm1552, %v2098, %v2100
    %v2102 = vrot.slane %v2088, 1
    %v2103 = vrot.slane %v2089, 1
    %v2104 = vsel %vm1552, %v2102, %v2103
    %v2105 = vrot.slane %v2090, 1
    %v2106 = vsel %vm1552, %v2103, %v2105
    %v2111 = vadd.f32 %v1855, %v2099
    %v2112 = vadd.f32 %v1856, %v2101
    %v2113 = vadd.f32 %v1857, %v2104
    %v2114 = vadd.f32 %v1858, %v2106
    %s2115 = sld [smem:[#allocation2 + $0x5a]]
    %v2116 = vstv %s2115
    %v2117 = vmul.f32 %v70, %v2116
    %v2118 = vmul.f32 %v71, %v2116
    %v2119 = vmul.f32 %v72, %v2116
    %v2120 = vmul.f32 %v79, %v2116
    %v2121 = vmul.f32 %v80, %v2116
    %v2122 = vmul.f32 %v81, %v2116
    %v2129 = vrot.slane %v2117, 1
    %v2130 = vrot.slane %v2118, 1
    %v2131 = vsel %vm1552, %v2129, %v2130
    %v2132 = vrot.slane %v2119, 1
    %v2133 = vsel %vm1552, %v2130, %v2132
    %v2134 = vrot.slane %v2120, 1
    %v2135 = vrot.slane %v2121, 1
    %v2136 = vsel %vm1552, %v2134, %v2135
    %v2137 = vrot.slane %v2122, 1
    %v2138 = vsel %vm1552, %v2135, %v2137
    %v2143 = vadd.f32 %v1887, %v2131
    %v2144 = vadd.f32 %v1888, %v2133
    %v2145 = vadd.f32 %v1889, %v2136
    %v2146 = vadd.f32 %v1890, %v2138
    %s2147 = sld [smem:[#allocation2 + $0x5b]]
    %v2148 = vstv %s2147
    %v2149 = vmul.f32 %v70, %v2148
    %v2150 = vmul.f32 %v71, %v2148
    %v2151 = vmul.f32 %v72, %v2148
    %v2152 = vmul.f32 %v79, %v2148
    %v2153 = vmul.f32 %v80, %v2148
    %v2154 = vmul.f32 %v81, %v2148
    %v2161 = vrot.slane %v2149, 1
    %v2162 = vrot.slane %v2150, 1
    %v2163 = vsel %vm1552, %v2161, %v2162
    %v2164 = vrot.slane %v2151, 1
    %v2165 = vsel %vm1552, %v2162, %v2164
    %v2166 = vrot.slane %v2152, 1
    %v2167 = vrot.slane %v2153, 1
    %v2168 = vsel %vm1552, %v2166, %v2167
    %v2169 = vrot.slane %v2154, 1
    %v2170 = vsel %vm1552, %v2167, %v2169
    %v2175 = vadd.f32 %v1919, %v2163
    %v2176 = vadd.f32 %v1920, %v2165
    %v2177 = vadd.f32 %v1921, %v2168
    %v2178 = vadd.f32 %v1922, %v2170
    %s2179 = sld [smem:[#allocation2 + $0x5c]]
    %v2180 = vstv %s2179
    %v2181 = vmul.f32 %v70, %v2180
    %v2182 = vmul.f32 %v71, %v2180
    %v2183 = vmul.f32 %v72, %v2180
    %v2184 = vmul.f32 %v79, %v2180
    %v2185 = vmul.f32 %v80, %v2180
    %v2186 = vmul.f32 %v81, %v2180
    %v2193 = vrot.slane %v2181, 1
    %v2194 = vrot.slane %v2182, 1
    %v2195 = vsel %vm1552, %v2193, %v2194
    %v2196 = vrot.slane %v2183, 1
    %v2197 = vsel %vm1552, %v2194, %v2196
    %v2198 = vrot.slane %v2184, 1
    %v2199 = vrot.slane %v2185, 1
    %v2200 = vsel %vm1552, %v2198, %v2199
    %v2201 = vrot.slane %v2186, 1
    %v2202 = vsel %vm1552, %v2199, %v2201
    %v2207 = vadd.f32 %v1951, %v2195
    %v2208 = vadd.f32 %v1952, %v2197
    %v2209 = vadd.f32 %v1953, %v2200
    %v2210 = vadd.f32 %v1954, %v2202
    %s2211 = sld [smem:[#allocation2 + $0x5d]]
    %v2212 = vstv %s2211
    %v2213 = vmul.f32 %v70, %v2212
    %v2214 = vmul.f32 %v71, %v2212
    %v2215 = vmul.f32 %v72, %v2212
    %v2216 = vmul.f32 %v79, %v2212
    %v2217 = vmul.f32 %v80, %v2212
    %v2218 = vmul.f32 %v81, %v2212
    %v2225 = vrot.slane %v2213, 1
    %v2226 = vrot.slane %v2214, 1
    %v2227 = vsel %vm1552, %v2225, %v2226
    %v2228 = vrot.slane %v2215, 1
    %v2229 = vsel %vm1552, %v2226, %v2228
    %v2230 = vrot.slane %v2216, 1
    %v2231 = vrot.slane %v2217, 1
    %v2232 = vsel %vm1552, %v2230, %v2231
    %v2233 = vrot.slane %v2218, 1
    %v2234 = vsel %vm1552, %v2231, %v2233
    %v2239 = vadd.f32 %v1983, %v2227
    %v2240 = vadd.f32 %v1984, %v2229
    %v2241 = vadd.f32 %v1985, %v2232
    %v2242 = vadd.f32 %v1986, %v2234
    %s2243 = sld [smem:[#allocation2 + $0x5e]]
    %v2244 = vstv %s2243
    %v2245 = vmul.f32 %v70, %v2244
    %v2246 = vmul.f32 %v71, %v2244
    %v2247 = vmul.f32 %v72, %v2244
    %v2248 = vmul.f32 %v79, %v2244
    %v2249 = vmul.f32 %v80, %v2244
    %v2250 = vmul.f32 %v81, %v2244
    %v2257 = vrot.slane %v2245, 1
    %v2258 = vrot.slane %v2246, 1
    %v2259 = vsel %vm1552, %v2257, %v2258
    %v2260 = vrot.slane %v2247, 1
    %v2261 = vsel %vm1552, %v2258, %v2260
    %v2262 = vrot.slane %v2248, 1
    %v2263 = vrot.slane %v2249, 1
    %v2264 = vsel %vm1552, %v2262, %v2263
    %v2265 = vrot.slane %v2250, 1
    %v2266 = vsel %vm1552, %v2263, %v2265
    %v2271 = vadd.f32 %v2015, %v2259
    %v2272 = vadd.f32 %v2016, %v2261
    %v2273 = vadd.f32 %v2017, %v2264
    %v2274 = vadd.f32 %v2018, %v2266
    %s2275 = sld [smem:[#allocation2 + $0x5f]]
    %v2276 = vstv %s2275
    %v2277 = vmul.f32 %v70, %v2276
    %v2278 = vmul.f32 %v71, %v2276
    %v2279 = vmul.f32 %v72, %v2276
    %v2280 = vmul.f32 %v79, %v2276
    %v2281 = vmul.f32 %v80, %v2276
    %v2282 = vmul.f32 %v81, %v2276
    %v2289 = vrot.slane %v2277, 1
    %v2290 = vrot.slane %v2278, 1
    %v2291 = vsel %vm1552, %v2289, %v2290
    %v2292 = vrot.slane %v2279, 1
    %v2293 = vsel %vm1552, %v2290, %v2292
    %v2294 = vrot.slane %v2280, 1
    %v2295 = vrot.slane %v2281, 1
    %v2296 = vsel %vm1552, %v2294, %v2295
    %v2297 = vrot.slane %v2282, 1
    %v2298 = vsel %vm1552, %v2295, %v2297
    %v2303 = vadd.f32 %v2047, %v2291
    %v2304 = vadd.f32 %v2048, %v2293
    %v2305 = vadd.f32 %v2049, %v2296
    %v2306 = vadd.f32 %v2050, %v2298
    %s2307 = sld [smem:[#allocation2 + $0x60]]
    %v2308 = vstv %s2307
    %v2309 = vmul.f32 %v64, %v2308
    %v2310 = vmul.f32 %v65, %v2308
    %v2311 = vmul.f32 %v66, %v2308
    %v2312 = vmul.f32 %v73, %v2308
    %v2313 = vmul.f32 %v74, %v2308
    %v2314 = vmul.f32 %v75, %v2308
    %v2321 = vrot.slane %v2309, 1
    %v2322 = vrot.slane %v2310, 1
    %v2323 = vsel %vm1552, %v2321, %v2322
    %v2324 = vrot.slane %v2311, 1
    %v2325 = vsel %vm1552, %v2322, %v2324
    %v2326 = vrot.slane %v2312, 1
    %v2327 = vrot.slane %v2313, 1
    %v2328 = vsel %vm1552, %v2326, %v2327
    %v2329 = vrot.slane %v2314, 1
    %v2330 = vsel %vm1552, %v2327, %v2329
    %2331 = vrot.lane.b32.xlu0 %v2323, 127
    %v2332 = vpop.permute.xlu0 %2331
    %2333 = vrot.lane.b32.xlu0 %v2325, 127
    %v2334 = vpop.permute.xlu0 %2333
    %2335 = vrot.lane.b32.xlu0 %v2328, 127
    %v2336 = vpop.permute.xlu0 %2335
    %2337 = vrot.lane.b32.xlu0 %v2330, 127
    %v2338 = vpop.permute.xlu0 %2337
    %v2343 = vadd.f32 %v2079, %v2332
    %v2344 = vadd.f32 %v2080, %v2334
    %v2345 = vadd.f32 %v2081, %v2336
    %v2346 = vadd.f32 %v2082, %v2338
    %s2347 = sld [smem:[#allocation2 + $0x61]]
    %v2348 = vstv %s2347
    %v2349 = vmul.f32 %v64, %v2348
    %v2350 = vmul.f32 %v65, %v2348
    %v2351 = vmul.f32 %v66, %v2348
    %v2352 = vmul.f32 %v73, %v2348
    %v2353 = vmul.f32 %v74, %v2348
    %v2354 = vmul.f32 %v75, %v2348
    %v2361 = vrot.slane %v2349, 1
    %v2362 = vrot.slane %v2350, 1
    %v2363 = vsel %vm1552, %v2361, %v2362
    %v2364 = vrot.slane %v2351, 1
    %v2365 = vsel %vm1552, %v2362, %v2364
    %v2366 = vrot.slane %v2352, 1
    %v2367 = vrot.slane %v2353, 1
    %v2368 = vsel %vm1552, %v2366, %v2367
    %v2369 = vrot.slane %v2354, 1
    %v2370 = vsel %vm1552, %v2367, %v2369
    %2371 = vrot.lane.b32.xlu0 %v2363, 127
    %v2372 = vpop.permute.xlu0 %2371
    %2373 = vrot.lane.b32.xlu0 %v2365, 127
    %v2374 = vpop.permute.xlu0 %2373
    %2375 = vrot.lane.b32.xlu0 %v2368, 127
    %v2376 = vpop.permute.xlu0 %2375
    %2377 = vrot.lane.b32.xlu0 %v2370, 127
    %v2378 = vpop.permute.xlu0 %2377
    %v2383 = vadd.f32 %v2111, %v2372
    %v2384 = vadd.f32 %v2112, %v2374
    %v2385 = vadd.f32 %v2113, %v2376
    %v2386 = vadd.f32 %v2114, %v2378
    %s2387 = sld [smem:[#allocation2 + $0x62]]
    %v2388 = vstv %s2387
    %v2389 = vmul.f32 %v64, %v2388
    %v2390 = vmul.f32 %v65, %v2388
    %v2391 = vmul.f32 %v66, %v2388
    %v2392 = vmul.f32 %v73, %v2388
    %v2393 = vmul.f32 %v74, %v2388
    %v2394 = vmul.f32 %v75, %v2388
    %v2401 = vrot.slane %v2389, 1
    %v2402 = vrot.slane %v2390, 1
    %v2403 = vsel %vm1552, %v2401, %v2402
    %v2404 = vrot.slane %v2391, 1
    %v2405 = vsel %vm1552, %v2402, %v2404
    %v2406 = vrot.slane %v2392, 1
    %v2407 = vrot.slane %v2393, 1
    %v2408 = vsel %vm1552, %v2406, %v2407
    %v2409 = vrot.slane %v2394, 1
    %v2410 = vsel %vm1552, %v2407, %v2409
    %2411 = vrot.lane.b32.xlu0 %v2403, 127
    %v2412 = vpop.permute.xlu0 %2411
    %2413 = vrot.lane.b32.xlu0 %v2405, 127
    %v2414 = vpop.permute.xlu0 %2413
    %2415 = vrot.lane.b32.xlu0 %v2408, 127
    %v2416 = vpop.permute.xlu0 %2415
    %2417 = vrot.lane.b32.xlu0 %v2410, 127
    %v2418 = vpop.permute.xlu0 %2417
    %v2423 = vadd.f32 %v2143, %v2412
    %v2424 = vadd.f32 %v2144, %v2414
    %v2425 = vadd.f32 %v2145, %v2416
    %v2426 = vadd.f32 %v2146, %v2418
    %s2427 = sld [smem:[#allocation2 + $0x63]]
    %v2428 = vstv %s2427
    %v2429 = vmul.f32 %v64, %v2428
    %v2430 = vmul.f32 %v65, %v2428
    %v2431 = vmul.f32 %v66, %v2428
    %v2432 = vmul.f32 %v73, %v2428
    %v2433 = vmul.f32 %v74, %v2428
    %v2434 = vmul.f32 %v75, %v2428
    %v2441 = vrot.slane %v2429, 1
    %v2442 = vrot.slane %v2430, 1
    %v2443 = vsel %vm1552, %v2441, %v2442
    %v2444 = vrot.slane %v2431, 1
    %v2445 = vsel %vm1552, %v2442, %v2444
    %v2446 = vrot.slane %v2432, 1
    %v2447 = vrot.slane %v2433, 1
    %v2448 = vsel %vm1552, %v2446, %v2447
    %v2449 = vrot.slane %v2434, 1
    %v2450 = vsel %vm1552, %v2447, %v2449
    %2451 = vrot.lane.b32.xlu0 %v2443, 127
    %v2452 = vpop.permute.xlu0 %2451
    %2453 = vrot.lane.b32.xlu0 %v2445, 127
    %v2454 = vpop.permute.xlu0 %2453
    %2455 = vrot.lane.b32.xlu0 %v2448, 127
    %v2456 = vpop.permute.xlu0 %2455
    %2457 = vrot.lane.b32.xlu0 %v2450, 127
    %v2458 = vpop.permute.xlu0 %2457
    %v2463 = vadd.f32 %v2175, %v2452
    %v2464 = vadd.f32 %v2176, %v2454
    %v2465 = vadd.f32 %v2177, %v2456
    %v2466 = vadd.f32 %v2178, %v2458
    %s2467 = sld [smem:[#allocation2 + $0x64]]
    %v2468 = vstv %s2467
    %v2469 = vmul.f32 %v64, %v2468
    %v2470 = vmul.f32 %v65, %v2468
    %v2471 = vmul.f32 %v66, %v2468
    %v2472 = vmul.f32 %v73, %v2468
    %v2473 = vmul.f32 %v74, %v2468
    %v2474 = vmul.f32 %v75, %v2468
    %v2481 = vrot.slane %v2469, 1
    %v2482 = vrot.slane %v2470, 1
    %v2483 = vsel %vm1552, %v2481, %v2482
    %v2484 = vrot.slane %v2471, 1
    %v2485 = vsel %vm1552, %v2482, %v2484
    %v2486 = vrot.slane %v2472, 1
    %v2487 = vrot.slane %v2473, 1
    %v2488 = vsel %vm1552, %v2486, %v2487
    %v2489 = vrot.slane %v2474, 1
    %v2490 = vsel %vm1552, %v2487, %v2489
    %2491 = vrot.lane.b32.xlu0 %v2483, 127
    %v2492 = vpop.permute.xlu0 %2491
    %2493 = vrot.lane.b32.xlu0 %v2485, 127
    %v2494 = vpop.permute.xlu0 %2493
    %2495 = vrot.lane.b32.xlu0 %v2488, 127
    %v2496 = vpop.permute.xlu0 %2495
    %2497 = vrot.lane.b32.xlu0 %v2490, 127
    %v2498 = vpop.permute.xlu0 %2497
    %v2503 = vadd.f32 %v2207, %v2492
    %v2504 = vadd.f32 %v2208, %v2494
    %v2505 = vadd.f32 %v2209, %v2496
    %v2506 = vadd.f32 %v2210, %v2498
    %s2507 = sld [smem:[#allocation2 + $0x65]]
    %v2508 = vstv %s2507
    %v2509 = vmul.f32 %v64, %v2508
    %v2510 = vmul.f32 %v65, %v2508
    %v2511 = vmul.f32 %v66, %v2508
    %v2512 = vmul.f32 %v73, %v2508
    %v2513 = vmul.f32 %v74, %v2508
    %v2514 = vmul.f32 %v75, %v2508
    %v2521 = vrot.slane %v2509, 1
    %v2522 = vrot.slane %v2510, 1
    %v2523 = vsel %vm1552, %v2521, %v2522
    %v2524 = vrot.slane %v2511, 1
    %v2525 = vsel %vm1552, %v2522, %v2524
    %v2526 = vrot.slane %v2512, 1
    %v2527 = vrot.slane %v2513, 1
    %v2528 = vsel %vm1552, %v2526, %v2527
    %v2529 = vrot.slane %v2514, 1
    %v2530 = vsel %vm1552, %v2527, %v2529
    %2531 = vrot.lane.b32.xlu0 %v2523, 127
    %v2532 = vpop.permute.xlu0 %2531
    %2533 = vrot.lane.b32.xlu0 %v2525, 127
    %v2534 = vpop.permute.xlu0 %2533
    %2535 = vrot.lane.b32.xlu0 %v2528, 127
    %v2536 = vpop.permute.xlu0 %2535
    %2537 = vrot.lane.b32.xlu0 %v2530, 127
    %v2538 = vpop.permute.xlu0 %2537
    %v2543 = vadd.f32 %v2239, %v2532
    %v2544 = vadd.f32 %v2240, %v2534
    %v2545 = vadd.f32 %v2241, %v2536
    %v2546 = vadd.f32 %v2242, %v2538
    %s2547 = sld [smem:[#allocation2 + $0x66]]
    %v2548 = vstv %s2547
    %v2549 = vmul.f32 %v64, %v2548
    %v2550 = vmul.f32 %v65, %v2548
    %v2551 = vmul.f32 %v66, %v2548
    %v2552 = vmul.f32 %v73, %v2548
    %v2553 = vmul.f32 %v74, %v2548
    %v2554 = vmul.f32 %v75, %v2548
    %v2561 = vrot.slane %v2549, 1
    %v2562 = vrot.slane %v2550, 1
    %v2563 = vsel %vm1552, %v2561, %v2562
    %v2564 = vrot.slane %v2551, 1
    %v2565 = vsel %vm1552, %v2562, %v2564
    %v2566 = vrot.slane %v2552, 1
    %v2567 = vrot.slane %v2553, 1
    %v2568 = vsel %vm1552, %v2566, %v2567
    %v2569 = vrot.slane %v2554, 1
    %v2570 = vsel %vm1552, %v2567, %v2569
    %2571 = vrot.lane.b32.xlu0 %v2563, 127
    %v2572 = vpop.permute.xlu0 %2571
    %2573 = vrot.lane.b32.xlu0 %v2565, 127
    %v2574 = vpop.permute.xlu0 %2573
    %2575 = vrot.lane.b32.xlu0 %v2568, 127
    %v2576 = vpop.permute.xlu0 %2575
    %2577 = vrot.lane.b32.xlu0 %v2570, 127
    %v2578 = vpop.permute.xlu0 %2577
    %v2583 = vadd.f32 %v2271, %v2572
    %v2584 = vadd.f32 %v2272, %v2574
    %v2585 = vadd.f32 %v2273, %v2576
    %v2586 = vadd.f32 %v2274, %v2578
    %s2587 = sld [smem:[#allocation2 + $0x67]]
    %v2588 = vstv %s2587
    %v2589 = vmul.f32 %v64, %v2588
    %v2590 = vmul.f32 %v65, %v2588
    %v2591 = vmul.f32 %v66, %v2588
    %v2592 = vmul.f32 %v73, %v2588
    %v2593 = vmul.f32 %v74, %v2588
    %v2594 = vmul.f32 %v75, %v2588
    %v2601 = vrot.slane %v2589, 1
    %v2602 = vrot.slane %v2590, 1
    %v2603 = vsel %vm1552, %v2601, %v2602
    %v2604 = vrot.slane %v2591, 1
    %v2605 = vsel %vm1552, %v2602, %v2604
    %v2606 = vrot.slane %v2592, 1
    %v2607 = vrot.slane %v2593, 1
    %v2608 = vsel %vm1552, %v2606, %v2607
    %v2609 = vrot.slane %v2594, 1
    %v2610 = vsel %vm1552, %v2607, %v2609
    %2611 = vrot.lane.b32.xlu0 %v2603, 127
    %v2612 = vpop.permute.xlu0 %2611
    %2613 = vrot.lane.b32.xlu0 %v2605, 127
    %v2614 = vpop.permute.xlu0 %2613
    %2615 = vrot.lane.b32.xlu0 %v2608, 127
    %v2616 = vpop.permute.xlu0 %2615
    %2617 = vrot.lane.b32.xlu0 %v2610, 127
    %v2618 = vpop.permute.xlu0 %2617
    %v2623 = vadd.f32 %v2303, %v2612
    %v2624 = vadd.f32 %v2304, %v2614
    %v2625 = vadd.f32 %v2305, %v2616
    %v2626 = vadd.f32 %v2306, %v2618
    %s2627 = sld [smem:[#allocation2 + $0x68]]
    %v2628 = vstv %s2627
    %v2629 = vmul.f32 %v67, %v2628
    %v2630 = vmul.f32 %v68, %v2628
    %v2631 = vmul.f32 %v69, %v2628
    %v2632 = vmul.f32 %v76, %v2628
    %v2633 = vmul.f32 %v77, %v2628
    %v2634 = vmul.f32 %v78, %v2628
    %v2641 = vrot.slane %v2629, 1
    %v2642 = vrot.slane %v2630, 1
    %v2643 = vsel %vm1552, %v2641, %v2642
    %v2644 = vrot.slane %v2631, 1
    %v2645 = vsel %vm1552, %v2642, %v2644
    %v2646 = vrot.slane %v2632, 1
    %v2647 = vrot.slane %v2633, 1
    %v2648 = vsel %vm1552, %v2646, %v2647
    %v2649 = vrot.slane %v2634, 1
    %v2650 = vsel %vm1552, %v2647, %v2649
    %2651 = vrot.lane.b32.xlu0 %v2643, 127
    %v2652 = vpop.permute.xlu0 %2651
    %2653 = vrot.lane.b32.xlu0 %v2645, 127
    %v2654 = vpop.permute.xlu0 %2653
    %2655 = vrot.lane.b32.xlu0 %v2648, 127
    %v2656 = vpop.permute.xlu0 %2655
    %2657 = vrot.lane.b32.xlu0 %v2650, 127
    %v2658 = vpop.permute.xlu0 %2657
    %v2663 = vadd.f32 %v2343, %v2652
    %v2664 = vadd.f32 %v2344, %v2654
    %v2665 = vadd.f32 %v2345, %v2656
    %v2666 = vadd.f32 %v2346, %v2658
    %s2667 = sld [smem:[#allocation2 + $0x69]]
    %v2668 = vstv %s2667
    %v2669 = vmul.f32 %v67, %v2668
    %v2670 = vmul.f32 %v68, %v2668
    %v2671 = vmul.f32 %v69, %v2668
    %v2672 = vmul.f32 %v76, %v2668
    %v2673 = vmul.f32 %v77, %v2668
    %v2674 = vmul.f32 %v78, %v2668
    %v2681 = vrot.slane %v2669, 1
    %v2682 = vrot.slane %v2670, 1
    %v2683 = vsel %vm1552, %v2681, %v2682
    %v2684 = vrot.slane %v2671, 1
    %v2685 = vsel %vm1552, %v2682, %v2684
    %v2686 = vrot.slane %v2672, 1
    %v2687 = vrot.slane %v2673, 1
    %v2688 = vsel %vm1552, %v2686, %v2687
    %v2689 = vrot.slane %v2674, 1
    %v2690 = vsel %vm1552, %v2687, %v2689
    %2691 = vrot.lane.b32.xlu0 %v2683, 127
    %v2692 = vpop.permute.xlu0 %2691
    %2693 = vrot.lane.b32.xlu0 %v2685, 127
    %v2694 = vpop.permute.xlu0 %2693
    %2695 = vrot.lane.b32.xlu0 %v2688, 127
    %v2696 = vpop.permute.xlu0 %2695
    %2697 = vrot.lane.b32.xlu0 %v2690, 127
    %v2698 = vpop.permute.xlu0 %2697
    %v2703 = vadd.f32 %v2383, %v2692
    %v2704 = vadd.f32 %v2384, %v2694
    %v2705 = vadd.f32 %v2385, %v2696
    %v2706 = vadd.f32 %v2386, %v2698
    %s2707 = sld [smem:[#allocation2 + $0x6a]]
    %v2708 = vstv %s2707
    %v2709 = vmul.f32 %v67, %v2708
    %v2710 = vmul.f32 %v68, %v2708
    %v2711 = vmul.f32 %v69, %v2708
    %v2712 = vmul.f32 %v76, %v2708
    %v2713 = vmul.f32 %v77, %v2708
    %v2714 = vmul.f32 %v78, %v2708
    %v2721 = vrot.slane %v2709, 1
    %v2722 = vrot.slane %v2710, 1
    %v2723 = vsel %vm1552, %v2721, %v2722
    %v2724 = vrot.slane %v2711, 1
    %v2725 = vsel %vm1552, %v2722, %v2724
    %v2726 = vrot.slane %v2712, 1
    %v2727 = vrot.slane %v2713, 1
    %v2728 = vsel %vm1552, %v2726, %v2727
    %v2729 = vrot.slane %v2714, 1
    %v2730 = vsel %vm1552, %v2727, %v2729
    %2731 = vrot.lane.b32.xlu0 %v2723, 127
    %v2732 = vpop.permute.xlu0 %2731
    %2733 = vrot.lane.b32.xlu0 %v2725, 127
    %v2734 = vpop.permute.xlu0 %2733
    %2735 = vrot.lane.b32.xlu0 %v2728, 127
    %v2736 = vpop.permute.xlu0 %2735
    %2737 = vrot.lane.b32.xlu0 %v2730, 127
    %v2738 = vpop.permute.xlu0 %2737
    %v2743 = vadd.f32 %v2423, %v2732
    %v2744 = vadd.f32 %v2424, %v2734
    %v2745 = vadd.f32 %v2425, %v2736
    %v2746 = vadd.f32 %v2426, %v2738
    %s2747 = sld [smem:[#allocation2 + $0x6b]]
    %v2748 = vstv %s2747
    %v2749 = vmul.f32 %v67, %v2748
    %v2750 = vmul.f32 %v68, %v2748
    %v2751 = vmul.f32 %v69, %v2748
    %v2752 = vmul.f32 %v76, %v2748
    %v2753 = vmul.f32 %v77, %v2748
    %v2754 = vmul.f32 %v78, %v2748
    %v2761 = vrot.slane %v2749, 1
    %v2762 = vrot.slane %v2750, 1
    %v2763 = vsel %vm1552, %v2761, %v2762
    %v2764 = vrot.slane %v2751, 1
    %v2765 = vsel %vm1552, %v2762, %v2764
    %v2766 = vrot.slane %v2752, 1
    %v2767 = vrot.slane %v2753, 1
    %v2768 = vsel %vm1552, %v2766, %v2767
    %v2769 = vrot.slane %v2754, 1
    %v2770 = vsel %vm1552, %v2767, %v2769
    %2771 = vrot.lane.b32.xlu0 %v2763, 127
    %v2772 = vpop.permute.xlu0 %2771
    %2773 = vrot.lane.b32.xlu0 %v2765, 127
    %v2774 = vpop.permute.xlu0 %2773
    %2775 = vrot.lane.b32.xlu0 %v2768, 127
    %v2776 = vpop.permute.xlu0 %2775
    %2777 = vrot.lane.b32.xlu0 %v2770, 127
    %v2778 = vpop.permute.xlu0 %2777
    %v2783 = vadd.f32 %v2463, %v2772
    %v2784 = vadd.f32 %v2464, %v2774
    %v2785 = vadd.f32 %v2465, %v2776
    %v2786 = vadd.f32 %v2466, %v2778
    %s2787 = sld [smem:[#allocation2 + $0x6c]]
    %v2788 = vstv %s2787
    %v2789 = vmul.f32 %v67, %v2788
    %v2790 = vmul.f32 %v68, %v2788
    %v2791 = vmul.f32 %v69, %v2788
    %v2792 = vmul.f32 %v76, %v2788
    %v2793 = vmul.f32 %v77, %v2788
    %v2794 = vmul.f32 %v78, %v2788
    %v2801 = vrot.slane %v2789, 1
    %v2802 = vrot.slane %v2790, 1
    %v2803 = vsel %vm1552, %v2801, %v2802
    %v2804 = vrot.slane %v2791, 1
    %v2805 = vsel %vm1552, %v2802, %v2804
    %v2806 = vrot.slane %v2792, 1
    %v2807 = vrot.slane %v2793, 1
    %v2808 = vsel %vm1552, %v2806, %v2807
    %v2809 = vrot.slane %v2794, 1
    %v2810 = vsel %vm1552, %v2807, %v2809
    %2811 = vrot.lane.b32.xlu0 %v2803, 127
    %v2812 = vpop.permute.xlu0 %2811
    %2813 = vrot.lane.b32.xlu0 %v2805, 127
    %v2814 = vpop.permute.xlu0 %2813
    %2815 = vrot.lane.b32.xlu0 %v2808, 127
    %v2816 = vpop.permute.xlu0 %2815
    %2817 = vrot.lane.b32.xlu0 %v2810, 127
    %v2818 = vpop.permute.xlu0 %2817
    %v2823 = vadd.f32 %v2503, %v2812
    %v2824 = vadd.f32 %v2504, %v2814
    %v2825 = vadd.f32 %v2505, %v2816
    %v2826 = vadd.f32 %v2506, %v2818
    %s2827 = sld [smem:[#allocation2 + $0x6d]]
    %v2828 = vstv %s2827
    %v2829 = vmul.f32 %v67, %v2828
    %v2830 = vmul.f32 %v68, %v2828
    %v2831 = vmul.f32 %v69, %v2828
    %v2832 = vmul.f32 %v76, %v2828
    %v2833 = vmul.f32 %v77, %v2828
    %v2834 = vmul.f32 %v78, %v2828
    %v2841 = vrot.slane %v2829, 1
    %v2842 = vrot.slane %v2830, 1
    %v2843 = vsel %vm1552, %v2841, %v2842
    %v2844 = vrot.slane %v2831, 1
    %v2845 = vsel %vm1552, %v2842, %v2844
    %v2846 = vrot.slane %v2832, 1
    %v2847 = vrot.slane %v2833, 1
    %v2848 = vsel %vm1552, %v2846, %v2847
    %v2849 = vrot.slane %v2834, 1
    %v2850 = vsel %vm1552, %v2847, %v2849
    %2851 = vrot.lane.b32.xlu0 %v2843, 127
    %v2852 = vpop.permute.xlu0 %2851
    %2853 = vrot.lane.b32.xlu0 %v2845, 127
    %v2854 = vpop.permute.xlu0 %2853
    %2855 = vrot.lane.b32.xlu0 %v2848, 127
    %v2856 = vpop.permute.xlu0 %2855
    %2857 = vrot.lane.b32.xlu0 %v2850, 127
    %v2858 = vpop.permute.xlu0 %2857
    %v2863 = vadd.f32 %v2543, %v2852
    %v2864 = vadd.f32 %v2544, %v2854
    %v2865 = vadd.f32 %v2545, %v2856
    %v2866 = vadd.f32 %v2546, %v2858
    %s2867 = sld [smem:[#allocation2 + $0x6e]]
    %v2868 = vstv %s2867
    %v2869 = vmul.f32 %v67, %v2868
    %v2870 = vmul.f32 %v68, %v2868
    %v2871 = vmul.f32 %v69, %v2868
    %v2872 = vmul.f32 %v76, %v2868
    %v2873 = vmul.f32 %v77, %v2868
    %v2874 = vmul.f32 %v78, %v2868
    %v2881 = vrot.slane %v2869, 1
    %v2882 = vrot.slane %v2870, 1
    %v2883 = vsel %vm1552, %v2881, %v2882
    %v2884 = vrot.slane %v2871, 1
    %v2885 = vsel %vm1552, %v2882, %v2884
    %v2886 = vrot.slane %v2872, 1
    %v2887 = vrot.slane %v2873, 1
    %v2888 = vsel %vm1552, %v2886, %v2887
    %v2889 = vrot.slane %v2874, 1
    %v2890 = vsel %vm1552, %v2887, %v2889
    %2891 = vrot.lane.b32.xlu0 %v2883, 127
    %v2892 = vpop.permute.xlu0 %2891
    %2893 = vrot.lane.b32.xlu0 %v2885, 127
    %v2894 = vpop.permute.xlu0 %2893
    %2895 = vrot.lane.b32.xlu0 %v2888, 127
    %v2896 = vpop.permute.xlu0 %2895
    %2897 = vrot.lane.b32.xlu0 %v2890, 127
    %v2898 = vpop.permute.xlu0 %2897
    %v2903 = vadd.f32 %v2583, %v2892
    %v2904 = vadd.f32 %v2584, %v2894
    %v2905 = vadd.f32 %v2585, %v2896
    %v2906 = vadd.f32 %v2586, %v2898
    %s2907 = sld [smem:[#allocation2 + $0x6f]]
    %v2908 = vstv %s2907
    %v2909 = vmul.f32 %v67, %v2908
    %v2910 = vmul.f32 %v68, %v2908
    %v2911 = vmul.f32 %v69, %v2908
    %v2912 = vmul.f32 %v76, %v2908
    %v2913 = vmul.f32 %v77, %v2908
    %v2914 = vmul.f32 %v78, %v2908
    %v2921 = vrot.slane %v2909, 1
    %v2922 = vrot.slane %v2910, 1
    %v2923 = vsel %vm1552, %v2921, %v2922
    %v2924 = vrot.slane %v2911, 1
    %v2925 = vsel %vm1552, %v2922, %v2924
    %v2926 = vrot.slane %v2912, 1
    %v2927 = vrot.slane %v2913, 1
    %v2928 = vsel %vm1552, %v2926, %v2927
    %v2929 = vrot.slane %v2914, 1
    %v2930 = vsel %vm1552, %v2927, %v2929
    %2931 = vrot.lane.b32.xlu0 %v2923, 127
    %v2932 = vpop.permute.xlu0 %2931
    %2933 = vrot.lane.b32.xlu0 %v2925, 127
    %v2934 = vpop.permute.xlu0 %2933
    %2935 = vrot.lane.b32.xlu0 %v2928, 127
    %v2936 = vpop.permute.xlu0 %2935
    %2937 = vrot.lane.b32.xlu0 %v2930, 127
    %v2938 = vpop.permute.xlu0 %2937
    %v2943 = vadd.f32 %v2623, %v2932
    %v2944 = vadd.f32 %v2624, %v2934
    %v2945 = vadd.f32 %v2625, %v2936
    %v2946 = vadd.f32 %v2626, %v2938
    %s2947 = sld [smem:[#allocation2 + $0x70]]
    %v2948 = vstv %s2947
    %v2949 = vmul.f32 %v70, %v2948
    %v2950 = vmul.f32 %v71, %v2948
    %v2951 = vmul.f32 %v72, %v2948
    %v2952 = vmul.f32 %v79, %v2948
    %v2953 = vmul.f32 %v80, %v2948
    %v2954 = vmul.f32 %v81, %v2948
    %v2961 = vrot.slane %v2949, 1
    %v2962 = vrot.slane %v2950, 1
    %v2963 = vsel %vm1552, %v2961, %v2962
    %v2964 = vrot.slane %v2951, 1
    %v2965 = vsel %vm1552, %v2962, %v2964
    %v2966 = vrot.slane %v2952, 1
    %v2967 = vrot.slane %v2953, 1
    %v2968 = vsel %vm1552, %v2966, %v2967
    %v2969 = vrot.slane %v2954, 1
    %v2970 = vsel %vm1552, %v2967, %v2969
    %2971 = vrot.lane.b32.xlu0 %v2963, 127
    %v2972 = vpop.permute.xlu0 %2971
    %2973 = vrot.lane.b32.xlu0 %v2965, 127
    %v2974 = vpop.permute.xlu0 %2973
    %2975 = vrot.lane.b32.xlu0 %v2968, 127
    %v2976 = vpop.permute.xlu0 %2975
    %2977 = vrot.lane.b32.xlu0 %v2970, 127
    %v2978 = vpop.permute.xlu0 %2977
    %v2983 = vadd.f32 %v2663, %v2972
    %v2984 = vadd.f32 %v2664, %v2974
    %v2985 = vadd.f32 %v2665, %v2976
    %v2986 = vadd.f32 %v2666, %v2978
    %s2987 = sld [smem:[#allocation2 + $0x71]]
    %v2988 = vstv %s2987
    %v2989 = vmul.f32 %v70, %v2988
    %v2990 = vmul.f32 %v71, %v2988
    %v2991 = vmul.f32 %v72, %v2988
    %v2992 = vmul.f32 %v79, %v2988
    %v2993 = vmul.f32 %v80, %v2988
    %v2994 = vmul.f32 %v81, %v2988
    %v3001 = vrot.slane %v2989, 1
    %v3002 = vrot.slane %v2990, 1
    %v3003 = vsel %vm1552, %v3001, %v3002
    %v3004 = vrot.slane %v2991, 1
    %v3005 = vsel %vm1552, %v3002, %v3004
    %v3006 = vrot.slane %v2992, 1
    %v3007 = vrot.slane %v2993, 1
    %v3008 = vsel %vm1552, %v3006, %v3007
    %v3009 = vrot.slane %v2994, 1
    %v3010 = vsel %vm1552, %v3007, %v3009
    %3011 = vrot.lane.b32.xlu0 %v3003, 127
    %v3012 = vpop.permute.xlu0 %3011
    %3013 = vrot.lane.b32.xlu0 %v3005, 127
    %v3014 = vpop.permute.xlu0 %3013
    %3015 = vrot.lane.b32.xlu0 %v3008, 127
    %v3016 = vpop.permute.xlu0 %3015
    %3017 = vrot.lane.b32.xlu0 %v3010, 127
    %v3018 = vpop.permute.xlu0 %3017
    %v3023 = vadd.f32 %v2703, %v3012
    %v3024 = vadd.f32 %v2704, %v3014
    %v3025 = vadd.f32 %v2705, %v3016
    %v3026 = vadd.f32 %v2706, %v3018
    %s3027 = sld [smem:[#allocation2 + $0x72]]
    %v3028 = vstv %s3027
    %v3029 = vmul.f32 %v70, %v3028
    %v3030 = vmul.f32 %v71, %v3028
    %v3031 = vmul.f32 %v72, %v3028
    %v3032 = vmul.f32 %v79, %v3028
    %v3033 = vmul.f32 %v80, %v3028
    %v3034 = vmul.f32 %v81, %v3028
    %v3041 = vrot.slane %v3029, 1
    %v3042 = vrot.slane %v3030, 1
    %v3043 = vsel %vm1552, %v3041, %v3042
    %v3044 = vrot.slane %v3031, 1
    %v3045 = vsel %vm1552, %v3042, %v3044
    %v3046 = vrot.slane %v3032, 1
    %v3047 = vrot.slane %v3033, 1
    %v3048 = vsel %vm1552, %v3046, %v3047
    %v3049 = vrot.slane %v3034, 1
    %v3050 = vsel %vm1552, %v3047, %v3049
    %3051 = vrot.lane.b32.xlu0 %v3043, 127
    %v3052 = vpop.permute.xlu0 %3051
    %3053 = vrot.lane.b32.xlu0 %v3045, 127
    %v3054 = vpop.permute.xlu0 %3053
    %3055 = vrot.lane.b32.xlu0 %v3048, 127
    %v3056 = vpop.permute.xlu0 %3055
    %3057 = vrot.lane.b32.xlu0 %v3050, 127
    %v3058 = vpop.permute.xlu0 %3057
    %v3063 = vadd.f32 %v2743, %v3052
    %v3064 = vadd.f32 %v2744, %v3054
    %v3065 = vadd.f32 %v2745, %v3056
    %v3066 = vadd.f32 %v2746, %v3058
    %s3067 = sld [smem:[#allocation2 + $0x73]]
    %v3068 = vstv %s3067
    %v3069 = vmul.f32 %v70, %v3068
    %v3070 = vmul.f32 %v71, %v3068
    %v3071 = vmul.f32 %v72, %v3068
    %v3072 = vmul.f32 %v79, %v3068
    %v3073 = vmul.f32 %v80, %v3068
    %v3074 = vmul.f32 %v81, %v3068
    %v3081 = vrot.slane %v3069, 1
    %v3082 = vrot.slane %v3070, 1
    %v3083 = vsel %vm1552, %v3081, %v3082
    %v3084 = vrot.slane %v3071, 1
    %v3085 = vsel %vm1552, %v3082, %v3084
    %v3086 = vrot.slane %v3072, 1
    %v3087 = vrot.slane %v3073, 1
    %v3088 = vsel %vm1552, %v3086, %v3087
    %v3089 = vrot.slane %v3074, 1
    %v3090 = vsel %vm1552, %v3087, %v3089
    %3091 = vrot.lane.b32.xlu0 %v3083, 127
    %v3092 = vpop.permute.xlu0 %3091
    %3093 = vrot.lane.b32.xlu0 %v3085, 127
    %v3094 = vpop.permute.xlu0 %3093
    %3095 = vrot.lane.b32.xlu0 %v3088, 127
    %v3096 = vpop.permute.xlu0 %3095
    %3097 = vrot.lane.b32.xlu0 %v3090, 127
    %v3098 = vpop.permute.xlu0 %3097
    %v3103 = vadd.f32 %v2783, %v3092
    %v3104 = vadd.f32 %v2784, %v3094
    %v3105 = vadd.f32 %v2785, %v3096
    %v3106 = vadd.f32 %v2786, %v3098
    %s3107 = sld [smem:[#allocation2 + $0x74]]
    %v3108 = vstv %s3107
    %v3109 = vmul.f32 %v70, %v3108
    %v3110 = vmul.f32 %v71, %v3108
    %v3111 = vmul.f32 %v72, %v3108
    %v3112 = vmul.f32 %v79, %v3108
    %v3113 = vmul.f32 %v80, %v3108
    %v3114 = vmul.f32 %v81, %v3108
    %v3121 = vrot.slane %v3109, 1
    %v3122 = vrot.slane %v3110, 1
    %v3123 = vsel %vm1552, %v3121, %v3122
    %v3124 = vrot.slane %v3111, 1
    %v3125 = vsel %vm1552, %v3122, %v3124
    %v3126 = vrot.slane %v3112, 1
    %v3127 = vrot.slane %v3113, 1
    %v3128 = vsel %vm1552, %v3126, %v3127
    %v3129 = vrot.slane %v3114, 1
    %v3130 = vsel %vm1552, %v3127, %v3129
    %3131 = vrot.lane.b32.xlu0 %v3123, 127
    %v3132 = vpop.permute.xlu0 %3131
    %3133 = vrot.lane.b32.xlu0 %v3125, 127
    %v3134 = vpop.permute.xlu0 %3133
    %3135 = vrot.lane.b32.xlu0 %v3128, 127
    %v3136 = vpop.permute.xlu0 %3135
    %3137 = vrot.lane.b32.xlu0 %v3130, 127
    %v3138 = vpop.permute.xlu0 %3137
    %v3143 = vadd.f32 %v2823, %v3132
    %v3144 = vadd.f32 %v2824, %v3134
    %v3145 = vadd.f32 %v2825, %v3136
    %v3146 = vadd.f32 %v2826, %v3138
    %s3147 = sld [smem:[#allocation2 + $0x75]]
    %v3148 = vstv %s3147
    %v3149 = vmul.f32 %v70, %v3148
    %v3150 = vmul.f32 %v71, %v3148
    %v3151 = vmul.f32 %v72, %v3148
    %v3152 = vmul.f32 %v79, %v3148
    %v3153 = vmul.f32 %v80, %v3148
    %v3154 = vmul.f32 %v81, %v3148
    %v3161 = vrot.slane %v3149, 1
    %v3162 = vrot.slane %v3150, 1
    %v3163 = vsel %vm1552, %v3161, %v3162
    %v3164 = vrot.slane %v3151, 1
    %v3165 = vsel %vm1552, %v3162, %v3164
    %v3166 = vrot.slane %v3152, 1
    %v3167 = vrot.slane %v3153, 1
    %v3168 = vsel %vm1552, %v3166, %v3167
    %v3169 = vrot.slane %v3154, 1
    %v3170 = vsel %vm1552, %v3167, %v3169
    %3171 = vrot.lane.b32.xlu0 %v3163, 127
    %v3172 = vpop.permute.xlu0 %3171
    %3173 = vrot.lane.b32.xlu0 %v3165, 127
    %v3174 = vpop.permute.xlu0 %3173
    %3175 = vrot.lane.b32.xlu0 %v3168, 127
    %v3176 = vpop.permute.xlu0 %3175
    %3177 = vrot.lane.b32.xlu0 %v3170, 127
    %v3178 = vpop.permute.xlu0 %3177
    %v3183 = vadd.f32 %v2863, %v3172
    %v3184 = vadd.f32 %v2864, %v3174
    %v3185 = vadd.f32 %v2865, %v3176
    %v3186 = vadd.f32 %v2866, %v3178
    %s3187 = sld [smem:[#allocation2 + $0x76]]
    %v3188 = vstv %s3187
    %v3189 = vmul.f32 %v70, %v3188
    %v3190 = vmul.f32 %v71, %v3188
    %v3191 = vmul.f32 %v72, %v3188
    %v3192 = vmul.f32 %v79, %v3188
    %v3193 = vmul.f32 %v80, %v3188
    %v3194 = vmul.f32 %v81, %v3188
    %v3201 = vrot.slane %v3189, 1
    %v3202 = vrot.slane %v3190, 1
    %v3203 = vsel %vm1552, %v3201, %v3202
    %v3204 = vrot.slane %v3191, 1
    %v3205 = vsel %vm1552, %v3202, %v3204
    %v3206 = vrot.slane %v3192, 1
    %v3207 = vrot.slane %v3193, 1
    %v3208 = vsel %vm1552, %v3206, %v3207
    %v3209 = vrot.slane %v3194, 1
    %v3210 = vsel %vm1552, %v3207, %v3209
    %3211 = vrot.lane.b32.xlu0 %v3203, 127
    %v3212 = vpop.permute.xlu0 %3211
    %3213 = vrot.lane.b32.xlu0 %v3205, 127
    %v3214 = vpop.permute.xlu0 %3213
    %3215 = vrot.lane.b32.xlu0 %v3208, 127
    %v3216 = vpop.permute.xlu0 %3215
    %3217 = vrot.lane.b32.xlu0 %v3210, 127
    %v3218 = vpop.permute.xlu0 %3217
    %v3223 = vadd.f32 %v2903, %v3212
    %v3224 = vadd.f32 %v2904, %v3214
    %v3225 = vadd.f32 %v2905, %v3216
    %v3226 = vadd.f32 %v2906, %v3218
    %s3227 = sld [smem:[#allocation2 + $0x77]]
    %v3228 = vstv %s3227
    %v3229 = vmul.f32 %v70, %v3228
    %v3230 = vmul.f32 %v71, %v3228
    %v3231 = vmul.f32 %v72, %v3228
    %v3232 = vmul.f32 %v79, %v3228
    %v3233 = vmul.f32 %v80, %v3228
    %v3234 = vmul.f32 %v81, %v3228
    %v3241 = vrot.slane %v3229, 1
    %v3242 = vrot.slane %v3230, 1
    %v3243 = vsel %vm1552, %v3241, %v3242
    %v3244 = vrot.slane %v3231, 1
    %v3245 = vsel %vm1552, %v3242, %v3244
    %v3246 = vrot.slane %v3232, 1
    %v3247 = vrot.slane %v3233, 1
    %v3248 = vsel %vm1552, %v3246, %v3247
    %v3249 = vrot.slane %v3234, 1
    %v3250 = vsel %vm1552, %v3247, %v3249
    %3251 = vrot.lane.b32.xlu0 %v3243, 127
    %v3252 = vpop.permute.xlu0 %3251
    %3253 = vrot.lane.b32.xlu0 %v3245, 127
    %v3254 = vpop.permute.xlu0 %3253
    %3255 = vrot.lane.b32.xlu0 %v3248, 127
    %v3256 = vpop.permute.xlu0 %3255
    %3257 = vrot.lane.b32.xlu0 %v3250, 127
    %v3258 = vpop.permute.xlu0 %3257
    %v3263 = vadd.f32 %v2943, %v3252
    %v3264 = vadd.f32 %v2944, %v3254
    %v3265 = vadd.f32 %v2945, %v3256
    %v3266 = vadd.f32 %v2946, %v3258
    %s3267 = sld [smem:[#allocation2 + $0x78]]
    %v3268 = vstv %s3267
    %v3269 = vmul.f32 %v64, %v3268
    %v3270 = vmul.f32 %v65, %v3268
    %v3271 = vmul.f32 %v66, %v3268
    %v3272 = vmul.f32 %v73, %v3268
    %v3273 = vmul.f32 %v74, %v3268
    %v3274 = vmul.f32 %v75, %v3268
    %v3281 = vrot.slane %v3269, 1
    %v3282 = vrot.slane %v3270, 1
    %v3283 = vsel %vm1552, %v3281, %v3282
    %v3284 = vrot.slane %v3271, 1
    %v3285 = vsel %vm1552, %v3282, %v3284
    %v3286 = vrot.slane %v3272, 1
    %v3287 = vrot.slane %v3273, 1
    %v3288 = vsel %vm1552, %v3286, %v3287
    %v3289 = vrot.slane %v3274, 1
    %v3290 = vsel %vm1552, %v3287, %v3289
    %3291 = vrot.lane.b32.xlu0 %v3283, 126
    %v3292 = vpop.permute.xlu0 %3291
    %3293 = vrot.lane.b32.xlu0 %v3285, 126
    %v3294 = vpop.permute.xlu0 %3293
    %3295 = vrot.lane.b32.xlu0 %v3288, 126
    %v3296 = vpop.permute.xlu0 %3295
    %3297 = vrot.lane.b32.xlu0 %v3290, 126
    %v3298 = vpop.permute.xlu0 %3297
    %v3303 = vadd.f32 %v2983, %v3292
    %v3304 = vadd.f32 %v2984, %v3294
    %v3305 = vadd.f32 %v2985, %v3296
    %v3306 = vadd.f32 %v2986, %v3298
    %s3307 = sld [smem:[#allocation2 + $0x79]]
    %v3308 = vstv %s3307
    %v3309 = vmul.f32 %v64, %v3308
    %v3310 = vmul.f32 %v65, %v3308
    %v3311 = vmul.f32 %v66, %v3308
    %v3312 = vmul.f32 %v73, %v3308
    %v3313 = vmul.f32 %v74, %v3308
    %v3314 = vmul.f32 %v75, %v3308
    %v3321 = vrot.slane %v3309, 1
    %v3322 = vrot.slane %v3310, 1
    %v3323 = vsel %vm1552, %v3321, %v3322
    %v3324 = vrot.slane %v3311, 1
    %v3325 = vsel %vm1552, %v3322, %v3324
    %v3326 = vrot.slane %v3312, 1
    %v3327 = vrot.slane %v3313, 1
    %v3328 = vsel %vm1552, %v3326, %v3327
    %v3329 = vrot.slane %v3314, 1
    %v3330 = vsel %vm1552, %v3327, %v3329
    %3331 = vrot.lane.b32.xlu0 %v3323, 126
    %v3332 = vpop.permute.xlu0 %3331
    %3333 = vrot.lane.b32.xlu0 %v3325, 126
    %v3334 = vpop.permute.xlu0 %3333
    %3335 = vrot.lane.b32.xlu0 %v3328, 126
    %v3336 = vpop.permute.xlu0 %3335
    %3337 = vrot.lane.b32.xlu0 %v3330, 126
    %v3338 = vpop.permute.xlu0 %3337
    %v3343 = vadd.f32 %v3023, %v3332
    %v3344 = vadd.f32 %v3024, %v3334
    %v3345 = vadd.f32 %v3025, %v3336
    %v3346 = vadd.f32 %v3026, %v3338
    %s3347 = sld [smem:[#allocation2 + $0x7a]]
    %v3348 = vstv %s3347
    %v3349 = vmul.f32 %v64, %v3348
    %v3350 = vmul.f32 %v65, %v3348
    %v3351 = vmul.f32 %v66, %v3348
    %v3352 = vmul.f32 %v73, %v3348
    %v3353 = vmul.f32 %v74, %v3348
    %v3354 = vmul.f32 %v75, %v3348
    %v3361 = vrot.slane %v3349, 1
    %v3362 = vrot.slane %v3350, 1
    %v3363 = vsel %vm1552, %v3361, %v3362
    %v3364 = vrot.slane %v3351, 1
    %v3365 = vsel %vm1552, %v3362, %v3364
    %v3366 = vrot.slane %v3352, 1
    %v3367 = vrot.slane %v3353, 1
    %v3368 = vsel %vm1552, %v3366, %v3367
    %v3369 = vrot.slane %v3354, 1
    %v3370 = vsel %vm1552, %v3367, %v3369
    %3371 = vrot.lane.b32.xlu0 %v3363, 126
    %v3372 = vpop.permute.xlu0 %3371
    %3373 = vrot.lane.b32.xlu0 %v3365, 126
    %v3374 = vpop.permute.xlu0 %3373
    %3375 = vrot.lane.b32.xlu0 %v3368, 126
    %v3376 = vpop.permute.xlu0 %3375
    %3377 = vrot.lane.b32.xlu0 %v3370, 126
    %v3378 = vpop.permute.xlu0 %3377
    %v3383 = vadd.f32 %v3063, %v3372
    %v3384 = vadd.f32 %v3064, %v3374
    %v3385 = vadd.f32 %v3065, %v3376
    %v3386 = vadd.f32 %v3066, %v3378
    %s3387 = sld [smem:[#allocation2 + $0x7b]]
    %v3388 = vstv %s3387
    %v3389 = vmul.f32 %v64, %v3388
    %v3390 = vmul.f32 %v65, %v3388
    %v3391 = vmul.f32 %v66, %v3388
    %v3392 = vmul.f32 %v73, %v3388
    %v3393 = vmul.f32 %v74, %v3388
    %v3394 = vmul.f32 %v75, %v3388
    %v3401 = vrot.slane %v3389, 1
    %v3402 = vrot.slane %v3390, 1
    %v3403 = vsel %vm1552, %v3401, %v3402
    %v3404 = vrot.slane %v3391, 1
    %v3405 = vsel %vm1552, %v3402, %v3404
    %v3406 = vrot.slane %v3392, 1
    %v3407 = vrot.slane %v3393, 1
    %v3408 = vsel %vm1552, %v3406, %v3407
    %v3409 = vrot.slane %v3394, 1
    %v3410 = vsel %vm1552, %v3407, %v3409
    %3411 = vrot.lane.b32.xlu0 %v3403, 126
    %v3412 = vpop.permute.xlu0 %3411
    %3413 = vrot.lane.b32.xlu0 %v3405, 126
    %v3414 = vpop.permute.xlu0 %3413
    %3415 = vrot.lane.b32.xlu0 %v3408, 126
    %v3416 = vpop.permute.xlu0 %3415
    %3417 = vrot.lane.b32.xlu0 %v3410, 126
    %v3418 = vpop.permute.xlu0 %3417
    %v3423 = vadd.f32 %v3103, %v3412
    %v3424 = vadd.f32 %v3104, %v3414
    %v3425 = vadd.f32 %v3105, %v3416
    %v3426 = vadd.f32 %v3106, %v3418
    %s3427 = sld [smem:[#allocation2 + $0x7c]]
    %v3428 = vstv %s3427
    %v3429 = vmul.f32 %v64, %v3428
    %v3430 = vmul.f32 %v65, %v3428
    %v3431 = vmul.f32 %v66, %v3428
    %v3432 = vmul.f32 %v73, %v3428
    %v3433 = vmul.f32 %v74, %v3428
    %v3434 = vmul.f32 %v75, %v3428
    %v3441 = vrot.slane %v3429, 1
    %v3442 = vrot.slane %v3430, 1
    %v3443 = vsel %vm1552, %v3441, %v3442
    %v3444 = vrot.slane %v3431, 1
    %v3445 = vsel %vm1552, %v3442, %v3444
    %v3446 = vrot.slane %v3432, 1
    %v3447 = vrot.slane %v3433, 1
    %v3448 = vsel %vm1552, %v3446, %v3447
    %v3449 = vrot.slane %v3434, 1
    %v3450 = vsel %vm1552, %v3447, %v3449
    %3451 = vrot.lane.b32.xlu0 %v3443, 126
    %v3452 = vpop.permute.xlu0 %3451
    %3453 = vrot.lane.b32.xlu0 %v3445, 126
    %v3454 = vpop.permute.xlu0 %3453
    %3455 = vrot.lane.b32.xlu0 %v3448, 126
    %v3456 = vpop.permute.xlu0 %3455
    %3457 = vrot.lane.b32.xlu0 %v3450, 126
    %v3458 = vpop.permute.xlu0 %3457
    %v3463 = vadd.f32 %v3143, %v3452
    %v3464 = vadd.f32 %v3144, %v3454
    %v3465 = vadd.f32 %v3145, %v3456
    %v3466 = vadd.f32 %v3146, %v3458
    %s3467 = sld [smem:[#allocation2 + $0x7d]]
    %v3468 = vstv %s3467
    %v3469 = vmul.f32 %v64, %v3468
    %v3470 = vmul.f32 %v65, %v3468
    %v3471 = vmul.f32 %v66, %v3468
    %v3472 = vmul.f32 %v73, %v3468
    %v3473 = vmul.f32 %v74, %v3468
    %v3474 = vmul.f32 %v75, %v3468
    %v3481 = vrot.slane %v3469, 1
    %v3482 = vrot.slane %v3470, 1
    %v3483 = vsel %vm1552, %v3481, %v3482
    %v3484 = vrot.slane %v3471, 1
    %v3485 = vsel %vm1552, %v3482, %v3484
    %v3486 = vrot.slane %v3472, 1
    %v3487 = vrot.slane %v3473, 1
    %v3488 = vsel %vm1552, %v3486, %v3487
    %v3489 = vrot.slane %v3474, 1
    %v3490 = vsel %vm1552, %v3487, %v3489
    %3491 = vrot.lane.b32.xlu0 %v3483, 126
    %v3492 = vpop.permute.xlu0 %3491
    %3493 = vrot.lane.b32.xlu0 %v3485, 126
    %v3494 = vpop.permute.xlu0 %3493
    %3495 = vrot.lane.b32.xlu0 %v3488, 126
    %v3496 = vpop.permute.xlu0 %3495
    %3497 = vrot.lane.b32.xlu0 %v3490, 126
    %v3498 = vpop.permute.xlu0 %3497
    %v3503 = vadd.f32 %v3183, %v3492
    %v3504 = vadd.f32 %v3184, %v3494
    %v3505 = vadd.f32 %v3185, %v3496
    %v3506 = vadd.f32 %v3186, %v3498
    %s3507 = sld [smem:[#allocation2 + $0x7e]]
    %v3508 = vstv %s3507
    %v3509 = vmul.f32 %v64, %v3508
    %v3510 = vmul.f32 %v65, %v3508
    %v3511 = vmul.f32 %v66, %v3508
    %v3512 = vmul.f32 %v73, %v3508
    %v3513 = vmul.f32 %v74, %v3508
    %v3514 = vmul.f32 %v75, %v3508
    %v3521 = vrot.slane %v3509, 1
    %v3522 = vrot.slane %v3510, 1
    %v3523 = vsel %vm1552, %v3521, %v3522
    %v3524 = vrot.slane %v3511, 1
    %v3525 = vsel %vm1552, %v3522, %v3524
    %v3526 = vrot.slane %v3512, 1
    %v3527 = vrot.slane %v3513, 1
    %v3528 = vsel %vm1552, %v3526, %v3527
    %v3529 = vrot.slane %v3514, 1
    %v3530 = vsel %vm1552, %v3527, %v3529
    %3531 = vrot.lane.b32.xlu0 %v3523, 126
    %v3532 = vpop.permute.xlu0 %3531
    %3533 = vrot.lane.b32.xlu0 %v3525, 126
    %v3534 = vpop.permute.xlu0 %3533
    %3535 = vrot.lane.b32.xlu0 %v3528, 126
    %v3536 = vpop.permute.xlu0 %3535
    %3537 = vrot.lane.b32.xlu0 %v3530, 126
    %v3538 = vpop.permute.xlu0 %3537
    %v3543 = vadd.f32 %v3223, %v3532
    %v3544 = vadd.f32 %v3224, %v3534
    %v3545 = vadd.f32 %v3225, %v3536
    %v3546 = vadd.f32 %v3226, %v3538
    %s3547 = sld [smem:[#allocation2 + $0x7f]]
    %v3548 = vstv %s3547
    %v3549 = vmul.f32 %v64, %v3548
    %v3550 = vmul.f32 %v65, %v3548
    %v3551 = vmul.f32 %v66, %v3548
    %v3552 = vmul.f32 %v73, %v3548
    %v3553 = vmul.f32 %v74, %v3548
    %v3554 = vmul.f32 %v75, %v3548
    %v3561 = vrot.slane %v3549, 1
    %v3562 = vrot.slane %v3550, 1
    %v3563 = vsel %vm1552, %v3561, %v3562
    %v3564 = vrot.slane %v3551, 1
    %v3565 = vsel %vm1552, %v3562, %v3564
    %v3566 = vrot.slane %v3552, 1
    %v3567 = vrot.slane %v3553, 1
    %v3568 = vsel %vm1552, %v3566, %v3567
    %v3569 = vrot.slane %v3554, 1
    %v3570 = vsel %vm1552, %v3567, %v3569
    %3571 = vrot.lane.b32.xlu0 %v3563, 126
    %v3572 = vpop.permute.xlu0 %3571
    %3573 = vrot.lane.b32.xlu0 %v3565, 126
    %v3574 = vpop.permute.xlu0 %3573
    %3575 = vrot.lane.b32.xlu0 %v3568, 126
    %v3576 = vpop.permute.xlu0 %3575
    %3577 = vrot.lane.b32.xlu0 %v3570, 126
    %v3578 = vpop.permute.xlu0 %3577
    %v3583 = vadd.f32 %v3263, %v3572
    %v3584 = vadd.f32 %v3264, %v3574
    %v3585 = vadd.f32 %v3265, %v3576
    %v3586 = vadd.f32 %v3266, %v3578
    %s3587 = sld [smem:[#allocation2 + $0x80]]
    %v3588 = vstv %s3587
    %v3589 = vmul.f32 %v67, %v3588
    %v3590 = vmul.f32 %v68, %v3588
    %v3591 = vmul.f32 %v69, %v3588
    %v3592 = vmul.f32 %v76, %v3588
    %v3593 = vmul.f32 %v77, %v3588
    %v3594 = vmul.f32 %v78, %v3588
    %v3601 = vrot.slane %v3589, 1
    %v3602 = vrot.slane %v3590, 1
    %v3603 = vsel %vm1552, %v3601, %v3602
    %v3604 = vrot.slane %v3591, 1
    %v3605 = vsel %vm1552, %v3602, %v3604
    %v3606 = vrot.slane %v3592, 1
    %v3607 = vrot.slane %v3593, 1
    %v3608 = vsel %vm1552, %v3606, %v3607
    %v3609 = vrot.slane %v3594, 1
    %v3610 = vsel %vm1552, %v3607, %v3609
    %3611 = vrot.lane.b32.xlu0 %v3603, 126
    %v3612 = vpop.permute.xlu0 %3611
    %3613 = vrot.lane.b32.xlu0 %v3605, 126
    %v3614 = vpop.permute.xlu0 %3613
    %3615 = vrot.lane.b32.xlu0 %v3608, 126
    %v3616 = vpop.permute.xlu0 %3615
    %3617 = vrot.lane.b32.xlu0 %v3610, 126
    %v3618 = vpop.permute.xlu0 %3617
    %v3623 = vadd.f32 %v3303, %v3612
    %v3624 = vadd.f32 %v3304, %v3614
    %v3625 = vadd.f32 %v3305, %v3616
    %v3626 = vadd.f32 %v3306, %v3618
    %s3627 = sld [smem:[#allocation2 + $0x81]]
    %v3628 = vstv %s3627
    %v3629 = vmul.f32 %v67, %v3628
    %v3630 = vmul.f32 %v68, %v3628
    %v3631 = vmul.f32 %v69, %v3628
    %v3632 = vmul.f32 %v76, %v3628
    %v3633 = vmul.f32 %v77, %v3628
    %v3634 = vmul.f32 %v78, %v3628
    %v3641 = vrot.slane %v3629, 1
    %v3642 = vrot.slane %v3630, 1
    %v3643 = vsel %vm1552, %v3641, %v3642
    %v3644 = vrot.slane %v3631, 1
    %v3645 = vsel %vm1552, %v3642, %v3644
    %v3646 = vrot.slane %v3632, 1
    %v3647 = vrot.slane %v3633, 1
    %v3648 = vsel %vm1552, %v3646, %v3647
    %v3649 = vrot.slane %v3634, 1
    %v3650 = vsel %vm1552, %v3647, %v3649
    %3651 = vrot.lane.b32.xlu0 %v3643, 126
    %v3652 = vpop.permute.xlu0 %3651
    %3653 = vrot.lane.b32.xlu0 %v3645, 126
    %v3654 = vpop.permute.xlu0 %3653
    %3655 = vrot.lane.b32.xlu0 %v3648, 126
    %v3656 = vpop.permute.xlu0 %3655
    %3657 = vrot.lane.b32.xlu0 %v3650, 126
    %v3658 = vpop.permute.xlu0 %3657
    %v3663 = vadd.f32 %v3343, %v3652
    %v3664 = vadd.f32 %v3344, %v3654
    %v3665 = vadd.f32 %v3345, %v3656
    %v3666 = vadd.f32 %v3346, %v3658
    %s3667 = sld [smem:[#allocation2 + $0x82]]
    %v3668 = vstv %s3667
    %v3669 = vmul.f32 %v67, %v3668
    %v3670 = vmul.f32 %v68, %v3668
    %v3671 = vmul.f32 %v69, %v3668
    %v3672 = vmul.f32 %v76, %v3668
    %v3673 = vmul.f32 %v77, %v3668
    %v3674 = vmul.f32 %v78, %v3668
    %v3681 = vrot.slane %v3669, 1
    %v3682 = vrot.slane %v3670, 1
    %v3683 = vsel %vm1552, %v3681, %v3682
    %v3684 = vrot.slane %v3671, 1
    %v3685 = vsel %vm1552, %v3682, %v3684
    %v3686 = vrot.slane %v3672, 1
    %v3687 = vrot.slane %v3673, 1
    %v3688 = vsel %vm1552, %v3686, %v3687
    %v3689 = vrot.slane %v3674, 1
    %v3690 = vsel %vm1552, %v3687, %v3689
    %3691 = vrot.lane.b32.xlu0 %v3683, 126
    %v3692 = vpop.permute.xlu0 %3691
    %3693 = vrot.lane.b32.xlu0 %v3685, 126
    %v3694 = vpop.permute.xlu0 %3693
    %3695 = vrot.lane.b32.xlu0 %v3688, 126
    %v3696 = vpop.permute.xlu0 %3695
    %3697 = vrot.lane.b32.xlu0 %v3690, 126
    %v3698 = vpop.permute.xlu0 %3697
    %v3703 = vadd.f32 %v3383, %v3692
    %v3704 = vadd.f32 %v3384, %v3694
    %v3705 = vadd.f32 %v3385, %v3696
    %v3706 = vadd.f32 %v3386, %v3698
    %s3707 = sld [smem:[#allocation2 + $0x83]]
    %v3708 = vstv %s3707
    %v3709 = vmul.f32 %v67, %v3708
    %v3710 = vmul.f32 %v68, %v3708
    %v3711 = vmul.f32 %v69, %v3708
    %v3712 = vmul.f32 %v76, %v3708
    %v3713 = vmul.f32 %v77, %v3708
    %v3714 = vmul.f32 %v78, %v3708
    %v3721 = vrot.slane %v3709, 1
    %v3722 = vrot.slane %v3710, 1
    %v3723 = vsel %vm1552, %v3721, %v3722
    %v3724 = vrot.slane %v3711, 1
    %v3725 = vsel %vm1552, %v3722, %v3724
    %v3726 = vrot.slane %v3712, 1
    %v3727 = vrot.slane %v3713, 1
    %v3728 = vsel %vm1552, %v3726, %v3727
    %v3729 = vrot.slane %v3714, 1
    %v3730 = vsel %vm1552, %v3727, %v3729
    %3731 = vrot.lane.b32.xlu0 %v3723, 126
    %v3732 = vpop.permute.xlu0 %3731
    %3733 = vrot.lane.b32.xlu0 %v3725, 126
    %v3734 = vpop.permute.xlu0 %3733
    %3735 = vrot.lane.b32.xlu0 %v3728, 126
    %v3736 = vpop.permute.xlu0 %3735
    %3737 = vrot.lane.b32.xlu0 %v3730, 126
    %v3738 = vpop.permute.xlu0 %3737
    %v3743 = vadd.f32 %v3423, %v3732
    %v3744 = vadd.f32 %v3424, %v3734
    %v3745 = vadd.f32 %v3425, %v3736
    %v3746 = vadd.f32 %v3426, %v3738
    %s3747 = sld [smem:[#allocation2 + $0x84]]
    %v3748 = vstv %s3747
    %v3749 = vmul.f32 %v67, %v3748
    %v3750 = vmul.f32 %v68, %v3748
    %v3751 = vmul.f32 %v69, %v3748
    %v3752 = vmul.f32 %v76, %v3748
    %v3753 = vmul.f32 %v77, %v3748
    %v3754 = vmul.f32 %v78, %v3748
    %v3761 = vrot.slane %v3749, 1
    %v3762 = vrot.slane %v3750, 1
    %v3763 = vsel %vm1552, %v3761, %v3762
    %v3764 = vrot.slane %v3751, 1
    %v3765 = vsel %vm1552, %v3762, %v3764
    %v3766 = vrot.slane %v3752, 1
    %v3767 = vrot.slane %v3753, 1
    %v3768 = vsel %vm1552, %v3766, %v3767
    %v3769 = vrot.slane %v3754, 1
    %v3770 = vsel %vm1552, %v3767, %v3769
    %3771 = vrot.lane.b32.xlu0 %v3763, 126
    %v3772 = vpop.permute.xlu0 %3771
    %3773 = vrot.lane.b32.xlu0 %v3765, 126
    %v3774 = vpop.permute.xlu0 %3773
    %3775 = vrot.lane.b32.xlu0 %v3768, 126
    %v3776 = vpop.permute.xlu0 %3775
    %3777 = vrot.lane.b32.xlu0 %v3770, 126
    %v3778 = vpop.permute.xlu0 %3777
    %v3783 = vadd.f32 %v3463, %v3772
    %v3784 = vadd.f32 %v3464, %v3774
    %v3785 = vadd.f32 %v3465, %v3776
    %v3786 = vadd.f32 %v3466, %v3778
    %s3787 = sld [smem:[#allocation2 + $0x85]]
    %v3788 = vstv %s3787
    %v3789 = vmul.f32 %v67, %v3788
    %v3790 = vmul.f32 %v68, %v3788
    %v3791 = vmul.f32 %v69, %v3788
    %v3792 = vmul.f32 %v76, %v3788
    %v3793 = vmul.f32 %v77, %v3788
    %v3794 = vmul.f32 %v78, %v3788
    %v3801 = vrot.slane %v3789, 1
    %v3802 = vrot.slane %v3790, 1
    %v3803 = vsel %vm1552, %v3801, %v3802
    %v3804 = vrot.slane %v3791, 1
    %v3805 = vsel %vm1552, %v3802, %v3804
    %v3806 = vrot.slane %v3792, 1
    %v3807 = vrot.slane %v3793, 1
    %v3808 = vsel %vm1552, %v3806, %v3807
    %v3809 = vrot.slane %v3794, 1
    %v3810 = vsel %vm1552, %v3807, %v3809
    %3811 = vrot.lane.b32.xlu0 %v3803, 126
    %v3812 = vpop.permute.xlu0 %3811
    %3813 = vrot.lane.b32.xlu0 %v3805, 126
    %v3814 = vpop.permute.xlu0 %3813
    %3815 = vrot.lane.b32.xlu0 %v3808, 126
    %v3816 = vpop.permute.xlu0 %3815
    %3817 = vrot.lane.b32.xlu0 %v3810, 126
    %v3818 = vpop.permute.xlu0 %3817
    %v3823 = vadd.f32 %v3503, %v3812
    %v3824 = vadd.f32 %v3504, %v3814
    %v3825 = vadd.f32 %v3505, %v3816
    %v3826 = vadd.f32 %v3506, %v3818
    %s3827 = sld [smem:[#allocation2 + $0x86]]
    %v3828 = vstv %s3827
    %v3829 = vmul.f32 %v67, %v3828
    %v3830 = vmul.f32 %v68, %v3828
    %v3831 = vmul.f32 %v69, %v3828
    %v3832 = vmul.f32 %v76, %v3828
    %v3833 = vmul.f32 %v77, %v3828
    %v3834 = vmul.f32 %v78, %v3828
    %v3841 = vrot.slane %v3829, 1
    %v3842 = vrot.slane %v3830, 1
    %v3843 = vsel %vm1552, %v3841, %v3842
    %v3844 = vrot.slane %v3831, 1
    %v3845 = vsel %vm1552, %v3842, %v3844
    %v3846 = vrot.slane %v3832, 1
    %v3847 = vrot.slane %v3833, 1
    %v3848 = vsel %vm1552, %v3846, %v3847
    %v3849 = vrot.slane %v3834, 1
    %v3850 = vsel %vm1552, %v3847, %v3849
    %3851 = vrot.lane.b32.xlu0 %v3843, 126
    %v3852 = vpop.permute.xlu0 %3851
    %3853 = vrot.lane.b32.xlu0 %v3845, 126
    %v3854 = vpop.permute.xlu0 %3853
    %3855 = vrot.lane.b32.xlu0 %v3848, 126
    %v3856 = vpop.permute.xlu0 %3855
    %3857 = vrot.lane.b32.xlu0 %v3850, 126
    %v3858 = vpop.permute.xlu0 %3857
    %v3863 = vadd.f32 %v3543, %v3852
    %v3864 = vadd.f32 %v3544, %v3854
    %v3865 = vadd.f32 %v3545, %v3856
    %v3866 = vadd.f32 %v3546, %v3858
    %s3867 = sld [smem:[#allocation2 + $0x87]]
    %v3868 = vstv %s3867
    %v3869 = vmul.f32 %v67, %v3868
    %v3870 = vmul.f32 %v68, %v3868
    %v3871 = vmul.f32 %v69, %v3868
    %v3872 = vmul.f32 %v76, %v3868
    %v3873 = vmul.f32 %v77, %v3868
    %v3874 = vmul.f32 %v78, %v3868
    %v3881 = vrot.slane %v3869, 1
    %v3882 = vrot.slane %v3870, 1
    %v3883 = vsel %vm1552, %v3881, %v3882
    %v3884 = vrot.slane %v3871, 1
    %v3885 = vsel %vm1552, %v3882, %v3884
    %v3886 = vrot.slane %v3872, 1
    %v3887 = vrot.slane %v3873, 1
    %v3888 = vsel %vm1552, %v3886, %v3887
    %v3889 = vrot.slane %v3874, 1
    %v3890 = vsel %vm1552, %v3887, %v3889
    %3891 = vrot.lane.b32.xlu0 %v3883, 126
    %v3892 = vpop.permute.xlu0 %3891
    %3893 = vrot.lane.b32.xlu0 %v3885, 126
    %v3894 = vpop.permute.xlu0 %3893
    %3895 = vrot.lane.b32.xlu0 %v3888, 126
    %v3896 = vpop.permute.xlu0 %3895
    %3897 = vrot.lane.b32.xlu0 %v3890, 126
    %v3898 = vpop.permute.xlu0 %3897
    %v3903 = vadd.f32 %v3583, %v3892
    %v3904 = vadd.f32 %v3584, %v3894
    %v3905 = vadd.f32 %v3585, %v3896
    %v3906 = vadd.f32 %v3586, %v3898
    %s3907 = sld [smem:[#allocation2 + $0x88]]
    %v3908 = vstv %s3907
    %v3909 = vmul.f32 %v70, %v3908
    %v3910 = vmul.f32 %v71, %v3908
    %v3911 = vmul.f32 %v72, %v3908
    %v3912 = vmul.f32 %v79, %v3908
    %v3913 = vmul.f32 %v80, %v3908
    %v3914 = vmul.f32 %v81, %v3908
    %v3921 = vrot.slane %v3909, 1
    %v3922 = vrot.slane %v3910, 1
    %v3923 = vsel %vm1552, %v3921, %v3922
    %v3924 = vrot.slane %v3911, 1
    %v3925 = vsel %vm1552, %v3922, %v3924
    %v3926 = vrot.slane %v3912, 1
    %v3927 = vrot.slane %v3913, 1
    %v3928 = vsel %vm1552, %v3926, %v3927
    %v3929 = vrot.slane %v3914, 1
    %v3930 = vsel %vm1552, %v3927, %v3929
    %3931 = vrot.lane.b32.xlu0 %v3923, 126
    %v3932 = vpop.permute.xlu0 %3931
    %3933 = vrot.lane.b32.xlu0 %v3925, 126
    %v3934 = vpop.permute.xlu0 %3933
    %3935 = vrot.lane.b32.xlu0 %v3928, 126
    %v3936 = vpop.permute.xlu0 %3935
    %3937 = vrot.lane.b32.xlu0 %v3930, 126
    %v3938 = vpop.permute.xlu0 %3937
    %v3943 = vadd.f32 %v3623, %v3932
    %v3944 = vadd.f32 %v3624, %v3934
    %v3945 = vadd.f32 %v3625, %v3936
    %v3946 = vadd.f32 %v3626, %v3938
    %s3947 = sld [smem:[#allocation2 + $0x89]]
    %v3948 = vstv %s3947
    %v3949 = vmul.f32 %v70, %v3948
    %v3950 = vmul.f32 %v71, %v3948
    %v3951 = vmul.f32 %v72, %v3948
    %v3952 = vmul.f32 %v79, %v3948
    %v3953 = vmul.f32 %v80, %v3948
    %v3954 = vmul.f32 %v81, %v3948
    %v3961 = vrot.slane %v3949, 1
    %v3962 = vrot.slane %v3950, 1
    %v3963 = vsel %vm1552, %v3961, %v3962
    %v3964 = vrot.slane %v3951, 1
    %v3965 = vsel %vm1552, %v3962, %v3964
    %v3966 = vrot.slane %v3952, 1
    %v3967 = vrot.slane %v3953, 1
    %v3968 = vsel %vm1552, %v3966, %v3967
    %v3969 = vrot.slane %v3954, 1
    %v3970 = vsel %vm1552, %v3967, %v3969
    %3971 = vrot.lane.b32.xlu0 %v3963, 126
    %v3972 = vpop.permute.xlu0 %3971
    %3973 = vrot.lane.b32.xlu0 %v3965, 126
    %v3974 = vpop.permute.xlu0 %3973
    %3975 = vrot.lane.b32.xlu0 %v3968, 126
    %v3976 = vpop.permute.xlu0 %3975
    %3977 = vrot.lane.b32.xlu0 %v3970, 126
    %v3978 = vpop.permute.xlu0 %3977
    %v3983 = vadd.f32 %v3663, %v3972
    %v3984 = vadd.f32 %v3664, %v3974
    %v3985 = vadd.f32 %v3665, %v3976
    %v3986 = vadd.f32 %v3666, %v3978
    %s3987 = sld [smem:[#allocation2 + $0x8a]]
    %v3988 = vstv %s3987
    %v3989 = vmul.f32 %v70, %v3988
    %v3990 = vmul.f32 %v71, %v3988
    %v3991 = vmul.f32 %v72, %v3988
    %v3992 = vmul.f32 %v79, %v3988
    %v3993 = vmul.f32 %v80, %v3988
    %v3994 = vmul.f32 %v81, %v3988
    %v4001 = vrot.slane %v3989, 1
    %v4002 = vrot.slane %v3990, 1
    %v4003 = vsel %vm1552, %v4001, %v4002
    %v4004 = vrot.slane %v3991, 1
    %v4005 = vsel %vm1552, %v4002, %v4004
    %v4006 = vrot.slane %v3992, 1
    %v4007 = vrot.slane %v3993, 1
    %v4008 = vsel %vm1552, %v4006, %v4007
    %v4009 = vrot.slane %v3994, 1
    %v4010 = vsel %vm1552, %v4007, %v4009
    %4011 = vrot.lane.b32.xlu0 %v4003, 126
    %v4012 = vpop.permute.xlu0 %4011
    %4013 = vrot.lane.b32.xlu0 %v4005, 126
    %v4014 = vpop.permute.xlu0 %4013
    %4015 = vrot.lane.b32.xlu0 %v4008, 126
    %v4016 = vpop.permute.xlu0 %4015
    %4017 = vrot.lane.b32.xlu0 %v4010, 126
    %v4018 = vpop.permute.xlu0 %4017
    %v4023 = vadd.f32 %v3703, %v4012
    %v4024 = vadd.f32 %v3704, %v4014
    %v4025 = vadd.f32 %v3705, %v4016
    %v4026 = vadd.f32 %v3706, %v4018
    %s4027 = sld [smem:[#allocation2 + $0x8b]]
    %v4028 = vstv %s4027
    %v4029 = vmul.f32 %v70, %v4028
    %v4030 = vmul.f32 %v71, %v4028
    %v4031 = vmul.f32 %v72, %v4028
    %v4032 = vmul.f32 %v79, %v4028
    %v4033 = vmul.f32 %v80, %v4028
    %v4034 = vmul.f32 %v81, %v4028
    %v4041 = vrot.slane %v4029, 1
    %v4042 = vrot.slane %v4030, 1
    %v4043 = vsel %vm1552, %v4041, %v4042
    %v4044 = vrot.slane %v4031, 1
    %v4045 = vsel %vm1552, %v4042, %v4044
    %v4046 = vrot.slane %v4032, 1
    %v4047 = vrot.slane %v4033, 1
    %v4048 = vsel %vm1552, %v4046, %v4047
    %v4049 = vrot.slane %v4034, 1
    %v4050 = vsel %vm1552, %v4047, %v4049
    %4051 = vrot.lane.b32.xlu0 %v4043, 126
    %v4052 = vpop.permute.xlu0 %4051
    %4053 = vrot.lane.b32.xlu0 %v4045, 126
    %v4054 = vpop.permute.xlu0 %4053
    %4055 = vrot.lane.b32.xlu0 %v4048, 126
    %v4056 = vpop.permute.xlu0 %4055
    %4057 = vrot.lane.b32.xlu0 %v4050, 126
    %v4058 = vpop.permute.xlu0 %4057
    %v4063 = vadd.f32 %v3743, %v4052
    %v4064 = vadd.f32 %v3744, %v4054
    %v4065 = vadd.f32 %v3745, %v4056
    %v4066 = vadd.f32 %v3746, %v4058
    %s4067 = sld [smem:[#allocation2 + $0x8c]]
    %v4068 = vstv %s4067
    %v4069 = vmul.f32 %v70, %v4068
    %v4070 = vmul.f32 %v71, %v4068
    %v4071 = vmul.f32 %v72, %v4068
    %v4072 = vmul.f32 %v79, %v4068
    %v4073 = vmul.f32 %v80, %v4068
    %v4074 = vmul.f32 %v81, %v4068
    %v4081 = vrot.slane %v4069, 1
    %v4082 = vrot.slane %v4070, 1
    %v4083 = vsel %vm1552, %v4081, %v4082
    %v4084 = vrot.slane %v4071, 1
    %v4085 = vsel %vm1552, %v4082, %v4084
    %v4086 = vrot.slane %v4072, 1
    %v4087 = vrot.slane %v4073, 1
    %v4088 = vsel %vm1552, %v4086, %v4087
    %v4089 = vrot.slane %v4074, 1
    %v4090 = vsel %vm1552, %v4087, %v4089
    %4091 = vrot.lane.b32.xlu0 %v4083, 126
    %v4092 = vpop.permute.xlu0 %4091
    %4093 = vrot.lane.b32.xlu0 %v4085, 126
    %v4094 = vpop.permute.xlu0 %4093
    %4095 = vrot.lane.b32.xlu0 %v4088, 126
    %v4096 = vpop.permute.xlu0 %4095
    %4097 = vrot.lane.b32.xlu0 %v4090, 126
    %v4098 = vpop.permute.xlu0 %4097
    %v4103 = vadd.f32 %v3783, %v4092
    %v4104 = vadd.f32 %v3784, %v4094
    %v4105 = vadd.f32 %v3785, %v4096
    %v4106 = vadd.f32 %v3786, %v4098
    %s4107 = sld [smem:[#allocation2 + $0x8d]]
    %v4108 = vstv %s4107
    %v4109 = vmul.f32 %v70, %v4108
    %v4110 = vmul.f32 %v71, %v4108
    %v4111 = vmul.f32 %v72, %v4108
    %v4112 = vmul.f32 %v79, %v4108
    %v4113 = vmul.f32 %v80, %v4108
    %v4114 = vmul.f32 %v81, %v4108
    %v4121 = vrot.slane %v4109, 1
    %v4122 = vrot.slane %v4110, 1
    %v4123 = vsel %vm1552, %v4121, %v4122
    %v4124 = vrot.slane %v4111, 1
    %v4125 = vsel %vm1552, %v4122, %v4124
    %v4126 = vrot.slane %v4112, 1
    %v4127 = vrot.slane %v4113, 1
    %v4128 = vsel %vm1552, %v4126, %v4127
    %v4129 = vrot.slane %v4114, 1
    %v4130 = vsel %vm1552, %v4127, %v4129
    %4131 = vrot.lane.b32.xlu0 %v4123, 126
    %v4132 = vpop.permute.xlu0 %4131
    %4133 = vrot.lane.b32.xlu0 %v4125, 126
    %v4134 = vpop.permute.xlu0 %4133
    %4135 = vrot.lane.b32.xlu0 %v4128, 126
    %v4136 = vpop.permute.xlu0 %4135
    %4137 = vrot.lane.b32.xlu0 %v4130, 126
    %v4138 = vpop.permute.xlu0 %4137
    %v4143 = vadd.f32 %v3823, %v4132
    %v4144 = vadd.f32 %v3824, %v4134
    %v4145 = vadd.f32 %v3825, %v4136
    %v4146 = vadd.f32 %v3826, %v4138
    %s4147 = sld [smem:[#allocation2 + $0x8e]]
    %v4148 = vstv %s4147
    %v4149 = vmul.f32 %v70, %v4148
    %v4150 = vmul.f32 %v71, %v4148
    %v4151 = vmul.f32 %v72, %v4148
    %v4152 = vmul.f32 %v79, %v4148
    %v4153 = vmul.f32 %v80, %v4148
    %v4154 = vmul.f32 %v81, %v4148
    %v4161 = vrot.slane %v4149, 1
    %v4162 = vrot.slane %v4150, 1
    %v4163 = vsel %vm1552, %v4161, %v4162
    %v4164 = vrot.slane %v4151, 1
    %v4165 = vsel %vm1552, %v4162, %v4164
    %v4166 = vrot.slane %v4152, 1
    %v4167 = vrot.slane %v4153, 1
    %v4168 = vsel %vm1552, %v4166, %v4167
    %v4169 = vrot.slane %v4154, 1
    %v4170 = vsel %vm1552, %v4167, %v4169
    %4171 = vrot.lane.b32.xlu0 %v4163, 126
    %v4172 = vpop.permute.xlu0 %4171
    %4173 = vrot.lane.b32.xlu0 %v4165, 126
    %v4174 = vpop.permute.xlu0 %4173
    %4175 = vrot.lane.b32.xlu0 %v4168, 126
    %v4176 = vpop.permute.xlu0 %4175
    %4177 = vrot.lane.b32.xlu0 %v4170, 126
    %v4178 = vpop.permute.xlu0 %4177
    %v4183 = vadd.f32 %v3863, %v4172
    %v4184 = vadd.f32 %v3864, %v4174
    %v4185 = vadd.f32 %v3865, %v4176
    %v4186 = vadd.f32 %v3866, %v4178
    %s4187 = sld [smem:[#allocation2 + $0x8f]]
    %v4188 = vstv %s4187
    %v4189 = vmul.f32 %v70, %v4188
    %v4190 = vmul.f32 %v71, %v4188
    %v4191 = vmul.f32 %v72, %v4188
    %v4192 = vmul.f32 %v79, %v4188
    %v4193 = vmul.f32 %v80, %v4188
    %v4194 = vmul.f32 %v81, %v4188
    %v4201 = vrot.slane %v4189, 1
    %v4202 = vrot.slane %v4190, 1
    %v4203 = vsel %vm1552, %v4201, %v4202
    %v4204 = vrot.slane %v4191, 1
    %v4205 = vsel %vm1552, %v4202, %v4204
    %v4206 = vrot.slane %v4192, 1
    %v4207 = vrot.slane %v4193, 1
    %v4208 = vsel %vm1552, %v4206, %v4207
    %v4209 = vrot.slane %v4194, 1
    %v4210 = vsel %vm1552, %v4207, %v4209
    %4211 = vrot.lane.b32.xlu0 %v4203, 126
    %v4212 = vpop.permute.xlu0 %4211
    %4213 = vrot.lane.b32.xlu0 %v4205, 126
    %v4214 = vpop.permute.xlu0 %4213
    %4215 = vrot.lane.b32.xlu0 %v4208, 126
    %v4216 = vpop.permute.xlu0 %4215
    %4217 = vrot.lane.b32.xlu0 %v4210, 126
    %v4218 = vpop.permute.xlu0 %4217
    %v4223 = vadd.f32 %v3903, %v4212
    %v4224 = vadd.f32 %v3904, %v4214
    %v4225 = vadd.f32 %v3905, %v4216
    %v4226 = vadd.f32 %v3906, %v4218
    %s4227 = sld [smem:[#allocation2 + $0x90]]
    %v4228 = vstv %s4227
    %v4229 = vmul.f32 %v64, %v4228
    %v4230 = vmul.f32 %v65, %v4228
    %v4231 = vmul.f32 %v66, %v4228
    %v4232 = vmul.f32 %v73, %v4228
    %v4233 = vmul.f32 %v74, %v4228
    %v4234 = vmul.f32 %v75, %v4228
    %vm4241 = vcmask 1045504
    %v4242 = vrot.slane %v4229, 2
    %v4243 = vrot.slane %v4230, 2
    %v4244 = vsel %vm4241, %v4242, %v4243
    %v4245 = vrot.slane %v4231, 2
    %v4246 = vsel %vm4241, %v4243, %v4245
    %v4247 = vrot.slane %v4232, 2
    %v4248 = vrot.slane %v4233, 2
    %v4249 = vsel %vm4241, %v4247, %v4248
    %v4250 = vrot.slane %v4234, 2
    %v4251 = vsel %vm4241, %v4248, %v4250
    %v4256 = vadd.f32 %v3943, %v4244
    %v4257 = vadd.f32 %v3944, %v4246
    %v4258 = vadd.f32 %v3945, %v4249
    %v4259 = vadd.f32 %v3946, %v4251
    %s4260 = sld [smem:[#allocation2 + $0x91]]
    %v4261 = vstv %s4260
    %v4262 = vmul.f32 %v64, %v4261
    %v4263 = vmul.f32 %v65, %v4261
    %v4264 = vmul.f32 %v66, %v4261
    %v4265 = vmul.f32 %v73, %v4261
    %v4266 = vmul.f32 %v74, %v4261
    %v4267 = vmul.f32 %v75, %v4261
    %v4274 = vrot.slane %v4262, 2
    %v4275 = vrot.slane %v4263, 2
    %v4276 = vsel %vm4241, %v4274, %v4275
    %v4277 = vrot.slane %v4264, 2
    %v4278 = vsel %vm4241, %v4275, %v4277
    %v4279 = vrot.slane %v4265, 2
    %v4280 = vrot.slane %v4266, 2
    %v4281 = vsel %vm4241, %v4279, %v4280
    %v4282 = vrot.slane %v4267, 2
    %v4283 = vsel %vm4241, %v4280, %v4282
    %v4288 = vadd.f32 %v3983, %v4276
    %v4289 = vadd.f32 %v3984, %v4278
    %v4290 = vadd.f32 %v3985, %v4281
    %v4291 = vadd.f32 %v3986, %v4283
    %s4292 = sld [smem:[#allocation2 + $0x92]]
    %v4293 = vstv %s4292
    %v4294 = vmul.f32 %v64, %v4293
    %v4295 = vmul.f32 %v65, %v4293
    %v4296 = vmul.f32 %v66, %v4293
    %v4297 = vmul.f32 %v73, %v4293
    %v4298 = vmul.f32 %v74, %v4293
    %v4299 = vmul.f32 %v75, %v4293
    %v4306 = vrot.slane %v4294, 2
    %v4307 = vrot.slane %v4295, 2
    %v4308 = vsel %vm4241, %v4306, %v4307
    %v4309 = vrot.slane %v4296, 2
    %v4310 = vsel %vm4241, %v4307, %v4309
    %v4311 = vrot.slane %v4297, 2
    %v4312 = vrot.slane %v4298, 2
    %v4313 = vsel %vm4241, %v4311, %v4312
    %v4314 = vrot.slane %v4299, 2
    %v4315 = vsel %vm4241, %v4312, %v4314
    %v4320 = vadd.f32 %v4023, %v4308
    %v4321 = vadd.f32 %v4024, %v4310
    %v4322 = vadd.f32 %v4025, %v4313
    %v4323 = vadd.f32 %v4026, %v4315
    %s4324 = sld [smem:[#allocation2 + $0x93]]
    %v4325 = vstv %s4324
    %v4326 = vmul.f32 %v64, %v4325
    %v4327 = vmul.f32 %v65, %v4325
    %v4328 = vmul.f32 %v66, %v4325
    %v4329 = vmul.f32 %v73, %v4325
    %v4330 = vmul.f32 %v74, %v4325
    %v4331 = vmul.f32 %v75, %v4325
    %v4338 = vrot.slane %v4326, 2
    %v4339 = vrot.slane %v4327, 2
    %v4340 = vsel %vm4241, %v4338, %v4339
    %v4341 = vrot.slane %v4328, 2
    %v4342 = vsel %vm4241, %v4339, %v4341
    %v4343 = vrot.slane %v4329, 2
    %v4344 = vrot.slane %v4330, 2
    %v4345 = vsel %vm4241, %v4343, %v4344
    %v4346 = vrot.slane %v4331, 2
    %v4347 = vsel %vm4241, %v4344, %v4346
    %v4352 = vadd.f32 %v4063, %v4340
    %v4353 = vadd.f32 %v4064, %v4342
    %v4354 = vadd.f32 %v4065, %v4345
    %v4355 = vadd.f32 %v4066, %v4347
    %s4356 = sld [smem:[#allocation2 + $0x94]]
    %v4357 = vstv %s4356
    %v4358 = vmul.f32 %v64, %v4357
    %v4359 = vmul.f32 %v65, %v4357
    %v4360 = vmul.f32 %v66, %v4357
    %v4361 = vmul.f32 %v73, %v4357
    %v4362 = vmul.f32 %v74, %v4357
    %v4363 = vmul.f32 %v75, %v4357
    %v4370 = vrot.slane %v4358, 2
    %v4371 = vrot.slane %v4359, 2
    %v4372 = vsel %vm4241, %v4370, %v4371
    %v4373 = vrot.slane %v4360, 2
    %v4374 = vsel %vm4241, %v4371, %v4373
    %v4375 = vrot.slane %v4361, 2
    %v4376 = vrot.slane %v4362, 2
    %v4377 = vsel %vm4241, %v4375, %v4376
    %v4378 = vrot.slane %v4363, 2
    %v4379 = vsel %vm4241, %v4376, %v4378
    %v4384 = vadd.f32 %v4103, %v4372
    %v4385 = vadd.f32 %v4104, %v4374
    %v4386 = vadd.f32 %v4105, %v4377
    %v4387 = vadd.f32 %v4106, %v4379
    %s4388 = sld [smem:[#allocation2 + $0x95]]
    %v4389 = vstv %s4388
    %v4390 = vmul.f32 %v64, %v4389
    %v4391 = vmul.f32 %v65, %v4389
    %v4392 = vmul.f32 %v66, %v4389
    %v4393 = vmul.f32 %v73, %v4389
    %v4394 = vmul.f32 %v74, %v4389
    %v4395 = vmul.f32 %v75, %v4389
    %v4402 = vrot.slane %v4390, 2
    %v4403 = vrot.slane %v4391, 2
    %v4404 = vsel %vm4241, %v4402, %v4403
    %v4405 = vrot.slane %v4392, 2
    %v4406 = vsel %vm4241, %v4403, %v4405
    %v4407 = vrot.slane %v4393, 2
    %v4408 = vrot.slane %v4394, 2
    %v4409 = vsel %vm4241, %v4407, %v4408
    %v4410 = vrot.slane %v4395, 2
    %v4411 = vsel %vm4241, %v4408, %v4410
    %v4416 = vadd.f32 %v4143, %v4404
    %v4417 = vadd.f32 %v4144, %v4406
    %v4418 = vadd.f32 %v4145, %v4409
    %v4419 = vadd.f32 %v4146, %v4411
    %s4420 = sld [smem:[#allocation2 + $0x96]]
    %v4421 = vstv %s4420
    %v4422 = vmul.f32 %v64, %v4421
    %v4423 = vmul.f32 %v65, %v4421
    %v4424 = vmul.f32 %v66, %v4421
    %v4425 = vmul.f32 %v73, %v4421
    %v4426 = vmul.f32 %v74, %v4421
    %v4427 = vmul.f32 %v75, %v4421
    %v4434 = vrot.slane %v4422, 2
    %v4435 = vrot.slane %v4423, 2
    %v4436 = vsel %vm4241, %v4434, %v4435
    %v4437 = vrot.slane %v4424, 2
    %v4438 = vsel %vm4241, %v4435, %v4437
    %v4439 = vrot.slane %v4425, 2
    %v4440 = vrot.slane %v4426, 2
    %v4441 = vsel %vm4241, %v4439, %v4440
    %v4442 = vrot.slane %v4427, 2
    %v4443 = vsel %vm4241, %v4440, %v4442
    %v4448 = vadd.f32 %v4183, %v4436
    %v4449 = vadd.f32 %v4184, %v4438
    %v4450 = vadd.f32 %v4185, %v4441
    %v4451 = vadd.f32 %v4186, %v4443
    %s4452 = sld [smem:[#allocation2 + $0x97]]
    %v4453 = vstv %s4452
    %v4454 = vmul.f32 %v64, %v4453
    %v4455 = vmul.f32 %v65, %v4453
    %v4456 = vmul.f32 %v66, %v4453
    %v4457 = vmul.f32 %v73, %v4453
    %v4458 = vmul.f32 %v74, %v4453
    %v4459 = vmul.f32 %v75, %v4453
    %v4466 = vrot.slane %v4454, 2
    %v4467 = vrot.slane %v4455, 2
    %v4468 = vsel %vm4241, %v4466, %v4467
    %v4469 = vrot.slane %v4456, 2
    %v4470 = vsel %vm4241, %v4467, %v4469
    %v4471 = vrot.slane %v4457, 2
    %v4472 = vrot.slane %v4458, 2
    %v4473 = vsel %vm4241, %v4471, %v4472
    %v4474 = vrot.slane %v4459, 2
    %v4475 = vsel %vm4241, %v4472, %v4474
    %v4480 = vadd.f32 %v4223, %v4468
    %v4481 = vadd.f32 %v4224, %v4470
    %v4482 = vadd.f32 %v4225, %v4473
    %v4483 = vadd.f32 %v4226, %v4475
    %s4484 = sld [smem:[#allocation2 + $0x98]]
    %v4485 = vstv %s4484
    %v4486 = vmul.f32 %v67, %v4485
    %v4487 = vmul.f32 %v68, %v4485
    %v4488 = vmul.f32 %v69, %v4485
    %v4489 = vmul.f32 %v76, %v4485
    %v4490 = vmul.f32 %v77, %v4485
    %v4491 = vmul.f32 %v78, %v4485
    %v4498 = vrot.slane %v4486, 2
    %v4499 = vrot.slane %v4487, 2
    %v4500 = vsel %vm4241, %v4498, %v4499
    %v4501 = vrot.slane %v4488, 2
    %v4502 = vsel %vm4241, %v4499, %v4501
    %v4503 = vrot.slane %v4489, 2
    %v4504 = vrot.slane %v4490, 2
    %v4505 = vsel %vm4241, %v4503, %v4504
    %v4506 = vrot.slane %v4491, 2
    %v4507 = vsel %vm4241, %v4504, %v4506
    %v4512 = vadd.f32 %v4256, %v4500
    %v4513 = vadd.f32 %v4257, %v4502
    %v4514 = vadd.f32 %v4258, %v4505
    %v4515 = vadd.f32 %v4259, %v4507
    %s4516 = sld [smem:[#allocation2 + $0x99]]
    %v4517 = vstv %s4516
    %v4518 = vmul.f32 %v67, %v4517
    %v4519 = vmul.f32 %v68, %v4517
    %v4520 = vmul.f32 %v69, %v4517
    %v4521 = vmul.f32 %v76, %v4517
    %v4522 = vmul.f32 %v77, %v4517
    %v4523 = vmul.f32 %v78, %v4517
    %v4530 = vrot.slane %v4518, 2
    %v4531 = vrot.slane %v4519, 2
    %v4532 = vsel %vm4241, %v4530, %v4531
    %v4533 = vrot.slane %v4520, 2
    %v4534 = vsel %vm4241, %v4531, %v4533
    %v4535 = vrot.slane %v4521, 2
    %v4536 = vrot.slane %v4522, 2
    %v4537 = vsel %vm4241, %v4535, %v4536
    %v4538 = vrot.slane %v4523, 2
    %v4539 = vsel %vm4241, %v4536, %v4538
    %v4544 = vadd.f32 %v4288, %v4532
    %v4545 = vadd.f32 %v4289, %v4534
    %v4546 = vadd.f32 %v4290, %v4537
    %v4547 = vadd.f32 %v4291, %v4539
    %s4548 = sld [smem:[#allocation2 + $0x9a]]
    %v4549 = vstv %s4548
    %v4550 = vmul.f32 %v67, %v4549
    %v4551 = vmul.f32 %v68, %v4549
    %v4552 = vmul.f32 %v69, %v4549
    %v4553 = vmul.f32 %v76, %v4549
    %v4554 = vmul.f32 %v77, %v4549
    %v4555 = vmul.f32 %v78, %v4549
    %v4562 = vrot.slane %v4550, 2
    %v4563 = vrot.slane %v4551, 2
    %v4564 = vsel %vm4241, %v4562, %v4563
    %v4565 = vrot.slane %v4552, 2
    %v4566 = vsel %vm4241, %v4563, %v4565
    %v4567 = vrot.slane %v4553, 2
    %v4568 = vrot.slane %v4554, 2
    %v4569 = vsel %vm4241, %v4567, %v4568
    %v4570 = vrot.slane %v4555, 2
    %v4571 = vsel %vm4241, %v4568, %v4570
    %v4576 = vadd.f32 %v4320, %v4564
    %v4577 = vadd.f32 %v4321, %v4566
    %v4578 = vadd.f32 %v4322, %v4569
    %v4579 = vadd.f32 %v4323, %v4571
    %s4580 = sld [smem:[#allocation2 + $0x9b]]
    %v4581 = vstv %s4580
    %v4582 = vmul.f32 %v67, %v4581
    %v4583 = vmul.f32 %v68, %v4581
    %v4584 = vmul.f32 %v69, %v4581
    %v4585 = vmul.f32 %v76, %v4581
    %v4586 = vmul.f32 %v77, %v4581
    %v4587 = vmul.f32 %v78, %v4581
    %v4594 = vrot.slane %v4582, 2
    %v4595 = vrot.slane %v4583, 2
    %v4596 = vsel %vm4241, %v4594, %v4595
    %v4597 = vrot.slane %v4584, 2
    %v4598 = vsel %vm4241, %v4595, %v4597
    %v4599 = vrot.slane %v4585, 2
    %v4600 = vrot.slane %v4586, 2
    %v4601 = vsel %vm4241, %v4599, %v4600
    %v4602 = vrot.slane %v4587, 2
    %v4603 = vsel %vm4241, %v4600, %v4602
    %v4608 = vadd.f32 %v4352, %v4596
    %v4609 = vadd.f32 %v4353, %v4598
    %v4610 = vadd.f32 %v4354, %v4601
    %v4611 = vadd.f32 %v4355, %v4603
    %s4612 = sld [smem:[#allocation2 + $0x9c]]
    %v4613 = vstv %s4612
    %v4614 = vmul.f32 %v67, %v4613
    %v4615 = vmul.f32 %v68, %v4613
    %v4616 = vmul.f32 %v69, %v4613
    %v4617 = vmul.f32 %v76, %v4613
    %v4618 = vmul.f32 %v77, %v4613
    %v4619 = vmul.f32 %v78, %v4613
    %v4626 = vrot.slane %v4614, 2
    %v4627 = vrot.slane %v4615, 2
    %v4628 = vsel %vm4241, %v4626, %v4627
    %v4629 = vrot.slane %v4616, 2
    %v4630 = vsel %vm4241, %v4627, %v4629
    %v4631 = vrot.slane %v4617, 2
    %v4632 = vrot.slane %v4618, 2
    %v4633 = vsel %vm4241, %v4631, %v4632
    %v4634 = vrot.slane %v4619, 2
    %v4635 = vsel %vm4241, %v4632, %v4634
    %v4640 = vadd.f32 %v4384, %v4628
    %v4641 = vadd.f32 %v4385, %v4630
    %v4642 = vadd.f32 %v4386, %v4633
    %v4643 = vadd.f32 %v4387, %v4635
    %s4644 = sld [smem:[#allocation2 + $0x9d]]
    %v4645 = vstv %s4644
    %v4646 = vmul.f32 %v67, %v4645
    %v4647 = vmul.f32 %v68, %v4645
    %v4648 = vmul.f32 %v69, %v4645
    %v4649 = vmul.f32 %v76, %v4645
    %v4650 = vmul.f32 %v77, %v4645
    %v4651 = vmul.f32 %v78, %v4645
    %v4658 = vrot.slane %v4646, 2
    %v4659 = vrot.slane %v4647, 2
    %v4660 = vsel %vm4241, %v4658, %v4659
    %v4661 = vrot.slane %v4648, 2
    %v4662 = vsel %vm4241, %v4659, %v4661
    %v4663 = vrot.slane %v4649, 2
    %v4664 = vrot.slane %v4650, 2
    %v4665 = vsel %vm4241, %v4663, %v4664
    %v4666 = vrot.slane %v4651, 2
    %v4667 = vsel %vm4241, %v4664, %v4666
    %v4672 = vadd.f32 %v4416, %v4660
    %v4673 = vadd.f32 %v4417, %v4662
    %v4674 = vadd.f32 %v4418, %v4665
    %v4675 = vadd.f32 %v4419, %v4667
    %s4676 = sld [smem:[#allocation2 + $0x9e]]
    %v4677 = vstv %s4676
    %v4678 = vmul.f32 %v67, %v4677
    %v4679 = vmul.f32 %v68, %v4677
    %v4680 = vmul.f32 %v69, %v4677
    %v4681 = vmul.f32 %v76, %v4677
    %v4682 = vmul.f32 %v77, %v4677
    %v4683 = vmul.f32 %v78, %v4677
    %v4690 = vrot.slane %v4678, 2
    %v4691 = vrot.slane %v4679, 2
    %v4692 = vsel %vm4241, %v4690, %v4691
    %v4693 = vrot.slane %v4680, 2
    %v4694 = vsel %vm4241, %v4691, %v4693
    %v4695 = vrot.slane %v4681, 2
    %v4696 = vrot.slane %v4682, 2
    %v4697 = vsel %vm4241, %v4695, %v4696
    %v4698 = vrot.slane %v4683, 2
    %v4699 = vsel %vm4241, %v4696, %v4698
    %v4704 = vadd.f32 %v4448, %v4692
    %v4705 = vadd.f32 %v4449, %v4694
    %v4706 = vadd.f32 %v4450, %v4697
    %v4707 = vadd.f32 %v4451, %v4699
    %s4708 = sld [smem:[#allocation2 + $0x9f]]
    %v4709 = vstv %s4708
    %v4710 = vmul.f32 %v67, %v4709
    %v4711 = vmul.f32 %v68, %v4709
    %v4712 = vmul.f32 %v69, %v4709
    %v4713 = vmul.f32 %v76, %v4709
    %v4714 = vmul.f32 %v77, %v4709
    %v4715 = vmul.f32 %v78, %v4709
    %v4722 = vrot.slane %v4710, 2
    %v4723 = vrot.slane %v4711, 2
    %v4724 = vsel %vm4241, %v4722, %v4723
    %v4725 = vrot.slane %v4712, 2
    %v4726 = vsel %vm4241, %v4723, %v4725
    %v4727 = vrot.slane %v4713, 2
    %v4728 = vrot.slane %v4714, 2
    %v4729 = vsel %vm4241, %v4727, %v4728
    %v4730 = vrot.slane %v4715, 2
    %v4731 = vsel %vm4241, %v4728, %v4730
    %v4736 = vadd.f32 %v4480, %v4724
    %v4737 = vadd.f32 %v4481, %v4726
    %v4738 = vadd.f32 %v4482, %v4729
    %v4739 = vadd.f32 %v4483, %v4731
    %s4740 = sld [smem:[#allocation2 + $0xa0]]
    %v4741 = vstv %s4740
    %v4742 = vmul.f32 %v70, %v4741
    %v4743 = vmul.f32 %v71, %v4741
    %v4744 = vmul.f32 %v72, %v4741
    %v4745 = vmul.f32 %v79, %v4741
    %v4746 = vmul.f32 %v80, %v4741
    %v4747 = vmul.f32 %v81, %v4741
    %v4754 = vrot.slane %v4742, 2
    %v4755 = vrot.slane %v4743, 2
    %v4756 = vsel %vm4241, %v4754, %v4755
    %v4757 = vrot.slane %v4744, 2
    %v4758 = vsel %vm4241, %v4755, %v4757
    %v4759 = vrot.slane %v4745, 2
    %v4760 = vrot.slane %v4746, 2
    %v4761 = vsel %vm4241, %v4759, %v4760
    %v4762 = vrot.slane %v4747, 2
    %v4763 = vsel %vm4241, %v4760, %v4762
    %v4768 = vadd.f32 %v4512, %v4756
    %v4769 = vadd.f32 %v4513, %v4758
    %v4770 = vadd.f32 %v4514, %v4761
    %v4771 = vadd.f32 %v4515, %v4763
    %s4772 = sld [smem:[#allocation2 + $0xa1]]
    %v4773 = vstv %s4772
    %v4774 = vmul.f32 %v70, %v4773
    %v4775 = vmul.f32 %v71, %v4773
    %v4776 = vmul.f32 %v72, %v4773
    %v4777 = vmul.f32 %v79, %v4773
    %v4778 = vmul.f32 %v80, %v4773
    %v4779 = vmul.f32 %v81, %v4773
    %v4786 = vrot.slane %v4774, 2
    %v4787 = vrot.slane %v4775, 2
    %v4788 = vsel %vm4241, %v4786, %v4787
    %v4789 = vrot.slane %v4776, 2
    %v4790 = vsel %vm4241, %v4787, %v4789
    %v4791 = vrot.slane %v4777, 2
    %v4792 = vrot.slane %v4778, 2
    %v4793 = vsel %vm4241, %v4791, %v4792
    %v4794 = vrot.slane %v4779, 2
    %v4795 = vsel %vm4241, %v4792, %v4794
    %v4800 = vadd.f32 %v4544, %v4788
    %v4801 = vadd.f32 %v4545, %v4790
    %v4802 = vadd.f32 %v4546, %v4793
    %v4803 = vadd.f32 %v4547, %v4795
    %s4804 = sld [smem:[#allocation2 + $0xa2]]
    %v4805 = vstv %s4804
    %v4806 = vmul.f32 %v70, %v4805
    %v4807 = vmul.f32 %v71, %v4805
    %v4808 = vmul.f32 %v72, %v4805
    %v4809 = vmul.f32 %v79, %v4805
    %v4810 = vmul.f32 %v80, %v4805
    %v4811 = vmul.f32 %v81, %v4805
    %v4818 = vrot.slane %v4806, 2
    %v4819 = vrot.slane %v4807, 2
    %v4820 = vsel %vm4241, %v4818, %v4819
    %v4821 = vrot.slane %v4808, 2
    %v4822 = vsel %vm4241, %v4819, %v4821
    %v4823 = vrot.slane %v4809, 2
    %v4824 = vrot.slane %v4810, 2
    %v4825 = vsel %vm4241, %v4823, %v4824
    %v4826 = vrot.slane %v4811, 2
    %v4827 = vsel %vm4241, %v4824, %v4826
    %v4832 = vadd.f32 %v4576, %v4820
    %v4833 = vadd.f32 %v4577, %v4822
    %v4834 = vadd.f32 %v4578, %v4825
    %v4835 = vadd.f32 %v4579, %v4827
    %s4836 = sld [smem:[#allocation2 + $0xa3]]
    %v4837 = vstv %s4836
    %v4838 = vmul.f32 %v70, %v4837
    %v4839 = vmul.f32 %v71, %v4837
    %v4840 = vmul.f32 %v72, %v4837
    %v4841 = vmul.f32 %v79, %v4837
    %v4842 = vmul.f32 %v80, %v4837
    %v4843 = vmul.f32 %v81, %v4837
    %v4850 = vrot.slane %v4838, 2
    %v4851 = vrot.slane %v4839, 2
    %v4852 = vsel %vm4241, %v4850, %v4851
    %v4853 = vrot.slane %v4840, 2
    %v4854 = vsel %vm4241, %v4851, %v4853
    %v4855 = vrot.slane %v4841, 2
    %v4856 = vrot.slane %v4842, 2
    %v4857 = vsel %vm4241, %v4855, %v4856
    %v4858 = vrot.slane %v4843, 2
    %v4859 = vsel %vm4241, %v4856, %v4858
    %v4864 = vadd.f32 %v4608, %v4852
    %v4865 = vadd.f32 %v4609, %v4854
    %v4866 = vadd.f32 %v4610, %v4857
    %v4867 = vadd.f32 %v4611, %v4859
    %s4868 = sld [smem:[#allocation2 + $0xa4]]
    %v4869 = vstv %s4868
    %v4870 = vmul.f32 %v70, %v4869
    %v4871 = vmul.f32 %v71, %v4869
    %v4872 = vmul.f32 %v72, %v4869
    %v4873 = vmul.f32 %v79, %v4869
    %v4874 = vmul.f32 %v80, %v4869
    %v4875 = vmul.f32 %v81, %v4869
    %v4882 = vrot.slane %v4870, 2
    %v4883 = vrot.slane %v4871, 2
    %v4884 = vsel %vm4241, %v4882, %v4883
    %v4885 = vrot.slane %v4872, 2
    %v4886 = vsel %vm4241, %v4883, %v4885
    %v4887 = vrot.slane %v4873, 2
    %v4888 = vrot.slane %v4874, 2
    %v4889 = vsel %vm4241, %v4887, %v4888
    %v4890 = vrot.slane %v4875, 2
    %v4891 = vsel %vm4241, %v4888, %v4890
    %v4896 = vadd.f32 %v4640, %v4884
    %v4897 = vadd.f32 %v4641, %v4886
    %v4898 = vadd.f32 %v4642, %v4889
    %v4899 = vadd.f32 %v4643, %v4891
    %s4900 = sld [smem:[#allocation2 + $0xa5]]
    %v4901 = vstv %s4900
    %v4902 = vmul.f32 %v70, %v4901
    %v4903 = vmul.f32 %v71, %v4901
    %v4904 = vmul.f32 %v72, %v4901
    %v4905 = vmul.f32 %v79, %v4901
    %v4906 = vmul.f32 %v80, %v4901
    %v4907 = vmul.f32 %v81, %v4901
    %v4914 = vrot.slane %v4902, 2
    %v4915 = vrot.slane %v4903, 2
    %v4916 = vsel %vm4241, %v4914, %v4915
    %v4917 = vrot.slane %v4904, 2
    %v4918 = vsel %vm4241, %v4915, %v4917
    %v4919 = vrot.slane %v4905, 2
    %v4920 = vrot.slane %v4906, 2
    %v4921 = vsel %vm4241, %v4919, %v4920
    %v4922 = vrot.slane %v4907, 2
    %v4923 = vsel %vm4241, %v4920, %v4922
    %v4928 = vadd.f32 %v4672, %v4916
    %v4929 = vadd.f32 %v4673, %v4918
    %v4930 = vadd.f32 %v4674, %v4921
    %v4931 = vadd.f32 %v4675, %v4923
    %s4932 = sld [smem:[#allocation2 + $0xa6]]
    %v4933 = vstv %s4932
    %v4934 = vmul.f32 %v70, %v4933
    %v4935 = vmul.f32 %v71, %v4933
    %v4936 = vmul.f32 %v72, %v4933
    %v4937 = vmul.f32 %v79, %v4933
    %v4938 = vmul.f32 %v80, %v4933
    %v4939 = vmul.f32 %v81, %v4933
    %v4946 = vrot.slane %v4934, 2
    %v4947 = vrot.slane %v4935, 2
    %v4948 = vsel %vm4241, %v4946, %v4947
    %v4949 = vrot.slane %v4936, 2
    %v4950 = vsel %vm4241, %v4947, %v4949
    %v4951 = vrot.slane %v4937, 2
    %v4952 = vrot.slane %v4938, 2
    %v4953 = vsel %vm4241, %v4951, %v4952
    %v4954 = vrot.slane %v4939, 2
    %v4955 = vsel %vm4241, %v4952, %v4954
    %v4960 = vadd.f32 %v4704, %v4948
    %v4961 = vadd.f32 %v4705, %v4950
    %v4962 = vadd.f32 %v4706, %v4953
    %v4963 = vadd.f32 %v4707, %v4955
    %s4964 = sld [smem:[#allocation2 + $0xa7]]
    %v4965 = vstv %s4964
    %v4966 = vmul.f32 %v70, %v4965
    %v4967 = vmul.f32 %v71, %v4965
    %v4968 = vmul.f32 %v72, %v4965
    %v4969 = vmul.f32 %v79, %v4965
    %v4970 = vmul.f32 %v80, %v4965
    %v4971 = vmul.f32 %v81, %v4965
    %v4978 = vrot.slane %v4966, 2
    %v4979 = vrot.slane %v4967, 2
    %v4980 = vsel %vm4241, %v4978, %v4979
    %v4981 = vrot.slane %v4968, 2
    %v4982 = vsel %vm4241, %v4979, %v4981
    %v4983 = vrot.slane %v4969, 2
    %v4984 = vrot.slane %v4970, 2
    %v4985 = vsel %vm4241, %v4983, %v4984
    %v4986 = vrot.slane %v4971, 2
    %v4987 = vsel %vm4241, %v4984, %v4986
    %v4992 = vadd.f32 %v4736, %v4980
    %v4993 = vadd.f32 %v4737, %v4982
    %v4994 = vadd.f32 %v4738, %v4985
    %v4995 = vadd.f32 %v4739, %v4987
    %s4996 = sld [smem:[#allocation2 + $0xa8]]
    %v4997 = vstv %s4996
    %v4998 = vmul.f32 %v64, %v4997
    %v4999 = vmul.f32 %v65, %v4997
    %v5000 = vmul.f32 %v66, %v4997
    %v5001 = vmul.f32 %v73, %v4997
    %v5002 = vmul.f32 %v74, %v4997
    %v5003 = vmul.f32 %v75, %v4997
    %v5010 = vrot.slane %v4998, 2
    %v5011 = vrot.slane %v4999, 2
    %v5012 = vsel %vm4241, %v5010, %v5011
    %v5013 = vrot.slane %v5000, 2
    %v5014 = vsel %vm4241, %v5011, %v5013
    %v5015 = vrot.slane %v5001, 2
    %v5016 = vrot.slane %v5002, 2
    %v5017 = vsel %vm4241, %v5015, %v5016
    %v5018 = vrot.slane %v5003, 2
    %v5019 = vsel %vm4241, %v5016, %v5018
    %5020 = vrot.lane.b32.xlu0 %v5012, 127
    %v5021 = vpop.permute.xlu0 %5020
    %5022 = vrot.lane.b32.xlu0 %v5014, 127
    %v5023 = vpop.permute.xlu0 %5022
    %5024 = vrot.lane.b32.xlu0 %v5017, 127
    %v5025 = vpop.permute.xlu0 %5024
    %5026 = vrot.lane.b32.xlu0 %v5019, 127
    %v5027 = vpop.permute.xlu0 %5026
    %v5032 = vadd.f32 %v4768, %v5021
    %v5033 = vadd.f32 %v4769, %v5023
    %v5034 = vadd.f32 %v4770, %v5025
    %v5035 = vadd.f32 %v4771, %v5027
    %s5036 = sld [smem:[#allocation2 + $0xa9]]
    %v5037 = vstv %s5036
    %v5038 = vmul.f32 %v64, %v5037
    %v5039 = vmul.f32 %v65, %v5037
    %v5040 = vmul.f32 %v66, %v5037
    %v5041 = vmul.f32 %v73, %v5037
    %v5042 = vmul.f32 %v74, %v5037
    %v5043 = vmul.f32 %v75, %v5037
    %v5050 = vrot.slane %v5038, 2
    %v5051 = vrot.slane %v5039, 2
    %v5052 = vsel %vm4241, %v5050, %v5051
    %v5053 = vrot.slane %v5040, 2
    %v5054 = vsel %vm4241, %v5051, %v5053
    %v5055 = vrot.slane %v5041, 2
    %v5056 = vrot.slane %v5042, 2
    %v5057 = vsel %vm4241, %v5055, %v5056
    %v5058 = vrot.slane %v5043, 2
    %v5059 = vsel %vm4241, %v5056, %v5058
    %5060 = vrot.lane.b32.xlu0 %v5052, 127
    %v5061 = vpop.permute.xlu0 %5060
    %5062 = vrot.lane.b32.xlu0 %v5054, 127
    %v5063 = vpop.permute.xlu0 %5062
    %5064 = vrot.lane.b32.xlu0 %v5057, 127
    %v5065 = vpop.permute.xlu0 %5064
    %5066 = vrot.lane.b32.xlu0 %v5059, 127
    %v5067 = vpop.permute.xlu0 %5066
    %v5072 = vadd.f32 %v4800, %v5061
    %v5073 = vadd.f32 %v4801, %v5063
    %v5074 = vadd.f32 %v4802, %v5065
    %v5075 = vadd.f32 %v4803, %v5067
    %s5076 = sld [smem:[#allocation2 + $0xaa]]
    %v5077 = vstv %s5076
    %v5078 = vmul.f32 %v64, %v5077
    %v5079 = vmul.f32 %v65, %v5077
    %v5080 = vmul.f32 %v66, %v5077
    %v5081 = vmul.f32 %v73, %v5077
    %v5082 = vmul.f32 %v74, %v5077
    %v5083 = vmul.f32 %v75, %v5077
    %v5090 = vrot.slane %v5078, 2
    %v5091 = vrot.slane %v5079, 2
    %v5092 = vsel %vm4241, %v5090, %v5091
    %v5093 = vrot.slane %v5080, 2
    %v5094 = vsel %vm4241, %v5091, %v5093
    %v5095 = vrot.slane %v5081, 2
    %v5096 = vrot.slane %v5082, 2
    %v5097 = vsel %vm4241, %v5095, %v5096
    %v5098 = vrot.slane %v5083, 2
    %v5099 = vsel %vm4241, %v5096, %v5098
    %5100 = vrot.lane.b32.xlu0 %v5092, 127
    %v5101 = vpop.permute.xlu0 %5100
    %5102 = vrot.lane.b32.xlu0 %v5094, 127
    %v5103 = vpop.permute.xlu0 %5102
    %5104 = vrot.lane.b32.xlu0 %v5097, 127
    %v5105 = vpop.permute.xlu0 %5104
    %5106 = vrot.lane.b32.xlu0 %v5099, 127
    %v5107 = vpop.permute.xlu0 %5106
    %v5112 = vadd.f32 %v4832, %v5101
    %v5113 = vadd.f32 %v4833, %v5103
    %v5114 = vadd.f32 %v4834, %v5105
    %v5115 = vadd.f32 %v4835, %v5107
    %s5116 = sld [smem:[#allocation2 + $0xab]]
    %v5117 = vstv %s5116
    %v5118 = vmul.f32 %v64, %v5117
    %v5119 = vmul.f32 %v65, %v5117
    %v5120 = vmul.f32 %v66, %v5117
    %v5121 = vmul.f32 %v73, %v5117
    %v5122 = vmul.f32 %v74, %v5117
    %v5123 = vmul.f32 %v75, %v5117
    %v5130 = vrot.slane %v5118, 2
    %v5131 = vrot.slane %v5119, 2
    %v5132 = vsel %vm4241, %v5130, %v5131
    %v5133 = vrot.slane %v5120, 2
    %v5134 = vsel %vm4241, %v5131, %v5133
    %v5135 = vrot.slane %v5121, 2
    %v5136 = vrot.slane %v5122, 2
    %v5137 = vsel %vm4241, %v5135, %v5136
    %v5138 = vrot.slane %v5123, 2
    %v5139 = vsel %vm4241, %v5136, %v5138
    %5140 = vrot.lane.b32.xlu0 %v5132, 127
    %v5141 = vpop.permute.xlu0 %5140
    %5142 = vrot.lane.b32.xlu0 %v5134, 127
    %v5143 = vpop.permute.xlu0 %5142
    %5144 = vrot.lane.b32.xlu0 %v5137, 127
    %v5145 = vpop.permute.xlu0 %5144
    %5146 = vrot.lane.b32.xlu0 %v5139, 127
    %v5147 = vpop.permute.xlu0 %5146
    %v5152 = vadd.f32 %v4864, %v5141
    %v5153 = vadd.f32 %v4865, %v5143
    %v5154 = vadd.f32 %v4866, %v5145
    %v5155 = vadd.f32 %v4867, %v5147
    %s5156 = sld [smem:[#allocation2 + $0xac]]
    %v5157 = vstv %s5156
    %v5158 = vmul.f32 %v64, %v5157
    %v5159 = vmul.f32 %v65, %v5157
    %v5160 = vmul.f32 %v66, %v5157
    %v5161 = vmul.f32 %v73, %v5157
    %v5162 = vmul.f32 %v74, %v5157
    %v5163 = vmul.f32 %v75, %v5157
    %v5170 = vrot.slane %v5158, 2
    %v5171 = vrot.slane %v5159, 2
    %v5172 = vsel %vm4241, %v5170, %v5171
    %v5173 = vrot.slane %v5160, 2
    %v5174 = vsel %vm4241, %v5171, %v5173
    %v5175 = vrot.slane %v5161, 2
    %v5176 = vrot.slane %v5162, 2
    %v5177 = vsel %vm4241, %v5175, %v5176
    %v5178 = vrot.slane %v5163, 2
    %v5179 = vsel %vm4241, %v5176, %v5178
    %5180 = vrot.lane.b32.xlu0 %v5172, 127
    %v5181 = vpop.permute.xlu0 %5180
    %5182 = vrot.lane.b32.xlu0 %v5174, 127
    %v5183 = vpop.permute.xlu0 %5182
    %5184 = vrot.lane.b32.xlu0 %v5177, 127
    %v5185 = vpop.permute.xlu0 %5184
    %5186 = vrot.lane.b32.xlu0 %v5179, 127
    %v5187 = vpop.permute.xlu0 %5186
    %v5192 = vadd.f32 %v4896, %v5181
    %v5193 = vadd.f32 %v4897, %v5183
    %v5194 = vadd.f32 %v4898, %v5185
    %v5195 = vadd.f32 %v4899, %v5187
    %s5196 = sld [smem:[#allocation2 + $0xad]]
    %v5197 = vstv %s5196
    %v5198 = vmul.f32 %v64, %v5197
    %v5199 = vmul.f32 %v65, %v5197
    %v5200 = vmul.f32 %v66, %v5197
    %v5201 = vmul.f32 %v73, %v5197
    %v5202 = vmul.f32 %v74, %v5197
    %v5203 = vmul.f32 %v75, %v5197
    %v5210 = vrot.slane %v5198, 2
    %v5211 = vrot.slane %v5199, 2
    %v5212 = vsel %vm4241, %v5210, %v5211
    %v5213 = vrot.slane %v5200, 2
    %v5214 = vsel %vm4241, %v5211, %v5213
    %v5215 = vrot.slane %v5201, 2
    %v5216 = vrot.slane %v5202, 2
    %v5217 = vsel %vm4241, %v5215, %v5216
    %v5218 = vrot.slane %v5203, 2
    %v5219 = vsel %vm4241, %v5216, %v5218
    %5220 = vrot.lane.b32.xlu0 %v5212, 127
    %v5221 = vpop.permute.xlu0 %5220
    %5222 = vrot.lane.b32.xlu0 %v5214, 127
    %v5223 = vpop.permute.xlu0 %5222
    %5224 = vrot.lane.b32.xlu0 %v5217, 127
    %v5225 = vpop.permute.xlu0 %5224
    %5226 = vrot.lane.b32.xlu0 %v5219, 127
    %v5227 = vpop.permute.xlu0 %5226
    %v5232 = vadd.f32 %v4928, %v5221
    %v5233 = vadd.f32 %v4929, %v5223
    %v5234 = vadd.f32 %v4930, %v5225
    %v5235 = vadd.f32 %v4931, %v5227
    %s5236 = sld [smem:[#allocation2 + $0xae]]
    %v5237 = vstv %s5236
    %v5238 = vmul.f32 %v64, %v5237
    %v5239 = vmul.f32 %v65, %v5237
    %v5240 = vmul.f32 %v66, %v5237
    %v5241 = vmul.f32 %v73, %v5237
    %v5242 = vmul.f32 %v74, %v5237
    %v5243 = vmul.f32 %v75, %v5237
    %v5250 = vrot.slane %v5238, 2
    %v5251 = vrot.slane %v5239, 2
    %v5252 = vsel %vm4241, %v5250, %v5251
    %v5253 = vrot.slane %v5240, 2
    %v5254 = vsel %vm4241, %v5251, %v5253
    %v5255 = vrot.slane %v5241, 2
    %v5256 = vrot.slane %v5242, 2
    %v5257 = vsel %vm4241, %v5255, %v5256
    %v5258 = vrot.slane %v5243, 2
    %v5259 = vsel %vm4241, %v5256, %v5258
    %5260 = vrot.lane.b32.xlu0 %v5252, 127
    %v5261 = vpop.permute.xlu0 %5260
    %5262 = vrot.lane.b32.xlu0 %v5254, 127
    %v5263 = vpop.permute.xlu0 %5262
    %5264 = vrot.lane.b32.xlu0 %v5257, 127
    %v5265 = vpop.permute.xlu0 %5264
    %5266 = vrot.lane.b32.xlu0 %v5259, 127
    %v5267 = vpop.permute.xlu0 %5266
    %v5272 = vadd.f32 %v4960, %v5261
    %v5273 = vadd.f32 %v4961, %v5263
    %v5274 = vadd.f32 %v4962, %v5265
    %v5275 = vadd.f32 %v4963, %v5267
    %s5276 = sld [smem:[#allocation2 + $0xaf]]
    %v5277 = vstv %s5276
    %v5278 = vmul.f32 %v64, %v5277
    %v5279 = vmul.f32 %v65, %v5277
    %v5280 = vmul.f32 %v66, %v5277
    %v5281 = vmul.f32 %v73, %v5277
    %v5282 = vmul.f32 %v74, %v5277
    %v5283 = vmul.f32 %v75, %v5277
    %v5290 = vrot.slane %v5278, 2
    %v5291 = vrot.slane %v5279, 2
    %v5292 = vsel %vm4241, %v5290, %v5291
    %v5293 = vrot.slane %v5280, 2
    %v5294 = vsel %vm4241, %v5291, %v5293
    %v5295 = vrot.slane %v5281, 2
    %v5296 = vrot.slane %v5282, 2
    %v5297 = vsel %vm4241, %v5295, %v5296
    %v5298 = vrot.slane %v5283, 2
    %v5299 = vsel %vm4241, %v5296, %v5298
    %5300 = vrot.lane.b32.xlu0 %v5292, 127
    %v5301 = vpop.permute.xlu0 %5300
    %5302 = vrot.lane.b32.xlu0 %v5294, 127
    %v5303 = vpop.permute.xlu0 %5302
    %5304 = vrot.lane.b32.xlu0 %v5297, 127
    %v5305 = vpop.permute.xlu0 %5304
    %5306 = vrot.lane.b32.xlu0 %v5299, 127
    %v5307 = vpop.permute.xlu0 %5306
    %v5312 = vadd.f32 %v4992, %v5301
    %v5313 = vadd.f32 %v4993, %v5303
    %v5314 = vadd.f32 %v4994, %v5305
    %v5315 = vadd.f32 %v4995, %v5307
    %s5316 = sld [smem:[#allocation2 + $0xb0]]
    %v5317 = vstv %s5316
    %v5318 = vmul.f32 %v67, %v5317
    %v5319 = vmul.f32 %v68, %v5317
    %v5320 = vmul.f32 %v69, %v5317
    %v5321 = vmul.f32 %v76, %v5317
    %v5322 = vmul.f32 %v77, %v5317
    %v5323 = vmul.f32 %v78, %v5317
    %v5330 = vrot.slane %v5318, 2
    %v5331 = vrot.slane %v5319, 2
    %v5332 = vsel %vm4241, %v5330, %v5331
    %v5333 = vrot.slane %v5320, 2
    %v5334 = vsel %vm4241, %v5331, %v5333
    %v5335 = vrot.slane %v5321, 2
    %v5336 = vrot.slane %v5322, 2
    %v5337 = vsel %vm4241, %v5335, %v5336
    %v5338 = vrot.slane %v5323, 2
    %v5339 = vsel %vm4241, %v5336, %v5338
    %5340 = vrot.lane.b32.xlu0 %v5332, 127
    %v5341 = vpop.permute.xlu0 %5340
    %5342 = vrot.lane.b32.xlu0 %v5334, 127
    %v5343 = vpop.permute.xlu0 %5342
    %5344 = vrot.lane.b32.xlu0 %v5337, 127
    %v5345 = vpop.permute.xlu0 %5344
    %5346 = vrot.lane.b32.xlu0 %v5339, 127
    %v5347 = vpop.permute.xlu0 %5346
    %v5352 = vadd.f32 %v5032, %v5341
    %v5353 = vadd.f32 %v5033, %v5343
    %v5354 = vadd.f32 %v5034, %v5345
    %v5355 = vadd.f32 %v5035, %v5347
    %s5356 = sld [smem:[#allocation2 + $0xb1]]
    %v5357 = vstv %s5356
    %v5358 = vmul.f32 %v67, %v5357
    %v5359 = vmul.f32 %v68, %v5357
    %v5360 = vmul.f32 %v69, %v5357
    %v5361 = vmul.f32 %v76, %v5357
    %v5362 = vmul.f32 %v77, %v5357
    %v5363 = vmul.f32 %v78, %v5357
    %v5370 = vrot.slane %v5358, 2
    %v5371 = vrot.slane %v5359, 2
    %v5372 = vsel %vm4241, %v5370, %v5371
    %v5373 = vrot.slane %v5360, 2
    %v5374 = vsel %vm4241, %v5371, %v5373
    %v5375 = vrot.slane %v5361, 2
    %v5376 = vrot.slane %v5362, 2
    %v5377 = vsel %vm4241, %v5375, %v5376
    %v5378 = vrot.slane %v5363, 2
    %v5379 = vsel %vm4241, %v5376, %v5378
    %5380 = vrot.lane.b32.xlu0 %v5372, 127
    %v5381 = vpop.permute.xlu0 %5380
    %5382 = vrot.lane.b32.xlu0 %v5374, 127
    %v5383 = vpop.permute.xlu0 %5382
    %5384 = vrot.lane.b32.xlu0 %v5377, 127
    %v5385 = vpop.permute.xlu0 %5384
    %5386 = vrot.lane.b32.xlu0 %v5379, 127
    %v5387 = vpop.permute.xlu0 %5386
    %v5392 = vadd.f32 %v5072, %v5381
    %v5393 = vadd.f32 %v5073, %v5383
    %v5394 = vadd.f32 %v5074, %v5385
    %v5395 = vadd.f32 %v5075, %v5387
    %s5396 = sld [smem:[#allocation2 + $0xb2]]
    %v5397 = vstv %s5396
    %v5398 = vmul.f32 %v67, %v5397
    %v5399 = vmul.f32 %v68, %v5397
    %v5400 = vmul.f32 %v69, %v5397
    %v5401 = vmul.f32 %v76, %v5397
    %v5402 = vmul.f32 %v77, %v5397
    %v5403 = vmul.f32 %v78, %v5397
    %v5410 = vrot.slane %v5398, 2
    %v5411 = vrot.slane %v5399, 2
    %v5412 = vsel %vm4241, %v5410, %v5411
    %v5413 = vrot.slane %v5400, 2
    %v5414 = vsel %vm4241, %v5411, %v5413
    %v5415 = vrot.slane %v5401, 2
    %v5416 = vrot.slane %v5402, 2
    %v5417 = vsel %vm4241, %v5415, %v5416
    %v5418 = vrot.slane %v5403, 2
    %v5419 = vsel %vm4241, %v5416, %v5418
    %5420 = vrot.lane.b32.xlu0 %v5412, 127
    %v5421 = vpop.permute.xlu0 %5420
    %5422 = vrot.lane.b32.xlu0 %v5414, 127
    %v5423 = vpop.permute.xlu0 %5422
    %5424 = vrot.lane.b32.xlu0 %v5417, 127
    %v5425 = vpop.permute.xlu0 %5424
    %5426 = vrot.lane.b32.xlu0 %v5419, 127
    %v5427 = vpop.permute.xlu0 %5426
    %v5432 = vadd.f32 %v5112, %v5421
    %v5433 = vadd.f32 %v5113, %v5423
    %v5434 = vadd.f32 %v5114, %v5425
    %v5435 = vadd.f32 %v5115, %v5427
    %s5436 = sld [smem:[#allocation2 + $0xb3]]
    %v5437 = vstv %s5436
    %v5438 = vmul.f32 %v67, %v5437
    %v5439 = vmul.f32 %v68, %v5437
    %v5440 = vmul.f32 %v69, %v5437
    %v5441 = vmul.f32 %v76, %v5437
    %v5442 = vmul.f32 %v77, %v5437
    %v5443 = vmul.f32 %v78, %v5437
    %v5450 = vrot.slane %v5438, 2
    %v5451 = vrot.slane %v5439, 2
    %v5452 = vsel %vm4241, %v5450, %v5451
    %v5453 = vrot.slane %v5440, 2
    %v5454 = vsel %vm4241, %v5451, %v5453
    %v5455 = vrot.slane %v5441, 2
    %v5456 = vrot.slane %v5442, 2
    %v5457 = vsel %vm4241, %v5455, %v5456
    %v5458 = vrot.slane %v5443, 2
    %v5459 = vsel %vm4241, %v5456, %v5458
    %5460 = vrot.lane.b32.xlu0 %v5452, 127
    %v5461 = vpop.permute.xlu0 %5460
    %5462 = vrot.lane.b32.xlu0 %v5454, 127
    %v5463 = vpop.permute.xlu0 %5462
    %5464 = vrot.lane.b32.xlu0 %v5457, 127
    %v5465 = vpop.permute.xlu0 %5464
    %5466 = vrot.lane.b32.xlu0 %v5459, 127
    %v5467 = vpop.permute.xlu0 %5466
    %v5472 = vadd.f32 %v5152, %v5461
    %v5473 = vadd.f32 %v5153, %v5463
    %v5474 = vadd.f32 %v5154, %v5465
    %v5475 = vadd.f32 %v5155, %v5467
    %s5476 = sld [smem:[#allocation2 + $0xb4]]
    %v5477 = vstv %s5476
    %v5478 = vmul.f32 %v67, %v5477
    %v5479 = vmul.f32 %v68, %v5477
    %v5480 = vmul.f32 %v69, %v5477
    %v5481 = vmul.f32 %v76, %v5477
    %v5482 = vmul.f32 %v77, %v5477
    %v5483 = vmul.f32 %v78, %v5477
    %v5490 = vrot.slane %v5478, 2
    %v5491 = vrot.slane %v5479, 2
    %v5492 = vsel %vm4241, %v5490, %v5491
    %v5493 = vrot.slane %v5480, 2
    %v5494 = vsel %vm4241, %v5491, %v5493
    %v5495 = vrot.slane %v5481, 2
    %v5496 = vrot.slane %v5482, 2
    %v5497 = vsel %vm4241, %v5495, %v5496
    %v5498 = vrot.slane %v5483, 2
    %v5499 = vsel %vm4241, %v5496, %v5498
    %5500 = vrot.lane.b32.xlu0 %v5492, 127
    %v5501 = vpop.permute.xlu0 %5500
    %5502 = vrot.lane.b32.xlu0 %v5494, 127
    %v5503 = vpop.permute.xlu0 %5502
    %5504 = vrot.lane.b32.xlu0 %v5497, 127
    %v5505 = vpop.permute.xlu0 %5504
    %5506 = vrot.lane.b32.xlu0 %v5499, 127
    %v5507 = vpop.permute.xlu0 %5506
    %v5512 = vadd.f32 %v5192, %v5501
    %v5513 = vadd.f32 %v5193, %v5503
    %v5514 = vadd.f32 %v5194, %v5505
    %v5515 = vadd.f32 %v5195, %v5507
    %s5516 = sld [smem:[#allocation2 + $0xb5]]
    %v5517 = vstv %s5516
    %v5518 = vmul.f32 %v67, %v5517
    %v5519 = vmul.f32 %v68, %v5517
    %v5520 = vmul.f32 %v69, %v5517
    %v5521 = vmul.f32 %v76, %v5517
    %v5522 = vmul.f32 %v77, %v5517
    %v5523 = vmul.f32 %v78, %v5517
    %v5530 = vrot.slane %v5518, 2
    %v5531 = vrot.slane %v5519, 2
    %v5532 = vsel %vm4241, %v5530, %v5531
    %v5533 = vrot.slane %v5520, 2
    %v5534 = vsel %vm4241, %v5531, %v5533
    %v5535 = vrot.slane %v5521, 2
    %v5536 = vrot.slane %v5522, 2
    %v5537 = vsel %vm4241, %v5535, %v5536
    %v5538 = vrot.slane %v5523, 2
    %v5539 = vsel %vm4241, %v5536, %v5538
    %5540 = vrot.lane.b32.xlu0 %v5532, 127
    %v5541 = vpop.permute.xlu0 %5540
    %5542 = vrot.lane.b32.xlu0 %v5534, 127
    %v5543 = vpop.permute.xlu0 %5542
    %5544 = vrot.lane.b32.xlu0 %v5537, 127
    %v5545 = vpop.permute.xlu0 %5544
    %5546 = vrot.lane.b32.xlu0 %v5539, 127
    %v5547 = vpop.permute.xlu0 %5546
    %v5552 = vadd.f32 %v5232, %v5541
    %v5553 = vadd.f32 %v5233, %v5543
    %v5554 = vadd.f32 %v5234, %v5545
    %v5555 = vadd.f32 %v5235, %v5547
    %s5556 = sld [smem:[#allocation2 + $0xb6]]
    %v5557 = vstv %s5556
    %v5558 = vmul.f32 %v67, %v5557
    %v5559 = vmul.f32 %v68, %v5557
    %v5560 = vmul.f32 %v69, %v5557
    %v5561 = vmul.f32 %v76, %v5557
    %v5562 = vmul.f32 %v77, %v5557
    %v5563 = vmul.f32 %v78, %v5557
    %v5570 = vrot.slane %v5558, 2
    %v5571 = vrot.slane %v5559, 2
    %v5572 = vsel %vm4241, %v5570, %v5571
    %v5573 = vrot.slane %v5560, 2
    %v5574 = vsel %vm4241, %v5571, %v5573
    %v5575 = vrot.slane %v5561, 2
    %v5576 = vrot.slane %v5562, 2
    %v5577 = vsel %vm4241, %v5575, %v5576
    %v5578 = vrot.slane %v5563, 2
    %v5579 = vsel %vm4241, %v5576, %v5578
    %5580 = vrot.lane.b32.xlu0 %v5572, 127
    %v5581 = vpop.permute.xlu0 %5580
    %5582 = vrot.lane.b32.xlu0 %v5574, 127
    %v5583 = vpop.permute.xlu0 %5582
    %5584 = vrot.lane.b32.xlu0 %v5577, 127
    %v5585 = vpop.permute.xlu0 %5584
    %5586 = vrot.lane.b32.xlu0 %v5579, 127
    %v5587 = vpop.permute.xlu0 %5586
    %v5592 = vadd.f32 %v5272, %v5581
    %v5593 = vadd.f32 %v5273, %v5583
    %v5594 = vadd.f32 %v5274, %v5585
    %v5595 = vadd.f32 %v5275, %v5587
    %s5596 = sld [smem:[#allocation2 + $0xb7]]
    %v5597 = vstv %s5596
    %v5598 = vmul.f32 %v67, %v5597
    %v5599 = vmul.f32 %v68, %v5597
    %v5600 = vmul.f32 %v69, %v5597
    %v5601 = vmul.f32 %v76, %v5597
    %v5602 = vmul.f32 %v77, %v5597
    %v5603 = vmul.f32 %v78, %v5597
    %v5610 = vrot.slane %v5598, 2
    %v5611 = vrot.slane %v5599, 2
    %v5612 = vsel %vm4241, %v5610, %v5611
    %v5613 = vrot.slane %v5600, 2
    %v5614 = vsel %vm4241, %v5611, %v5613
    %v5615 = vrot.slane %v5601, 2
    %v5616 = vrot.slane %v5602, 2
    %v5617 = vsel %vm4241, %v5615, %v5616
    %v5618 = vrot.slane %v5603, 2
    %v5619 = vsel %vm4241, %v5616, %v5618
    %5620 = vrot.lane.b32.xlu0 %v5612, 127
    %v5621 = vpop.permute.xlu0 %5620
    %5622 = vrot.lane.b32.xlu0 %v5614, 127
    %v5623 = vpop.permute.xlu0 %5622
    %5624 = vrot.lane.b32.xlu0 %v5617, 127
    %v5625 = vpop.permute.xlu0 %5624
    %5626 = vrot.lane.b32.xlu0 %v5619, 127
    %v5627 = vpop.permute.xlu0 %5626
    %v5632 = vadd.f32 %v5312, %v5621
    %v5633 = vadd.f32 %v5313, %v5623
    %v5634 = vadd.f32 %v5314, %v5625
    %v5635 = vadd.f32 %v5315, %v5627
    %s5636 = sld [smem:[#allocation2 + $0xb8]]
    %v5637 = vstv %s5636
    %v5638 = vmul.f32 %v70, %v5637
    %v5639 = vmul.f32 %v71, %v5637
    %v5640 = vmul.f32 %v72, %v5637
    %v5641 = vmul.f32 %v79, %v5637
    %v5642 = vmul.f32 %v80, %v5637
    %v5643 = vmul.f32 %v81, %v5637
    %v5650 = vrot.slane %v5638, 2
    %v5651 = vrot.slane %v5639, 2
    %v5652 = vsel %vm4241, %v5650, %v5651
    %v5653 = vrot.slane %v5640, 2
    %v5654 = vsel %vm4241, %v5651, %v5653
    %v5655 = vrot.slane %v5641, 2
    %v5656 = vrot.slane %v5642, 2
    %v5657 = vsel %vm4241, %v5655, %v5656
    %v5658 = vrot.slane %v5643, 2
    %v5659 = vsel %vm4241, %v5656, %v5658
    %5660 = vrot.lane.b32.xlu0 %v5652, 127
    %v5661 = vpop.permute.xlu0 %5660
    %5662 = vrot.lane.b32.xlu0 %v5654, 127
    %v5663 = vpop.permute.xlu0 %5662
    %5664 = vrot.lane.b32.xlu0 %v5657, 127
    %v5665 = vpop.permute.xlu0 %5664
    %5666 = vrot.lane.b32.xlu0 %v5659, 127
    %v5667 = vpop.permute.xlu0 %5666
    %v5672 = vadd.f32 %v5352, %v5661
    %v5673 = vadd.f32 %v5353, %v5663
    %v5674 = vadd.f32 %v5354, %v5665
    %v5675 = vadd.f32 %v5355, %v5667
    %s5676 = sld [smem:[#allocation2 + $0xb9]]
    %v5677 = vstv %s5676
    %v5678 = vmul.f32 %v70, %v5677
    %v5679 = vmul.f32 %v71, %v5677
    %v5680 = vmul.f32 %v72, %v5677
    %v5681 = vmul.f32 %v79, %v5677
    %v5682 = vmul.f32 %v80, %v5677
    %v5683 = vmul.f32 %v81, %v5677
    %v5690 = vrot.slane %v5678, 2
    %v5691 = vrot.slane %v5679, 2
    %v5692 = vsel %vm4241, %v5690, %v5691
    %v5693 = vrot.slane %v5680, 2
    %v5694 = vsel %vm4241, %v5691, %v5693
    %v5695 = vrot.slane %v5681, 2
    %v5696 = vrot.slane %v5682, 2
    %v5697 = vsel %vm4241, %v5695, %v5696
    %v5698 = vrot.slane %v5683, 2
    %v5699 = vsel %vm4241, %v5696, %v5698
    %5700 = vrot.lane.b32.xlu0 %v5692, 127
    %v5701 = vpop.permute.xlu0 %5700
    %5702 = vrot.lane.b32.xlu0 %v5694, 127
    %v5703 = vpop.permute.xlu0 %5702
    %5704 = vrot.lane.b32.xlu0 %v5697, 127
    %v5705 = vpop.permute.xlu0 %5704
    %5706 = vrot.lane.b32.xlu0 %v5699, 127
    %v5707 = vpop.permute.xlu0 %5706
    %v5712 = vadd.f32 %v5392, %v5701
    %v5713 = vadd.f32 %v5393, %v5703
    %v5714 = vadd.f32 %v5394, %v5705
    %v5715 = vadd.f32 %v5395, %v5707
    %s5716 = sld [smem:[#allocation2 + $0xba]]
    %v5717 = vstv %s5716
    %v5718 = vmul.f32 %v70, %v5717
    %v5719 = vmul.f32 %v71, %v5717
    %v5720 = vmul.f32 %v72, %v5717
    %v5721 = vmul.f32 %v79, %v5717
    %v5722 = vmul.f32 %v80, %v5717
    %v5723 = vmul.f32 %v81, %v5717
    %v5730 = vrot.slane %v5718, 2
    %v5731 = vrot.slane %v5719, 2
    %v5732 = vsel %vm4241, %v5730, %v5731
    %v5733 = vrot.slane %v5720, 2
    %v5734 = vsel %vm4241, %v5731, %v5733
    %v5735 = vrot.slane %v5721, 2
    %v5736 = vrot.slane %v5722, 2
    %v5737 = vsel %vm4241, %v5735, %v5736
    %v5738 = vrot.slane %v5723, 2
    %v5739 = vsel %vm4241, %v5736, %v5738
    %5740 = vrot.lane.b32.xlu0 %v5732, 127
    %v5741 = vpop.permute.xlu0 %5740
    %5742 = vrot.lane.b32.xlu0 %v5734, 127
    %v5743 = vpop.permute.xlu0 %5742
    %5744 = vrot.lane.b32.xlu0 %v5737, 127
    %v5745 = vpop.permute.xlu0 %5744
    %5746 = vrot.lane.b32.xlu0 %v5739, 127
    %v5747 = vpop.permute.xlu0 %5746
    %v5752 = vadd.f32 %v5432, %v5741
    %v5753 = vadd.f32 %v5433, %v5743
    %v5754 = vadd.f32 %v5434, %v5745
    %v5755 = vadd.f32 %v5435, %v5747
    %s5756 = sld [smem:[#allocation2 + $0xbb]]
    %v5757 = vstv %s5756
    %v5758 = vmul.f32 %v70, %v5757
    %v5759 = vmul.f32 %v71, %v5757
    %v5760 = vmul.f32 %v72, %v5757
    %v5761 = vmul.f32 %v79, %v5757
    %v5762 = vmul.f32 %v80, %v5757
    %v5763 = vmul.f32 %v81, %v5757
    %v5770 = vrot.slane %v5758, 2
    %v5771 = vrot.slane %v5759, 2
    %v5772 = vsel %vm4241, %v5770, %v5771
    %v5773 = vrot.slane %v5760, 2
    %v5774 = vsel %vm4241, %v5771, %v5773
    %v5775 = vrot.slane %v5761, 2
    %v5776 = vrot.slane %v5762, 2
    %v5777 = vsel %vm4241, %v5775, %v5776
    %v5778 = vrot.slane %v5763, 2
    %v5779 = vsel %vm4241, %v5776, %v5778
    %5780 = vrot.lane.b32.xlu0 %v5772, 127
    %v5781 = vpop.permute.xlu0 %5780
    %5782 = vrot.lane.b32.xlu0 %v5774, 127
    %v5783 = vpop.permute.xlu0 %5782
    %5784 = vrot.lane.b32.xlu0 %v5777, 127
    %v5785 = vpop.permute.xlu0 %5784
    %5786 = vrot.lane.b32.xlu0 %v5779, 127
    %v5787 = vpop.permute.xlu0 %5786
    %v5792 = vadd.f32 %v5472, %v5781
    %v5793 = vadd.f32 %v5473, %v5783
    %v5794 = vadd.f32 %v5474, %v5785
    %v5795 = vadd.f32 %v5475, %v5787
    %s5796 = sld [smem:[#allocation2 + $0xbc]]
    %v5797 = vstv %s5796
    %v5798 = vmul.f32 %v70, %v5797
    %v5799 = vmul.f32 %v71, %v5797
    %v5800 = vmul.f32 %v72, %v5797
    %v5801 = vmul.f32 %v79, %v5797
    %v5802 = vmul.f32 %v80, %v5797
    %v5803 = vmul.f32 %v81, %v5797
    %v5810 = vrot.slane %v5798, 2
    %v5811 = vrot.slane %v5799, 2
    %v5812 = vsel %vm4241, %v5810, %v5811
    %v5813 = vrot.slane %v5800, 2
    %v5814 = vsel %vm4241, %v5811, %v5813
    %v5815 = vrot.slane %v5801, 2
    %v5816 = vrot.slane %v5802, 2
    %v5817 = vsel %vm4241, %v5815, %v5816
    %v5818 = vrot.slane %v5803, 2
    %v5819 = vsel %vm4241, %v5816, %v5818
    %5820 = vrot.lane.b32.xlu0 %v5812, 127
    %v5821 = vpop.permute.xlu0 %5820
    %5822 = vrot.lane.b32.xlu0 %v5814, 127
    %v5823 = vpop.permute.xlu0 %5822
    %5824 = vrot.lane.b32.xlu0 %v5817, 127
    %v5825 = vpop.permute.xlu0 %5824
    %5826 = vrot.lane.b32.xlu0 %v5819, 127
    %v5827 = vpop.permute.xlu0 %5826
    %v5832 = vadd.f32 %v5512, %v5821
    %v5833 = vadd.f32 %v5513, %v5823
    %v5834 = vadd.f32 %v5514, %v5825
    %v5835 = vadd.f32 %v5515, %v5827
    %s5836 = sld [smem:[#allocation2 + $0xbd]]
    %v5837 = vstv %s5836
    %v5838 = vmul.f32 %v70, %v5837
    %v5839 = vmul.f32 %v71, %v5837
    %v5840 = vmul.f32 %v72, %v5837
    %v5841 = vmul.f32 %v79, %v5837
    %v5842 = vmul.f32 %v80, %v5837
    %v5843 = vmul.f32 %v81, %v5837
    %v5850 = vrot.slane %v5838, 2
    %v5851 = vrot.slane %v5839, 2
    %v5852 = vsel %vm4241, %v5850, %v5851
    %v5853 = vrot.slane %v5840, 2
    %v5854 = vsel %vm4241, %v5851, %v5853
    %v5855 = vrot.slane %v5841, 2
    %v5856 = vrot.slane %v5842, 2
    %v5857 = vsel %vm4241, %v5855, %v5856
    %v5858 = vrot.slane %v5843, 2
    %v5859 = vsel %vm4241, %v5856, %v5858
    %5860 = vrot.lane.b32.xlu0 %v5852, 127
    %v5861 = vpop.permute.xlu0 %5860
    %5862 = vrot.lane.b32.xlu0 %v5854, 127
    %v5863 = vpop.permute.xlu0 %5862
    %5864 = vrot.lane.b32.xlu0 %v5857, 127
    %v5865 = vpop.permute.xlu0 %5864
    %5866 = vrot.lane.b32.xlu0 %v5859, 127
    %v5867 = vpop.permute.xlu0 %5866
    %v5872 = vadd.f32 %v5552, %v5861
    %v5873 = vadd.f32 %v5553, %v5863
    %v5874 = vadd.f32 %v5554, %v5865
    %v5875 = vadd.f32 %v5555, %v5867
    %s5876 = sld [smem:[#allocation2 + $0xbe]]
    %v5877 = vstv %s5876
    %v5878 = vmul.f32 %v70, %v5877
    %v5879 = vmul.f32 %v71, %v5877
    %v5880 = vmul.f32 %v72, %v5877
    %v5881 = vmul.f32 %v79, %v5877
    %v5882 = vmul.f32 %v80, %v5877
    %v5883 = vmul.f32 %v81, %v5877
    %v5890 = vrot.slane %v5878, 2
    %v5891 = vrot.slane %v5879, 2
    %v5892 = vsel %vm4241, %v5890, %v5891
    %v5893 = vrot.slane %v5880, 2
    %v5894 = vsel %vm4241, %v5891, %v5893
    %v5895 = vrot.slane %v5881, 2
    %v5896 = vrot.slane %v5882, 2
    %v5897 = vsel %vm4241, %v5895, %v5896
    %v5898 = vrot.slane %v5883, 2
    %v5899 = vsel %vm4241, %v5896, %v5898
    %5900 = vrot.lane.b32.xlu0 %v5892, 127
    %v5901 = vpop.permute.xlu0 %5900
    %5902 = vrot.lane.b32.xlu0 %v5894, 127
    %v5903 = vpop.permute.xlu0 %5902
    %5904 = vrot.lane.b32.xlu0 %v5897, 127
    %v5905 = vpop.permute.xlu0 %5904
    %5906 = vrot.lane.b32.xlu0 %v5899, 127
    %v5907 = vpop.permute.xlu0 %5906
    %v5912 = vadd.f32 %v5592, %v5901
    %v5913 = vadd.f32 %v5593, %v5903
    %v5914 = vadd.f32 %v5594, %v5905
    %v5915 = vadd.f32 %v5595, %v5907
    %s5916 = sld [smem:[#allocation2 + $0xbf]]
    %v5917 = vstv %s5916
    %v5918 = vmul.f32 %v70, %v5917
    %v5919 = vmul.f32 %v71, %v5917
    %v5920 = vmul.f32 %v72, %v5917
    %v5921 = vmul.f32 %v79, %v5917
    %v5922 = vmul.f32 %v80, %v5917
    %v5923 = vmul.f32 %v81, %v5917
    %v5930 = vrot.slane %v5918, 2
    %v5931 = vrot.slane %v5919, 2
    %v5932 = vsel %vm4241, %v5930, %v5931
    %v5933 = vrot.slane %v5920, 2
    %v5934 = vsel %vm4241, %v5931, %v5933
    %v5935 = vrot.slane %v5921, 2
    %v5936 = vrot.slane %v5922, 2
    %v5937 = vsel %vm4241, %v5935, %v5936
    %v5938 = vrot.slane %v5923, 2
    %v5939 = vsel %vm4241, %v5936, %v5938
    %5940 = vrot.lane.b32.xlu0 %v5932, 127
    %v5941 = vpop.permute.xlu0 %5940
    %5942 = vrot.lane.b32.xlu0 %v5934, 127
    %v5943 = vpop.permute.xlu0 %5942
    %5944 = vrot.lane.b32.xlu0 %v5937, 127
    %v5945 = vpop.permute.xlu0 %5944
    %5946 = vrot.lane.b32.xlu0 %v5939, 127
    %v5947 = vpop.permute.xlu0 %5946
    %v5952 = vadd.f32 %v5632, %v5941
    %v5953 = vadd.f32 %v5633, %v5943
    %v5954 = vadd.f32 %v5634, %v5945
    %v5955 = vadd.f32 %v5635, %v5947
    %s5956 = sld [smem:[#allocation2 + $0xc0]]
    %v5957 = vstv %s5956
    %v5958 = vmul.f32 %v64, %v5957
    %v5959 = vmul.f32 %v65, %v5957
    %v5960 = vmul.f32 %v66, %v5957
    %v5961 = vmul.f32 %v73, %v5957
    %v5962 = vmul.f32 %v74, %v5957
    %v5963 = vmul.f32 %v75, %v5957
    %v5970 = vrot.slane %v5958, 2
    %v5971 = vrot.slane %v5959, 2
    %v5972 = vsel %vm4241, %v5970, %v5971
    %v5973 = vrot.slane %v5960, 2
    %v5974 = vsel %vm4241, %v5971, %v5973
    %v5975 = vrot.slane %v5961, 2
    %v5976 = vrot.slane %v5962, 2
    %v5977 = vsel %vm4241, %v5975, %v5976
    %v5978 = vrot.slane %v5963, 2
    %v5979 = vsel %vm4241, %v5976, %v5978
    %5980 = vrot.lane.b32.xlu0 %v5972, 126
    %v5981 = vpop.permute.xlu0 %5980
    %5982 = vrot.lane.b32.xlu0 %v5974, 126
    %v5983 = vpop.permute.xlu0 %5982
    %5984 = vrot.lane.b32.xlu0 %v5977, 126
    %v5985 = vpop.permute.xlu0 %5984
    %5986 = vrot.lane.b32.xlu0 %v5979, 126
    %v5987 = vpop.permute.xlu0 %5986
    %v5992 = vadd.f32 %v5672, %v5981
    %v5993 = vadd.f32 %v5673, %v5983
    %v5994 = vadd.f32 %v5674, %v5985
    %v5995 = vadd.f32 %v5675, %v5987
    %s5996 = sld [smem:[#allocation2 + $0xc1]]
    %v5997 = vstv %s5996
    %v5998 = vmul.f32 %v64, %v5997
    %v5999 = vmul.f32 %v65, %v5997
    %v6000 = vmul.f32 %v66, %v5997
    %v6001 = vmul.f32 %v73, %v5997
    %v6002 = vmul.f32 %v74, %v5997
    %v6003 = vmul.f32 %v75, %v5997
    %v6010 = vrot.slane %v5998, 2
    %v6011 = vrot.slane %v5999, 2
    %v6012 = vsel %vm4241, %v6010, %v6011
    %v6013 = vrot.slane %v6000, 2
    %v6014 = vsel %vm4241, %v6011, %v6013
    %v6015 = vrot.slane %v6001, 2
    %v6016 = vrot.slane %v6002, 2
    %v6017 = vsel %vm4241, %v6015, %v6016
    %v6018 = vrot.slane %v6003, 2
    %v6019 = vsel %vm4241, %v6016, %v6018
    %6020 = vrot.lane.b32.xlu0 %v6012, 126
    %v6021 = vpop.permute.xlu0 %6020
    %6022 = vrot.lane.b32.xlu0 %v6014, 126
    %v6023 = vpop.permute.xlu0 %6022
    %6024 = vrot.lane.b32.xlu0 %v6017, 126
    %v6025 = vpop.permute.xlu0 %6024
    %6026 = vrot.lane.b32.xlu0 %v6019, 126
    %v6027 = vpop.permute.xlu0 %6026
    %v6032 = vadd.f32 %v5712, %v6021
    %v6033 = vadd.f32 %v5713, %v6023
    %v6034 = vadd.f32 %v5714, %v6025
    %v6035 = vadd.f32 %v5715, %v6027
    %s6036 = sld [smem:[#allocation2 + $0xc2]]
    %v6037 = vstv %s6036
    %v6038 = vmul.f32 %v64, %v6037
    %v6039 = vmul.f32 %v65, %v6037
    %v6040 = vmul.f32 %v66, %v6037
    %v6041 = vmul.f32 %v73, %v6037
    %v6042 = vmul.f32 %v74, %v6037
    %v6043 = vmul.f32 %v75, %v6037
    %v6050 = vrot.slane %v6038, 2
    %v6051 = vrot.slane %v6039, 2
    %v6052 = vsel %vm4241, %v6050, %v6051
    %v6053 = vrot.slane %v6040, 2
    %v6054 = vsel %vm4241, %v6051, %v6053
    %v6055 = vrot.slane %v6041, 2
    %v6056 = vrot.slane %v6042, 2
    %v6057 = vsel %vm4241, %v6055, %v6056
    %v6058 = vrot.slane %v6043, 2
    %v6059 = vsel %vm4241, %v6056, %v6058
    %6060 = vrot.lane.b32.xlu0 %v6052, 126
    %v6061 = vpop.permute.xlu0 %6060
    %6062 = vrot.lane.b32.xlu0 %v6054, 126
    %v6063 = vpop.permute.xlu0 %6062
    %6064 = vrot.lane.b32.xlu0 %v6057, 126
    %v6065 = vpop.permute.xlu0 %6064
    %6066 = vrot.lane.b32.xlu0 %v6059, 126
    %v6067 = vpop.permute.xlu0 %6066
    %v6072 = vadd.f32 %v5752, %v6061
    %v6073 = vadd.f32 %v5753, %v6063
    %v6074 = vadd.f32 %v5754, %v6065
    %v6075 = vadd.f32 %v5755, %v6067
    %s6076 = sld [smem:[#allocation2 + $0xc3]]
    %v6077 = vstv %s6076
    %v6078 = vmul.f32 %v64, %v6077
    %v6079 = vmul.f32 %v65, %v6077
    %v6080 = vmul.f32 %v66, %v6077
    %v6081 = vmul.f32 %v73, %v6077
    %v6082 = vmul.f32 %v74, %v6077
    %v6083 = vmul.f32 %v75, %v6077
    %v6090 = vrot.slane %v6078, 2
    %v6091 = vrot.slane %v6079, 2
    %v6092 = vsel %vm4241, %v6090, %v6091
    %v6093 = vrot.slane %v6080, 2
    %v6094 = vsel %vm4241, %v6091, %v6093
    %v6095 = vrot.slane %v6081, 2
    %v6096 = vrot.slane %v6082, 2
    %v6097 = vsel %vm4241, %v6095, %v6096
    %v6098 = vrot.slane %v6083, 2
    %v6099 = vsel %vm4241, %v6096, %v6098
    %6100 = vrot.lane.b32.xlu0 %v6092, 126
    %v6101 = vpop.permute.xlu0 %6100
    %6102 = vrot.lane.b32.xlu0 %v6094, 126
    %v6103 = vpop.permute.xlu0 %6102
    %6104 = vrot.lane.b32.xlu0 %v6097, 126
    %v6105 = vpop.permute.xlu0 %6104
    %6106 = vrot.lane.b32.xlu0 %v6099, 126
    %v6107 = vpop.permute.xlu0 %6106
    %v6112 = vadd.f32 %v5792, %v6101
    %v6113 = vadd.f32 %v5793, %v6103
    %v6114 = vadd.f32 %v5794, %v6105
    %v6115 = vadd.f32 %v5795, %v6107
    %s6116 = sld [smem:[#allocation2 + $0xc4]]
    %v6117 = vstv %s6116
    %v6118 = vmul.f32 %v64, %v6117
    %v6119 = vmul.f32 %v65, %v6117
    %v6120 = vmul.f32 %v66, %v6117
    %v6121 = vmul.f32 %v73, %v6117
    %v6122 = vmul.f32 %v74, %v6117
    %v6123 = vmul.f32 %v75, %v6117
    %v6130 = vrot.slane %v6118, 2
    %v6131 = vrot.slane %v6119, 2
    %v6132 = vsel %vm4241, %v6130, %v6131
    %v6133 = vrot.slane %v6120, 2
    %v6134 = vsel %vm4241, %v6131, %v6133
    %v6135 = vrot.slane %v6121, 2
    %v6136 = vrot.slane %v6122, 2
    %v6137 = vsel %vm4241, %v6135, %v6136
    %v6138 = vrot.slane %v6123, 2
    %v6139 = vsel %vm4241, %v6136, %v6138
    %6140 = vrot.lane.b32.xlu0 %v6132, 126
    %v6141 = vpop.permute.xlu0 %6140
    %6142 = vrot.lane.b32.xlu0 %v6134, 126
    %v6143 = vpop.permute.xlu0 %6142
    %6144 = vrot.lane.b32.xlu0 %v6137, 126
    %v6145 = vpop.permute.xlu0 %6144
    %6146 = vrot.lane.b32.xlu0 %v6139, 126
    %v6147 = vpop.permute.xlu0 %6146
    %v6152 = vadd.f32 %v5832, %v6141
    %v6153 = vadd.f32 %v5833, %v6143
    %v6154 = vadd.f32 %v5834, %v6145
    %v6155 = vadd.f32 %v5835, %v6147
    %s6156 = sld [smem:[#allocation2 + $0xc5]]
    %v6157 = vstv %s6156
    %v6158 = vmul.f32 %v64, %v6157
    %v6159 = vmul.f32 %v65, %v6157
    %v6160 = vmul.f32 %v66, %v6157
    %v6161 = vmul.f32 %v73, %v6157
    %v6162 = vmul.f32 %v74, %v6157
    %v6163 = vmul.f32 %v75, %v6157
    %v6170 = vrot.slane %v6158, 2
    %v6171 = vrot.slane %v6159, 2
    %v6172 = vsel %vm4241, %v6170, %v6171
    %v6173 = vrot.slane %v6160, 2
    %v6174 = vsel %vm4241, %v6171, %v6173
    %v6175 = vrot.slane %v6161, 2
    %v6176 = vrot.slane %v6162, 2
    %v6177 = vsel %vm4241, %v6175, %v6176
    %v6178 = vrot.slane %v6163, 2
    %v6179 = vsel %vm4241, %v6176, %v6178
    %6180 = vrot.lane.b32.xlu0 %v6172, 126
    %v6181 = vpop.permute.xlu0 %6180
    %6182 = vrot.lane.b32.xlu0 %v6174, 126
    %v6183 = vpop.permute.xlu0 %6182
    %6184 = vrot.lane.b32.xlu0 %v6177, 126
    %v6185 = vpop.permute.xlu0 %6184
    %6186 = vrot.lane.b32.xlu0 %v6179, 126
    %v6187 = vpop.permute.xlu0 %6186
    %v6192 = vadd.f32 %v5872, %v6181
    %v6193 = vadd.f32 %v5873, %v6183
    %v6194 = vadd.f32 %v5874, %v6185
    %v6195 = vadd.f32 %v5875, %v6187
    %s6196 = sld [smem:[#allocation2 + $0xc6]]
    %v6197 = vstv %s6196
    %v6198 = vmul.f32 %v64, %v6197
    %v6199 = vmul.f32 %v65, %v6197
    %v6200 = vmul.f32 %v66, %v6197
    %v6201 = vmul.f32 %v73, %v6197
    %v6202 = vmul.f32 %v74, %v6197
    %v6203 = vmul.f32 %v75, %v6197
    %v6210 = vrot.slane %v6198, 2
    %v6211 = vrot.slane %v6199, 2
    %v6212 = vsel %vm4241, %v6210, %v6211
    %v6213 = vrot.slane %v6200, 2
    %v6214 = vsel %vm4241, %v6211, %v6213
    %v6215 = vrot.slane %v6201, 2
    %v6216 = vrot.slane %v6202, 2
    %v6217 = vsel %vm4241, %v6215, %v6216
    %v6218 = vrot.slane %v6203, 2
    %v6219 = vsel %vm4241, %v6216, %v6218
    %6220 = vrot.lane.b32.xlu0 %v6212, 126
    %v6221 = vpop.permute.xlu0 %6220
    %6222 = vrot.lane.b32.xlu0 %v6214, 126
    %v6223 = vpop.permute.xlu0 %6222
    %6224 = vrot.lane.b32.xlu0 %v6217, 126
    %v6225 = vpop.permute.xlu0 %6224
    %6226 = vrot.lane.b32.xlu0 %v6219, 126
    %v6227 = vpop.permute.xlu0 %6226
    %v6232 = vadd.f32 %v5912, %v6221
    %v6233 = vadd.f32 %v5913, %v6223
    %v6234 = vadd.f32 %v5914, %v6225
    %v6235 = vadd.f32 %v5915, %v6227
    %s6236 = sld [smem:[#allocation2 + $0xc7]]
    %v6237 = vstv %s6236
    %v6238 = vmul.f32 %v64, %v6237
    %v6239 = vmul.f32 %v65, %v6237
    %v6240 = vmul.f32 %v66, %v6237
    %v6241 = vmul.f32 %v73, %v6237
    %v6242 = vmul.f32 %v74, %v6237
    %v6243 = vmul.f32 %v75, %v6237
    %v6250 = vrot.slane %v6238, 2
    %v6251 = vrot.slane %v6239, 2
    %v6252 = vsel %vm4241, %v6250, %v6251
    %v6253 = vrot.slane %v6240, 2
    %v6254 = vsel %vm4241, %v6251, %v6253
    %v6255 = vrot.slane %v6241, 2
    %v6256 = vrot.slane %v6242, 2
    %v6257 = vsel %vm4241, %v6255, %v6256
    %v6258 = vrot.slane %v6243, 2
    %v6259 = vsel %vm4241, %v6256, %v6258
    %6260 = vrot.lane.b32.xlu0 %v6252, 126
    %v6261 = vpop.permute.xlu0 %6260
    %6262 = vrot.lane.b32.xlu0 %v6254, 126
    %v6263 = vpop.permute.xlu0 %6262
    %6264 = vrot.lane.b32.xlu0 %v6257, 126
    %v6265 = vpop.permute.xlu0 %6264
    %6266 = vrot.lane.b32.xlu0 %v6259, 126
    %v6267 = vpop.permute.xlu0 %6266
    %v6272 = vadd.f32 %v5952, %v6261
    %v6273 = vadd.f32 %v5953, %v6263
    %v6274 = vadd.f32 %v5954, %v6265
    %v6275 = vadd.f32 %v5955, %v6267
    %s6276 = sld [smem:[#allocation2 + $0xc8]]
    %v6277 = vstv %s6276
    %v6278 = vmul.f32 %v67, %v6277
    %v6279 = vmul.f32 %v68, %v6277
    %v6280 = vmul.f32 %v69, %v6277
    %v6281 = vmul.f32 %v76, %v6277
    %v6282 = vmul.f32 %v77, %v6277
    %v6283 = vmul.f32 %v78, %v6277
    %v6290 = vrot.slane %v6278, 2
    %v6291 = vrot.slane %v6279, 2
    %v6292 = vsel %vm4241, %v6290, %v6291
    %v6293 = vrot.slane %v6280, 2
    %v6294 = vsel %vm4241, %v6291, %v6293
    %v6295 = vrot.slane %v6281, 2
    %v6296 = vrot.slane %v6282, 2
    %v6297 = vsel %vm4241, %v6295, %v6296
    %v6298 = vrot.slane %v6283, 2
    %v6299 = vsel %vm4241, %v6296, %v6298
    %6300 = vrot.lane.b32.xlu0 %v6292, 126
    %v6301 = vpop.permute.xlu0 %6300
    %6302 = vrot.lane.b32.xlu0 %v6294, 126
    %v6303 = vpop.permute.xlu0 %6302
    %6304 = vrot.lane.b32.xlu0 %v6297, 126
    %v6305 = vpop.permute.xlu0 %6304
    %6306 = vrot.lane.b32.xlu0 %v6299, 126
    %v6307 = vpop.permute.xlu0 %6306
    %v6312 = vadd.f32 %v5992, %v6301
    %v6313 = vadd.f32 %v5993, %v6303
    %v6314 = vadd.f32 %v5994, %v6305
    %v6315 = vadd.f32 %v5995, %v6307
    %s6316 = sld [smem:[#allocation2 + $0xc9]]
    %v6317 = vstv %s6316
    %v6318 = vmul.f32 %v67, %v6317
    %v6319 = vmul.f32 %v68, %v6317
    %v6320 = vmul.f32 %v69, %v6317
    %v6321 = vmul.f32 %v76, %v6317
    %v6322 = vmul.f32 %v77, %v6317
    %v6323 = vmul.f32 %v78, %v6317
    %v6330 = vrot.slane %v6318, 2
    %v6331 = vrot.slane %v6319, 2
    %v6332 = vsel %vm4241, %v6330, %v6331
    %v6333 = vrot.slane %v6320, 2
    %v6334 = vsel %vm4241, %v6331, %v6333
    %v6335 = vrot.slane %v6321, 2
    %v6336 = vrot.slane %v6322, 2
    %v6337 = vsel %vm4241, %v6335, %v6336
    %v6338 = vrot.slane %v6323, 2
    %v6339 = vsel %vm4241, %v6336, %v6338
    %6340 = vrot.lane.b32.xlu0 %v6332, 126
    %v6341 = vpop.permute.xlu0 %6340
    %6342 = vrot.lane.b32.xlu0 %v6334, 126
    %v6343 = vpop.permute.xlu0 %6342
    %6344 = vrot.lane.b32.xlu0 %v6337, 126
    %v6345 = vpop.permute.xlu0 %6344
    %6346 = vrot.lane.b32.xlu0 %v6339, 126
    %v6347 = vpop.permute.xlu0 %6346
    %v6352 = vadd.f32 %v6032, %v6341
    %v6353 = vadd.f32 %v6033, %v6343
    %v6354 = vadd.f32 %v6034, %v6345
    %v6355 = vadd.f32 %v6035, %v6347
    %s6356 = sld [smem:[#allocation2 + $0xca]]
    %v6357 = vstv %s6356
    %v6358 = vmul.f32 %v67, %v6357
    %v6359 = vmul.f32 %v68, %v6357
    %v6360 = vmul.f32 %v69, %v6357
    %v6361 = vmul.f32 %v76, %v6357
    %v6362 = vmul.f32 %v77, %v6357
    %v6363 = vmul.f32 %v78, %v6357
    %v6370 = vrot.slane %v6358, 2
    %v6371 = vrot.slane %v6359, 2
    %v6372 = vsel %vm4241, %v6370, %v6371
    %v6373 = vrot.slane %v6360, 2
    %v6374 = vsel %vm4241, %v6371, %v6373
    %v6375 = vrot.slane %v6361, 2
    %v6376 = vrot.slane %v6362, 2
    %v6377 = vsel %vm4241, %v6375, %v6376
    %v6378 = vrot.slane %v6363, 2
    %v6379 = vsel %vm4241, %v6376, %v6378
    %6380 = vrot.lane.b32.xlu0 %v6372, 126
    %v6381 = vpop.permute.xlu0 %6380
    %6382 = vrot.lane.b32.xlu0 %v6374, 126
    %v6383 = vpop.permute.xlu0 %6382
    %6384 = vrot.lane.b32.xlu0 %v6377, 126
    %v6385 = vpop.permute.xlu0 %6384
    %6386 = vrot.lane.b32.xlu0 %v6379, 126
    %v6387 = vpop.permute.xlu0 %6386
    %v6392 = vadd.f32 %v6072, %v6381
    %v6393 = vadd.f32 %v6073, %v6383
    %v6394 = vadd.f32 %v6074, %v6385
    %v6395 = vadd.f32 %v6075, %v6387
    %s6396 = sld [smem:[#allocation2 + $0xcb]]
    %v6397 = vstv %s6396
    %v6398 = vmul.f32 %v67, %v6397
    %v6399 = vmul.f32 %v68, %v6397
    %v6400 = vmul.f32 %v69, %v6397
    %v6401 = vmul.f32 %v76, %v6397
    %v6402 = vmul.f32 %v77, %v6397
    %v6403 = vmul.f32 %v78, %v6397
    %v6410 = vrot.slane %v6398, 2
    %v6411 = vrot.slane %v6399, 2
    %v6412 = vsel %vm4241, %v6410, %v6411
    %v6413 = vrot.slane %v6400, 2
    %v6414 = vsel %vm4241, %v6411, %v6413
    %v6415 = vrot.slane %v6401, 2
    %v6416 = vrot.slane %v6402, 2
    %v6417 = vsel %vm4241, %v6415, %v6416
    %v6418 = vrot.slane %v6403, 2
    %v6419 = vsel %vm4241, %v6416, %v6418
    %6420 = vrot.lane.b32.xlu0 %v6412, 126
    %v6421 = vpop.permute.xlu0 %6420
    %6422 = vrot.lane.b32.xlu0 %v6414, 126
    %v6423 = vpop.permute.xlu0 %6422
    %6424 = vrot.lane.b32.xlu0 %v6417, 126
    %v6425 = vpop.permute.xlu0 %6424
    %6426 = vrot.lane.b32.xlu0 %v6419, 126
    %v6427 = vpop.permute.xlu0 %6426
    %v6432 = vadd.f32 %v6112, %v6421
    %v6433 = vadd.f32 %v6113, %v6423
    %v6434 = vadd.f32 %v6114, %v6425
    %v6435 = vadd.f32 %v6115, %v6427
    %s6436 = sld [smem:[#allocation2 + $0xcc]]
    %v6437 = vstv %s6436
    %v6438 = vmul.f32 %v67, %v6437
    %v6439 = vmul.f32 %v68, %v6437
    %v6440 = vmul.f32 %v69, %v6437
    %v6441 = vmul.f32 %v76, %v6437
    %v6442 = vmul.f32 %v77, %v6437
    %v6443 = vmul.f32 %v78, %v6437
    %v6450 = vrot.slane %v6438, 2
    %v6451 = vrot.slane %v6439, 2
    %v6452 = vsel %vm4241, %v6450, %v6451
    %v6453 = vrot.slane %v6440, 2
    %v6454 = vsel %vm4241, %v6451, %v6453
    %v6455 = vrot.slane %v6441, 2
    %v6456 = vrot.slane %v6442, 2
    %v6457 = vsel %vm4241, %v6455, %v6456
    %v6458 = vrot.slane %v6443, 2
    %v6459 = vsel %vm4241, %v6456, %v6458
    %6460 = vrot.lane.b32.xlu0 %v6452, 126
    %v6461 = vpop.permute.xlu0 %6460
    %6462 = vrot.lane.b32.xlu0 %v6454, 126
    %v6463 = vpop.permute.xlu0 %6462
    %6464 = vrot.lane.b32.xlu0 %v6457, 126
    %v6465 = vpop.permute.xlu0 %6464
    %6466 = vrot.lane.b32.xlu0 %v6459, 126
    %v6467 = vpop.permute.xlu0 %6466
    %v6472 = vadd.f32 %v6152, %v6461
    %v6473 = vadd.f32 %v6153, %v6463
    %v6474 = vadd.f32 %v6154, %v6465
    %v6475 = vadd.f32 %v6155, %v6467
    %s6476 = sld [smem:[#allocation2 + $0xcd]]
    %v6477 = vstv %s6476
    %v6478 = vmul.f32 %v67, %v6477
    %v6479 = vmul.f32 %v68, %v6477
    %v6480 = vmul.f32 %v69, %v6477
    %v6481 = vmul.f32 %v76, %v6477
    %v6482 = vmul.f32 %v77, %v6477
    %v6483 = vmul.f32 %v78, %v6477
    %v6490 = vrot.slane %v6478, 2
    %v6491 = vrot.slane %v6479, 2
    %v6492 = vsel %vm4241, %v6490, %v6491
    %v6493 = vrot.slane %v6480, 2
    %v6494 = vsel %vm4241, %v6491, %v6493
    %v6495 = vrot.slane %v6481, 2
    %v6496 = vrot.slane %v6482, 2
    %v6497 = vsel %vm4241, %v6495, %v6496
    %v6498 = vrot.slane %v6483, 2
    %v6499 = vsel %vm4241, %v6496, %v6498
    %6500 = vrot.lane.b32.xlu0 %v6492, 126
    %v6501 = vpop.permute.xlu0 %6500
    %6502 = vrot.lane.b32.xlu0 %v6494, 126
    %v6503 = vpop.permute.xlu0 %6502
    %6504 = vrot.lane.b32.xlu0 %v6497, 126
    %v6505 = vpop.permute.xlu0 %6504
    %6506 = vrot.lane.b32.xlu0 %v6499, 126
    %v6507 = vpop.permute.xlu0 %6506
    %v6512 = vadd.f32 %v6192, %v6501
    %v6513 = vadd.f32 %v6193, %v6503
    %v6514 = vadd.f32 %v6194, %v6505
    %v6515 = vadd.f32 %v6195, %v6507
    %s6516 = sld [smem:[#allocation2 + $0xce]]
    %v6517 = vstv %s6516
    %v6518 = vmul.f32 %v67, %v6517
    %v6519 = vmul.f32 %v68, %v6517
    %v6520 = vmul.f32 %v69, %v6517
    %v6521 = vmul.f32 %v76, %v6517
    %v6522 = vmul.f32 %v77, %v6517
    %v6523 = vmul.f32 %v78, %v6517
    %v6530 = vrot.slane %v6518, 2
    %v6531 = vrot.slane %v6519, 2
    %v6532 = vsel %vm4241, %v6530, %v6531
    %v6533 = vrot.slane %v6520, 2
    %v6534 = vsel %vm4241, %v6531, %v6533
    %v6535 = vrot.slane %v6521, 2
    %v6536 = vrot.slane %v6522, 2
    %v6537 = vsel %vm4241, %v6535, %v6536
    %v6538 = vrot.slane %v6523, 2
    %v6539 = vsel %vm4241, %v6536, %v6538
    %6540 = vrot.lane.b32.xlu0 %v6532, 126
    %v6541 = vpop.permute.xlu0 %6540
    %6542 = vrot.lane.b32.xlu0 %v6534, 126
    %v6543 = vpop.permute.xlu0 %6542
    %6544 = vrot.lane.b32.xlu0 %v6537, 126
    %v6545 = vpop.permute.xlu0 %6544
    %6546 = vrot.lane.b32.xlu0 %v6539, 126
    %v6547 = vpop.permute.xlu0 %6546
    %v6552 = vadd.f32 %v6232, %v6541
    %v6553 = vadd.f32 %v6233, %v6543
    %v6554 = vadd.f32 %v6234, %v6545
    %v6555 = vadd.f32 %v6235, %v6547
    %s6556 = sld [smem:[#allocation2 + $0xcf]]
    %v6557 = vstv %s6556
    %v6558 = vmul.f32 %v67, %v6557
    %v6559 = vmul.f32 %v68, %v6557
    %v6560 = vmul.f32 %v69, %v6557
    %v6561 = vmul.f32 %v76, %v6557
    %v6562 = vmul.f32 %v77, %v6557
    %v6563 = vmul.f32 %v78, %v6557
    %v6570 = vrot.slane %v6558, 2
    %v6571 = vrot.slane %v6559, 2
    %v6572 = vsel %vm4241, %v6570, %v6571
    %v6573 = vrot.slane %v6560, 2
    %v6574 = vsel %vm4241, %v6571, %v6573
    %v6575 = vrot.slane %v6561, 2
    %v6576 = vrot.slane %v6562, 2
    %v6577 = vsel %vm4241, %v6575, %v6576
    %v6578 = vrot.slane %v6563, 2
    %v6579 = vsel %vm4241, %v6576, %v6578
    %6580 = vrot.lane.b32.xlu0 %v6572, 126
    %v6581 = vpop.permute.xlu0 %6580
    %6582 = vrot.lane.b32.xlu0 %v6574, 126
    %v6583 = vpop.permute.xlu0 %6582
    %6584 = vrot.lane.b32.xlu0 %v6577, 126
    %v6585 = vpop.permute.xlu0 %6584
    %6586 = vrot.lane.b32.xlu0 %v6579, 126
    %v6587 = vpop.permute.xlu0 %6586
    %v6592 = vadd.f32 %v6272, %v6581
    %v6593 = vadd.f32 %v6273, %v6583
    %v6594 = vadd.f32 %v6274, %v6585
    %v6595 = vadd.f32 %v6275, %v6587
    %s6596 = sld [smem:[#allocation2 + $0xd0]]
    %v6597 = vstv %s6596
    %v6598 = vmul.f32 %v70, %v6597
    %v6599 = vmul.f32 %v71, %v6597
    %v6600 = vmul.f32 %v72, %v6597
    %v6601 = vmul.f32 %v79, %v6597
    %v6602 = vmul.f32 %v80, %v6597
    %v6603 = vmul.f32 %v81, %v6597
    %v6610 = vrot.slane %v6598, 2
    %v6611 = vrot.slane %v6599, 2
    %v6612 = vsel %vm4241, %v6610, %v6611
    %v6613 = vrot.slane %v6600, 2
    %v6614 = vsel %vm4241, %v6611, %v6613
    %v6615 = vrot.slane %v6601, 2
    %v6616 = vrot.slane %v6602, 2
    %v6617 = vsel %vm4241, %v6615, %v6616
    %v6618 = vrot.slane %v6603, 2
    %v6619 = vsel %vm4241, %v6616, %v6618
    %6620 = vrot.lane.b32.xlu0 %v6612, 126
    %v6621 = vpop.permute.xlu0 %6620
    %6622 = vrot.lane.b32.xlu0 %v6614, 126
    %v6623 = vpop.permute.xlu0 %6622
    %6624 = vrot.lane.b32.xlu0 %v6617, 126
    %v6625 = vpop.permute.xlu0 %6624
    %6626 = vrot.lane.b32.xlu0 %v6619, 126
    %v6627 = vpop.permute.xlu0 %6626
    %v6632 = vadd.f32 %v6312, %v6621
    %v6633 = vadd.f32 %v6313, %v6623
    %v6634 = vadd.f32 %v6314, %v6625
    %v6635 = vadd.f32 %v6315, %v6627
    %s6636 = sld [smem:[#allocation2 + $0xd1]]
    %v6637 = vstv %s6636
    %v6638 = vmul.f32 %v70, %v6637
    %v6639 = vmul.f32 %v71, %v6637
    %v6640 = vmul.f32 %v72, %v6637
    %v6641 = vmul.f32 %v79, %v6637
    %v6642 = vmul.f32 %v80, %v6637
    %v6643 = vmul.f32 %v81, %v6637
    %v6650 = vrot.slane %v6638, 2
    %v6651 = vrot.slane %v6639, 2
    %v6652 = vsel %vm4241, %v6650, %v6651
    %v6653 = vrot.slane %v6640, 2
    %v6654 = vsel %vm4241, %v6651, %v6653
    %v6655 = vrot.slane %v6641, 2
    %v6656 = vrot.slane %v6642, 2
    %v6657 = vsel %vm4241, %v6655, %v6656
    %v6658 = vrot.slane %v6643, 2
    %v6659 = vsel %vm4241, %v6656, %v6658
    %6660 = vrot.lane.b32.xlu0 %v6652, 126
    %v6661 = vpop.permute.xlu0 %6660
    %6662 = vrot.lane.b32.xlu0 %v6654, 126
    %v6663 = vpop.permute.xlu0 %6662
    %6664 = vrot.lane.b32.xlu0 %v6657, 126
    %v6665 = vpop.permute.xlu0 %6664
    %6666 = vrot.lane.b32.xlu0 %v6659, 126
    %v6667 = vpop.permute.xlu0 %6666
    %v6672 = vadd.f32 %v6352, %v6661
    %v6673 = vadd.f32 %v6353, %v6663
    %v6674 = vadd.f32 %v6354, %v6665
    %v6675 = vadd.f32 %v6355, %v6667
    %s6676 = sld [smem:[#allocation2 + $0xd2]]
    %v6677 = vstv %s6676
    %v6678 = vmul.f32 %v70, %v6677
    %v6679 = vmul.f32 %v71, %v6677
    %v6680 = vmul.f32 %v72, %v6677
    %v6681 = vmul.f32 %v79, %v6677
    %v6682 = vmul.f32 %v80, %v6677
    %v6683 = vmul.f32 %v81, %v6677
    %v6690 = vrot.slane %v6678, 2
    %v6691 = vrot.slane %v6679, 2
    %v6692 = vsel %vm4241, %v6690, %v6691
    %v6693 = vrot.slane %v6680, 2
    %v6694 = vsel %vm4241, %v6691, %v6693
    %v6695 = vrot.slane %v6681, 2
    %v6696 = vrot.slane %v6682, 2
    %v6697 = vsel %vm4241, %v6695, %v6696
    %v6698 = vrot.slane %v6683, 2
    %v6699 = vsel %vm4241, %v6696, %v6698
    %6700 = vrot.lane.b32.xlu0 %v6692, 126
    %v6701 = vpop.permute.xlu0 %6700
    %6702 = vrot.lane.b32.xlu0 %v6694, 126
    %v6703 = vpop.permute.xlu0 %6702
    %6704 = vrot.lane.b32.xlu0 %v6697, 126
    %v6705 = vpop.permute.xlu0 %6704
    %6706 = vrot.lane.b32.xlu0 %v6699, 126
    %v6707 = vpop.permute.xlu0 %6706
    %v6712 = vadd.f32 %v6392, %v6701
    %v6713 = vadd.f32 %v6393, %v6703
    %v6714 = vadd.f32 %v6394, %v6705
    %v6715 = vadd.f32 %v6395, %v6707
    %s6716 = sld [smem:[#allocation2 + $0xd3]]
    %v6717 = vstv %s6716
    %v6718 = vmul.f32 %v70, %v6717
    %v6719 = vmul.f32 %v71, %v6717
    %v6720 = vmul.f32 %v72, %v6717
    %v6721 = vmul.f32 %v79, %v6717
    %v6722 = vmul.f32 %v80, %v6717
    %v6723 = vmul.f32 %v81, %v6717
    %v6730 = vrot.slane %v6718, 2
    %v6731 = vrot.slane %v6719, 2
    %v6732 = vsel %vm4241, %v6730, %v6731
    %v6733 = vrot.slane %v6720, 2
    %v6734 = vsel %vm4241, %v6731, %v6733
    %v6735 = vrot.slane %v6721, 2
    %v6736 = vrot.slane %v6722, 2
    %v6737 = vsel %vm4241, %v6735, %v6736
    %v6738 = vrot.slane %v6723, 2
    %v6739 = vsel %vm4241, %v6736, %v6738
    %6740 = vrot.lane.b32.xlu0 %v6732, 126
    %v6741 = vpop.permute.xlu0 %6740
    %6742 = vrot.lane.b32.xlu0 %v6734, 126
    %v6743 = vpop.permute.xlu0 %6742
    %6744 = vrot.lane.b32.xlu0 %v6737, 126
    %v6745 = vpop.permute.xlu0 %6744
    %6746 = vrot.lane.b32.xlu0 %v6739, 126
    %v6747 = vpop.permute.xlu0 %6746
    %v6752 = vadd.f32 %v6432, %v6741
    %v6753 = vadd.f32 %v6433, %v6743
    %v6754 = vadd.f32 %v6434, %v6745
    %v6755 = vadd.f32 %v6435, %v6747
    %s6756 = sld [smem:[#allocation2 + $0xd4]]
    %v6757 = vstv %s6756
    %v6758 = vmul.f32 %v70, %v6757
    %v6759 = vmul.f32 %v71, %v6757
    %v6760 = vmul.f32 %v72, %v6757
    %v6761 = vmul.f32 %v79, %v6757
    %v6762 = vmul.f32 %v80, %v6757
    %v6763 = vmul.f32 %v81, %v6757
    %v6770 = vrot.slane %v6758, 2
    %v6771 = vrot.slane %v6759, 2
    %v6772 = vsel %vm4241, %v6770, %v6771
    %v6773 = vrot.slane %v6760, 2
    %v6774 = vsel %vm4241, %v6771, %v6773
    %v6775 = vrot.slane %v6761, 2
    %v6776 = vrot.slane %v6762, 2
    %v6777 = vsel %vm4241, %v6775, %v6776
    %v6778 = vrot.slane %v6763, 2
    %v6779 = vsel %vm4241, %v6776, %v6778
    %6780 = vrot.lane.b32.xlu0 %v6772, 126
    %v6781 = vpop.permute.xlu0 %6780
    %6782 = vrot.lane.b32.xlu0 %v6774, 126
    %v6783 = vpop.permute.xlu0 %6782
    %6784 = vrot.lane.b32.xlu0 %v6777, 126
    %v6785 = vpop.permute.xlu0 %6784
    %6786 = vrot.lane.b32.xlu0 %v6779, 126
    %v6787 = vpop.permute.xlu0 %6786
    %v6792 = vadd.f32 %v6472, %v6781
    %v6793 = vadd.f32 %v6473, %v6783
    %v6794 = vadd.f32 %v6474, %v6785
    %v6795 = vadd.f32 %v6475, %v6787
    %s6796 = sld [smem:[#allocation2 + $0xd5]]
    %v6797 = vstv %s6796
    %v6798 = vmul.f32 %v70, %v6797
    %v6799 = vmul.f32 %v71, %v6797
    %v6800 = vmul.f32 %v72, %v6797
    %v6801 = vmul.f32 %v79, %v6797
    %v6802 = vmul.f32 %v80, %v6797
    %v6803 = vmul.f32 %v81, %v6797
    %v6810 = vrot.slane %v6798, 2
    %v6811 = vrot.slane %v6799, 2
    %v6812 = vsel %vm4241, %v6810, %v6811
    %v6813 = vrot.slane %v6800, 2
    %v6814 = vsel %vm4241, %v6811, %v6813
    %v6815 = vrot.slane %v6801, 2
    %v6816 = vrot.slane %v6802, 2
    %v6817 = vsel %vm4241, %v6815, %v6816
    %v6818 = vrot.slane %v6803, 2
    %v6819 = vsel %vm4241, %v6816, %v6818
    %6820 = vrot.lane.b32.xlu0 %v6812, 126
    %v6821 = vpop.permute.xlu0 %6820
    %6822 = vrot.lane.b32.xlu0 %v6814, 126
    %v6823 = vpop.permute.xlu0 %6822
    %6824 = vrot.lane.b32.xlu0 %v6817, 126
    %v6825 = vpop.permute.xlu0 %6824
    %6826 = vrot.lane.b32.xlu0 %v6819, 126
    %v6827 = vpop.permute.xlu0 %6826
    %v6832 = vadd.f32 %v6512, %v6821
    %v6833 = vadd.f32 %v6513, %v6823
    %v6834 = vadd.f32 %v6514, %v6825
    %v6835 = vadd.f32 %v6515, %v6827
    %s6836 = sld [smem:[#allocation2 + $0xd6]]
    %v6837 = vstv %s6836
    %v6838 = vmul.f32 %v70, %v6837
    %v6839 = vmul.f32 %v71, %v6837
    %v6840 = vmul.f32 %v72, %v6837
    %v6841 = vmul.f32 %v79, %v6837
    %v6842 = vmul.f32 %v80, %v6837
    %v6843 = vmul.f32 %v81, %v6837
    %v6850 = vrot.slane %v6838, 2
    %v6851 = vrot.slane %v6839, 2
    %v6852 = vsel %vm4241, %v6850, %v6851
    %v6853 = vrot.slane %v6840, 2
    %v6854 = vsel %vm4241, %v6851, %v6853
    %v6855 = vrot.slane %v6841, 2
    %v6856 = vrot.slane %v6842, 2
    %v6857 = vsel %vm4241, %v6855, %v6856
    %v6858 = vrot.slane %v6843, 2
    %v6859 = vsel %vm4241, %v6856, %v6858
    %6860 = vrot.lane.b32.xlu0 %v6852, 126
    %v6861 = vpop.permute.xlu0 %6860
    %6862 = vrot.lane.b32.xlu0 %v6854, 126
    %v6863 = vpop.permute.xlu0 %6862
    %6864 = vrot.lane.b32.xlu0 %v6857, 126
    %v6865 = vpop.permute.xlu0 %6864
    %6866 = vrot.lane.b32.xlu0 %v6859, 126
    %v6867 = vpop.permute.xlu0 %6866
    %v6872 = vadd.f32 %v6552, %v6861
    %v6873 = vadd.f32 %v6553, %v6863
    %v6874 = vadd.f32 %v6554, %v6865
    %v6875 = vadd.f32 %v6555, %v6867
    %s6876 = sld [smem:[#allocation2 + $0xd7]]
    %v6877 = vstv %s6876
    %v6878 = vmul.f32 %v70, %v6877
    %v6879 = vmul.f32 %v71, %v6877
    %v6880 = vmul.f32 %v72, %v6877
    %v6881 = vmul.f32 %v79, %v6877
    %v6882 = vmul.f32 %v80, %v6877
    %v6883 = vmul.f32 %v81, %v6877
    %v6890 = vrot.slane %v6878, 2
    %v6891 = vrot.slane %v6879, 2
    %v6892 = vsel %vm4241, %v6890, %v6891
    %v6893 = vrot.slane %v6880, 2
    %v6894 = vsel %vm4241, %v6891, %v6893
    %v6895 = vrot.slane %v6881, 2
    %v6896 = vrot.slane %v6882, 2
    %v6897 = vsel %vm4241, %v6895, %v6896
    %v6898 = vrot.slane %v6883, 2
    %v6899 = vsel %vm4241, %v6896, %v6898
    %6900 = vrot.lane.b32.xlu0 %v6892, 126
    %v6901 = vpop.permute.xlu0 %6900
    %6902 = vrot.lane.b32.xlu0 %v6894, 126
    %v6903 = vpop.permute.xlu0 %6902
    %6904 = vrot.lane.b32.xlu0 %v6897, 126
    %v6905 = vpop.permute.xlu0 %6904
    %6906 = vrot.lane.b32.xlu0 %v6899, 126
    %v6907 = vpop.permute.xlu0 %6906
    %v6912 = vadd.f32 %v6592, %v6901
    %v6913 = vadd.f32 %v6593, %v6903
    %v6914 = vadd.f32 %v6594, %v6905
    %v6915 = vadd.f32 %v6595, %v6907
    %s6916 = sld [smem:[#allocation5]]
    %v6917 = vstv %s6916
    %v6918 = vadd.f32 %v6632, %v6917
    %v6919 = vadd.f32 %v6633, %v6917
    %v6920 = vadd.f32 %v6634, %v6917
    %v6921 = vadd.f32 %v6635, %v6917
    %v6922 = vmax.f32 %v6918, 0.0
    %v6923 = vmax.f32 %v6919, 0.0
    %v6924 = vmax.f32 %v6920, 0.0
    %v6925 = vmax.f32 %v6921, 0.0
    %vm6926 = vcmask 130048
    %v6927 = vsel %vm6926, %v6922, 0.0
    %6928 = vadd.xlane.f32.xlu0 %v6927
    %v6929 = vpop.xlane.xlu0 %6928
    %v6930 = vsel %vm6926, %v6923, 0.0
    %6931 = vadd.xlane.f32.xlu0 %v6930
    %v6932 = vpop.xlane.xlu0 %6931
    %v6933 = vsel %vm6926, %v6924, 0.0
    %6934 = vadd.xlane.f32.xlu0 %v6933
    %v6935 = vpop.xlane.xlu0 %6934
    %v6936 = vsel %vm6926, %v6925, 0.0
    %6937 = vadd.xlane.f32.xlu0 %v6936
    %v6938 = vpop.xlane.xlu0 %6937
    %v6943 = vlaneseq
    %v6944 = vand.u32 %v6943, 127
    %v6945 = vlaneseq
    %v6946 = vshrl.u32 %v6945, 7
    %v6947 = vsub.s32 %v6944, %v6946
    %v6948 = vrot.slane %v6929, %v6947
    %v6949 = vadd.s32 %v6944, 4294967288
    %v6950 = vlaneseq
    %v6951 = vshrl.u32 %v6950, 7
    %v6952 = vsub.s32 %v6949, %v6951
    %v6953 = vrot.slane %v6932, %v6952
    %vm6954 = vcmask 130112
    %v6955 = vsel %vm6954, %v6953, %v6948
    %v6956 = vlaneseq
    %v6957 = vshrl.u32 %v6956, 7
    %v6958 = vsub.s32 %v6944, %v6957
    %v6959 = vrot.slane %v6935, %v6958
    %v6960 = vlaneseq
    %v6961 = vshrl.u32 %v6960, 7
    %v6962 = vsub.s32 %v6949, %v6961
    %v6963 = vrot.slane %v6938, %v6962
    %v6964 = vsel %vm6954, %v6963, %v6959
    %vm6965 = vcmask 1041409
    %v6966 = vsel %vm6965, %v6964, %v6955
    %vm6968 = vcmask 123904
    %v6969 = vsel %vm6968, %v6966, 0.0
    %6970 = vadd.xlane.f32.xlu0 %v6969
    %v6971 = vpop.xlane.xlu0 %6970
    %v6972 = vmul.f32 %v6971, 0.00390625
    %s6973 = sld [smem:[#allocation5 + $0x1]]
    %v6974 = vstv %s6973
    %v6975 = vadd.f32 %v6672, %v6974
    %v6976 = vadd.f32 %v6673, %v6974
    %v6977 = vadd.f32 %v6674, %v6974
    %v6978 = vadd.f32 %v6675, %v6974
    %v6979 = vmax.f32 %v6975, 0.0
    %v6980 = vmax.f32 %v6976, 0.0
    %v6981 = vmax.f32 %v6977, 0.0
    %v6982 = vmax.f32 %v6978, 0.0
    %v6983 = vsel %vm6926, %v6979, 0.0
    %6984 = vadd.xlane.f32.xlu0 %v6983
    %v6985 = vpop.xlane.xlu0 %6984
    %v6986 = vsel %vm6926, %v6980, 0.0
    %6987 = vadd.xlane.f32.xlu0 %v6986
    %v6988 = vpop.xlane.xlu0 %6987
    %v6989 = vsel %vm6926, %v6981, 0.0
    %6990 = vadd.xlane.f32.xlu0 %v6989
    %v6991 = vpop.xlane.xlu0 %6990
    %v6992 = vsel %vm6926, %v6982, 0.0
    %6993 = vadd.xlane.f32.xlu0 %v6992
    %v6994 = vpop.xlane.xlu0 %6993
    %v6999 = vlaneseq
    %v7000 = vshrl.u32 %v6999, 7
    %v7001 = vsub.s32 %v6944, %v7000
    %v7002 = vrot.slane %v6985, %v7001
    %v7003 = vlaneseq
    %v7004 = vshrl.u32 %v7003, 7
    %v7005 = vsub.s32 %v6949, %v7004
    %v7006 = vrot.slane %v6988, %v7005
    %v7007 = vsel %vm6954, %v7006, %v7002
    %v7008 = vlaneseq
    %v7009 = vshrl.u32 %v7008, 7
    %v7010 = vsub.s32 %v6944, %v7009
    %v7011 = vrot.slane %v6991, %v7010
    %v7012 = vlaneseq
    %v7013 = vshrl.u32 %v7012, 7
    %v7014 = vsub.s32 %v6949, %v7013
    %v7015 = vrot.slane %v6994, %v7014
    %v7016 = vsel %vm6954, %v7015, %v7011
    %v7017 = vsel %vm6965, %v7016, %v7007
    %v7019 = vsel %vm6968, %v7017, 0.0
    %7020 = vadd.xlane.f32.xlu0 %v7019
    %v7021 = vpop.xlane.xlu0 %7020
    %v7022 = vmul.f32 %v7021, 0.00390625
    %s7023 = sld [smem:[#allocation5 + $0x2]]
    %v7024 = vstv %s7023
    %v7025 = vadd.f32 %v6712, %v7024
    %v7026 = vadd.f32 %v6713, %v7024
    %v7027 = vadd.f32 %v6714, %v7024
    %v7028 = vadd.f32 %v6715, %v7024
    %v7029 = vmax.f32 %v7025, 0.0
    %v7030 = vmax.f32 %v7026, 0.0
    %v7031 = vmax.f32 %v7027, 0.0
    %v7032 = vmax.f32 %v7028, 0.0
    %v7033 = vsel %vm6926, %v7029, 0.0
    %7034 = vadd.xlane.f32.xlu0 %v7033
    %v7035 = vpop.xlane.xlu0 %7034
    %v7036 = vsel %vm6926, %v7030, 0.0
    %7037 = vadd.xlane.f32.xlu0 %v7036
    %v7038 = vpop.xlane.xlu0 %7037
    %v7039 = vsel %vm6926, %v7031, 0.0
    %7040 = vadd.xlane.f32.xlu0 %v7039
    %v7041 = vpop.xlane.xlu0 %7040
    %v7042 = vsel %vm6926, %v7032, 0.0
    %7043 = vadd.xlane.f32.xlu0 %v7042
    %v7044 = vpop.xlane.xlu0 %7043
    %v7049 = vlaneseq
    %v7050 = vshrl.u32 %v7049, 7
    %v7051 = vsub.s32 %v6944, %v7050
    %v7052 = vrot.slane %v7035, %v7051
    %v7053 = vlaneseq
    %v7054 = vshrl.u32 %v7053, 7
    %v7055 = vsub.s32 %v6949, %v7054
    %v7056 = vrot.slane %v7038, %v7055
    %v7057 = vsel %vm6954, %v7056, %v7052
    %v7058 = vlaneseq
    %v7059 = vshrl.u32 %v7058, 7
    %v7060 = vsub.s32 %v6944, %v7059
    %v7061 = vrot.slane %v7041, %v7060
    %v7062 = vlaneseq
    %v7063 = vshrl.u32 %v7062, 7
    %v7064 = vsub.s32 %v6949, %v7063
    %v7065 = vrot.slane %v7044, %v7064
    %v7066 = vsel %vm6954, %v7065, %v7061
    %v7067 = vsel %vm6965, %v7066, %v7057
    %v7069 = vsel %vm6968, %v7067, 0.0
    %7070 = vadd.xlane.f32.xlu0 %v7069
    %v7071 = vpop.xlane.xlu0 %7070
    %v7072 = vmul.f32 %v7071, 0.00390625
    %s7073 = sld [smem:[#allocation5 + $0x3]]
    %v7074 = vstv %s7073
    %v7075 = vadd.f32 %v6752, %v7074
    %v7076 = vadd.f32 %v6753, %v7074
    %v7077 = vadd.f32 %v6754, %v7074
    %v7078 = vadd.f32 %v6755, %v7074
    %v7079 = vmax.f32 %v7075, 0.0
    %v7080 = vmax.f32 %v7076, 0.0
    %v7081 = vmax.f32 %v7077, 0.0
    %v7082 = vmax.f32 %v7078, 0.0
    %v7083 = vsel %vm6926, %v7079, 0.0
    %7084 = vadd.xlane.f32.xlu0 %v7083
    %v7085 = vpop.xlane.xlu0 %7084
    %v7086 = vsel %vm6926, %v7080, 0.0
    %7087 = vadd.xlane.f32.xlu0 %v7086
    %v7088 = vpop.xlane.xlu0 %7087
    %v7089 = vsel %vm6926, %v7081, 0.0
    %7090 = vadd.xlane.f32.xlu0 %v7089
    %v7091 = vpop.xlane.xlu0 %7090
    %v7092 = vsel %vm6926, %v7082, 0.0
    %7093 = vadd.xlane.f32.xlu0 %v7092
    %v7094 = vpop.xlane.xlu0 %7093
    %v7099 = vlaneseq
    %v7100 = vshrl.u32 %v7099, 7
    %v7101 = vsub.s32 %v6944, %v7100
    %v7102 = vrot.slane %v7085, %v7101
    %v7103 = vlaneseq
    %v7104 = vshrl.u32 %v7103, 7
    %v7105 = vsub.s32 %v6949, %v7104
    %v7106 = vrot.slane %v7088, %v7105
    %v7107 = vsel %vm6954, %v7106, %v7102
    %v7108 = vlaneseq
    %v7109 = vshrl.u32 %v7108, 7
    %v7110 = vsub.s32 %v6944, %v7109
    %v7111 = vrot.slane %v7091, %v7110
    %v7112 = vlaneseq
    %v7113 = vshrl.u32 %v7112, 7
    %v7114 = vsub.s32 %v6949, %v7113
    %v7115 = vrot.slane %v7094, %v7114
    %v7116 = vsel %vm6954, %v7115, %v7111
    %v7117 = vsel %vm6965, %v7116, %v7107
    %v7119 = vsel %vm6968, %v7117, 0.0
    %7120 = vadd.xlane.f32.xlu0 %v7119
    %v7121 = vpop.xlane.xlu0 %7120
    %v7122 = vmul.f32 %v7121, 0.00390625
    %s7123 = sld [smem:[#allocation5 + $0x4]]
    %v7124 = vstv %s7123
    %v7125 = vadd.f32 %v6792, %v7124
    %v7126 = vadd.f32 %v6793, %v7124
    %v7127 = vadd.f32 %v6794, %v7124
    %v7128 = vadd.f32 %v6795, %v7124
    %v7129 = vmax.f32 %v7125, 0.0
    %v7130 = vmax.f32 %v7126, 0.0
    %v7131 = vmax.f32 %v7127, 0.0
    %v7132 = vmax.f32 %v7128, 0.0
    %v7133 = vsel %vm6926, %v7129, 0.0
    %7134 = vadd.xlane.f32.xlu0 %v7133
    %v7135 = vpop.xlane.xlu0 %7134
    %v7136 = vsel %vm6926, %v7130, 0.0
    %7137 = vadd.xlane.f32.xlu0 %v7136
    %v7138 = vpop.xlane.xlu0 %7137
    %v7139 = vsel %vm6926, %v7131, 0.0
    %7140 = vadd.xlane.f32.xlu0 %v7139
    %v7141 = vpop.xlane.xlu0 %7140
    %v7142 = vsel %vm6926, %v7132, 0.0
    %7143 = vadd.xlane.f32.xlu0 %v7142
    %v7144 = vpop.xlane.xlu0 %7143
    %v7149 = vlaneseq
    %v7150 = vshrl.u32 %v7149, 7
    %v7151 = vsub.s32 %v6944, %v7150
    %v7152 = vrot.slane %v7135, %v7151
    %v7153 = vlaneseq
    %v7154 = vshrl.u32 %v7153, 7
    %v7155 = vsub.s32 %v6949, %v7154
    %v7156 = vrot.slane %v7138, %v7155
    %v7157 = vsel %vm6954, %v7156, %v7152
    %v7158 = vlaneseq
    %v7159 = vshrl.u32 %v7158, 7
    %v7160 = vsub.s32 %v6944, %v7159
    %v7161 = vrot.slane %v7141, %v7160
    %v7162 = vlaneseq
    %v7163 = vshrl.u32 %v7162, 7
    %v7164 = vsub.s32 %v6949, %v7163
    %v7165 = vrot.slane %v7144, %v7164
    %v7166 = vsel %vm6954, %v7165, %v7161
    %v7167 = vsel %vm6965, %v7166, %v7157
    %v7169 = vsel %vm6968, %v7167, 0.0
    %7170 = vadd.xlane.f32.xlu0 %v7169
    %v7171 = vpop.xlane.xlu0 %7170
    %v7172 = vmul.f32 %v7171, 0.00390625
    %s7173 = sld [smem:[#allocation5 + $0x5]]
    %v7174 = vstv %s7173
    %v7175 = vadd.f32 %v6832, %v7174
    %v7176 = vadd.f32 %v6833, %v7174
    %v7177 = vadd.f32 %v6834, %v7174
    %v7178 = vadd.f32 %v6835, %v7174
    %v7179 = vmax.f32 %v7175, 0.0
    %v7180 = vmax.f32 %v7176, 0.0
    %v7181 = vmax.f32 %v7177, 0.0
    %v7182 = vmax.f32 %v7178, 0.0
    %v7183 = vsel %vm6926, %v7179, 0.0
    %7184 = vadd.xlane.f32.xlu0 %v7183
    %v7185 = vpop.xlane.xlu0 %7184
    %v7186 = vsel %vm6926, %v7180, 0.0
    %7187 = vadd.xlane.f32.xlu0 %v7186
    %v7188 = vpop.xlane.xlu0 %7187
    %v7189 = vsel %vm6926, %v7181, 0.0
    %7190 = vadd.xlane.f32.xlu0 %v7189
    %v7191 = vpop.xlane.xlu0 %7190
    %v7192 = vsel %vm6926, %v7182, 0.0
    %7193 = vadd.xlane.f32.xlu0 %v7192
    %v7194 = vpop.xlane.xlu0 %7193
    %v7199 = vlaneseq
    %v7200 = vshrl.u32 %v7199, 7
    %v7201 = vsub.s32 %v6944, %v7200
    %v7202 = vrot.slane %v7185, %v7201
    %v7203 = vlaneseq
    %v7204 = vshrl.u32 %v7203, 7
    %v7205 = vsub.s32 %v6949, %v7204
    %v7206 = vrot.slane %v7188, %v7205
    %v7207 = vsel %vm6954, %v7206, %v7202
    %v7208 = vlaneseq
    %v7209 = vshrl.u32 %v7208, 7
    %v7210 = vsub.s32 %v6944, %v7209
    %v7211 = vrot.slane %v7191, %v7210
    %v7212 = vlaneseq
    %v7213 = vshrl.u32 %v7212, 7
    %v7214 = vsub.s32 %v6949, %v7213
    %v7215 = vrot.slane %v7194, %v7214
    %v7216 = vsel %vm6954, %v7215, %v7211
    %v7217 = vsel %vm6965, %v7216, %v7207
    %v7219 = vsel %vm6968, %v7217, 0.0
    %7220 = vadd.xlane.f32.xlu0 %v7219
    %v7221 = vpop.xlane.xlu0 %7220
    %v7222 = vmul.f32 %v7221, 0.00390625
    %s7223 = sld [smem:[#allocation5 + $0x6]]
    %v7224 = vstv %s7223
    %v7225 = vadd.f32 %v6872, %v7224
    %v7226 = vadd.f32 %v6873, %v7224
    %v7227 = vadd.f32 %v6874, %v7224
    %v7228 = vadd.f32 %v6875, %v7224
    %v7229 = vmax.f32 %v7225, 0.0
    %v7230 = vmax.f32 %v7226, 0.0
    %v7231 = vmax.f32 %v7227, 0.0
    %v7232 = vmax.f32 %v7228, 0.0
    %v7233 = vsel %vm6926, %v7229, 0.0
    %7234 = vadd.xlane.f32.xlu0 %v7233
    %v7235 = vpop.xlane.xlu0 %7234
    %v7236 = vsel %vm6926, %v7230, 0.0
    %7237 = vadd.xlane.f32.xlu0 %v7236
    %v7238 = vpop.xlane.xlu0 %7237
    %v7239 = vsel %vm6926, %v7231, 0.0
    %7240 = vadd.xlane.f32.xlu0 %v7239
    %v7241 = vpop.xlane.xlu0 %7240
    %v7242 = vsel %vm6926, %v7232, 0.0
    %7243 = vadd.xlane.f32.xlu0 %v7242
    %v7244 = vpop.xlane.xlu0 %7243
    %v7249 = vlaneseq
    %v7250 = vshrl.u32 %v7249, 7
    %v7251 = vsub.s32 %v6944, %v7250
    %v7252 = vrot.slane %v7235, %v7251
    %v7253 = vlaneseq
    %v7254 = vshrl.u32 %v7253, 7
    %v7255 = vsub.s32 %v6949, %v7254
    %v7256 = vrot.slane %v7238, %v7255
    %v7257 = vsel %vm6954, %v7256, %v7252
    %v7258 = vlaneseq
    %v7259 = vshrl.u32 %v7258, 7
    %v7260 = vsub.s32 %v6944, %v7259
    %v7261 = vrot.slane %v7241, %v7260
    %v7262 = vlaneseq
    %v7263 = vshrl.u32 %v7262, 7
    %v7264 = vsub.s32 %v6949, %v7263
    %v7265 = vrot.slane %v7244, %v7264
    %v7266 = vsel %vm6954, %v7265, %v7261
    %v7267 = vsel %vm6965, %v7266, %v7257
    %v7269 = vsel %vm6968, %v7267, 0.0
    %7270 = vadd.xlane.f32.xlu0 %v7269
    %v7271 = vpop.xlane.xlu0 %7270
    %v7272 = vmul.f32 %v7271, 0.00390625
    %s7273 = sld [smem:[#allocation5 + $0x7]]
    %v7274 = vstv %s7273
    %v7275 = vadd.f32 %v6912, %v7274
    %v7276 = vadd.f32 %v6913, %v7274
    %v7277 = vadd.f32 %v6914, %v7274
    %v7278 = vadd.f32 %v6915, %v7274
    %v7279 = vmax.f32 %v7275, 0.0
    %v7280 = vmax.f32 %v7276, 0.0
    %v7281 = vmax.f32 %v7277, 0.0
    %v7282 = vmax.f32 %v7278, 0.0
    %v7283 = vsel %vm6926, %v7279, 0.0
    %7284 = vadd.xlane.f32.xlu0 %v7283
    %v7285 = vpop.xlane.xlu0 %7284
    %v7286 = vsel %vm6926, %v7280, 0.0
    %7287 = vadd.xlane.f32.xlu0 %v7286
    %v7288 = vpop.xlane.xlu0 %7287
    %v7289 = vsel %vm6926, %v7281, 0.0
    %7290 = vadd.xlane.f32.xlu0 %v7289
    %v7291 = vpop.xlane.xlu0 %7290
    %v7292 = vsel %vm6926, %v7282, 0.0
    %7293 = vadd.xlane.f32.xlu0 %v7292
    %v7294 = vpop.xlane.xlu0 %7293
    %v7299 = vlaneseq
    %v7300 = vshrl.u32 %v7299, 7
    %v7301 = vsub.s32 %v6944, %v7300
    %v7302 = vrot.slane %v7285, %v7301
    %v7303 = vlaneseq
    %v7304 = vshrl.u32 %v7303, 7
    %v7305 = vsub.s32 %v6949, %v7304
    %v7306 = vrot.slane %v7288, %v7305
    %v7307 = vsel %vm6954, %v7306, %v7302
    %v7308 = vlaneseq
    %v7309 = vshrl.u32 %v7308, 7
    %v7310 = vsub.s32 %v6944, %v7309
    %v7311 = vrot.slane %v7291, %v7310
    %v7312 = vlaneseq
    %v7313 = vshrl.u32 %v7312, 7
    %v7314 = vsub.s32 %v6949, %v7313
    %v7315 = vrot.slane %v7294, %v7314
    %v7316 = vsel %vm6954, %v7315, %v7311
    %v7317 = vsel %vm6965, %v7316, %v7307
    %v7319 = vsel %vm6968, %v7317, 0.0
    %7320 = vadd.xlane.f32.xlu0 %v7319
    %v7321 = vpop.xlane.xlu0 %7320
    %v7322 = vmul.f32 %v7321, 0.00390625
    %vm7323 = vcmask 7168
    %v7324 = vsel %vm7323, %v6972, %v7022
    %vm7325 = vcmask 15360
    %v7326 = vsel %vm7325, %v7324, %v7072
    %vm7327 = vcmask 23552
    %v7328 = vsel %vm7327, %v7326, %v7122
    %vm7329 = vcmask 31744
    %v7330 = vsel %vm7329, %v7328, %v7172
    %vm7331 = vcmask 39936
    %v7332 = vsel %vm7331, %v7330, %v7222
    %vm7333 = vcmask 48128
    %v7334 = vsel %vm7333, %v7332, %v7272
    %vm7335 = vcmask 56320
    %v7336 = vsel %vm7335, %v7334, %v7322
    %v7337 = vld [vmem:[%s3] sm:$0xff]
    %v7338 = vld [vmem:[%s4] sm:$0x1]
    %v7340 = vlaneseq
    %v7341 = vshrl.u32 %v7340, 7
    %v7342 = vsub.s32 0, %v7341
    %v7343 = vrot.slane %v7338, %v7342
    %vm7345 = vcmask 64512
    %v7347 = vsel %vm7345, %v7336, 0
    %7349 = vmatprep.subr.mxu0 0.0
    %7350 = vmatpush1.msra.mxu0 0.0
    %7351 = vmatprep.subr.mxu0 0.0
    %7352 = vmatpush1.msra.mxu0 0.0
    %7353 = vmatprep.subr.mxu0 0.0
    %7354 = vmatpush1.msra.mxu0 0.0
    %7355 = vmatprep.subr.mxu0 0.0
    %7356 = vmatpush1.msra.mxu0 0.0
    %7357 = vmatprep.subr.mxu0 0.0
    %7358 = vmatpush1.msra.mxu0 0.0
    %7359 = vmatprep.subr.mxu0 0.0
    %7360 = vmatpush1.msra.mxu0 0.0
    %7361 = vmatprep.subr.mxu0 0.0
    %7362 = vmatpush1.msra.mxu0 0.0
    %7363 = vmatprep.subr.mxu0 0.0
    %7364 = vmatpush1.msra.mxu0 0.0
    %7365 = vmatprep.subr.mxu0 0.0
    %7366 = vmatpush1.msra.mxu0 0.0
    %7367 = vmatprep.subr.mxu0 0.0
    %7368 = vmatpush1.msra.mxu0 0.0
    %7369 = vmatprep.subr.mxu0 0.0
    %7370 = vmatpush1.msra.mxu0 0.0
    %7371 = vmatprep.subr.mxu0 0.0
    %7372 = vmatpush1.msra.mxu0 0.0
    %7373 = vmatprep.subr.mxu0 0.0
    %7374 = vmatpush1.msra.mxu0 0.0
    %7375 = vmatprep.subr.mxu0 0.0
    %7376 = vmatpush1.msra.mxu0 0.0
    %7377 = vmatprep.subr.mxu0 0.0
    %7378 = vmatpush1.msra.mxu0 0.0
    %7379 = vmatprep.subr.mxu0 0.0
    %7380 = vmatpush1.msra.mxu0 %v7337
    %7381 = vmatprep.subr.mxu0 0.0
    %7382 = vmatpush2.msra.mxu0 0.0
    %7383 = vmatprep.subr.mxu0 0.0
    %7384 = vmatpush2.msra.mxu0 0.0
    %7385 = vmatprep.subr.mxu0 0.0
    %7386 = vmatpush2.msra.mxu0 0.0
    %7387 = vmatprep.subr.mxu0 0.0
    %7388 = vmatpush2.msra.mxu0 0.0
    %7389 = vmatprep.subr.mxu0 0.0
    %7390 = vmatpush2.msra.mxu0 0.0
    %7391 = vmatprep.subr.mxu0 0.0
    %7392 = vmatpush2.msra.mxu0 0.0
    %7393 = vmatprep.subr.mxu0 0.0
    %7394 = vmatpush2.msra.mxu0 0.0
    %7395 = vmatprep.subr.mxu0 0.0
    %7396 = vmatpush2.msra.mxu0 0.0
    %7397 = vmatprep.subr.mxu0 0.0
    %7398 = vmatpush2.msra.mxu0 0.0
    %7399 = vmatprep.subr.mxu0 0.0
    %7400 = vmatpush2.msra.mxu0 0.0
    %7401 = vmatprep.subr.mxu0 0.0
    %7402 = vmatpush2.msra.mxu0 0.0
    %7403 = vmatprep.subr.mxu0 0.0
    %7404 = vmatpush2.msra.mxu0 0.0
    %7405 = vmatprep.subr.mxu0 0.0
    %7406 = vmatpush2.msra.mxu0 0.0
    %7407 = vmatprep.subr.mxu0 0.0
    %7408 = vmatpush2.msra.mxu0 0.0
    %7409 = vmatprep.subr.mxu0 0.0
    %7410 = vmatpush2.msra.mxu0 0.0
    %7411 = vmatprep.subr.mxu0 0.0
    %7412 = vmatpush2.msra.mxu0 0.0
    %7413 = vmatprep.mubr.f32.mxu0 0.0
    %7414 = vmatmul.mubr.f32.gmra.mxu0 %v7347
    %v7415 = vpop.f32.mrf.mxu0
    %v7416 = vadd.f32 %v7343, %v7415
    %v7417 = vpop.f32.mrf.mxu0
    %7418 = vdwg.mxu0
    %vm7419 = vcmask 58368
    %7420 = vst.msk [vmem:[#allocation7] sm:$0x3] %vm7419, %v7416
    // Predicated region
    $region30: #{abstract_model_forward.1} parent=1 // pred_check
      _
    $region31: #{abstract_model_forward.1} parent=1 // pred_check_branch
      %7422 = sbr.rel (0) target = $region33
    $region32: #{abstract_model_forward.1} parent=1 // pred_region
      %s7424 = ssub.s32 32, 32
      %7425 = vsyncadd [#allocation3], %s7424
      %s7427 = sshll.u32 [#allocation7], 4
      %s7428 = int_to_ptr.vmem [resolvable:$true] %s7427
      %7430 = dma.vmem_to_hbm [thread:$0]  %s7428, 32, %s5, [#allocation3]
    $region33: #{abstract_model_forward.1} parent=1 // pred_fallthru
      _
    // Predicated region
    $region34: #{abstract_model_forward.1} parent=1 // pred_check
      _
    $region35: #{abstract_model_forward.1} parent=1 // pred_check_branch
      %7432 = sbr.rel (0) target = $region37
    $region36: #{abstract_model_forward.1} parent=1 // pred_region
      %7433 = dma.done [#allocation3], 32
    $region37: #{abstract_model_forward.1} parent=1 // pred_fallthru
      _
    %7434 = vsyncpa [#allocation3], 1
    %7435 = vsyncpa [#allocation4], 1
    %7436 = vsyncpa [#allocation6], 1

</llo_original>
